<compile_context>
chip_gen: v6e
topology: v6e:2x2x1
jax: 0.10.0
libtpu: 0.0.40
codegen_flags: <defaults>
</compile_context>

<pallas_src>
import functools

import numpy as np
import jax
import jax.numpy as jnp
from jax.experimental import pallas as pl
from jax.experimental.pallas import tpu as pltpu

LRELU_SLOPE = 0.2
POOL = 3  # AvgPool3d(3): kernel 3, stride 3, no padding


def add_dis_block_kernel(x_ref, w1_ref, b1_ref, w2_ref, b2_ref, mask_ref,
                         pool_ref, o_ref, y1g_ref, *, offsets, guard, spad,
                         rows, c_in, c_out):
    """One batch element per grid step.

    x_ref:    (1, rows, C_in)   bf16  zero-guarded channel-last slab
    w1_ref:   (27*C_in,  C_out) bf16  im2col-flattened conv1 weight
    w2_ref:   (27*C_out, C_out) bf16  im2col-flattened conv2 weight
    b1_ref, b2_ref: (1, C_out)  f32
    mask_ref: (Spad, 1)         f32   1 on interior voxels, 0 on padding ring
    pool_ref: (So, Spad)        bf16  AvgPool3d(3) selection matrix (1.0 entries)
    o_ref:    (1, So, C_out)    f32
    y1g_ref:  (rows, C_out)     bf16  VMEM scratch: conv1 output + zero guards
    """
    # Zero the y1 guard bands every step (NOT only at program_id==0: the
    # scratch is per-TensorCore under megacore sharding of the batch axis).
    zg = jnp.zeros((guard, c_out), jnp.bfloat16)
    y1g_ref[0:guard, :] = zg
    y1g_ref[guard + spad:rows, :] = zg

    # ---- conv1: im2col along lanes -> single K = 27*C_in MXU contraction ----
    cols1 = [x_ref[0, guard + off:guard + off + spad, :] for off in offsets]
    im2col1 = jnp.concatenate(cols1, axis=1)            # (Spad, 27*C_in) bf16
    y1 = jnp.dot(im2col1, w1_ref[...], preferred_element_type=jnp.float32)
    y1 = y1 + b1_ref[...]
    y1 = jnp.maximum(LRELU_SLOPE * y1, y1)              # LeakyReLU(0.2), f32
    y1 = y1 * mask_ref[...]                             # zero the padding ring

    # Stage y1 (bf16) with zero guard bands so conv2 taps are static slices.
    y1g_ref[guard:guard + spad, :] = y1.astype(jnp.bfloat16)

    # ---- conv2: same im2col from the zero-guarded y1 scratch ----
    cols2 = [y1g_ref[guard + off:guard + off + spad, :] for off in offsets]
    im2col2 = jnp.concatenate(cols2, axis=1)            # (Spad, 27*C_out) bf16
    y2 = jnp.dot(im2col2, w2_ref[...], preferred_element_type=jnp.float32)
    y2 = y2 + b2_ref[...]
    y2 = jnp.maximum(LRELU_SLOPE * y2, y2)              # LeakyReLU(0.2), f32

    # ---- AvgPool3d(3) + interior extraction: one selection matmul.
    # pool_ref has exact 1.0 entries (bf16-safe); 1/27 scale stays in f32. ----
    pooled = jnp.dot(pool_ref[...], y2.astype(jnp.bfloat16),
                     preferred_element_type=jnp.float32)
    o_ref[0] = (pooled * (1.0 / (POOL ** 3))).astype(o_ref.dtype)


def add_dis_block(x, w1, b1, w2, b2):
    """x: (N, C_in, D, H, W); w1: (C_out, C_in, 3,3,3); w2: (C_out, C_out, 3,3,3).
    Returns (N, C_out, D//3, H//3, W//3) in NCDHW order."""
    n, c_in, d, h, w = x.shape
    c_out = w1.shape[0]
    # TODO(synk): the reference module declares conv2 as Conv3d(in_channels,
    # out_channels) but applies it to an out_channels tensor, so it only
    # type-checks when in_channels == out_channels.
    assert w2.shape[1] == c_out, "conv2 requires in_channels == out_channels"
    assert d >= POOL and h >= POOL and w >= POOL

    dpad, hpad, wpad = d + 2, h + 2, w + 2
    spad = dpad * hpad * wpad
    do_, ho_, wo_ = d // POOL, h // POOL, w // POOL
    so = do_ * ho_ * wo_
    # Guard band >= largest |tap offset|, rounded up to a sublane multiple.
    guard = ((hpad * wpad + wpad + 1 + 7) // 8) * 8
    rows = spad + 2 * guard

    # Channel-last bf16 slab: zero spatial padding + zero guard rows, so every
    # tap window is an in-bounds static slice of zero-extended data.
    x_pad = jnp.pad(x.astype(jnp.bfloat16),
                    ((0, 0), (0, 0), (1, 1), (1, 1), (1, 1)))
    x_flat = jnp.transpose(x_pad, (0, 2, 3, 4, 1)).reshape(n, spad, c_in)
    x_guard = jnp.pad(x_flat, ((0, 0), (guard, guard), (0, 0)))

    # im2col-flattened weights: row t*C + c with tap index t = kd*9 + kh*3 + kw
    # (same order as the window concatenation inside the kernel).
    w1_flat = (jnp.transpose(w1.reshape(c_out, c_in, 27), (2, 1, 0))
               .reshape(27 * c_in, c_out).astype(jnp.bfloat16))
    w2_flat = (jnp.transpose(w2.reshape(c_out, c_out, 27), (2, 1, 0))
               .reshape(27 * c_out, c_out).astype(jnp.bfloat16))
    b1_r = b1.reshape(1, c_out).astype(jnp.float32)
    b2_r = b2.reshape(1, c_out).astype(jnp.float32)

    # Row offset of each tap in the flattened padded volume (t = kd*9+kh*3+kw).
    # kd/kh strides and the guard are multiples of 8 when wpad % 8 == 0; only
    # the kw = +-1 component breaks sublane alignment (inherent to the fold).
    offsets = tuple((kd - 1) * hpad * wpad + (kh - 1) * wpad + (kw - 1)
                    for kd in range(3) for kh in range(3) for kw in range(3))

    # Interior mask: 1 on real voxels, 0 on the padding ring.
    mask_np = np.zeros((dpad, hpad, wpad), np.float32)
    mask_np[1:1 + d, 1:1 + h, 1:1 + w] = 1.0
    mask = jnp.asarray(mask_np.reshape(spad, 1))

    # AvgPool3d(3) as a (So, Spad) selection matrix over interior rows only.
    # Entries are exact 1.0 (bf16-safe); the 1/27 scale is applied in-kernel.
    pool_np = np.zeros((so, spad), np.float32)
    for od in range(do_):
        for oh in range(ho_):
            for ow in range(wo_):
                row = (od * ho_ + oh) * wo_ + ow
                for a in range(POOL):
                    for b_ in range(POOL):
                        for c_ in range(POOL):
                            col = ((POOL * od + a + 1) * hpad
                                   + (POOL * oh + b_ + 1)) * wpad + (POOL * ow + c_ + 1)
                            pool_np[row, col] = 1.0
    pool_sel = jnp.asarray(pool_np).astype(jnp.bfloat16)

    # VMEM limit with headroom: ~48 MiB on v7x (64 MiB/TC), up to 96 MiB on
    # v5e/v6e (128 MiB/TC).  Fallback is the conservative v7x capacity.
    try:
        vmem_cap = int(pltpu.get_tpu_info().vmem_capacity_bytes)
    except Exception:
        vmem_cap = 0
    if vmem_cap <= 0:
        vmem_cap = 64 * 1024 * 1024
    vmem_limit = int(max(min((vmem_cap * 3) // 4, 96 * 1024 * 1024),
                         32 * 1024 * 1024))

    flops = n * (2 * spad * (27 * c_in) * c_out
                 + 2 * spad * (27 * c_out) * c_out
                 + 2 * so * spad * c_out)
    bytes_accessed = (x_guard.size * 2 + w1_flat.size * 2 + w2_flat.size * 2
                      + b1_r.size * 4 + b2_r.size * 4 + mask.size * 4
                      + pool_sel.size * 2 + n * so * c_out * 4)

    kernel = functools.partial(add_dis_block_kernel, offsets=offsets,
                               guard=guard, spad=spad, rows=rows,
                               c_in=c_in, c_out=c_out)

    out_flat = pl.pallas_call(
        kernel,
        out_shape=jax.ShapeDtypeStruct((n, so, c_out), jnp.float32),
        grid_spec=pltpu.PrefetchScalarGridSpec(
            num_scalar_prefetch=0,
            grid=(n,),                                                # batch grid
            in_specs=[
                pl.BlockSpec((1, rows, c_in), lambda i: (i, 0, 0)),       # streamed
                pl.BlockSpec((27 * c_in, c_out), lambda i: (0, 0)),       # resident
                pl.BlockSpec((1, c_out), lambda i: (0, 0)),               # resident
                pl.BlockSpec((27 * c_out, c_out), lambda i: (0, 0)),      # resident
                pl.BlockSpec((1, c_out), lambda i: (0, 0)),               # resident
                pl.BlockSpec((spad, 1), lambda i: (0, 0)),                # resident
                pl.BlockSpec((so, spad), lambda i: (0, 0)),               # resident
            ],
            out_specs=pl.BlockSpec((1, so, c_out), lambda i: (i, 0, 0)),
            scratch_shapes=[pltpu.VMEM((rows, c_out), jnp.bfloat16)],     # guarded y1
        ),
        compiler_params=pltpu.CompilerParams(
            dimension_semantics=("parallel",),        # megacore sharding on v7x
            vmem_limit_bytes=vmem_limit),
        cost_estimate=pl.CostEstimate(flops=int(flops), transcendentals=0,
                                      bytes_accessed=int(bytes_accessed)),
    )(x_guard, w1_flat, b1_r, w2_flat, b2_r, mask, pool_sel)

    out = out_flat.reshape(n, do_, ho_, wo_, c_out)
    return jnp.transpose(out, (0, 4, 1, 2, 3))                 # back to NCDHW


def reference(x, w1, b1, w2, b2):
    """Pure-JAX reference of the same forward pass (NCDHW)."""
    dn = ('NCDHW', 'OIDHW', 'NCDHW')
    pad = ((1, 1), (1, 1), (1, 1))
    y = jax.lax.conv_general_dilated(x, w1, (1, 1, 1), pad, dimension_numbers=dn)
    y = y + b1[None, :, None, None, None]
    y = jnp.maximum(LRELU_SLOPE * y, y)
    y = jax.lax.conv_general_dilated(y, w2, (1, 1, 1), pad, dimension_numbers=dn)
    y = y + b2[None, :, None, None, None]
    y = jnp.maximum(LRELU_SLOPE * y, y)
    n, c, d, h, w = y.shape
    do_, ho_, wo_ = d // POOL, h // POOL, w // POOL
    y = y[:, :, :do_ * POOL, :ho_ * POOL, :wo_ * POOL]
    return y.reshape(n, c, do_, POOL, ho_, POOL, wo_, POOL).mean(axis=(3, 5, 7))


if __name__ == "__main__":
    # conv2's declared signature only type-checks when in_channels == out_channels.
    N, C_IN, C_OUT, D, H, W = 2, 4, 4, 6, 6, 6

    key = jax.random.PRNGKey(0)
    kx, kw1, kb1, kw2, kb2 = jax.random.split(key, 5)
    x = jax.random.normal(kx, (N, C_IN, D, H, W), dtype=jnp.float32)
    w1 = 0.1 * jax.random.normal(kw1, (C_OUT, C_IN, 3, 3, 3), dtype=jnp.float32)
    b1 = 0.1 * jax.random.normal(kb1, (C_OUT,), dtype=jnp.float32)
    w2 = 0.1 * jax.random.normal(kw2, (C_OUT, C_OUT, 3, 3, 3), dtype=jnp.float32)
    b2 = 0.1 * jax.random.normal(kb2, (C_OUT,), dtype=jnp.float32)

    out = jax.block_until_ready(add_dis_block(x, w1, b1, w2, b2))
    ref = jax.block_until_ready(reference(x, w1, b1, w2, b2))

    assert out.shape == (N, C_OUT, D // 3, H // 3, W // 3), out.shape
    # bf16 matmul operands / bf16-staged intermediates with f32 accumulation.
    np.testing.assert_allclose(np.asarray(out), np.asarray(ref), rtol=4e-2, atol=4e-2)
    print("KERNEL_OK")
</pallas_src>

<mosaic_0001>
module attributes {stable_mosaic.version = 11 : i64} {
  func.func @add_dis_block_kernel(%arg0: i32, %arg1: memref<1x672x4xbf16, #tpu.memory_space<vmem>>, %arg2: memref<108x4xbf16, #tpu.memory_space<vmem>>, %arg3: memref<1x4xf32, #tpu.memory_space<vmem>>, %arg4: memref<108x4xbf16, #tpu.memory_space<vmem>>, %arg5: memref<1x4xf32, #tpu.memory_space<vmem>>, %arg6: memref<512x1xf32, #tpu.memory_space<vmem>>, %arg7: memref<8x512xbf16, #tpu.memory_space<vmem>>, %arg8: memref<1x8x4xf32, #tpu.memory_space<vmem>>, %arg9: memref<672x4xbf16, #tpu.memory_space<vmem>>) attributes {dimension_semantics = [#tpu.dimension_semantics<parallel>], iteration_bounds = array<i64: 2>, scalar_prefetch = 0 : i64, scratch_operands = 1 : i64, tpu.core_type = #tpu.core_type<tc>, window_params = [{transform_indices = @transform_0, window_bounds = array<i64: 1, 672, 4>}, {pipeline_mode = #tpu.pipeline_mode<synchronous>, transform_indices = @transform_1, window_bounds = array<i64: 108, 4>}, {pipeline_mode = #tpu.pipeline_mode<synchronous>, transform_indices = @transform_2, window_bounds = array<i64: 1, 4>}, {pipeline_mode = #tpu.pipeline_mode<synchronous>, transform_indices = @transform_3, window_bounds = array<i64: 108, 4>}, {pipeline_mode = #tpu.pipeline_mode<synchronous>, transform_indices = @transform_4, window_bounds = array<i64: 1, 4>}, {pipeline_mode = #tpu.pipeline_mode<synchronous>, transform_indices = @transform_5, window_bounds = array<i64: 512, 1>}, {pipeline_mode = #tpu.pipeline_mode<synchronous>, transform_indices = @transform_6, window_bounds = array<i64: 8, 512>}, {transform_indices = @transform_7, window_bounds = array<i64: 1, 8, 4>}]} {
    %cst = arith.constant 0.000000e+00 : bf16
    %0 = vector.broadcast %cst : bf16 to vector<80x4xbf16>
    %c0 = arith.constant 0 : index
    %c0_0 = arith.constant 0 : index
    %1 = vector.load %arg9[%c0, %c0_0] : memref<672x4xbf16, #tpu.memory_space<vmem>>, vector<80x4xbf16>
    tpu.vector_store %arg9[%c0, %c0_0], %0 {strides = array<i32>} : memref<672x4xbf16, #tpu.memory_space<vmem>>, vector<80x4xbf16>,
    %c592 = arith.constant 592 : index
    %c0_1 = arith.constant 0 : index
    %2 = vector.load %arg9[%c592, %c0_1] : memref<672x4xbf16, #tpu.memory_space<vmem>>, vector<80x4xbf16>
    tpu.vector_store %arg9[%c592, %c0_1], %0 {strides = array<i32>} : memref<672x4xbf16, #tpu.memory_space<vmem>>, vector<80x4xbf16>,
    %c0_2 = arith.constant 0 : index
    %c7 = arith.constant 7 : index
    %c0_3 = arith.constant 0 : index
    %3 = vector.load %arg1[%c0_2, %c7, %c0_3] : memref<1x672x4xbf16, #tpu.memory_space<vmem>>, vector<1x512x4xbf16>
    %4 = vector.shape_cast %3 : vector<1x512x4xbf16> to vector<512x4xbf16>
    %c0_4 = arith.constant 0 : index
    %c8 = arith.constant 8 : index
    %c0_5 = arith.constant 0 : index
    %5 = vector.load %arg1[%c0_4, %c8, %c0_5] : memref<1x672x4xbf16, #tpu.memory_space<vmem>>, vector<1x512x4xbf16>
    %6 = vector.shape_cast %5 : vector<1x512x4xbf16> to vector<512x4xbf16>
    %c0_6 = arith.constant 0 : index
    %c9 = arith.constant 9 : index
    %c0_7 = arith.constant 0 : index
    %7 = vector.load %arg1[%c0_6, %c9, %c0_7] : memref<1x672x4xbf16, #tpu.memory_space<vmem>>, vector<1x512x4xbf16>
    %8 = vector.shape_cast %7 : vector<1x512x4xbf16> to vector<512x4xbf16>
    %c0_8 = arith.constant 0 : index
    %c15 = arith.constant 15 : index
    %c0_9 = arith.constant 0 : index
    %9 = vector.load %arg1[%c0_8, %c15, %c0_9] : memref<1x672x4xbf16, #tpu.memory_space<vmem>>, vector<1x512x4xbf16>
    %10 = vector.shape_cast %9 : vector<1x512x4xbf16> to vector<512x4xbf16>
    %c0_10 = arith.constant 0 : index
    %c16 = arith.constant 16 : index
    %c0_11 = arith.constant 0 : index
    %11 = vector.load %arg1[%c0_10, %c16, %c0_11] : memref<1x672x4xbf16, #tpu.memory_space<vmem>>, vector<1x512x4xbf16>
    %12 = vector.shape_cast %11 : vector<1x512x4xbf16> to vector<512x4xbf16>
    %c0_12 = arith.constant 0 : index
    %c17 = arith.constant 17 : index
    %c0_13 = arith.constant 0 : index
    %13 = vector.load %arg1[%c0_12, %c17, %c0_13] : memref<1x672x4xbf16, #tpu.memory_space<vmem>>, vector<1x512x4xbf16>
    %14 = vector.shape_cast %13 : vector<1x512x4xbf16> to vector<512x4xbf16>
    %c0_14 = arith.constant 0 : index
    %c23 = arith.constant 23 : index
    %c0_15 = arith.constant 0 : index
    %15 = vector.load %arg1[%c0_14, %c23, %c0_15] : memref<1x672x4xbf16, #tpu.memory_space<vmem>>, vector<1x512x4xbf16>
    %16 = vector.shape_cast %15 : vector<1x512x4xbf16> to vector<512x4xbf16>
    %c0_16 = arith.constant 0 : index
    %c24 = arith.constant 24 : index
    %c0_17 = arith.constant 0 : index
    %17 = vector.load %arg1[%c0_16, %c24, %c0_17] : memref<1x672x4xbf16, #tpu.memory_space<vmem>>, vector<1x512x4xbf16>
    %18 = vector.shape_cast %17 : vector<1x512x4xbf16> to vector<512x4xbf16>
    %c0_18 = arith.constant 0 : index
    %c25 = arith.constant 25 : index
    %c0_19 = arith.constant 0 : index
    %19 = vector.load %arg1[%c0_18, %c25, %c0_19] : memref<1x672x4xbf16, #tpu.memory_space<vmem>>, vector<1x512x4xbf16>
    %20 = vector.shape_cast %19 : vector<1x512x4xbf16> to vector<512x4xbf16>
    %c0_20 = arith.constant 0 : index
    %c71 = arith.constant 71 : index
    %c0_21 = arith.constant 0 : index
    %21 = vector.load %arg1[%c0_20, %c71, %c0_21] : memref<1x672x4xbf16, #tpu.memory_space<vmem>>, vector<1x512x4xbf16>
    %22 = vector.shape_cast %21 : vector<1x512x4xbf16> to vector<512x4xbf16>
    %c0_22 = arith.constant 0 : index
    %c72 = arith.constant 72 : index
    %c0_23 = arith.constant 0 : index
    %23 = vector.load %arg1[%c0_22, %c72, %c0_23] : memref<1x672x4xbf16, #tpu.memory_space<vmem>>, vector<1x512x4xbf16>
    %24 = vector.shape_cast %23 : vector<1x512x4xbf16> to vector<512x4xbf16>
    %c0_24 = arith.constant 0 : index
    %c73 = arith.constant 73 : index
    %c0_25 = arith.constant 0 : index
    %25 = vector.load %arg1[%c0_24, %c73, %c0_25] : memref<1x672x4xbf16, #tpu.memory_space<vmem>>, vector<1x512x4xbf16>
    %26 = vector.shape_cast %25 : vector<1x512x4xbf16> to vector<512x4xbf16>
    %c0_26 = arith.constant 0 : index
    %c79 = arith.constant 79 : index
    %c0_27 = arith.constant 0 : index
    %27 = vector.load %arg1[%c0_26, %c79, %c0_27] : memref<1x672x4xbf16, #tpu.memory_space<vmem>>, vector<1x512x4xbf16>
    %28 = vector.shape_cast %27 : vector<1x512x4xbf16> to vector<512x4xbf16>
    %c0_28 = arith.constant 0 : index
    %c80 = arith.constant 80 : index
    %c0_29 = arith.constant 0 : index
    %29 = vector.load %arg1[%c0_28, %c80, %c0_29] : memref<1x672x4xbf16, #tpu.memory_space<vmem>>, vector<1x512x4xbf16>
    %30 = vector.shape_cast %29 : vector<1x512x4xbf16> to vector<512x4xbf16>
    %c0_30 = arith.constant 0 : index
    %c81 = arith.constant 81 : index
    %c0_31 = arith.constant 0 : index
    %31 = vector.load %arg1[%c0_30, %c81, %c0_31] : memref<1x672x4xbf16, #tpu.memory_space<vmem>>, vector<1x512x4xbf16>
    %32 = vector.shape_cast %31 : vector<1x512x4xbf16> to vector<512x4xbf16>
    %c0_32 = arith.constant 0 : index
    %c87 = arith.constant 87 : index
    %c0_33 = arith.constant 0 : index
    %33 = vector.load %arg1[%c0_32, %c87, %c0_33] : memref<1x672x4xbf16, #tpu.memory_space<vmem>>, vector<1x512x4xbf16>
    %34 = vector.shape_cast %33 : vector<1x512x4xbf16> to vector<512x4xbf16>
    %c0_34 = arith.constant 0 : index
    %c88 = arith.constant 88 : index
    %c0_35 = arith.constant 0 : index
    %35 = vector.load %arg1[%c0_34, %c88, %c0_35] : memref<1x672x4xbf16, #tpu.memory_space<vmem>>, vector<1x512x4xbf16>
    %36 = vector.shape_cast %35 : vector<1x512x4xbf16> to vector<512x4xbf16>
    %c0_36 = arith.constant 0 : index
    %c89 = arith.constant 89 : index
    %c0_37 = arith.constant 0 : index
    %37 = vector.load %arg1[%c0_36, %c89, %c0_37] : memref<1x672x4xbf16, #tpu.memory_space<vmem>>, vector<1x512x4xbf16>
    %38 = vector.shape_cast %37 : vector<1x512x4xbf16> to vector<512x4xbf16>
    %c0_38 = arith.constant 0 : index
    %c135 = arith.constant 135 : index
    %c0_39 = arith.constant 0 : index
    %39 = vector.load %arg1[%c0_38, %c135, %c0_39] : memref<1x672x4xbf16, #tpu.memory_space<vmem>>, vector<1x512x4xbf16>
    %40 = vector.shape_cast %39 : vector<1x512x4xbf16> to vector<512x4xbf16>
    %c0_40 = arith.constant 0 : index
    %c136 = arith.constant 136 : index
    %c0_41 = arith.constant 0 : index
    %41 = vector.load %arg1[%c0_40, %c136, %c0_41] : memref<1x672x4xbf16, #tpu.memory_space<vmem>>, vector<1x512x4xbf16>
    %42 = vector.shape_cast %41 : vector<1x512x4xbf16> to vector<512x4xbf16>
    %c0_42 = arith.constant 0 : index
    %c137 = arith.constant 137 : index
    %c0_43 = arith.constant 0 : index
    %43 = vector.load %arg1[%c0_42, %c137, %c0_43] : memref<1x672x4xbf16, #tpu.memory_space<vmem>>, vector<1x512x4xbf16>
    %44 = vector.shape_cast %43 : vector<1x512x4xbf16> to vector<512x4xbf16>
    %c0_44 = arith.constant 0 : index
    %c143 = arith.constant 143 : index
    %c0_45 = arith.constant 0 : index
    %45 = vector.load %arg1[%c0_44, %c143, %c0_45] : memref<1x672x4xbf16, #tpu.memory_space<vmem>>, vector<1x512x4xbf16>
    %46 = vector.shape_cast %45 : vector<1x512x4xbf16> to vector<512x4xbf16>
    %c0_46 = arith.constant 0 : index
    %c144 = arith.constant 144 : index
    %c0_47 = arith.constant 0 : index
    %47 = vector.load %arg1[%c0_46, %c144, %c0_47] : memref<1x672x4xbf16, #tpu.memory_space<vmem>>, vector<1x512x4xbf16>
    %48 = vector.shape_cast %47 : vector<1x512x4xbf16> to vector<512x4xbf16>
    %c0_48 = arith.constant 0 : index
    %c145 = arith.constant 145 : index
    %c0_49 = arith.constant 0 : index
    %49 = vector.load %arg1[%c0_48, %c145, %c0_49] : memref<1x672x4xbf16, #tpu.memory_space<vmem>>, vector<1x512x4xbf16>
    %50 = vector.shape_cast %49 : vector<1x512x4xbf16> to vector<512x4xbf16>
    %c0_50 = arith.constant 0 : index
    %c151 = arith.constant 151 : index
    %c0_51 = arith.constant 0 : index
    %51 = vector.load %arg1[%c0_50, %c151, %c0_51] : memref<1x672x4xbf16, #tpu.memory_space<vmem>>, vector<1x512x4xbf16>
    %52 = vector.shape_cast %51 : vector<1x512x4xbf16> to vector<512x4xbf16>
    %c0_52 = arith.constant 0 : index
    %c152 = arith.constant 152 : index
    %c0_53 = arith.constant 0 : index
    %53 = vector.load %arg1[%c0_52, %c152, %c0_53] : memref<1x672x4xbf16, #tpu.memory_space<vmem>>, vector<1x512x4xbf16>
    %54 = vector.shape_cast %53 : vector<1x512x4xbf16> to vector<512x4xbf16>
    %c0_54 = arith.constant 0 : index
    %c153 = arith.constant 153 : index
    %c0_55 = arith.constant 0 : index
    %55 = vector.load %arg1[%c0_54, %c153, %c0_55] : memref<1x672x4xbf16, #tpu.memory_space<vmem>>, vector<1x512x4xbf16>
    %56 = vector.shape_cast %55 : vector<1x512x4xbf16> to vector<512x4xbf16>
    %57 = tpu.concatenate %4, %6, %8, %10, %12, %14, %16, %18, %20, %22, %24, %26, %28, %30, %32, %34 in 1 : vector<512x4xbf16>, vector<512x4xbf16>, vector<512x4xbf16>, vector<512x4xbf16>, vector<512x4xbf16>, vector<512x4xbf16>, vector<512x4xbf16>, vector<512x4xbf16>, vector<512x4xbf16>, vector<512x4xbf16>, vector<512x4xbf16>, vector<512x4xbf16>, vector<512x4xbf16>, vector<512x4xbf16>, vector<512x4xbf16>, vector<512x4xbf16> -> vector<512x64xbf16>
    %58 = tpu.concatenate %36, %38, %40, %42, %44, %46, %48, %50, %52, %54, %56 in 1 : vector<512x4xbf16>, vector<512x4xbf16>, vector<512x4xbf16>, vector<512x4xbf16>, vector<512x4xbf16>, vector<512x4xbf16>, vector<512x4xbf16>, vector<512x4xbf16>, vector<512x4xbf16>, vector<512x4xbf16>, vector<512x4xbf16> -> vector<512x44xbf16>
    %59 = tpu.concatenate %57, %58 in 1 : vector<512x64xbf16>, vector<512x44xbf16> -> vector<512x108xbf16>
    %c0_56 = arith.constant 0 : index
    %c0_57 = arith.constant 0 : index
    %60 = vector.load %arg2[%c0_56, %c0_57] : memref<108x4xbf16, #tpu.memory_space<vmem>>, vector<108x4xbf16>
    %cst_58 = arith.constant dense<0.000000e+00> : vector<512x4xf32>
    %61 = tpu.matmul %59, %60, %cst_58 {dimension_numbers = #tpu.dot_dimension_numbers<[1], [0], [0], [1], [0, 0, 1, 1], [], []>} : vector<512x108xbf16>, vector<108x4xbf16>, vector<512x4xf32> -> vector<512x4xf32>
    %c0_59 = arith.constant 0 : index
    %c0_60 = arith.constant 0 : index
    %62 = vector.load %arg3[%c0_59, %c0_60] : memref<1x4xf32, #tpu.memory_space<vmem>>, vector<1x4xf32>
    %63 = vector.broadcast %62 : vector<1x4xf32> to vector<512x4xf32>
    %64 = arith.addf %61, %63 : vector<512x4xf32>
    %cst_61 = arith.constant 2.000000e-01 : f32
    %65 = vector.broadcast %cst_61 : f32 to vector<512x4xf32>
    %66 = arith.mulf %65, %64 : vector<512x4xf32>
    %67 = arith.maximumf %66, %64 : vector<512x4xf32>
    %c0_62 = arith.constant 0 : index
    %c0_63 = arith.constant 0 : index
    %68 = vector.load %arg6[%c0_62, %c0_63] : memref<512x1xf32, #tpu.memory_space<vmem>>, vector<512x1xf32>
    %69 = vector.broadcast %68 : vector<512x1xf32> to vector<512x4xf32>
    %70 = arith.mulf %67, %69 : vector<512x4xf32>
    %71 = arith.truncf %70 : vector<512x4xf32> to vector<512x4xbf16>
    %c80_64 = arith.constant 80 : index
    %c0_65 = arith.constant 0 : index
    %72 = vector.load %arg9[%c80_64, %c0_65] : memref<672x4xbf16, #tpu.memory_space<vmem>>, vector<512x4xbf16>
    tpu.vector_store %arg9[%c80_64, %c0_65], %71 {strides = array<i32>} : memref<672x4xbf16, #tpu.memory_space<vmem>>, vector<512x4xbf16>,
    %c7_66 = arith.constant 7 : index
    %c0_67 = arith.constant 0 : index
    %73 = vector.load %arg9[%c7_66, %c0_67] : memref<672x4xbf16, #tpu.memory_space<vmem>>, vector<512x4xbf16>
    %c8_68 = arith.constant 8 : index
    %c0_69 = arith.constant 0 : index
    %74 = vector.load %arg9[%c8_68, %c0_69] : memref<672x4xbf16, #tpu.memory_space<vmem>>, vector<512x4xbf16>
    %c9_70 = arith.constant 9 : index
    %c0_71 = arith.constant 0 : index
    %75 = vector.load %arg9[%c9_70, %c0_71] : memref<672x4xbf16, #tpu.memory_space<vmem>>, vector<512x4xbf16>
    %c15_72 = arith.constant 15 : index
    %c0_73 = arith.constant 0 : index
    %76 = vector.load %arg9[%c15_72, %c0_73] : memref<672x4xbf16, #tpu.memory_space<vmem>>, vector<512x4xbf16>
    %c16_74 = arith.constant 16 : index
    %c0_75 = arith.constant 0 : index
    %77 = vector.load %arg9[%c16_74, %c0_75] : memref<672x4xbf16, #tpu.memory_space<vmem>>, vector<512x4xbf16>
    %c17_76 = arith.constant 17 : index
    %c0_77 = arith.constant 0 : index
    %78 = vector.load %arg9[%c17_76, %c0_77] : memref<672x4xbf16, #tpu.memory_space<vmem>>, vector<512x4xbf16>
    %c23_78 = arith.constant 23 : index
    %c0_79 = arith.constant 0 : index
    %79 = vector.load %arg9[%c23_78, %c0_79] : memref<672x4xbf16, #tpu.memory_space<vmem>>, vector<512x4xbf16>
    %c24_80 = arith.constant 24 : index
    %c0_81 = arith.constant 0 : index
    %80 = vector.load %arg9[%c24_80, %c0_81] : memref<672x4xbf16, #tpu.memory_space<vmem>>, vector<512x4xbf16>
    %c25_82 = arith.constant 25 : index
    %c0_83 = arith.constant 0 : index
    %81 = vector.load %arg9[%c25_82, %c0_83] : memref<672x4xbf16, #tpu.memory_space<vmem>>, vector<512x4xbf16>
    %c71_84 = arith.constant 71 : index
    %c0_85 = arith.constant 0 : index
    %82 = vector.load %arg9[%c71_84, %c0_85] : memref<672x4xbf16, #tpu.memory_space<vmem>>, vector<512x4xbf16>
    %c72_86 = arith.constant 72 : index
    %c0_87 = arith.constant 0 : index
    %83 = vector.load %arg9[%c72_86, %c0_87] : memref<672x4xbf16, #tpu.memory_space<vmem>>, vector<512x4xbf16>
    %c73_88 = arith.constant 73 : index
    %c0_89 = arith.constant 0 : index
    %84 = vector.load %arg9[%c73_88, %c0_89] : memref<672x4xbf16, #tpu.memory_space<vmem>>, vector<512x4xbf16>
    %c79_90 = arith.constant 79 : index
    %c0_91 = arith.constant 0 : index
    %85 = vector.load %arg9[%c79_90, %c0_91] : memref<672x4xbf16, #tpu.memory_space<vmem>>, vector<512x4xbf16>
    %c80_92 = arith.constant 80 : index
    %c0_93 = arith.constant 0 : index
    %86 = vector.load %arg9[%c80_92, %c0_93] : memref<672x4xbf16, #tpu.memory_space<vmem>>, vector<512x4xbf16>
    %c81_94 = arith.constant 81 : index
    %c0_95 = arith.constant 0 : index
    %87 = vector.load %arg9[%c81_94, %c0_95] : memref<672x4xbf16, #tpu.memory_space<vmem>>, vector<512x4xbf16>
    %c87_96 = arith.constant 87 : index
    %c0_97 = arith.constant 0 : index
    %88 = vector.load %arg9[%c87_96, %c0_97] : memref<672x4xbf16, #tpu.memory_space<vmem>>, vector<512x4xbf16>
    %c88_98 = arith.constant 88 : index
    %c0_99 = arith.constant 0 : index
    %89 = vector.load %arg9[%c88_98, %c0_99] : memref<672x4xbf16, #tpu.memory_space<vmem>>, vector<512x4xbf16>
    %c89_100 = arith.constant 89 : index
    %c0_101 = arith.constant 0 : index
    %90 = vector.load %arg9[%c89_100, %c0_101] : memref<672x4xbf16, #tpu.memory_space<vmem>>, vector<512x4xbf16>
    %c135_102 = arith.constant 135 : index
    %c0_103 = arith.constant 0 : index
    %91 = vector.load %arg9[%c135_102, %c0_103] : memref<672x4xbf16, #tpu.memory_space<vmem>>, vector<512x4xbf16>
    %c136_104 = arith.constant 136 : index
    %c0_105 = arith.constant 0 : index
    %92 = vector.load %arg9[%c136_104, %c0_105] : memref<672x4xbf16, #tpu.memory_space<vmem>>, vector<512x4xbf16>
    %c137_106 = arith.constant 137 : index
    %c0_107 = arith.constant 0 : index
    %93 = vector.load %arg9[%c137_106, %c0_107] : memref<672x4xbf16, #tpu.memory_space<vmem>>, vector<512x4xbf16>
    %c143_108 = arith.constant 143 : index
    %c0_109 = arith.constant 0 : index
    %94 = vector.load %arg9[%c143_108, %c0_109] : memref<672x4xbf16, #tpu.memory_space<vmem>>, vector<512x4xbf16>
    %c144_110 = arith.constant 144 : index
    %c0_111 = arith.constant 0 : index
    %95 = vector.load %arg9[%c144_110, %c0_111] : memref<672x4xbf16, #tpu.memory_space<vmem>>, vector<512x4xbf16>
    %c145_112 = arith.constant 145 : index
    %c0_113 = arith.constant 0 : index
    %96 = vector.load %arg9[%c145_112, %c0_113] : memref<672x4xbf16, #tpu.memory_space<vmem>>, vector<512x4xbf16>
    %c151_114 = arith.constant 151 : index
    %c0_115 = arith.constant 0 : index
    %97 = vector.load %arg9[%c151_114, %c0_115] : memref<672x4xbf16, #tpu.memory_space<vmem>>, vector<512x4xbf16>
    %c152_116 = arith.constant 152 : index
    %c0_117 = arith.constant 0 : index
    %98 = vector.load %arg9[%c152_116, %c0_117] : memref<672x4xbf16, #tpu.memory_space<vmem>>, vector<512x4xbf16>
    %c153_118 = arith.constant 153 : index
    %c0_119 = arith.constant 0 : index
    %99 = vector.load %arg9[%c153_118, %c0_119] : memref<672x4xbf16, #tpu.memory_space<vmem>>, vector<512x4xbf16>
    %100 = tpu.concatenate %73, %74, %75, %76, %77, %78, %79, %80, %81, %82, %83, %84, %85, %86, %87, %88 in 1 : vector<512x4xbf16>, vector<512x4xbf16>, vector<512x4xbf16>, vector<512x4xbf16>, vector<512x4xbf16>, vector<512x4xbf16>, vector<512x4xbf16>, vector<512x4xbf16>, vector<512x4xbf16>, vector<512x4xbf16>, vector<512x4xbf16>, vector<512x4xbf16>, vector<512x4xbf16>, vector<512x4xbf16>, vector<512x4xbf16>, vector<512x4xbf16> -> vector<512x64xbf16>
    %101 = tpu.concatenate %89, %90, %91, %92, %93, %94, %95, %96, %97, %98, %99 in 1 : vector<512x4xbf16>, vector<512x4xbf16>, vector<512x4xbf16>, vector<512x4xbf16>, vector<512x4xbf16>, vector<512x4xbf16>, vector<512x4xbf16>, vector<512x4xbf16>, vector<512x4xbf16>, vector<512x4xbf16>, vector<512x4xbf16> -> vector<512x44xbf16>
    %102 = tpu.concatenate %100, %101 in 1 : vector<512x64xbf16>, vector<512x44xbf16> -> vector<512x108xbf16>
    %c0_120 = arith.constant 0 : index
    %c0_121 = arith.constant 0 : index
    %103 = vector.load %arg4[%c0_120, %c0_121] : memref<108x4xbf16, #tpu.memory_space<vmem>>, vector<108x4xbf16>
    %cst_122 = arith.constant dense<0.000000e+00> : vector<512x4xf32>
    %104 = tpu.matmul %102, %103, %cst_122 {dimension_numbers = #tpu.dot_dimension_numbers<[1], [0], [0], [1], [0, 0, 1, 1], [], []>} : vector<512x108xbf16>, vector<108x4xbf16>, vector<512x4xf32> -> vector<512x4xf32>
    %c0_123 = arith.constant 0 : index
    %c0_124 = arith.constant 0 : index
    %105 = vector.load %arg5[%c0_123, %c0_124] : memref<1x4xf32, #tpu.memory_space<vmem>>, vector<1x4xf32>
    %106 = vector.broadcast %105 : vector<1x4xf32> to vector<512x4xf32>
    %107 = arith.addf %104, %106 : vector<512x4xf32>
    %cst_125 = arith.constant 2.000000e-01 : f32
    %108 = vector.broadcast %cst_125 : f32 to vector<512x4xf32>
    %109 = arith.mulf %108, %107 : vector<512x4xf32>
    %110 = arith.maximumf %109, %107 : vector<512x4xf32>
    %c0_126 = arith.constant 0 : index
    %c0_127 = arith.constant 0 : index
    %111 = vector.load %arg7[%c0_126, %c0_127] : memref<8x512xbf16, #tpu.memory_space<vmem>>, vector<8x512xbf16>
    %112 = arith.truncf %110 : vector<512x4xf32> to vector<512x4xbf16>
    %cst_128 = arith.constant dense<0.000000e+00> : vector<8x4xf32>
    %113 = tpu.matmul %111, %112, %cst_128 {dimension_numbers = #tpu.dot_dimension_numbers<[1], [0], [0], [1], [0, 0, 1, 1], [], []>} : vector<8x512xbf16>, vector<512x4xbf16>, vector<8x4xf32> -> vector<8x4xf32>
    %cst_129 = arith.constant 0.0370370373 : f32
    %114 = vector.broadcast %cst_129 : f32 to vector<8x4xf32>
    %115 = arith.mulf %113, %114 : vector<8x4xf32>
    %c0_130 = arith.constant 0 : index
    %c0_131 = arith.constant 0 : index
    %c0_132 = arith.constant 0 : index
    %116 = vector.load %arg8[%c0_130, %c0_131, %c0_132] : memref<1x8x4xf32, #tpu.memory_space<vmem>>, vector<1x8x4xf32>
    %117 = vector.shape_cast %116 : vector<1x8x4xf32> to vector<8x4xf32>
    %118 = vector.shape_cast %115 : vector<8x4xf32> to vector<1x8x4xf32>
    tpu.vector_store %arg8[%c0_130, %c0_131, %c0_132], %118 {strides = array<i32>} : memref<1x8x4xf32, #tpu.memory_space<vmem>>, vector<1x8x4xf32>,
    return
  }
  func.func @transform_0(%arg0: i32) -> (i32, i32, i32) {
    %c0_i32 = arith.constant 0 : i32
    %c0_i32_0 = arith.constant 0 : i32
    %c0_i32_1 = arith.constant 0 : i32
    return %arg0, %c0_i32, %c0_i32_0 : i32, i32, i32
  }
  func.func @transform_1(%arg0: i32) -> (i32, i32) {
    %c0_i32 = arith.constant 0 : i32
    %c0_i32_0 = arith.constant 0 : i32
    %c0_i32_1 = arith.constant 0 : i32
    return %c0_i32, %c0_i32_0 : i32, i32
  }
  func.func @transform_2(%arg0: i32) -> (i32, i32) {
    %c0_i32 = arith.constant 0 : i32
    %c0_i32_0 = arith.constant 0 : i32
    %c0_i32_1 = arith.constant 0 : i32
    return %c0_i32, %c0_i32_0 : i32, i32
  }
  func.func @transform_3(%arg0: i32) -> (i32, i32) {
    %c0_i32 = arith.constant 0 : i32
    %c0_i32_0 = arith.constant 0 : i32
    %c0_i32_1 = arith.constant 0 : i32
    return %c0_i32, %c0_i32_0 : i32, i32
  }
  func.func @transform_4(%arg0: i32) -> (i32, i32) {
    %c0_i32 = arith.constant 0 : i32
    %c0_i32_0 = arith.constant 0 : i32
    %c0_i32_1 = arith.constant 0 : i32
    return %c0_i32, %c0_i32_0 : i32, i32
  }
  func.func @transform_5(%arg0: i32) -> (i32, i32) {
    %c0_i32 = arith.constant 0 : i32
    %c0_i32_0 = arith.constant 0 : i32
    %c0_i32_1 = arith.constant 0 : i32
    return %c0_i32, %c0_i32_0 : i32, i32
  }
  func.func @transform_6(%arg0: i32) -> (i32, i32) {
    %c0_i32 = arith.constant 0 : i32
    %c0_i32_0 = arith.constant 0 : i32
    %c0_i32_1 = arith.constant 0 : i32
    return %c0_i32, %c0_i32_0 : i32, i32
  }
  func.func @transform_7(%arg0: i32) -> (i32, i32, i32) {
    %c0_i32 = arith.constant 0 : i32
    %c0_i32_0 = arith.constant 0 : i32
    %c0_i32_1 = arith.constant 0 : i32
    return %arg0, %c0_i32, %c0_i32_0 : i32, i32, i32
  }
}

</mosaic_0001>

<llo_original>
// kernel: tpu_custom_call.1
$region0: #{tpu_custom_call.1}
  #allocation0 [shape = 'u32[]', space=smem, size = 0x4, offset = 0x4, fixed_abs, tag = 'smem constant byte address 0x4 - core index']
  #allocation1 [shape = 'u32[144,128]{1,0:T(1,128)}', space=vmem, size = 0x12000, scoped, tag = 'internal scratch']
  #allocation2 [shape = 'bf16[672,4]{1,0:T(8,128)(2,1)}', space=vmem, size = 0x2a000, scoped, tag = 'scratch operand']
  %s0 = inlined_call_operand.vmem [shape: bf16[2,672,4], index: 0, kind: input, shape index: {}]
  %s1 = inlined_call_operand.vmem [shape: bf16[108,4], index: 1, kind: input, shape index: {}]
  %s2 = inlined_call_operand.vmem [shape: f32[1,4], index: 2, kind: input, shape index: {}]
  %s3 = inlined_call_operand.vmem [shape: bf16[108,4], index: 3, kind: input, shape index: {}]
  %s4 = inlined_call_operand.vmem [shape: f32[1,4], index: 4, kind: input, shape index: {}]
  %s5 = inlined_call_operand.vmem [shape: f32[512,1], index: 5, kind: input, shape index: {}]
  %s6 = inlined_call_operand.vmem [shape: bf16[8,512], index: 6, kind: input, shape index: {}]
  %s7 = inlined_call_operand.vmem [shape: f32[2,8,4], index: 7, kind: output, shape index: {}]
  %s8 = sld [smem:[#allocation0]]
  $region61: #{tpu_custom_call.1} parent=0
    _
  %s10 = ssub.s32 1, %s8
  %s11 = scalar_select 0, %s10, %s8
  loop: start=0, step=1, limit=4
  $region2: #{tpu_custom_call.1} parent=0 // loop_pre_header
    _
  $region3: #{tpu_custom_call.1} parent=0 // loop_header
    %s13 = sphi 0, %s17
    %p14 = scmp.ge.s32.totalorder %s13, 4
    %s23 = sphi 0, %s25
    %s26 = sphi 0, %s23
    %s27 = sphi 0, %s26
    %s43 = sphi 0, %s27
    %s47 = sphi 0, %s47
    %s49 = sphi 0, %s47
    %s50 = sphi 0, %s49
    %s64 = sphi 0, %s50
    %s68 = sphi 0, %s68
    %s70 = sphi 0, %s68
    %s71 = sphi 0, %s70
    %s85 = sphi 0, %s71
    %s89 = sphi 0, %s89
    %s91 = sphi 0, %s89
    %s92 = sphi 0, %s91
    %s106 = sphi 0, %s92
    %s110 = sphi 0, %s110
    %s112 = sphi 0, %s110
    %s113 = sphi 0, %s112
    %s127 = sphi 0, %s113
    %s131 = sphi 0, %s131
    %s133 = sphi 0, %s131
    %s134 = sphi 0, %s133
    %s148 = sphi 0, %s134
    %s152 = sphi 0, %s152
    %s154 = sphi 0, %s152
    %s155 = sphi 0, %s154
    %s169 = sphi 0, %s155
    %s175 = sphi 0, %s177
    %s178 = sphi 0, %s175
    %s179 = sphi 0, %s178
    %s195 = sphi 0, %s179
  $region4: #{tpu_custom_call.1} parent=0 // loop_header_branch
    %16 = sbr.rel (%p14) target = $region8
  $region5: #{tpu_custom_call.1} parent=0 // loop_body
    %s18 = ssub.s32 %s13, 1
    %s19 = ssub.s32 %s13, 2
    %s20 = sadd.s32 %s13, 1
    %s21 = ssub.s32 %s13, %s20
    %p22 = scmp.eq.s32.totalorder %s21, 0
    %s24 = sadd.s32 %s23, 1
    %s25 = scalar_select %p22, %s23, %s24
    %p28 = pneg %p22
    %p29 = scmp.eq.s32.totalorder %s13, 1
    %p30 = por %p28, %p29
    %p31 = scmp.ne.s32.totalorder %s23, %s26
    %p32 = scmp.eq.s32.totalorder %s13, 0
    %p33 = por %p31, %p32
    %p34 = scmp.ne.s32.totalorder %s23, %s26
    %p35 = scmp.eq.s32.totalorder %s18, 1
    %p36 = por %p34, %p35
    %p37 = scmp.ne.s32.totalorder %s26, %s27
    %p38 = scmp.eq.s32.totalorder %s18, 0
    %p39 = por %p37, %p38
    %p40 = scmp.ne.s32.totalorder %s26, %s27
    %p41 = scmp.eq.s32.totalorder %s19, 1
    %p42 = por %p40, %p41
    %p44 = scmp.ne.s32.totalorder %s27, %s43
    %p45 = scmp.eq.s32.totalorder %s19, 0
    %p46 = por %p44, %p45
    %s48 = sadd.s32 %s47, 1
    %p51 = scmp.eq.s32.totalorder %s13, 1
    %p52 = scmp.ne.s32.totalorder %s47, %s49
    %p53 = scmp.eq.s32.totalorder %s13, 0
    %p54 = por %p52, %p53
    %p55 = scmp.ne.s32.totalorder %s47, %s49
    %p56 = scmp.eq.s32.totalorder %s18, 1
    %p57 = por %p55, %p56
    %p58 = scmp.ne.s32.totalorder %s49, %s50
    %p59 = scmp.eq.s32.totalorder %s18, 0
    %p60 = por %p58, %p59
    %p61 = scmp.ne.s32.totalorder %s49, %s50
    %p62 = scmp.eq.s32.totalorder %s19, 1
    %p63 = por %p61, %p62
    %p65 = scmp.ne.s32.totalorder %s50, %s64
    %p66 = scmp.eq.s32.totalorder %s19, 0
    %p67 = por %p65, %p66
    %s69 = sadd.s32 %s68, 1
    %p72 = scmp.eq.s32.totalorder %s13, 1
    %p73 = scmp.ne.s32.totalorder %s68, %s70
    %p74 = scmp.eq.s32.totalorder %s13, 0
    %p75 = por %p73, %p74
    %p76 = scmp.ne.s32.totalorder %s68, %s70
    %p77 = scmp.eq.s32.totalorder %s18, 1
    %p78 = por %p76, %p77
    %p79 = scmp.ne.s32.totalorder %s70, %s71
    %p80 = scmp.eq.s32.totalorder %s18, 0
    %p81 = por %p79, %p80
    %p82 = scmp.ne.s32.totalorder %s70, %s71
    %p83 = scmp.eq.s32.totalorder %s19, 1
    %p84 = por %p82, %p83
    %p86 = scmp.ne.s32.totalorder %s71, %s85
    %p87 = scmp.eq.s32.totalorder %s19, 0
    %p88 = por %p86, %p87
    %s90 = sadd.s32 %s89, 1
    %p93 = scmp.eq.s32.totalorder %s13, 1
    %p94 = scmp.ne.s32.totalorder %s89, %s91
    %p95 = scmp.eq.s32.totalorder %s13, 0
    %p96 = por %p94, %p95
    %p97 = scmp.ne.s32.totalorder %s89, %s91
    %p98 = scmp.eq.s32.totalorder %s18, 1
    %p99 = por %p97, %p98
    %p100 = scmp.ne.s32.totalorder %s91, %s92
    %p101 = scmp.eq.s32.totalorder %s18, 0
    %p102 = por %p100, %p101
    %p103 = scmp.ne.s32.totalorder %s91, %s92
    %p104 = scmp.eq.s32.totalorder %s19, 1
    %p105 = por %p103, %p104
    %p107 = scmp.ne.s32.totalorder %s92, %s106
    %p108 = scmp.eq.s32.totalorder %s19, 0
    %p109 = por %p107, %p108
    %s111 = sadd.s32 %s110, 1
    %p114 = scmp.eq.s32.totalorder %s13, 1
    %p115 = scmp.ne.s32.totalorder %s110, %s112
    %p116 = scmp.eq.s32.totalorder %s13, 0
    %p117 = por %p115, %p116
    %p118 = scmp.ne.s32.totalorder %s110, %s112
    %p119 = scmp.eq.s32.totalorder %s18, 1
    %p120 = por %p118, %p119
    %p121 = scmp.ne.s32.totalorder %s112, %s113
    %p122 = scmp.eq.s32.totalorder %s18, 0
    %p123 = por %p121, %p122
    %p124 = scmp.ne.s32.totalorder %s112, %s113
    %p125 = scmp.eq.s32.totalorder %s19, 1
    %p126 = por %p124, %p125
    %p128 = scmp.ne.s32.totalorder %s113, %s127
    %p129 = scmp.eq.s32.totalorder %s19, 0
    %p130 = por %p128, %p129
    %s132 = sadd.s32 %s131, 1
    %p135 = scmp.eq.s32.totalorder %s13, 1
    %p136 = scmp.ne.s32.totalorder %s131, %s133
    %p137 = scmp.eq.s32.totalorder %s13, 0
    %p138 = por %p136, %p137
    %p139 = scmp.ne.s32.totalorder %s131, %s133
    %p140 = scmp.eq.s32.totalorder %s18, 1
    %p141 = por %p139, %p140
    %p142 = scmp.ne.s32.totalorder %s133, %s134
    %p143 = scmp.eq.s32.totalorder %s18, 0
    %p144 = por %p142, %p143
    %p145 = scmp.ne.s32.totalorder %s133, %s134
    %p146 = scmp.eq.s32.totalorder %s19, 1
    %p147 = por %p145, %p146
    %p149 = scmp.ne.s32.totalorder %s134, %s148
    %p150 = scmp.eq.s32.totalorder %s19, 0
    %p151 = por %p149, %p150
    %s153 = sadd.s32 %s152, 1
    %p156 = scmp.eq.s32.totalorder %s13, 1
    %p157 = scmp.ne.s32.totalorder %s152, %s154
    %p158 = scmp.eq.s32.totalorder %s13, 0
    %p159 = por %p157, %p158
    %p160 = scmp.ne.s32.totalorder %s152, %s154
    %p161 = scmp.eq.s32.totalorder %s18, 1
    %p162 = por %p160, %p161
    %p163 = scmp.ne.s32.totalorder %s154, %s155
    %p164 = scmp.eq.s32.totalorder %s18, 0
    %p165 = por %p163, %p164
    %p166 = scmp.ne.s32.totalorder %s154, %s155
    %p167 = scmp.eq.s32.totalorder %s19, 1
    %p168 = por %p166, %p167
    %p170 = scmp.ne.s32.totalorder %s155, %s169
    %p171 = scmp.eq.s32.totalorder %s19, 0
    %p172 = por %p170, %p171
    %s173 = ssub.s32 %s13, %s20
    %p174 = scmp.eq.s32.totalorder %s173, 0
    %s176 = sadd.s32 %s175, 1
    %s177 = scalar_select %p174, %s175, %s176
    %p180 = pneg %p174
    %p181 = scmp.eq.s32.totalorder %s13, 1
    %p182 = por %p180, %p181
    %p183 = scmp.ne.s32.totalorder %s175, %s178
    %p184 = scmp.eq.s32.totalorder %s13, 0
    %p185 = por %p183, %p184
    %p186 = scmp.ne.s32.totalorder %s175, %s178
    %p187 = scmp.eq.s32.totalorder %s18, 1
    %p188 = por %p186, %p187
    %p189 = scmp.ne.s32.totalorder %s178, %s179
    %p190 = scmp.eq.s32.totalorder %s18, 0
    %p191 = por %p189, %p190
    %p192 = scmp.ne.s32.totalorder %s178, %s179
    %p193 = scmp.eq.s32.totalorder %s19, 1
    %p194 = por %p192, %p193
    %p196 = scmp.ne.s32.totalorder %s179, %s195
    %p197 = scmp.eq.s32.totalorder %s19, 0
    %p198 = por %p196, %p197
    %p199 = scmp.le.s32.totalorder 1, %s13
    %p200 = scmp.lt.s32.totalorder %s13, 3
    %p201 = pnand %p199, %p200
    %p202 = pneg %p201
    // Predicated region
    $region9: #{tpu_custom_call.1} parent=5 // pred_check
      _
    $region10: #{tpu_custom_call.1} parent=5 // pred_check_branch
      %204 = sbr.rel (%p201) target = $region12
    $region11: #{tpu_custom_call.1} parent=5 // pred_region
      %s205 = ssub.s32 %s13, 1
      // Predicated region
      $region13: #{tpu_custom_call.1} parent=11 // pred_check
        %p206 = pneg %p60
      $region14: #{tpu_custom_call.1} parent=11 // pred_check_branch
        %208 = sbr.rel (%p206) target = $region16
      $region15: #{tpu_custom_call.1} parent=11 // pred_region
        _
      $region16: #{tpu_custom_call.1} parent=11 // pred_fallthru
        _
      // Predicated region
      $region17: #{tpu_custom_call.1} parent=11 // pred_check
        %p209 = pneg %p81
      $region18: #{tpu_custom_call.1} parent=11 // pred_check_branch
        %211 = sbr.rel (%p209) target = $region20
      $region19: #{tpu_custom_call.1} parent=11 // pred_region
        _
      $region20: #{tpu_custom_call.1} parent=11 // pred_fallthru
        _
      // Predicated region
      $region21: #{tpu_custom_call.1} parent=11 // pred_check
        %p212 = pneg %p102
      $region22: #{tpu_custom_call.1} parent=11 // pred_check_branch
        %214 = sbr.rel (%p212) target = $region24
      $region23: #{tpu_custom_call.1} parent=11 // pred_region
        _
      $region24: #{tpu_custom_call.1} parent=11 // pred_fallthru
        _
      // Predicated region
      $region25: #{tpu_custom_call.1} parent=11 // pred_check
        %p215 = pneg %p123
      $region26: #{tpu_custom_call.1} parent=11 // pred_check_branch
        %217 = sbr.rel (%p215) target = $region28
      $region27: #{tpu_custom_call.1} parent=11 // pred_region
        _
      $region28: #{tpu_custom_call.1} parent=11 // pred_fallthru
        _
      // Predicated region
      $region29: #{tpu_custom_call.1} parent=11 // pred_check
        %p218 = pneg %p144
      $region30: #{tpu_custom_call.1} parent=11 // pred_check_branch
        %220 = sbr.rel (%p218) target = $region32
      $region31: #{tpu_custom_call.1} parent=11 // pred_region
        _
      $region32: #{tpu_custom_call.1} parent=11 // pred_fallthru
        _
      // Predicated region
      $region33: #{tpu_custom_call.1} parent=11 // pred_check
        %p221 = pneg %p165
      $region34: #{tpu_custom_call.1} parent=11 // pred_check_branch
        %223 = sbr.rel (%p221) target = $region36
      $region35: #{tpu_custom_call.1} parent=11 // pred_region
        _
      $region36: #{tpu_custom_call.1} parent=11 // pred_fallthru
        _
    $region12: #{tpu_custom_call.1} parent=5 // pred_fallthru
      _
    %p224 = scmp.lt.s32.totalorder %s13, 2
    // Predicated region
    $region37: #{tpu_custom_call.1} parent=5 // pred_check
      %p225 = pneg %p224
    $region38: #{tpu_custom_call.1} parent=5 // pred_check_branch
      %227 = sbr.rel (%p225) target = $region40
    $region39: #{tpu_custom_call.1} parent=5 // pred_region
      // Predicated region
      $region41: #{tpu_custom_call.1} parent=39 // pred_check
        %p228 = pneg %p33
      $region42: #{tpu_custom_call.1} parent=39 // pred_check_branch
        %230 = sbr.rel (%p228) target = $region44
      $region43: #{tpu_custom_call.1} parent=39 // pred_region
        %p231 = scmp.lt.s32.totalorder %s13, 1
        %s232 = scalar_select %p231, %s13, 1
        %s233 = smul.addr %s232, 84
        %s234 = smul.addr %s233, 4
        %s235 = scalar_lea.vmem %s0, %s234
      $region44: #{tpu_custom_call.1} parent=39 // pred_fallthru
        _
    $region40: #{tpu_custom_call.1} parent=5 // pred_fallthru
      _
    %p236 = scmp.le.s32.totalorder 1, %s13
    %p237 = scmp.lt.s32.totalorder %s13, 3
    %p238 = pnand %p236, %p237
    %p239 = pneg %p238
    // Predicated region
    $region45: #{tpu_custom_call.1} parent=5 // pred_check
      _
    $region46: #{tpu_custom_call.1} parent=5 // pred_check_branch
      %241 = sbr.rel (%p238) target = $region48
    $region47: #{tpu_custom_call.1} parent=5 // pred_region
      %s242 = ssub.s32 %s13, 1
      %p243 = scmp.lt.s32.totalorder %s18, 1
      %s244 = scalar_select %p243, %s18, 1
      %s245 = smul.addr %s244, 84
      %s246 = smul.addr %s245, 4
      %s247 = scalar_lea.vmem %s0, %s246
      %p248 = pneg %p39
      %p249 = pneg %p36
      %p250 = pneg %p60
      %p251 = pneg %p57
      %p252 = pneg %p81
      %p253 = pneg %p78
      %p254 = pneg %p102
      %p255 = pneg %p99
      %p256 = pneg %p123
      %p257 = pneg %p120
      %p258 = pneg %p144
      %p259 = pneg %p141
      %p260 = pneg %p165
      %p261 = pneg %p162
      %p262 = pneg %p191
      %p263 = pneg %p188
      %p264 = scmp.lt.s32.totalorder %s18, 1
      %s265 = scalar_select %p264, %s18, 1
      %s266 = smul.addr %s265, 8
      %s267 = scalar_lea.vmem %s7, %s266
      %p268 = scmp.lt.s32.totalorder %s18, 1
      %s269 = scalar_select %p268, %s18, 1
      %s270 = smul.addr %s269, 84
      %s271 = smul.addr %s270, 4
      %s272 = scalar_lea.vmem %s0, %s271
      %p273 = scmp.lt.s32.totalorder %s18, 1
      %s274 = scalar_select %p273, %s18, 1
      %s275 = smul.addr %s274, 8
      %s276 = scalar_lea.vmem %s7, %s275
      %vm278 = vcmask 27648
      %279 = vst.msk [vmem:[#allocation2] sm:$0xf] %vm278, 0
      %280 = vst.msk [vmem:[#allocation2 + $0x4] sm:$0xf] %vm278, 0
      %281 = vst.msk [vmem:[#allocation2 + $0x8] sm:$0xf] %vm278, 0
      %282 = vst.msk [vmem:[#allocation2 + $0xc] sm:$0xf] %vm278, 0
      %283 = vst.msk [vmem:[#allocation2 + $0x10] sm:$0xf] %vm278, 0
      %284 = vst.msk [vmem:[#allocation2 + $0x14] sm:$0xf] %vm278, 0
      %285 = vst.msk [vmem:[#allocation2 + $0x18] sm:$0xf] %vm278, 0
      %286 = vst.msk [vmem:[#allocation2 + $0x1c] sm:$0xf] %vm278, 0
      %287 = vst.msk [vmem:[#allocation2 + $0x20] sm:$0xf] %vm278, 0
      %288 = vst.msk [vmem:[#allocation2 + $0x24] sm:$0xf] %vm278, 0
      %289 = vst.msk [vmem:[#allocation2 + $0x128] sm:$0xf] %vm278, 0
      %290 = vst.msk [vmem:[#allocation2 + $0x12c] sm:$0xf] %vm278, 0
      %291 = vst.msk [vmem:[#allocation2 + $0x130] sm:$0xf] %vm278, 0
      %292 = vst.msk [vmem:[#allocation2 + $0x134] sm:$0xf] %vm278, 0
      %293 = vst.msk [vmem:[#allocation2 + $0x138] sm:$0xf] %vm278, 0
      %294 = vst.msk [vmem:[#allocation2 + $0x13c] sm:$0xf] %vm278, 0
      %295 = vst.msk [vmem:[#allocation2 + $0x140] sm:$0xf] %vm278, 0
      %296 = vst.msk [vmem:[#allocation2 + $0x144] sm:$0xf] %vm278, 0
      %297 = vst.msk [vmem:[#allocation2 + $0x148] sm:$0xf] %vm278, 0
      %298 = vst.msk [vmem:[#allocation2 + $0x14c] sm:$0xf] %vm278, 0
      %v299 = vld [vmem:[%s272] sm:$0x8]
      %v300 = vld [vmem:[%s272 + $0x4] sm:$0xf]
      %v301 = vld [vmem:[%s272 + $0x8] sm:$0xf]
      %v302 = vld [vmem:[%s272 + $0xc] sm:$0xf]
      %v303 = vld [vmem:[%s272 + $0x10] sm:$0xf]
      %v304 = vld [vmem:[%s272 + $0x14] sm:$0xf]
      %v305 = vld [vmem:[%s272 + $0x18] sm:$0xf]
      %v306 = vld [vmem:[%s272 + $0x1c] sm:$0xf]
      %v307 = vld [vmem:[%s272 + $0x20] sm:$0xf]
      %v308 = vld [vmem:[%s272 + $0x24] sm:$0xf]
      %v309 = vld [vmem:[%s272 + $0x28] sm:$0xf]
      %v310 = vld [vmem:[%s272 + $0x2c] sm:$0xf]
      %v311 = vld [vmem:[%s272 + $0x30] sm:$0xf]
      %v312 = vld [vmem:[%s272 + $0x34] sm:$0xf]
      %v313 = vld [vmem:[%s272 + $0x38] sm:$0xf]
      %v314 = vld [vmem:[%s272 + $0x3c] sm:$0xf]
      %v315 = vld [vmem:[%s272 + $0x40] sm:$0xf]
      %v316 = vld [vmem:[%s272 + $0x44] sm:$0xf]
      %v317 = vld [vmem:[%s272 + $0x48] sm:$0xf]
      %v318 = vld [vmem:[%s272 + $0x4c] sm:$0xf]
      %v319 = vld [vmem:[%s272 + $0x50] sm:$0xf]
      %v320 = vld [vmem:[%s272 + $0x54] sm:$0xf]
      %v321 = vld [vmem:[%s272 + $0x58] sm:$0xf]
      %v322 = vld [vmem:[%s272 + $0x5c] sm:$0xf]
      %v323 = vld [vmem:[%s272 + $0x60] sm:$0xf]
      %v324 = vld [vmem:[%s272 + $0x64] sm:$0xf]
      %v325 = vld [vmem:[%s272 + $0x68] sm:$0xf]
      %v326 = vld [vmem:[%s272 + $0x6c] sm:$0xf]
      %v327 = vld [vmem:[%s272 + $0x70] sm:$0xf]
      %v328 = vld [vmem:[%s272 + $0x74] sm:$0xf]
      %v329 = vld [vmem:[%s272 + $0x78] sm:$0xf]
      %v330 = vld [vmem:[%s272 + $0x7c] sm:$0xf]
      %v331 = vld [vmem:[%s272 + $0x80] sm:$0xf]
      %v332 = vld [vmem:[%s272 + $0x84] sm:$0xf]
      %v333 = vld [vmem:[%s272 + $0x88] sm:$0xf]
      %v334 = vld [vmem:[%s272 + $0x8c] sm:$0xf]
      %v335 = vld [vmem:[%s272 + $0x90] sm:$0xf]
      %v336 = vld [vmem:[%s272 + $0x94] sm:$0xf]
      %v337 = vld [vmem:[%s272 + $0x98] sm:$0xf]
      %v338 = vld [vmem:[%s272 + $0x9c] sm:$0xf]
      %v339 = vld [vmem:[%s272 + $0xa0] sm:$0xf]
      %v340 = vld [vmem:[%s272 + $0xa4] sm:$0xf]
      %v341 = vld [vmem:[%s272 + $0xa8] sm:$0xf]
      %v342 = vld [vmem:[%s272 + $0xac] sm:$0xf]
      %v343 = vld [vmem:[%s272 + $0xb0] sm:$0xf]
      %v344 = vld [vmem:[%s272 + $0xb4] sm:$0xf]
      %v345 = vld [vmem:[%s272 + $0xb8] sm:$0xf]
      %v346 = vld [vmem:[%s272 + $0xbc] sm:$0xf]
      %v347 = vld [vmem:[%s272 + $0xc0] sm:$0xf]
      %v348 = vld [vmem:[%s272 + $0xc4] sm:$0xf]
      %v349 = vld [vmem:[%s272 + $0xc8] sm:$0xf]
      %v350 = vld [vmem:[%s272 + $0xcc] sm:$0xf]
      %v351 = vld [vmem:[%s272 + $0xd0] sm:$0xf]
      %v352 = vld [vmem:[%s272 + $0xd4] sm:$0xf]
      %v353 = vld [vmem:[%s272 + $0xd8] sm:$0xf]
      %v354 = vld [vmem:[%s272 + $0xdc] sm:$0xf]
      %v355 = vld [vmem:[%s272 + $0xe0] sm:$0xf]
      %v356 = vld [vmem:[%s272 + $0xe4] sm:$0xf]
      %v357 = vld [vmem:[%s272 + $0xe8] sm:$0xf]
      %v358 = vld [vmem:[%s272 + $0xec] sm:$0xf]
      %v359 = vld [vmem:[%s272 + $0xf0] sm:$0xf]
      %v360 = vld [vmem:[%s272 + $0xf4] sm:$0xf]
      %v361 = vld [vmem:[%s272 + $0xf8] sm:$0xf]
      %v362 = vld [vmem:[%s272 + $0xfc] sm:$0xf]
      %v363 = vld [vmem:[%s272 + $0x100] sm:$0xf]
      %v364 = vld [vmem:[%s272 + $0x104] sm:$0x1]
      %v365 = vld [vmem:[%s272 + $0x4] sm:$0x8]
      %v366 = vld [vmem:[%s272 + $0x104] sm:$0xf]
      %v367 = vld [vmem:[%s272 + $0x108] sm:$0x1]
      %v368 = vld [vmem:[%s272 + $0x8] sm:$0x8]
      %v369 = vld [vmem:[%s272 + $0x108] sm:$0xf]
      %v370 = vld [vmem:[%s272 + $0x10c] sm:$0x1]
      %v371 = vld [vmem:[%s272 + $0x20] sm:$0x8]
      %v372 = vld [vmem:[%s272 + $0x10c] sm:$0xf]
      %v373 = vld [vmem:[%s272 + $0x110] sm:$0xf]
      %v374 = vld [vmem:[%s272 + $0x114] sm:$0xf]
      %v375 = vld [vmem:[%s272 + $0x118] sm:$0xf]
      %v376 = vld [vmem:[%s272 + $0x11c] sm:$0xf]
      %v377 = vld [vmem:[%s272 + $0x120] sm:$0xf]
      %v378 = vld [vmem:[%s272 + $0x124] sm:$0x1]
      %v379 = vld [vmem:[%s272 + $0x24] sm:$0x8]
      %v380 = vld [vmem:[%s272 + $0x124] sm:$0xf]
      %v381 = vld [vmem:[%s272 + $0x128] sm:$0x1]
      %v382 = vld [vmem:[%s272 + $0x28] sm:$0x8]
      %v383 = vld [vmem:[%s272 + $0x128] sm:$0xf]
      %v384 = vld [vmem:[%s272 + $0x12c] sm:$0x1]
      %v385 = vld [vmem:[%s272 + $0x40] sm:$0x8]
      %v386 = vld [vmem:[%s272 + $0x12c] sm:$0xf]
      %v387 = vld [vmem:[%s272 + $0x130] sm:$0xf]
      %v388 = vld [vmem:[%s272 + $0x134] sm:$0xf]
      %v389 = vld [vmem:[%s272 + $0x138] sm:$0xf]
      %v390 = vld [vmem:[%s272 + $0x13c] sm:$0xf]
      %v391 = vld [vmem:[%s272 + $0x140] sm:$0xf]
      %v392 = vld [vmem:[%s272 + $0x144] sm:$0x1]
      %v393 = vld [vmem:[%s272 + $0x44] sm:$0x8]
      %v394 = vld [vmem:[%s272 + $0x144] sm:$0xf]
      %v395 = vld [vmem:[%s272 + $0x148] sm:$0x1]
      %v396 = vld [vmem:[%s272 + $0x48] sm:$0x8]
      %v397 = vld [vmem:[%s272 + $0x148] sm:$0xf]
      %v398 = vld [vmem:[%s272 + $0x14c] sm:$0x1]
      %v464 = vunpack.c.l.b16 %v299
      %v465 = vunpack.c.l.b16 %v300
      %v466 = vunpack.c.l.b16 %v301
      %v467 = vunpack.c.l.b16 %v302
      %v468 = vunpack.c.l.b16 %v303
      %v469 = vunpack.c.l.b16 %v304
      %v470 = vunpack.c.l.b16 %v305
      %v471 = vunpack.c.l.b16 %v306
      %v472 = vunpack.c.l.b16 %v307
      %v473 = vunpack.c.l.b16 %v308
      %v474 = vunpack.c.l.b16 %v309
      %v475 = vunpack.c.l.b16 %v310
      %v476 = vunpack.c.l.b16 %v311
      %v477 = vunpack.c.l.b16 %v312
      %v478 = vunpack.c.l.b16 %v313
      %v479 = vunpack.c.l.b16 %v314
      %v480 = vunpack.c.l.b16 %v315
      %v481 = vunpack.c.l.b16 %v316
      %v482 = vunpack.c.l.b16 %v317
      %v483 = vunpack.c.l.b16 %v318
      %v484 = vunpack.c.l.b16 %v319
      %v485 = vunpack.c.l.b16 %v320
      %v486 = vunpack.c.l.b16 %v321
      %v487 = vunpack.c.l.b16 %v322
      %v488 = vunpack.c.l.b16 %v323
      %v489 = vunpack.c.l.b16 %v324
      %v490 = vunpack.c.l.b16 %v325
      %v491 = vunpack.c.l.b16 %v326
      %v492 = vunpack.c.l.b16 %v327
      %v493 = vunpack.c.l.b16 %v328
      %v494 = vunpack.c.l.b16 %v329
      %v495 = vunpack.c.l.b16 %v330
      %v496 = vunpack.c.l.b16 %v331
      %v497 = vunpack.c.l.b16 %v332
      %v498 = vunpack.c.l.b16 %v333
      %v499 = vunpack.c.l.b16 %v334
      %v500 = vunpack.c.l.b16 %v335
      %v501 = vunpack.c.l.b16 %v336
      %v502 = vunpack.c.l.b16 %v337
      %v503 = vunpack.c.l.b16 %v338
      %v504 = vunpack.c.l.b16 %v339
      %v505 = vunpack.c.l.b16 %v340
      %v506 = vunpack.c.l.b16 %v341
      %v507 = vunpack.c.l.b16 %v342
      %v508 = vunpack.c.l.b16 %v343
      %v509 = vunpack.c.l.b16 %v344
      %v510 = vunpack.c.l.b16 %v345
      %v511 = vunpack.c.l.b16 %v346
      %v512 = vunpack.c.l.b16 %v347
      %v513 = vunpack.c.l.b16 %v348
      %v514 = vunpack.c.l.b16 %v349
      %v515 = vunpack.c.l.b16 %v350
      %v516 = vunpack.c.l.b16 %v351
      %v517 = vunpack.c.l.b16 %v352
      %v518 = vunpack.c.l.b16 %v353
      %v519 = vunpack.c.l.b16 %v354
      %v520 = vunpack.c.l.b16 %v355
      %v521 = vunpack.c.l.b16 %v356
      %v522 = vunpack.c.l.b16 %v357
      %v523 = vunpack.c.l.b16 %v358
      %v524 = vunpack.c.l.b16 %v359
      %v525 = vunpack.c.l.b16 %v360
      %v526 = vunpack.c.l.b16 %v361
      %v527 = vunpack.c.l.b16 %v362
      %v528 = vunpack.c.l.b16 %v363
      %v529 = vpack.c.b16 %v465, %v464
      %v530 = vpack.c.b16 %v467, %v466
      %v531 = vpack.c.b16 %v469, %v468
      %v532 = vpack.c.b16 %v471, %v470
      %v533 = vpack.c.b16 %v473, %v472
      %v534 = vpack.c.b16 %v475, %v474
      %v535 = vpack.c.b16 %v477, %v476
      %v536 = vpack.c.b16 %v479, %v478
      %v537 = vpack.c.b16 %v481, %v480
      %v538 = vpack.c.b16 %v483, %v482
      %v539 = vpack.c.b16 %v485, %v484
      %v540 = vpack.c.b16 %v487, %v486
      %v541 = vpack.c.b16 %v489, %v488
      %v542 = vpack.c.b16 %v491, %v490
      %v543 = vpack.c.b16 %v493, %v492
      %v544 = vpack.c.b16 %v495, %v494
      %v545 = vpack.c.b16 %v497, %v496
      %v546 = vpack.c.b16 %v499, %v498
      %v547 = vpack.c.b16 %v501, %v500
      %v548 = vpack.c.b16 %v503, %v502
      %v549 = vpack.c.b16 %v505, %v504
      %v550 = vpack.c.b16 %v507, %v506
      %v551 = vpack.c.b16 %v509, %v508
      %v552 = vpack.c.b16 %v511, %v510
      %v553 = vpack.c.b16 %v513, %v512
      %v554 = vpack.c.b16 %v515, %v514
      %v555 = vpack.c.b16 %v517, %v516
      %v556 = vpack.c.b16 %v519, %v518
      %v557 = vpack.c.b16 %v521, %v520
      %v558 = vpack.c.b16 %v523, %v522
      %v559 = vpack.c.b16 %v525, %v524
      %v560 = vpack.c.b16 %v527, %v526
      %v561 = vpack.c.b16 %v528, %v528
      %v562 = vpack.c.b16 %v466, %v465
      %v563 = vpack.c.b16 %v468, %v467
      %v564 = vpack.c.b16 %v470, %v469
      %v565 = vpack.c.b16 %v472, %v471
      %v566 = vpack.c.b16 %v474, %v473
      %v567 = vpack.c.b16 %v476, %v475
      %v568 = vpack.c.b16 %v478, %v477
      %v569 = vpack.c.b16 %v480, %v479
      %v570 = vpack.c.b16 %v482, %v481
      %v571 = vpack.c.b16 %v484, %v483
      %v572 = vpack.c.b16 %v486, %v485
      %v573 = vpack.c.b16 %v488, %v487
      %v574 = vpack.c.b16 %v490, %v489
      %v575 = vpack.c.b16 %v492, %v491
      %v576 = vpack.c.b16 %v494, %v493
      %v577 = vpack.c.b16 %v496, %v495
      %v578 = vpack.c.b16 %v498, %v497
      %v579 = vpack.c.b16 %v500, %v499
      %v580 = vpack.c.b16 %v502, %v501
      %v581 = vpack.c.b16 %v504, %v503
      %v582 = vpack.c.b16 %v506, %v505
      %v583 = vpack.c.b16 %v508, %v507
      %v584 = vpack.c.b16 %v510, %v509
      %v585 = vpack.c.b16 %v512, %v511
      %v586 = vpack.c.b16 %v514, %v513
      %v587 = vpack.c.b16 %v516, %v515
      %v588 = vpack.c.b16 %v518, %v517
      %v589 = vpack.c.b16 %v520, %v519
      %v590 = vpack.c.b16 %v522, %v521
      %v591 = vpack.c.b16 %v524, %v523
      %v592 = vpack.c.b16 %v526, %v525
      %v593 = vpack.c.b16 %v528, %v527
      %vm594 = vsmask.f32 3328
      %v596 = vshrl.u32 %v562, 16
      %v598 = vrot.slane %v596, 4
      %v599 = vshll.u32 %v562, 16
      %v601 = vrot.slane %v599, 5
      %v602 = vor.u32 %v598, %v601
      %v604 = vshrl.u32 %v563, 16
      %v606 = vrot.slane %v604, 4
      %v607 = vshll.u32 %v563, 16
      %v609 = vrot.slane %v607, 5
      %v610 = vor.u32 %v606, %v609
      %v611 = vsel %vm594, %v602, %v610
      %v613 = vshrl.u32 %v564, 16
      %v615 = vrot.slane %v613, 4
      %v616 = vshll.u32 %v564, 16
      %v618 = vrot.slane %v616, 5
      %v619 = vor.u32 %v615, %v618
      %v620 = vsel %vm594, %v610, %v619
      %v622 = vshrl.u32 %v565, 16
      %v624 = vrot.slane %v622, 4
      %v625 = vshll.u32 %v565, 16
      %v627 = vrot.slane %v625, 5
      %v628 = vor.u32 %v624, %v627
      %v629 = vsel %vm594, %v619, %v628
      %v631 = vshrl.u32 %v566, 16
      %v633 = vrot.slane %v631, 4
      %v634 = vshll.u32 %v566, 16
      %v636 = vrot.slane %v634, 5
      %v637 = vor.u32 %v633, %v636
      %v638 = vsel %vm594, %v628, %v637
      %v640 = vshrl.u32 %v567, 16
      %v642 = vrot.slane %v640, 4
      %v643 = vshll.u32 %v567, 16
      %v645 = vrot.slane %v643, 5
      %v646 = vor.u32 %v642, %v645
      %v647 = vsel %vm594, %v637, %v646
      %v649 = vshrl.u32 %v568, 16
      %v651 = vrot.slane %v649, 4
      %v652 = vshll.u32 %v568, 16
      %v654 = vrot.slane %v652, 5
      %v655 = vor.u32 %v651, %v654
      %v656 = vsel %vm594, %v646, %v655
      %v658 = vshrl.u32 %v569, 16
      %v660 = vrot.slane %v658, 4
      %v661 = vshll.u32 %v569, 16
      %v663 = vrot.slane %v661, 5
      %v664 = vor.u32 %v660, %v663
      %v665 = vsel %vm594, %v655, %v664
      %v667 = vshrl.u32 %v570, 16
      %v669 = vrot.slane %v667, 4
      %v670 = vshll.u32 %v570, 16
      %v672 = vrot.slane %v670, 5
      %v673 = vor.u32 %v669, %v672
      %v674 = vsel %vm594, %v664, %v673
      %v676 = vshrl.u32 %v571, 16
      %v678 = vrot.slane %v676, 4
      %v679 = vshll.u32 %v571, 16
      %v681 = vrot.slane %v679, 5
      %v682 = vor.u32 %v678, %v681
      %v683 = vsel %vm594, %v673, %v682
      %v685 = vshrl.u32 %v572, 16
      %v687 = vrot.slane %v685, 4
      %v688 = vshll.u32 %v572, 16
      %v690 = vrot.slane %v688, 5
      %v691 = vor.u32 %v687, %v690
      %v692 = vsel %vm594, %v682, %v691
      %v694 = vshrl.u32 %v573, 16
      %v696 = vrot.slane %v694, 4
      %v697 = vshll.u32 %v573, 16
      %v699 = vrot.slane %v697, 5
      %v700 = vor.u32 %v696, %v699
      %v701 = vsel %vm594, %v691, %v700
      %v703 = vshrl.u32 %v574, 16
      %v705 = vrot.slane %v703, 4
      %v706 = vshll.u32 %v574, 16
      %v708 = vrot.slane %v706, 5
      %v709 = vor.u32 %v705, %v708
      %v710 = vsel %vm594, %v700, %v709
      %v712 = vshrl.u32 %v575, 16
      %v714 = vrot.slane %v712, 4
      %v715 = vshll.u32 %v575, 16
      %v717 = vrot.slane %v715, 5
      %v718 = vor.u32 %v714, %v717
      %v719 = vsel %vm594, %v709, %v718
      %v721 = vshrl.u32 %v576, 16
      %v723 = vrot.slane %v721, 4
      %v724 = vshll.u32 %v576, 16
      %v726 = vrot.slane %v724, 5
      %v727 = vor.u32 %v723, %v726
      %v728 = vsel %vm594, %v718, %v727
      %v730 = vshrl.u32 %v577, 16
      %v732 = vrot.slane %v730, 4
      %v733 = vshll.u32 %v577, 16
      %v735 = vrot.slane %v733, 5
      %v736 = vor.u32 %v732, %v735
      %v737 = vsel %vm594, %v727, %v736
      %v739 = vshrl.u32 %v578, 16
      %v741 = vrot.slane %v739, 4
      %v742 = vshll.u32 %v578, 16
      %v744 = vrot.slane %v742, 5
      %v745 = vor.u32 %v741, %v744
      %v746 = vsel %vm594, %v736, %v745
      %v748 = vshrl.u32 %v579, 16
      %v750 = vrot.slane %v748, 4
      %v751 = vshll.u32 %v579, 16
      %v753 = vrot.slane %v751, 5
      %v754 = vor.u32 %v750, %v753
      %v755 = vsel %vm594, %v745, %v754
      %v757 = vshrl.u32 %v580, 16
      %v759 = vrot.slane %v757, 4
      %v760 = vshll.u32 %v580, 16
      %v762 = vrot.slane %v760, 5
      %v763 = vor.u32 %v759, %v762
      %v764 = vsel %vm594, %v754, %v763
      %v766 = vshrl.u32 %v581, 16
      %v768 = vrot.slane %v766, 4
      %v769 = vshll.u32 %v581, 16
      %v771 = vrot.slane %v769, 5
      %v772 = vor.u32 %v768, %v771
      %v773 = vsel %vm594, %v763, %v772
      %v775 = vshrl.u32 %v582, 16
      %v777 = vrot.slane %v775, 4
      %v778 = vshll.u32 %v582, 16
      %v780 = vrot.slane %v778, 5
      %v781 = vor.u32 %v777, %v780
      %v782 = vsel %vm594, %v772, %v781
      %v784 = vshrl.u32 %v583, 16
      %v786 = vrot.slane %v784, 4
      %v787 = vshll.u32 %v583, 16
      %v789 = vrot.slane %v787, 5
      %v790 = vor.u32 %v786, %v789
      %v791 = vsel %vm594, %v781, %v790
      %v793 = vshrl.u32 %v584, 16
      %v795 = vrot.slane %v793, 4
      %v796 = vshll.u32 %v584, 16
      %v798 = vrot.slane %v796, 5
      %v799 = vor.u32 %v795, %v798
      %v800 = vsel %vm594, %v790, %v799
      %v802 = vshrl.u32 %v585, 16
      %v804 = vrot.slane %v802, 4
      %v805 = vshll.u32 %v585, 16
      %v807 = vrot.slane %v805, 5
      %v808 = vor.u32 %v804, %v807
      %v809 = vsel %vm594, %v799, %v808
      %v811 = vshrl.u32 %v586, 16
      %v813 = vrot.slane %v811, 4
      %v814 = vshll.u32 %v586, 16
      %v816 = vrot.slane %v814, 5
      %v817 = vor.u32 %v813, %v816
      %v818 = vsel %vm594, %v808, %v817
      %v820 = vshrl.u32 %v587, 16
      %v822 = vrot.slane %v820, 4
      %v823 = vshll.u32 %v587, 16
      %v825 = vrot.slane %v823, 5
      %v826 = vor.u32 %v822, %v825
      %v827 = vsel %vm594, %v817, %v826
      %v829 = vshrl.u32 %v588, 16
      %v831 = vrot.slane %v829, 4
      %v832 = vshll.u32 %v588, 16
      %v834 = vrot.slane %v832, 5
      %v835 = vor.u32 %v831, %v834
      %v836 = vsel %vm594, %v826, %v835
      %v838 = vshrl.u32 %v589, 16
      %v840 = vrot.slane %v838, 4
      %v841 = vshll.u32 %v589, 16
      %v843 = vrot.slane %v841, 5
      %v844 = vor.u32 %v840, %v843
      %v845 = vsel %vm594, %v835, %v844
      %v847 = vshrl.u32 %v590, 16
      %v849 = vrot.slane %v847, 4
      %v850 = vshll.u32 %v590, 16
      %v852 = vrot.slane %v850, 5
      %v853 = vor.u32 %v849, %v852
      %v854 = vsel %vm594, %v844, %v853
      %v856 = vshrl.u32 %v591, 16
      %v858 = vrot.slane %v856, 4
      %v859 = vshll.u32 %v591, 16
      %v861 = vrot.slane %v859, 5
      %v862 = vor.u32 %v858, %v861
      %v863 = vsel %vm594, %v853, %v862
      %v865 = vshrl.u32 %v592, 16
      %v867 = vrot.slane %v865, 4
      %v868 = vshll.u32 %v592, 16
      %v870 = vrot.slane %v868, 5
      %v871 = vor.u32 %v867, %v870
      %v872 = vsel %vm594, %v862, %v871
      %v874 = vshrl.u32 %v593, 16
      %v876 = vrot.slane %v874, 4
      %v877 = vshll.u32 %v593, 16
      %v879 = vrot.slane %v877, 5
      %v880 = vor.u32 %v876, %v879
      %v881 = vsel %vm594, %v871, %v880
      %882 = vrot.lane.b32.xlu0 %v602, 4
      %v883 = vpop.permute.xlu0 %882
      %884 = vrot.lane.b32.xlu0 %v611, 4
      %v885 = vpop.permute.xlu0 %884
      %886 = vrot.lane.b32.xlu0 %v620, 4
      %v887 = vpop.permute.xlu0 %886
      %888 = vrot.lane.b32.xlu0 %v629, 4
      %v889 = vpop.permute.xlu0 %888
      %890 = vrot.lane.b32.xlu0 %v638, 4
      %v891 = vpop.permute.xlu0 %890
      %892 = vrot.lane.b32.xlu0 %v647, 4
      %v893 = vpop.permute.xlu0 %892
      %894 = vrot.lane.b32.xlu0 %v656, 4
      %v895 = vpop.permute.xlu0 %894
      %896 = vrot.lane.b32.xlu0 %v665, 4
      %v897 = vpop.permute.xlu0 %896
      %898 = vrot.lane.b32.xlu0 %v674, 4
      %v899 = vpop.permute.xlu0 %898
      %900 = vrot.lane.b32.xlu0 %v683, 4
      %v901 = vpop.permute.xlu0 %900
      %902 = vrot.lane.b32.xlu0 %v692, 4
      %v903 = vpop.permute.xlu0 %902
      %904 = vrot.lane.b32.xlu0 %v701, 4
      %v905 = vpop.permute.xlu0 %904
      %906 = vrot.lane.b32.xlu0 %v710, 4
      %v907 = vpop.permute.xlu0 %906
      %908 = vrot.lane.b32.xlu0 %v719, 4
      %v909 = vpop.permute.xlu0 %908
      %910 = vrot.lane.b32.xlu0 %v728, 4
      %v911 = vpop.permute.xlu0 %910
      %912 = vrot.lane.b32.xlu0 %v737, 4
      %v913 = vpop.permute.xlu0 %912
      %914 = vrot.lane.b32.xlu0 %v746, 4
      %v915 = vpop.permute.xlu0 %914
      %916 = vrot.lane.b32.xlu0 %v755, 4
      %v917 = vpop.permute.xlu0 %916
      %918 = vrot.lane.b32.xlu0 %v764, 4
      %v919 = vpop.permute.xlu0 %918
      %920 = vrot.lane.b32.xlu0 %v773, 4
      %v921 = vpop.permute.xlu0 %920
      %922 = vrot.lane.b32.xlu0 %v782, 4
      %v923 = vpop.permute.xlu0 %922
      %924 = vrot.lane.b32.xlu0 %v791, 4
      %v925 = vpop.permute.xlu0 %924
      %926 = vrot.lane.b32.xlu0 %v800, 4
      %v927 = vpop.permute.xlu0 %926
      %928 = vrot.lane.b32.xlu0 %v809, 4
      %v929 = vpop.permute.xlu0 %928
      %930 = vrot.lane.b32.xlu0 %v818, 4
      %v931 = vpop.permute.xlu0 %930
      %932 = vrot.lane.b32.xlu0 %v827, 4
      %v933 = vpop.permute.xlu0 %932
      %934 = vrot.lane.b32.xlu0 %v836, 4
      %v935 = vpop.permute.xlu0 %934
      %936 = vrot.lane.b32.xlu0 %v845, 4
      %v937 = vpop.permute.xlu0 %936
      %938 = vrot.lane.b32.xlu0 %v854, 4
      %v939 = vpop.permute.xlu0 %938
      %940 = vrot.lane.b32.xlu0 %v863, 4
      %v941 = vpop.permute.xlu0 %940
      %942 = vrot.lane.b32.xlu0 %v872, 4
      %v943 = vpop.permute.xlu0 %942
      %944 = vrot.lane.b32.xlu0 %v881, 4
      %v945 = vpop.permute.xlu0 %944
      %946 = vrot.lane.b32.xlu0 %v880, 4
      %v947 = vpop.permute.xlu0 %946
      %v949 = vunpack.c.l.b16 %v364
      %v950 = vpack.c.b16 %v949, %v949
      %vm951 = vcmask 1042432
      %v952 = vrot.slane %v562, 5
      %v953 = vrot.slane %v563, 5
      %v954 = vsel %vm951, %v952, %v953
      %v955 = vrot.slane %v564, 5
      %v956 = vsel %vm951, %v953, %v955
      %v957 = vrot.slane %v565, 5
      %v958 = vsel %vm951, %v955, %v957
      %v959 = vrot.slane %v566, 5
      %v960 = vsel %vm951, %v957, %v959
      %v961 = vrot.slane %v567, 5
      %v962 = vsel %vm951, %v959, %v961
      %v963 = vrot.slane %v568, 5
      %v964 = vsel %vm951, %v961, %v963
      %v965 = vrot.slane %v569, 5
      %v966 = vsel %vm951, %v963, %v965
      %v967 = vrot.slane %v570, 5
      %v968 = vsel %vm951, %v965, %v967
      %v969 = vrot.slane %v571, 5
      %v970 = vsel %vm951, %v967, %v969
      %v971 = vrot.slane %v572, 5
      %v972 = vsel %vm951, %v969, %v971
      %v973 = vrot.slane %v573, 5
      %v974 = vsel %vm951, %v971, %v973
      %v975 = vrot.slane %v574, 5
      %v976 = vsel %vm951, %v973, %v975
      %v977 = vrot.slane %v575, 5
      %v978 = vsel %vm951, %v975, %v977
      %v979 = vrot.slane %v576, 5
      %v980 = vsel %vm951, %v977, %v979
      %v981 = vrot.slane %v577, 5
      %v982 = vsel %vm951, %v979, %v981
      %v983 = vrot.slane %v578, 5
      %v984 = vsel %vm951, %v981, %v983
      %v985 = vrot.slane %v579, 5
      %v986 = vsel %vm951, %v983, %v985
      %v987 = vrot.slane %v580, 5
      %v988 = vsel %vm951, %v985, %v987
      %v989 = vrot.slane %v581, 5
      %v990 = vsel %vm951, %v987, %v989
      %v991 = vrot.slane %v582, 5
      %v992 = vsel %vm951, %v989, %v991
      %v993 = vrot.slane %v583, 5
      %v994 = vsel %vm951, %v991, %v993
      %v995 = vrot.slane %v584, 5
      %v996 = vsel %vm951, %v993, %v995
      %v997 = vrot.slane %v585, 5
      %v998 = vsel %vm951, %v995, %v997
      %v999 = vrot.slane %v586, 5
      %v1000 = vsel %vm951, %v997, %v999
      %v1001 = vrot.slane %v587, 5
      %v1002 = vsel %vm951, %v999, %v1001
      %v1003 = vrot.slane %v588, 5
      %v1004 = vsel %vm951, %v1001, %v1003
      %v1005 = vrot.slane %v589, 5
      %v1006 = vsel %vm951, %v1003, %v1005
      %v1007 = vrot.slane %v590, 5
      %v1008 = vsel %vm951, %v1005, %v1007
      %v1009 = vrot.slane %v591, 5
      %v1010 = vsel %vm951, %v1007, %v1009
      %v1011 = vrot.slane %v592, 5
      %v1012 = vsel %vm951, %v1009, %v1011
      %v1013 = vrot.slane %v593, 5
      %v1014 = vsel %vm951, %v1011, %v1013
      %v1015 = vrot.slane %v950, 5
      %v1016 = vsel %vm951, %v1013, %v1015
      %1017 = vrot.lane.b32.xlu0 %v952, 8
      %v1018 = vpop.permute.xlu0 %1017
      %1019 = vrot.lane.b32.xlu0 %v954, 8
      %v1020 = vpop.permute.xlu0 %1019
      %1021 = vrot.lane.b32.xlu0 %v956, 8
      %v1022 = vpop.permute.xlu0 %1021
      %1023 = vrot.lane.b32.xlu0 %v958, 8
      %v1024 = vpop.permute.xlu0 %1023
      %1025 = vrot.lane.b32.xlu0 %v960, 8
      %v1026 = vpop.permute.xlu0 %1025
      %1027 = vrot.lane.b32.xlu0 %v962, 8
      %v1028 = vpop.permute.xlu0 %1027
      %1029 = vrot.lane.b32.xlu0 %v964, 8
      %v1030 = vpop.permute.xlu0 %1029
      %1031 = vrot.lane.b32.xlu0 %v966, 8
      %v1032 = vpop.permute.xlu0 %1031
      %1033 = vrot.lane.b32.xlu0 %v968, 8
      %v1034 = vpop.permute.xlu0 %1033
      %1035 = vrot.lane.b32.xlu0 %v970, 8
      %v1036 = vpop.permute.xlu0 %1035
      %1037 = vrot.lane.b32.xlu0 %v972, 8
      %v1038 = vpop.permute.xlu0 %1037
      %1039 = vrot.lane.b32.xlu0 %v974, 8
      %v1040 = vpop.permute.xlu0 %1039
      %1041 = vrot.lane.b32.xlu0 %v976, 8
      %v1042 = vpop.permute.xlu0 %1041
      %1043 = vrot.lane.b32.xlu0 %v978, 8
      %v1044 = vpop.permute.xlu0 %1043
      %1045 = vrot.lane.b32.xlu0 %v980, 8
      %v1046 = vpop.permute.xlu0 %1045
      %1047 = vrot.lane.b32.xlu0 %v982, 8
      %v1048 = vpop.permute.xlu0 %1047
      %1049 = vrot.lane.b32.xlu0 %v984, 8
      %v1050 = vpop.permute.xlu0 %1049
      %1051 = vrot.lane.b32.xlu0 %v986, 8
      %v1052 = vpop.permute.xlu0 %1051
      %1053 = vrot.lane.b32.xlu0 %v988, 8
      %v1054 = vpop.permute.xlu0 %1053
      %1055 = vrot.lane.b32.xlu0 %v990, 8
      %v1056 = vpop.permute.xlu0 %1055
      %1057 = vrot.lane.b32.xlu0 %v992, 8
      %v1058 = vpop.permute.xlu0 %1057
      %1059 = vrot.lane.b32.xlu0 %v994, 8
      %v1060 = vpop.permute.xlu0 %1059
      %1061 = vrot.lane.b32.xlu0 %v996, 8
      %v1062 = vpop.permute.xlu0 %1061
      %1063 = vrot.lane.b32.xlu0 %v998, 8
      %v1064 = vpop.permute.xlu0 %1063
      %1065 = vrot.lane.b32.xlu0 %v1000, 8
      %v1066 = vpop.permute.xlu0 %1065
      %1067 = vrot.lane.b32.xlu0 %v1002, 8
      %v1068 = vpop.permute.xlu0 %1067
      %1069 = vrot.lane.b32.xlu0 %v1004, 8
      %v1070 = vpop.permute.xlu0 %1069
      %1071 = vrot.lane.b32.xlu0 %v1006, 8
      %v1072 = vpop.permute.xlu0 %1071
      %1073 = vrot.lane.b32.xlu0 %v1008, 8
      %v1074 = vpop.permute.xlu0 %1073
      %1075 = vrot.lane.b32.xlu0 %v1010, 8
      %v1076 = vpop.permute.xlu0 %1075
      %1077 = vrot.lane.b32.xlu0 %v1012, 8
      %v1078 = vpop.permute.xlu0 %1077
      %1079 = vrot.lane.b32.xlu0 %v1014, 8
      %v1080 = vpop.permute.xlu0 %1079
      %1081 = vrot.lane.b32.xlu0 %v1016, 8
      %v1082 = vpop.permute.xlu0 %1081
      %v1085 = vunpack.c.l.b16 %v365
      %v1086 = vunpack.c.l.b16 %v366
      %v1087 = vpack.c.b16 %v466, %v1085
      %v1088 = vpack.c.b16 %v1086, %v1086
      %1089 = vrot.lane.b32.xlu0 %v1087, 12
      %v1090 = vpop.permute.xlu0 %1089
      %1091 = vrot.lane.b32.xlu0 %v563, 12
      %v1092 = vpop.permute.xlu0 %1091
      %1093 = vrot.lane.b32.xlu0 %v564, 12
      %v1094 = vpop.permute.xlu0 %1093
      %1095 = vrot.lane.b32.xlu0 %v565, 12
      %v1096 = vpop.permute.xlu0 %1095
      %1097 = vrot.lane.b32.xlu0 %v566, 12
      %v1098 = vpop.permute.xlu0 %1097
      %1099 = vrot.lane.b32.xlu0 %v567, 12
      %v1100 = vpop.permute.xlu0 %1099
      %1101 = vrot.lane.b32.xlu0 %v568, 12
      %v1102 = vpop.permute.xlu0 %1101
      %1103 = vrot.lane.b32.xlu0 %v569, 12
      %v1104 = vpop.permute.xlu0 %1103
      %1105 = vrot.lane.b32.xlu0 %v570, 12
      %v1106 = vpop.permute.xlu0 %1105
      %1107 = vrot.lane.b32.xlu0 %v571, 12
      %v1108 = vpop.permute.xlu0 %1107
      %1109 = vrot.lane.b32.xlu0 %v572, 12
      %v1110 = vpop.permute.xlu0 %1109
      %1111 = vrot.lane.b32.xlu0 %v573, 12
      %v1112 = vpop.permute.xlu0 %1111
      %1113 = vrot.lane.b32.xlu0 %v574, 12
      %v1114 = vpop.permute.xlu0 %1113
      %1115 = vrot.lane.b32.xlu0 %v575, 12
      %v1116 = vpop.permute.xlu0 %1115
      %1117 = vrot.lane.b32.xlu0 %v576, 12
      %v1118 = vpop.permute.xlu0 %1117
      %1119 = vrot.lane.b32.xlu0 %v577, 12
      %v1120 = vpop.permute.xlu0 %1119
      %1121 = vrot.lane.b32.xlu0 %v578, 12
      %v1122 = vpop.permute.xlu0 %1121
      %1123 = vrot.lane.b32.xlu0 %v579, 12
      %v1124 = vpop.permute.xlu0 %1123
      %1125 = vrot.lane.b32.xlu0 %v580, 12
      %v1126 = vpop.permute.xlu0 %1125
      %1127 = vrot.lane.b32.xlu0 %v581, 12
      %v1128 = vpop.permute.xlu0 %1127
      %1129 = vrot.lane.b32.xlu0 %v582, 12
      %v1130 = vpop.permute.xlu0 %1129
      %1131 = vrot.lane.b32.xlu0 %v583, 12
      %v1132 = vpop.permute.xlu0 %1131
      %1133 = vrot.lane.b32.xlu0 %v584, 12
      %v1134 = vpop.permute.xlu0 %1133
      %1135 = vrot.lane.b32.xlu0 %v585, 12
      %v1136 = vpop.permute.xlu0 %1135
      %1137 = vrot.lane.b32.xlu0 %v586, 12
      %v1138 = vpop.permute.xlu0 %1137
      %1139 = vrot.lane.b32.xlu0 %v587, 12
      %v1140 = vpop.permute.xlu0 %1139
      %1141 = vrot.lane.b32.xlu0 %v588, 12
      %v1142 = vpop.permute.xlu0 %1141
      %1143 = vrot.lane.b32.xlu0 %v589, 12
      %v1144 = vpop.permute.xlu0 %1143
      %1145 = vrot.lane.b32.xlu0 %v590, 12
      %v1146 = vpop.permute.xlu0 %1145
      %1147 = vrot.lane.b32.xlu0 %v591, 12
      %v1148 = vpop.permute.xlu0 %1147
      %1149 = vrot.lane.b32.xlu0 %v592, 12
      %v1150 = vpop.permute.xlu0 %1149
      %1151 = vrot.lane.b32.xlu0 %v593, 12
      %v1152 = vpop.permute.xlu0 %1151
      %1153 = vrot.lane.b32.xlu0 %v1088, 12
      %v1154 = vpop.permute.xlu0 %1153
      %v1155 = vpack.c.b16 %v1086, %v528
      %v1157 = vshrl.u32 %v530, 16
      %v1159 = vrot.slane %v1157, 4
      %v1160 = vshll.u32 %v530, 16
      %v1162 = vrot.slane %v1160, 5
      %v1163 = vor.u32 %v1159, %v1162
      %v1165 = vshrl.u32 %v531, 16
      %v1167 = vrot.slane %v1165, 4
      %v1168 = vshll.u32 %v531, 16
      %v1170 = vrot.slane %v1168, 5
      %v1171 = vor.u32 %v1167, %v1170
      %v1172 = vsel %vm594, %v1163, %v1171
      %v1174 = vshrl.u32 %v532, 16
      %v1176 = vrot.slane %v1174, 4
      %v1177 = vshll.u32 %v532, 16
      %v1179 = vrot.slane %v1177, 5
      %v1180 = vor.u32 %v1176, %v1179
      %v1181 = vsel %vm594, %v1171, %v1180
      %v1183 = vshrl.u32 %v533, 16
      %v1185 = vrot.slane %v1183, 4
      %v1186 = vshll.u32 %v533, 16
      %v1188 = vrot.slane %v1186, 5
      %v1189 = vor.u32 %v1185, %v1188
      %v1190 = vsel %vm594, %v1180, %v1189
      %v1192 = vshrl.u32 %v534, 16
      %v1194 = vrot.slane %v1192, 4
      %v1195 = vshll.u32 %v534, 16
      %v1197 = vrot.slane %v1195, 5
      %v1198 = vor.u32 %v1194, %v1197
      %v1199 = vsel %vm594, %v1189, %v1198
      %v1201 = vshrl.u32 %v535, 16
      %v1203 = vrot.slane %v1201, 4
      %v1204 = vshll.u32 %v535, 16
      %v1206 = vrot.slane %v1204, 5
      %v1207 = vor.u32 %v1203, %v1206
      %v1208 = vsel %vm594, %v1198, %v1207
      %v1210 = vshrl.u32 %v536, 16
      %v1212 = vrot.slane %v1210, 4
      %v1213 = vshll.u32 %v536, 16
      %v1215 = vrot.slane %v1213, 5
      %v1216 = vor.u32 %v1212, %v1215
      %v1217 = vsel %vm594, %v1207, %v1216
      %v1219 = vshrl.u32 %v537, 16
      %v1221 = vrot.slane %v1219, 4
      %v1222 = vshll.u32 %v537, 16
      %v1224 = vrot.slane %v1222, 5
      %v1225 = vor.u32 %v1221, %v1224
      %v1226 = vsel %vm594, %v1216, %v1225
      %v1228 = vshrl.u32 %v538, 16
      %v1230 = vrot.slane %v1228, 4
      %v1231 = vshll.u32 %v538, 16
      %v1233 = vrot.slane %v1231, 5
      %v1234 = vor.u32 %v1230, %v1233
      %v1235 = vsel %vm594, %v1225, %v1234
      %v1237 = vshrl.u32 %v539, 16
      %v1239 = vrot.slane %v1237, 4
      %v1240 = vshll.u32 %v539, 16
      %v1242 = vrot.slane %v1240, 5
      %v1243 = vor.u32 %v1239, %v1242
      %v1244 = vsel %vm594, %v1234, %v1243
      %v1246 = vshrl.u32 %v540, 16
      %v1248 = vrot.slane %v1246, 4
      %v1249 = vshll.u32 %v540, 16
      %v1251 = vrot.slane %v1249, 5
      %v1252 = vor.u32 %v1248, %v1251
      %v1253 = vsel %vm594, %v1243, %v1252
      %v1255 = vshrl.u32 %v541, 16
      %v1257 = vrot.slane %v1255, 4
      %v1258 = vshll.u32 %v541, 16
      %v1260 = vrot.slane %v1258, 5
      %v1261 = vor.u32 %v1257, %v1260
      %v1262 = vsel %vm594, %v1252, %v1261
      %v1264 = vshrl.u32 %v542, 16
      %v1266 = vrot.slane %v1264, 4
      %v1267 = vshll.u32 %v542, 16
      %v1269 = vrot.slane %v1267, 5
      %v1270 = vor.u32 %v1266, %v1269
      %v1271 = vsel %vm594, %v1261, %v1270
      %v1273 = vshrl.u32 %v543, 16
      %v1275 = vrot.slane %v1273, 4
      %v1276 = vshll.u32 %v543, 16
      %v1278 = vrot.slane %v1276, 5
      %v1279 = vor.u32 %v1275, %v1278
      %v1280 = vsel %vm594, %v1270, %v1279
      %v1282 = vshrl.u32 %v544, 16
      %v1284 = vrot.slane %v1282, 4
      %v1285 = vshll.u32 %v544, 16
      %v1287 = vrot.slane %v1285, 5
      %v1288 = vor.u32 %v1284, %v1287
      %v1289 = vsel %vm594, %v1279, %v1288
      %v1291 = vshrl.u32 %v545, 16
      %v1293 = vrot.slane %v1291, 4
      %v1294 = vshll.u32 %v545, 16
      %v1296 = vrot.slane %v1294, 5
      %v1297 = vor.u32 %v1293, %v1296
      %v1298 = vsel %vm594, %v1288, %v1297
      %v1300 = vshrl.u32 %v546, 16
      %v1302 = vrot.slane %v1300, 4
      %v1303 = vshll.u32 %v546, 16
      %v1305 = vrot.slane %v1303, 5
      %v1306 = vor.u32 %v1302, %v1305
      %v1307 = vsel %vm594, %v1297, %v1306
      %v1309 = vshrl.u32 %v547, 16
      %v1311 = vrot.slane %v1309, 4
      %v1312 = vshll.u32 %v547, 16
      %v1314 = vrot.slane %v1312, 5
      %v1315 = vor.u32 %v1311, %v1314
      %v1316 = vsel %vm594, %v1306, %v1315
      %v1318 = vshrl.u32 %v548, 16
      %v1320 = vrot.slane %v1318, 4
      %v1321 = vshll.u32 %v548, 16
      %v1323 = vrot.slane %v1321, 5
      %v1324 = vor.u32 %v1320, %v1323
      %v1325 = vsel %vm594, %v1315, %v1324
      %v1327 = vshrl.u32 %v549, 16
      %v1329 = vrot.slane %v1327, 4
      %v1330 = vshll.u32 %v549, 16
      %v1332 = vrot.slane %v1330, 5
      %v1333 = vor.u32 %v1329, %v1332
      %v1334 = vsel %vm594, %v1324, %v1333
      %v1336 = vshrl.u32 %v550, 16
      %v1338 = vrot.slane %v1336, 4
      %v1339 = vshll.u32 %v550, 16
      %v1341 = vrot.slane %v1339, 5
      %v1342 = vor.u32 %v1338, %v1341
      %v1343 = vsel %vm594, %v1333, %v1342
      %v1345 = vshrl.u32 %v551, 16
      %v1347 = vrot.slane %v1345, 4
      %v1348 = vshll.u32 %v551, 16
      %v1350 = vrot.slane %v1348, 5
      %v1351 = vor.u32 %v1347, %v1350
      %v1352 = vsel %vm594, %v1342, %v1351
      %v1354 = vshrl.u32 %v552, 16
      %v1356 = vrot.slane %v1354, 4
      %v1357 = vshll.u32 %v552, 16
      %v1359 = vrot.slane %v1357, 5
      %v1360 = vor.u32 %v1356, %v1359
      %v1361 = vsel %vm594, %v1351, %v1360
      %v1363 = vshrl.u32 %v553, 16
      %v1365 = vrot.slane %v1363, 4
      %v1366 = vshll.u32 %v553, 16
      %v1368 = vrot.slane %v1366, 5
      %v1369 = vor.u32 %v1365, %v1368
      %v1370 = vsel %vm594, %v1360, %v1369
      %v1372 = vshrl.u32 %v554, 16
      %v1374 = vrot.slane %v1372, 4
      %v1375 = vshll.u32 %v554, 16
      %v1377 = vrot.slane %v1375, 5
      %v1378 = vor.u32 %v1374, %v1377
      %v1379 = vsel %vm594, %v1369, %v1378
      %v1381 = vshrl.u32 %v555, 16
      %v1383 = vrot.slane %v1381, 4
      %v1384 = vshll.u32 %v555, 16
      %v1386 = vrot.slane %v1384, 5
      %v1387 = vor.u32 %v1383, %v1386
      %v1388 = vsel %vm594, %v1378, %v1387
      %v1390 = vshrl.u32 %v556, 16
      %v1392 = vrot.slane %v1390, 4
      %v1393 = vshll.u32 %v556, 16
      %v1395 = vrot.slane %v1393, 5
      %v1396 = vor.u32 %v1392, %v1395
      %v1397 = vsel %vm594, %v1387, %v1396
      %v1399 = vshrl.u32 %v557, 16
      %v1401 = vrot.slane %v1399, 4
      %v1402 = vshll.u32 %v557, 16
      %v1404 = vrot.slane %v1402, 5
      %v1405 = vor.u32 %v1401, %v1404
      %v1406 = vsel %vm594, %v1396, %v1405
      %v1408 = vshrl.u32 %v558, 16
      %v1410 = vrot.slane %v1408, 4
      %v1411 = vshll.u32 %v558, 16
      %v1413 = vrot.slane %v1411, 5
      %v1414 = vor.u32 %v1410, %v1413
      %v1415 = vsel %vm594, %v1405, %v1414
      %v1417 = vshrl.u32 %v559, 16
      %v1419 = vrot.slane %v1417, 4
      %v1420 = vshll.u32 %v559, 16
      %v1422 = vrot.slane %v1420, 5
      %v1423 = vor.u32 %v1419, %v1422
      %v1424 = vsel %vm594, %v1414, %v1423
      %v1426 = vshrl.u32 %v560, 16
      %v1428 = vrot.slane %v1426, 4
      %v1429 = vshll.u32 %v560, 16
      %v1431 = vrot.slane %v1429, 5
      %v1432 = vor.u32 %v1428, %v1431
      %v1433 = vsel %vm594, %v1423, %v1432
      %v1435 = vshrl.u32 %v1155, 16
      %v1437 = vrot.slane %v1435, 4
      %v1438 = vshll.u32 %v1155, 16
      %v1440 = vrot.slane %v1438, 5
      %v1441 = vor.u32 %v1437, %v1440
      %v1442 = vsel %vm594, %v1432, %v1441
      %1443 = vrot.lane.b32.xlu0 %v1163, 16
      %v1444 = vpop.permute.xlu0 %1443
      %1445 = vrot.lane.b32.xlu0 %v1172, 16
      %v1446 = vpop.permute.xlu0 %1445
      %1447 = vrot.lane.b32.xlu0 %v1181, 16
      %v1448 = vpop.permute.xlu0 %1447
      %1449 = vrot.lane.b32.xlu0 %v1190, 16
      %v1450 = vpop.permute.xlu0 %1449
      %1451 = vrot.lane.b32.xlu0 %v1199, 16
      %v1452 = vpop.permute.xlu0 %1451
      %1453 = vrot.lane.b32.xlu0 %v1208, 16
      %v1454 = vpop.permute.xlu0 %1453
      %1455 = vrot.lane.b32.xlu0 %v1217, 16
      %v1456 = vpop.permute.xlu0 %1455
      %1457 = vrot.lane.b32.xlu0 %v1226, 16
      %v1458 = vpop.permute.xlu0 %1457
      %1459 = vrot.lane.b32.xlu0 %v1235, 16
      %v1460 = vpop.permute.xlu0 %1459
      %1461 = vrot.lane.b32.xlu0 %v1244, 16
      %v1462 = vpop.permute.xlu0 %1461
      %1463 = vrot.lane.b32.xlu0 %v1253, 16
      %v1464 = vpop.permute.xlu0 %1463
      %1465 = vrot.lane.b32.xlu0 %v1262, 16
      %v1466 = vpop.permute.xlu0 %1465
      %1467 = vrot.lane.b32.xlu0 %v1271, 16
      %v1468 = vpop.permute.xlu0 %1467
      %1469 = vrot.lane.b32.xlu0 %v1280, 16
      %v1470 = vpop.permute.xlu0 %1469
      %1471 = vrot.lane.b32.xlu0 %v1289, 16
      %v1472 = vpop.permute.xlu0 %1471
      %1473 = vrot.lane.b32.xlu0 %v1298, 16
      %v1474 = vpop.permute.xlu0 %1473
      %1475 = vrot.lane.b32.xlu0 %v1307, 16
      %v1476 = vpop.permute.xlu0 %1475
      %1477 = vrot.lane.b32.xlu0 %v1316, 16
      %v1478 = vpop.permute.xlu0 %1477
      %1479 = vrot.lane.b32.xlu0 %v1325, 16
      %v1480 = vpop.permute.xlu0 %1479
      %1481 = vrot.lane.b32.xlu0 %v1334, 16
      %v1482 = vpop.permute.xlu0 %1481
      %1483 = vrot.lane.b32.xlu0 %v1343, 16
      %v1484 = vpop.permute.xlu0 %1483
      %1485 = vrot.lane.b32.xlu0 %v1352, 16
      %v1486 = vpop.permute.xlu0 %1485
      %1487 = vrot.lane.b32.xlu0 %v1361, 16
      %v1488 = vpop.permute.xlu0 %1487
      %1489 = vrot.lane.b32.xlu0 %v1370, 16
      %v1490 = vpop.permute.xlu0 %1489
      %1491 = vrot.lane.b32.xlu0 %v1379, 16
      %v1492 = vpop.permute.xlu0 %1491
      %1493 = vrot.lane.b32.xlu0 %v1388, 16
      %v1494 = vpop.permute.xlu0 %1493
      %1495 = vrot.lane.b32.xlu0 %v1397, 16
      %v1496 = vpop.permute.xlu0 %1495
      %1497 = vrot.lane.b32.xlu0 %v1406, 16
      %v1498 = vpop.permute.xlu0 %1497
      %1499 = vrot.lane.b32.xlu0 %v1415, 16
      %v1500 = vpop.permute.xlu0 %1499
      %1501 = vrot.lane.b32.xlu0 %v1424, 16
      %v1502 = vpop.permute.xlu0 %1501
      %1503 = vrot.lane.b32.xlu0 %v1433, 16
      %v1504 = vpop.permute.xlu0 %1503
      %1505 = vrot.lane.b32.xlu0 %v1442, 16
      %v1506 = vpop.permute.xlu0 %1505
      %1507 = vrot.lane.b32.xlu0 %v1441, 16
      %v1508 = vpop.permute.xlu0 %1507
      %v1510 = vunpack.c.l.b16 %v367
      %v1511 = vpack.c.b16 %v1510, %v1510
      %v1512 = vrot.slane %v530, 5
      %v1513 = vrot.slane %v531, 5
      %v1514 = vsel %vm951, %v1512, %v1513
      %v1515 = vrot.slane %v532, 5
      %v1516 = vsel %vm951, %v1513, %v1515
      %v1517 = vrot.slane %v533, 5
      %v1518 = vsel %vm951, %v1515, %v1517
      %v1519 = vrot.slane %v534, 5
      %v1520 = vsel %vm951, %v1517, %v1519
      %v1521 = vrot.slane %v535, 5
      %v1522 = vsel %vm951, %v1519, %v1521
      %v1523 = vrot.slane %v536, 5
      %v1524 = vsel %vm951, %v1521, %v1523
      %v1525 = vrot.slane %v537, 5
      %v1526 = vsel %vm951, %v1523, %v1525
      %v1527 = vrot.slane %v538, 5
      %v1528 = vsel %vm951, %v1525, %v1527
      %v1529 = vrot.slane %v539, 5
      %v1530 = vsel %vm951, %v1527, %v1529
      %v1531 = vrot.slane %v540, 5
      %v1532 = vsel %vm951, %v1529, %v1531
      %v1533 = vrot.slane %v541, 5
      %v1534 = vsel %vm951, %v1531, %v1533
      %v1535 = vrot.slane %v542, 5
      %v1536 = vsel %vm951, %v1533, %v1535
      %v1537 = vrot.slane %v543, 5
      %v1538 = vsel %vm951, %v1535, %v1537
      %v1539 = vrot.slane %v544, 5
      %v1540 = vsel %vm951, %v1537, %v1539
      %v1541 = vrot.slane %v545, 5
      %v1542 = vsel %vm951, %v1539, %v1541
      %v1543 = vrot.slane %v546, 5
      %v1544 = vsel %vm951, %v1541, %v1543
      %v1545 = vrot.slane %v547, 5
      %v1546 = vsel %vm951, %v1543, %v1545
      %v1547 = vrot.slane %v548, 5
      %v1548 = vsel %vm951, %v1545, %v1547
      %v1549 = vrot.slane %v549, 5
      %v1550 = vsel %vm951, %v1547, %v1549
      %v1551 = vrot.slane %v550, 5
      %v1552 = vsel %vm951, %v1549, %v1551
      %v1553 = vrot.slane %v551, 5
      %v1554 = vsel %vm951, %v1551, %v1553
      %v1555 = vrot.slane %v552, 5
      %v1556 = vsel %vm951, %v1553, %v1555
      %v1557 = vrot.slane %v553, 5
      %v1558 = vsel %vm951, %v1555, %v1557
      %v1559 = vrot.slane %v554, 5
      %v1560 = vsel %vm951, %v1557, %v1559
      %v1561 = vrot.slane %v555, 5
      %v1562 = vsel %vm951, %v1559, %v1561
      %v1563 = vrot.slane %v556, 5
      %v1564 = vsel %vm951, %v1561, %v1563
      %v1565 = vrot.slane %v557, 5
      %v1566 = vsel %vm951, %v1563, %v1565
      %v1567 = vrot.slane %v558, 5
      %v1568 = vsel %vm951, %v1565, %v1567
      %v1569 = vrot.slane %v559, 5
      %v1570 = vsel %vm951, %v1567, %v1569
      %v1571 = vrot.slane %v560, 5
      %v1572 = vsel %vm951, %v1569, %v1571
      %v1573 = vrot.slane %v1155, 5
      %v1574 = vsel %vm951, %v1571, %v1573
      %v1575 = vrot.slane %v1511, 5
      %v1576 = vsel %vm951, %v1573, %v1575
      %1577 = vrot.lane.b32.xlu0 %v1512, 20
      %v1578 = vpop.permute.xlu0 %1577
      %1579 = vrot.lane.b32.xlu0 %v1514, 20
      %v1580 = vpop.permute.xlu0 %1579
      %1581 = vrot.lane.b32.xlu0 %v1516, 20
      %v1582 = vpop.permute.xlu0 %1581
      %1583 = vrot.lane.b32.xlu0 %v1518, 20
      %v1584 = vpop.permute.xlu0 %1583
      %1585 = vrot.lane.b32.xlu0 %v1520, 20
      %v1586 = vpop.permute.xlu0 %1585
      %1587 = vrot.lane.b32.xlu0 %v1522, 20
      %v1588 = vpop.permute.xlu0 %1587
      %1589 = vrot.lane.b32.xlu0 %v1524, 20
      %v1590 = vpop.permute.xlu0 %1589
      %1591 = vrot.lane.b32.xlu0 %v1526, 20
      %v1592 = vpop.permute.xlu0 %1591
      %1593 = vrot.lane.b32.xlu0 %v1528, 20
      %v1594 = vpop.permute.xlu0 %1593
      %1595 = vrot.lane.b32.xlu0 %v1530, 20
      %v1596 = vpop.permute.xlu0 %1595
      %1597 = vrot.lane.b32.xlu0 %v1532, 20
      %v1598 = vpop.permute.xlu0 %1597
      %1599 = vrot.lane.b32.xlu0 %v1534, 20
      %v1600 = vpop.permute.xlu0 %1599
      %1601 = vrot.lane.b32.xlu0 %v1536, 20
      %v1602 = vpop.permute.xlu0 %1601
      %1603 = vrot.lane.b32.xlu0 %v1538, 20
      %v1604 = vpop.permute.xlu0 %1603
      %1605 = vrot.lane.b32.xlu0 %v1540, 20
      %v1606 = vpop.permute.xlu0 %1605
      %1607 = vrot.lane.b32.xlu0 %v1542, 20
      %v1608 = vpop.permute.xlu0 %1607
      %1609 = vrot.lane.b32.xlu0 %v1544, 20
      %v1610 = vpop.permute.xlu0 %1609
      %1611 = vrot.lane.b32.xlu0 %v1546, 20
      %v1612 = vpop.permute.xlu0 %1611
      %1613 = vrot.lane.b32.xlu0 %v1548, 20
      %v1614 = vpop.permute.xlu0 %1613
      %1615 = vrot.lane.b32.xlu0 %v1550, 20
      %v1616 = vpop.permute.xlu0 %1615
      %1617 = vrot.lane.b32.xlu0 %v1552, 20
      %v1618 = vpop.permute.xlu0 %1617
      %1619 = vrot.lane.b32.xlu0 %v1554, 20
      %v1620 = vpop.permute.xlu0 %1619
      %1621 = vrot.lane.b32.xlu0 %v1556, 20
      %v1622 = vpop.permute.xlu0 %1621
      %1623 = vrot.lane.b32.xlu0 %v1558, 20
      %v1624 = vpop.permute.xlu0 %1623
      %1625 = vrot.lane.b32.xlu0 %v1560, 20
      %v1626 = vpop.permute.xlu0 %1625
      %1627 = vrot.lane.b32.xlu0 %v1562, 20
      %v1628 = vpop.permute.xlu0 %1627
      %1629 = vrot.lane.b32.xlu0 %v1564, 20
      %v1630 = vpop.permute.xlu0 %1629
      %1631 = vrot.lane.b32.xlu0 %v1566, 20
      %v1632 = vpop.permute.xlu0 %1631
      %1633 = vrot.lane.b32.xlu0 %v1568, 20
      %v1634 = vpop.permute.xlu0 %1633
      %1635 = vrot.lane.b32.xlu0 %v1570, 20
      %v1636 = vpop.permute.xlu0 %1635
      %1637 = vrot.lane.b32.xlu0 %v1572, 20
      %v1638 = vpop.permute.xlu0 %1637
      %1639 = vrot.lane.b32.xlu0 %v1574, 20
      %v1640 = vpop.permute.xlu0 %1639
      %1641 = vrot.lane.b32.xlu0 %v1576, 20
      %v1642 = vpop.permute.xlu0 %1641
      %v1645 = vunpack.c.l.b16 %v368
      %v1646 = vunpack.c.l.b16 %v369
      %v1647 = vpack.c.b16 %v467, %v1645
      %v1648 = vpack.c.b16 %v1646, %v1646
      %1649 = vrot.lane.b32.xlu0 %v1647, 24
      %v1650 = vpop.permute.xlu0 %1649
      %1651 = vrot.lane.b32.xlu0 %v531, 24
      %v1652 = vpop.permute.xlu0 %1651
      %1653 = vrot.lane.b32.xlu0 %v532, 24
      %v1654 = vpop.permute.xlu0 %1653
      %1655 = vrot.lane.b32.xlu0 %v533, 24
      %v1656 = vpop.permute.xlu0 %1655
      %1657 = vrot.lane.b32.xlu0 %v534, 24
      %v1658 = vpop.permute.xlu0 %1657
      %1659 = vrot.lane.b32.xlu0 %v535, 24
      %v1660 = vpop.permute.xlu0 %1659
      %1661 = vrot.lane.b32.xlu0 %v536, 24
      %v1662 = vpop.permute.xlu0 %1661
      %1663 = vrot.lane.b32.xlu0 %v537, 24
      %v1664 = vpop.permute.xlu0 %1663
      %1665 = vrot.lane.b32.xlu0 %v538, 24
      %v1666 = vpop.permute.xlu0 %1665
      %1667 = vrot.lane.b32.xlu0 %v539, 24
      %v1668 = vpop.permute.xlu0 %1667
      %1669 = vrot.lane.b32.xlu0 %v540, 24
      %v1670 = vpop.permute.xlu0 %1669
      %1671 = vrot.lane.b32.xlu0 %v541, 24
      %v1672 = vpop.permute.xlu0 %1671
      %1673 = vrot.lane.b32.xlu0 %v542, 24
      %v1674 = vpop.permute.xlu0 %1673
      %1675 = vrot.lane.b32.xlu0 %v543, 24
      %v1676 = vpop.permute.xlu0 %1675
      %1677 = vrot.lane.b32.xlu0 %v544, 24
      %v1678 = vpop.permute.xlu0 %1677
      %1679 = vrot.lane.b32.xlu0 %v545, 24
      %v1680 = vpop.permute.xlu0 %1679
      %1681 = vrot.lane.b32.xlu0 %v546, 24
      %v1682 = vpop.permute.xlu0 %1681
      %1683 = vrot.lane.b32.xlu0 %v547, 24
      %v1684 = vpop.permute.xlu0 %1683
      %1685 = vrot.lane.b32.xlu0 %v548, 24
      %v1686 = vpop.permute.xlu0 %1685
      %1687 = vrot.lane.b32.xlu0 %v549, 24
      %v1688 = vpop.permute.xlu0 %1687
      %1689 = vrot.lane.b32.xlu0 %v550, 24
      %v1690 = vpop.permute.xlu0 %1689
      %1691 = vrot.lane.b32.xlu0 %v551, 24
      %v1692 = vpop.permute.xlu0 %1691
      %1693 = vrot.lane.b32.xlu0 %v552, 24
      %v1694 = vpop.permute.xlu0 %1693
      %1695 = vrot.lane.b32.xlu0 %v553, 24
      %v1696 = vpop.permute.xlu0 %1695
      %1697 = vrot.lane.b32.xlu0 %v554, 24
      %v1698 = vpop.permute.xlu0 %1697
      %1699 = vrot.lane.b32.xlu0 %v555, 24
      %v1700 = vpop.permute.xlu0 %1699
      %1701 = vrot.lane.b32.xlu0 %v556, 24
      %v1702 = vpop.permute.xlu0 %1701
      %1703 = vrot.lane.b32.xlu0 %v557, 24
      %v1704 = vpop.permute.xlu0 %1703
      %1705 = vrot.lane.b32.xlu0 %v558, 24
      %v1706 = vpop.permute.xlu0 %1705
      %1707 = vrot.lane.b32.xlu0 %v559, 24
      %v1708 = vpop.permute.xlu0 %1707
      %1709 = vrot.lane.b32.xlu0 %v560, 24
      %v1710 = vpop.permute.xlu0 %1709
      %1711 = vrot.lane.b32.xlu0 %v1155, 24
      %v1712 = vpop.permute.xlu0 %1711
      %1713 = vrot.lane.b32.xlu0 %v1648, 24
      %v1714 = vpop.permute.xlu0 %1713
      %v1715 = vpack.c.b16 %v1646, %v1086
      %v1717 = vshrl.u32 %v1715, 16
      %v1719 = vrot.slane %v1717, 4
      %v1720 = vshll.u32 %v1715, 16
      %v1722 = vrot.slane %v1720, 5
      %v1723 = vor.u32 %v1719, %v1722
      %v1724 = vsel %vm594, %v880, %v1723
      %1725 = vrot.lane.b32.xlu0 %v610, 28
      %v1726 = vpop.permute.xlu0 %1725
      %1727 = vrot.lane.b32.xlu0 %v620, 28
      %v1728 = vpop.permute.xlu0 %1727
      %1729 = vrot.lane.b32.xlu0 %v629, 28
      %v1730 = vpop.permute.xlu0 %1729
      %1731 = vrot.lane.b32.xlu0 %v638, 28
      %v1732 = vpop.permute.xlu0 %1731
      %1733 = vrot.lane.b32.xlu0 %v647, 28
      %v1734 = vpop.permute.xlu0 %1733
      %1735 = vrot.lane.b32.xlu0 %v656, 28
      %v1736 = vpop.permute.xlu0 %1735
      %1737 = vrot.lane.b32.xlu0 %v665, 28
      %v1738 = vpop.permute.xlu0 %1737
      %1739 = vrot.lane.b32.xlu0 %v674, 28
      %v1740 = vpop.permute.xlu0 %1739
      %1741 = vrot.lane.b32.xlu0 %v683, 28
      %v1742 = vpop.permute.xlu0 %1741
      %1743 = vrot.lane.b32.xlu0 %v692, 28
      %v1744 = vpop.permute.xlu0 %1743
      %1745 = vrot.lane.b32.xlu0 %v701, 28
      %v1746 = vpop.permute.xlu0 %1745
      %1747 = vrot.lane.b32.xlu0 %v710, 28
      %v1748 = vpop.permute.xlu0 %1747
      %1749 = vrot.lane.b32.xlu0 %v719, 28
      %v1750 = vpop.permute.xlu0 %1749
      %1751 = vrot.lane.b32.xlu0 %v728, 28
      %v1752 = vpop.permute.xlu0 %1751
      %1753 = vrot.lane.b32.xlu0 %v737, 28
      %v1754 = vpop.permute.xlu0 %1753
      %1755 = vrot.lane.b32.xlu0 %v746, 28
      %v1756 = vpop.permute.xlu0 %1755
      %1757 = vrot.lane.b32.xlu0 %v755, 28
      %v1758 = vpop.permute.xlu0 %1757
      %1759 = vrot.lane.b32.xlu0 %v764, 28
      %v1760 = vpop.permute.xlu0 %1759
      %1761 = vrot.lane.b32.xlu0 %v773, 28
      %v1762 = vpop.permute.xlu0 %1761
      %1763 = vrot.lane.b32.xlu0 %v782, 28
      %v1764 = vpop.permute.xlu0 %1763
      %1765 = vrot.lane.b32.xlu0 %v791, 28
      %v1766 = vpop.permute.xlu0 %1765
      %1767 = vrot.lane.b32.xlu0 %v800, 28
      %v1768 = vpop.permute.xlu0 %1767
      %1769 = vrot.lane.b32.xlu0 %v809, 28
      %v1770 = vpop.permute.xlu0 %1769
      %1771 = vrot.lane.b32.xlu0 %v818, 28
      %v1772 = vpop.permute.xlu0 %1771
      %1773 = vrot.lane.b32.xlu0 %v827, 28
      %v1774 = vpop.permute.xlu0 %1773
      %1775 = vrot.lane.b32.xlu0 %v836, 28
      %v1776 = vpop.permute.xlu0 %1775
      %1777 = vrot.lane.b32.xlu0 %v845, 28
      %v1778 = vpop.permute.xlu0 %1777
      %1779 = vrot.lane.b32.xlu0 %v854, 28
      %v1780 = vpop.permute.xlu0 %1779
      %1781 = vrot.lane.b32.xlu0 %v863, 28
      %v1782 = vpop.permute.xlu0 %1781
      %1783 = vrot.lane.b32.xlu0 %v872, 28
      %v1784 = vpop.permute.xlu0 %1783
      %1785 = vrot.lane.b32.xlu0 %v881, 28
      %v1786 = vpop.permute.xlu0 %1785
      %1787 = vrot.lane.b32.xlu0 %v1724, 28
      %v1788 = vpop.permute.xlu0 %1787
      %1789 = vrot.lane.b32.xlu0 %v1723, 28
      %v1790 = vpop.permute.xlu0 %1789
      %v1792 = vunpack.c.l.b16 %v370
      %v1793 = vpack.c.b16 %v1792, %v1792
      %v1794 = vrot.slane %v1715, 5
      %v1795 = vsel %vm951, %v1013, %v1794
      %v1796 = vrot.slane %v1793, 5
      %v1797 = vsel %vm951, %v1794, %v1796
      %1798 = vrot.lane.b32.xlu0 %v953, 32
      %v1799 = vpop.permute.xlu0 %1798
      %1800 = vrot.lane.b32.xlu0 %v956, 32
      %v1801 = vpop.permute.xlu0 %1800
      %1802 = vrot.lane.b32.xlu0 %v958, 32
      %v1803 = vpop.permute.xlu0 %1802
      %1804 = vrot.lane.b32.xlu0 %v960, 32
      %v1805 = vpop.permute.xlu0 %1804
      %1806 = vrot.lane.b32.xlu0 %v962, 32
      %v1807 = vpop.permute.xlu0 %1806
      %1808 = vrot.lane.b32.xlu0 %v964, 32
      %v1809 = vpop.permute.xlu0 %1808
      %1810 = vrot.lane.b32.xlu0 %v966, 32
      %v1811 = vpop.permute.xlu0 %1810
      %1812 = vrot.lane.b32.xlu0 %v968, 32
      %v1813 = vpop.permute.xlu0 %1812
      %1814 = vrot.lane.b32.xlu0 %v970, 32
      %v1815 = vpop.permute.xlu0 %1814
      %1816 = vrot.lane.b32.xlu0 %v972, 32
      %v1817 = vpop.permute.xlu0 %1816
      %1818 = vrot.lane.b32.xlu0 %v974, 32
      %v1819 = vpop.permute.xlu0 %1818
      %1820 = vrot.lane.b32.xlu0 %v976, 32
      %v1821 = vpop.permute.xlu0 %1820
      %1822 = vrot.lane.b32.xlu0 %v978, 32
      %v1823 = vpop.permute.xlu0 %1822
      %1824 = vrot.lane.b32.xlu0 %v980, 32
      %v1825 = vpop.permute.xlu0 %1824
      %1826 = vrot.lane.b32.xlu0 %v982, 32
      %v1827 = vpop.permute.xlu0 %1826
      %1828 = vrot.lane.b32.xlu0 %v984, 32
      %v1829 = vpop.permute.xlu0 %1828
      %1830 = vrot.lane.b32.xlu0 %v986, 32
      %v1831 = vpop.permute.xlu0 %1830
      %1832 = vrot.lane.b32.xlu0 %v988, 32
      %v1833 = vpop.permute.xlu0 %1832
      %1834 = vrot.lane.b32.xlu0 %v990, 32
      %v1835 = vpop.permute.xlu0 %1834
      %1836 = vrot.lane.b32.xlu0 %v992, 32
      %v1837 = vpop.permute.xlu0 %1836
      %1838 = vrot.lane.b32.xlu0 %v994, 32
      %v1839 = vpop.permute.xlu0 %1838
      %1840 = vrot.lane.b32.xlu0 %v996, 32
      %v1841 = vpop.permute.xlu0 %1840
      %1842 = vrot.lane.b32.xlu0 %v998, 32
      %v1843 = vpop.permute.xlu0 %1842
      %1844 = vrot.lane.b32.xlu0 %v1000, 32
      %v1845 = vpop.permute.xlu0 %1844
      %1846 = vrot.lane.b32.xlu0 %v1002, 32
      %v1847 = vpop.permute.xlu0 %1846
      %1848 = vrot.lane.b32.xlu0 %v1004, 32
      %v1849 = vpop.permute.xlu0 %1848
      %1850 = vrot.lane.b32.xlu0 %v1006, 32
      %v1851 = vpop.permute.xlu0 %1850
      %1852 = vrot.lane.b32.xlu0 %v1008, 32
      %v1853 = vpop.permute.xlu0 %1852
      %1854 = vrot.lane.b32.xlu0 %v1010, 32
      %v1855 = vpop.permute.xlu0 %1854
      %1856 = vrot.lane.b32.xlu0 %v1012, 32
      %v1857 = vpop.permute.xlu0 %1856
      %1858 = vrot.lane.b32.xlu0 %v1014, 32
      %v1859 = vpop.permute.xlu0 %1858
      %1860 = vrot.lane.b32.xlu0 %v1795, 32
      %v1861 = vpop.permute.xlu0 %1860
      %1862 = vrot.lane.b32.xlu0 %v1797, 32
      %v1863 = vpop.permute.xlu0 %1862
      %v1871 = vunpack.c.l.b16 %v371
      %v1872 = vunpack.c.l.b16 %v372
      %v1873 = vunpack.c.l.b16 %v373
      %v1874 = vunpack.c.l.b16 %v374
      %v1875 = vunpack.c.l.b16 %v375
      %v1876 = vunpack.c.l.b16 %v376
      %v1877 = vunpack.c.l.b16 %v377
      %v1878 = vpack.c.b16 %v473, %v1871
      %v1879 = vpack.c.b16 %v1872, %v1646
      %v1880 = vpack.c.b16 %v1874, %v1873
      %v1881 = vpack.c.b16 %v1876, %v1875
      %v1882 = vpack.c.b16 %v1877, %v1877
      %1883 = vrot.lane.b32.xlu0 %v1878, 36
      %v1884 = vpop.permute.xlu0 %1883
      %1885 = vrot.lane.b32.xlu0 %v534, 36
      %v1886 = vpop.permute.xlu0 %1885
      %1887 = vrot.lane.b32.xlu0 %v535, 36
      %v1888 = vpop.permute.xlu0 %1887
      %1889 = vrot.lane.b32.xlu0 %v536, 36
      %v1890 = vpop.permute.xlu0 %1889
      %1891 = vrot.lane.b32.xlu0 %v537, 36
      %v1892 = vpop.permute.xlu0 %1891
      %1893 = vrot.lane.b32.xlu0 %v538, 36
      %v1894 = vpop.permute.xlu0 %1893
      %1895 = vrot.lane.b32.xlu0 %v539, 36
      %v1896 = vpop.permute.xlu0 %1895
      %1897 = vrot.lane.b32.xlu0 %v540, 36
      %v1898 = vpop.permute.xlu0 %1897
      %1899 = vrot.lane.b32.xlu0 %v541, 36
      %v1900 = vpop.permute.xlu0 %1899
      %1901 = vrot.lane.b32.xlu0 %v542, 36
      %v1902 = vpop.permute.xlu0 %1901
      %1903 = vrot.lane.b32.xlu0 %v543, 36
      %v1904 = vpop.permute.xlu0 %1903
      %1905 = vrot.lane.b32.xlu0 %v544, 36
      %v1906 = vpop.permute.xlu0 %1905
      %1907 = vrot.lane.b32.xlu0 %v545, 36
      %v1908 = vpop.permute.xlu0 %1907
      %1909 = vrot.lane.b32.xlu0 %v546, 36
      %v1910 = vpop.permute.xlu0 %1909
      %1911 = vrot.lane.b32.xlu0 %v547, 36
      %v1912 = vpop.permute.xlu0 %1911
      %1913 = vrot.lane.b32.xlu0 %v548, 36
      %v1914 = vpop.permute.xlu0 %1913
      %1915 = vrot.lane.b32.xlu0 %v549, 36
      %v1916 = vpop.permute.xlu0 %1915
      %1917 = vrot.lane.b32.xlu0 %v550, 36
      %v1918 = vpop.permute.xlu0 %1917
      %1919 = vrot.lane.b32.xlu0 %v551, 36
      %v1920 = vpop.permute.xlu0 %1919
      %1921 = vrot.lane.b32.xlu0 %v552, 36
      %v1922 = vpop.permute.xlu0 %1921
      %1923 = vrot.lane.b32.xlu0 %v553, 36
      %v1924 = vpop.permute.xlu0 %1923
      %1925 = vrot.lane.b32.xlu0 %v554, 36
      %v1926 = vpop.permute.xlu0 %1925
      %1927 = vrot.lane.b32.xlu0 %v555, 36
      %v1928 = vpop.permute.xlu0 %1927
      %1929 = vrot.lane.b32.xlu0 %v556, 36
      %v1930 = vpop.permute.xlu0 %1929
      %1931 = vrot.lane.b32.xlu0 %v557, 36
      %v1932 = vpop.permute.xlu0 %1931
      %1933 = vrot.lane.b32.xlu0 %v558, 36
      %v1934 = vpop.permute.xlu0 %1933
      %1935 = vrot.lane.b32.xlu0 %v559, 36
      %v1936 = vpop.permute.xlu0 %1935
      %1937 = vrot.lane.b32.xlu0 %v560, 36
      %v1938 = vpop.permute.xlu0 %1937
      %1939 = vrot.lane.b32.xlu0 %v1155, 36
      %v1940 = vpop.permute.xlu0 %1939
      %1941 = vrot.lane.b32.xlu0 %v1879, 36
      %v1942 = vpop.permute.xlu0 %1941
      %1943 = vrot.lane.b32.xlu0 %v1880, 36
      %v1944 = vpop.permute.xlu0 %1943
      %1945 = vrot.lane.b32.xlu0 %v1881, 36
      %v1946 = vpop.permute.xlu0 %1945
      %1947 = vrot.lane.b32.xlu0 %v1882, 36
      %v1948 = vpop.permute.xlu0 %1947
      %v1949 = vpack.c.b16 %v1873, %v1872
      %v1950 = vpack.c.b16 %v1875, %v1874
      %v1951 = vpack.c.b16 %v1877, %v1876
      %v1953 = vshrl.u32 %v1949, 16
      %v1955 = vrot.slane %v1953, 4
      %v1956 = vshll.u32 %v1949, 16
      %v1958 = vrot.slane %v1956, 5
      %v1959 = vor.u32 %v1955, %v1958
      %v1960 = vsel %vm594, %v1723, %v1959
      %v1962 = vshrl.u32 %v1950, 16
      %v1964 = vrot.slane %v1962, 4
      %v1965 = vshll.u32 %v1950, 16
      %v1967 = vrot.slane %v1965, 5
      %v1968 = vor.u32 %v1964, %v1967
      %v1969 = vsel %vm594, %v1959, %v1968
      %v1971 = vshrl.u32 %v1951, 16
      %v1973 = vrot.slane %v1971, 4
      %v1974 = vshll.u32 %v1951, 16
      %v1976 = vrot.slane %v1974, 5
      %v1977 = vor.u32 %v1973, %v1976
      %v1978 = vsel %vm594, %v1968, %v1977
      %1979 = vrot.lane.b32.xlu0 %v637, 40
      %v1980 = vpop.permute.xlu0 %1979
      %1981 = vrot.lane.b32.xlu0 %v647, 40
      %v1982 = vpop.permute.xlu0 %1981
      %1983 = vrot.lane.b32.xlu0 %v656, 40
      %v1984 = vpop.permute.xlu0 %1983
      %1985 = vrot.lane.b32.xlu0 %v665, 40
      %v1986 = vpop.permute.xlu0 %1985
      %1987 = vrot.lane.b32.xlu0 %v674, 40
      %v1988 = vpop.permute.xlu0 %1987
      %1989 = vrot.lane.b32.xlu0 %v683, 40
      %v1990 = vpop.permute.xlu0 %1989
      %1991 = vrot.lane.b32.xlu0 %v692, 40
      %v1992 = vpop.permute.xlu0 %1991
      %1993 = vrot.lane.b32.xlu0 %v701, 40
      %v1994 = vpop.permute.xlu0 %1993
      %1995 = vrot.lane.b32.xlu0 %v710, 40
      %v1996 = vpop.permute.xlu0 %1995
      %1997 = vrot.lane.b32.xlu0 %v719, 40
      %v1998 = vpop.permute.xlu0 %1997
      %1999 = vrot.lane.b32.xlu0 %v728, 40
      %v2000 = vpop.permute.xlu0 %1999
      %2001 = vrot.lane.b32.xlu0 %v737, 40
      %v2002 = vpop.permute.xlu0 %2001
      %2003 = vrot.lane.b32.xlu0 %v746, 40
      %v2004 = vpop.permute.xlu0 %2003
      %2005 = vrot.lane.b32.xlu0 %v755, 40
      %v2006 = vpop.permute.xlu0 %2005
      %2007 = vrot.lane.b32.xlu0 %v764, 40
      %v2008 = vpop.permute.xlu0 %2007
      %2009 = vrot.lane.b32.xlu0 %v773, 40
      %v2010 = vpop.permute.xlu0 %2009
      %2011 = vrot.lane.b32.xlu0 %v782, 40
      %v2012 = vpop.permute.xlu0 %2011
      %2013 = vrot.lane.b32.xlu0 %v791, 40
      %v2014 = vpop.permute.xlu0 %2013
      %2015 = vrot.lane.b32.xlu0 %v800, 40
      %v2016 = vpop.permute.xlu0 %2015
      %2017 = vrot.lane.b32.xlu0 %v809, 40
      %v2018 = vpop.permute.xlu0 %2017
      %2019 = vrot.lane.b32.xlu0 %v818, 40
      %v2020 = vpop.permute.xlu0 %2019
      %2021 = vrot.lane.b32.xlu0 %v827, 40
      %v2022 = vpop.permute.xlu0 %2021
      %2023 = vrot.lane.b32.xlu0 %v836, 40
      %v2024 = vpop.permute.xlu0 %2023
      %2025 = vrot.lane.b32.xlu0 %v845, 40
      %v2026 = vpop.permute.xlu0 %2025
      %2027 = vrot.lane.b32.xlu0 %v854, 40
      %v2028 = vpop.permute.xlu0 %2027
      %2029 = vrot.lane.b32.xlu0 %v863, 40
      %v2030 = vpop.permute.xlu0 %2029
      %2031 = vrot.lane.b32.xlu0 %v872, 40
      %v2032 = vpop.permute.xlu0 %2031
      %2033 = vrot.lane.b32.xlu0 %v881, 40
      %v2034 = vpop.permute.xlu0 %2033
      %2035 = vrot.lane.b32.xlu0 %v1724, 40
      %v2036 = vpop.permute.xlu0 %2035
      %2037 = vrot.lane.b32.xlu0 %v1960, 40
      %v2038 = vpop.permute.xlu0 %2037
      %2039 = vrot.lane.b32.xlu0 %v1969, 40
      %v2040 = vpop.permute.xlu0 %2039
      %2041 = vrot.lane.b32.xlu0 %v1978, 40
      %v2042 = vpop.permute.xlu0 %2041
      %2043 = vrot.lane.b32.xlu0 %v1977, 40
      %v2044 = vpop.permute.xlu0 %2043
      %v2046 = vunpack.c.l.b16 %v378
      %v2047 = vpack.c.b16 %v2046, %v2046
      %v2048 = vrot.slane %v1949, 5
      %v2049 = vsel %vm951, %v1794, %v2048
      %v2050 = vrot.slane %v1950, 5
      %v2051 = vsel %vm951, %v2048, %v2050
      %v2052 = vrot.slane %v1951, 5
      %v2053 = vsel %vm951, %v2050, %v2052
      %v2054 = vrot.slane %v2047, 5
      %v2055 = vsel %vm951, %v2052, %v2054
      %2056 = vrot.lane.b32.xlu0 %v959, 44
      %v2057 = vpop.permute.xlu0 %2056
      %2058 = vrot.lane.b32.xlu0 %v962, 44
      %v2059 = vpop.permute.xlu0 %2058
      %2060 = vrot.lane.b32.xlu0 %v964, 44
      %v2061 = vpop.permute.xlu0 %2060
      %2062 = vrot.lane.b32.xlu0 %v966, 44
      %v2063 = vpop.permute.xlu0 %2062
      %2064 = vrot.lane.b32.xlu0 %v968, 44
      %v2065 = vpop.permute.xlu0 %2064
      %2066 = vrot.lane.b32.xlu0 %v970, 44
      %v2067 = vpop.permute.xlu0 %2066
      %2068 = vrot.lane.b32.xlu0 %v972, 44
      %v2069 = vpop.permute.xlu0 %2068
      %2070 = vrot.lane.b32.xlu0 %v974, 44
      %v2071 = vpop.permute.xlu0 %2070
      %2072 = vrot.lane.b32.xlu0 %v976, 44
      %v2073 = vpop.permute.xlu0 %2072
      %2074 = vrot.lane.b32.xlu0 %v978, 44
      %v2075 = vpop.permute.xlu0 %2074
      %2076 = vrot.lane.b32.xlu0 %v980, 44
      %v2077 = vpop.permute.xlu0 %2076
      %2078 = vrot.lane.b32.xlu0 %v982, 44
      %v2079 = vpop.permute.xlu0 %2078
      %2080 = vrot.lane.b32.xlu0 %v984, 44
      %v2081 = vpop.permute.xlu0 %2080
      %2082 = vrot.lane.b32.xlu0 %v986, 44
      %v2083 = vpop.permute.xlu0 %2082
      %2084 = vrot.lane.b32.xlu0 %v988, 44
      %v2085 = vpop.permute.xlu0 %2084
      %2086 = vrot.lane.b32.xlu0 %v990, 44
      %v2087 = vpop.permute.xlu0 %2086
      %2088 = vrot.lane.b32.xlu0 %v992, 44
      %v2089 = vpop.permute.xlu0 %2088
      %2090 = vrot.lane.b32.xlu0 %v994, 44
      %v2091 = vpop.permute.xlu0 %2090
      %2092 = vrot.lane.b32.xlu0 %v996, 44
      %v2093 = vpop.permute.xlu0 %2092
      %2094 = vrot.lane.b32.xlu0 %v998, 44
      %v2095 = vpop.permute.xlu0 %2094
      %2096 = vrot.lane.b32.xlu0 %v1000, 44
      %v2097 = vpop.permute.xlu0 %2096
      %2098 = vrot.lane.b32.xlu0 %v1002, 44
      %v2099 = vpop.permute.xlu0 %2098
      %2100 = vrot.lane.b32.xlu0 %v1004, 44
      %v2101 = vpop.permute.xlu0 %2100
      %2102 = vrot.lane.b32.xlu0 %v1006, 44
      %v2103 = vpop.permute.xlu0 %2102
      %2104 = vrot.lane.b32.xlu0 %v1008, 44
      %v2105 = vpop.permute.xlu0 %2104
      %2106 = vrot.lane.b32.xlu0 %v1010, 44
      %v2107 = vpop.permute.xlu0 %2106
      %2108 = vrot.lane.b32.xlu0 %v1012, 44
      %v2109 = vpop.permute.xlu0 %2108
      %2110 = vrot.lane.b32.xlu0 %v1014, 44
      %v2111 = vpop.permute.xlu0 %2110
      %2112 = vrot.lane.b32.xlu0 %v1795, 44
      %v2113 = vpop.permute.xlu0 %2112
      %2114 = vrot.lane.b32.xlu0 %v2049, 44
      %v2115 = vpop.permute.xlu0 %2114
      %2116 = vrot.lane.b32.xlu0 %v2051, 44
      %v2117 = vpop.permute.xlu0 %2116
      %2118 = vrot.lane.b32.xlu0 %v2053, 44
      %v2119 = vpop.permute.xlu0 %2118
      %2120 = vrot.lane.b32.xlu0 %v2055, 44
      %v2121 = vpop.permute.xlu0 %2120
      %v2124 = vunpack.c.l.b16 %v379
      %v2125 = vunpack.c.l.b16 %v380
      %v2126 = vpack.c.b16 %v474, %v2124
      %v2127 = vpack.c.b16 %v2125, %v2125
      %2128 = vrot.lane.b32.xlu0 %v2126, 48
      %v2129 = vpop.permute.xlu0 %2128
      %2130 = vrot.lane.b32.xlu0 %v567, 48
      %v2131 = vpop.permute.xlu0 %2130
      %2132 = vrot.lane.b32.xlu0 %v568, 48
      %v2133 = vpop.permute.xlu0 %2132
      %2134 = vrot.lane.b32.xlu0 %v569, 48
      %v2135 = vpop.permute.xlu0 %2134
      %2136 = vrot.lane.b32.xlu0 %v570, 48
      %v2137 = vpop.permute.xlu0 %2136
      %2138 = vrot.lane.b32.xlu0 %v571, 48
      %v2139 = vpop.permute.xlu0 %2138
      %2140 = vrot.lane.b32.xlu0 %v572, 48
      %v2141 = vpop.permute.xlu0 %2140
      %2142 = vrot.lane.b32.xlu0 %v573, 48
      %v2143 = vpop.permute.xlu0 %2142
      %2144 = vrot.lane.b32.xlu0 %v574, 48
      %v2145 = vpop.permute.xlu0 %2144
      %2146 = vrot.lane.b32.xlu0 %v575, 48
      %v2147 = vpop.permute.xlu0 %2146
      %2148 = vrot.lane.b32.xlu0 %v576, 48
      %v2149 = vpop.permute.xlu0 %2148
      %2150 = vrot.lane.b32.xlu0 %v577, 48
      %v2151 = vpop.permute.xlu0 %2150
      %2152 = vrot.lane.b32.xlu0 %v578, 48
      %v2153 = vpop.permute.xlu0 %2152
      %2154 = vrot.lane.b32.xlu0 %v579, 48
      %v2155 = vpop.permute.xlu0 %2154
      %2156 = vrot.lane.b32.xlu0 %v580, 48
      %v2157 = vpop.permute.xlu0 %2156
      %2158 = vrot.lane.b32.xlu0 %v581, 48
      %v2159 = vpop.permute.xlu0 %2158
      %2160 = vrot.lane.b32.xlu0 %v582, 48
      %v2161 = vpop.permute.xlu0 %2160
      %2162 = vrot.lane.b32.xlu0 %v583, 48
      %v2163 = vpop.permute.xlu0 %2162
      %2164 = vrot.lane.b32.xlu0 %v584, 48
      %v2165 = vpop.permute.xlu0 %2164
      %2166 = vrot.lane.b32.xlu0 %v585, 48
      %v2167 = vpop.permute.xlu0 %2166
      %2168 = vrot.lane.b32.xlu0 %v586, 48
      %v2169 = vpop.permute.xlu0 %2168
      %2170 = vrot.lane.b32.xlu0 %v587, 48
      %v2171 = vpop.permute.xlu0 %2170
      %2172 = vrot.lane.b32.xlu0 %v588, 48
      %v2173 = vpop.permute.xlu0 %2172
      %2174 = vrot.lane.b32.xlu0 %v589, 48
      %v2175 = vpop.permute.xlu0 %2174
      %2176 = vrot.lane.b32.xlu0 %v590, 48
      %v2177 = vpop.permute.xlu0 %2176
      %2178 = vrot.lane.b32.xlu0 %v591, 48
      %v2179 = vpop.permute.xlu0 %2178
      %2180 = vrot.lane.b32.xlu0 %v592, 48
      %v2181 = vpop.permute.xlu0 %2180
      %2182 = vrot.lane.b32.xlu0 %v593, 48
      %v2183 = vpop.permute.xlu0 %2182
      %2184 = vrot.lane.b32.xlu0 %v1715, 48
      %v2185 = vpop.permute.xlu0 %2184
      %2186 = vrot.lane.b32.xlu0 %v1949, 48
      %v2187 = vpop.permute.xlu0 %2186
      %2188 = vrot.lane.b32.xlu0 %v1950, 48
      %v2189 = vpop.permute.xlu0 %2188
      %2190 = vrot.lane.b32.xlu0 %v1951, 48
      %v2191 = vpop.permute.xlu0 %2190
      %2192 = vrot.lane.b32.xlu0 %v2127, 48
      %v2193 = vpop.permute.xlu0 %2192
      %v2194 = vpack.c.b16 %v2125, %v1877
      %v2196 = vshrl.u32 %v1879, 16
      %v2198 = vrot.slane %v2196, 4
      %v2199 = vshll.u32 %v1879, 16
      %v2201 = vrot.slane %v2199, 5
      %v2202 = vor.u32 %v2198, %v2201
      %v2203 = vsel %vm594, %v1441, %v2202
      %v2205 = vshrl.u32 %v1880, 16
      %v2207 = vrot.slane %v2205, 4
      %v2208 = vshll.u32 %v1880, 16
      %v2210 = vrot.slane %v2208, 5
      %v2211 = vor.u32 %v2207, %v2210
      %v2212 = vsel %vm594, %v2202, %v2211
      %v2214 = vshrl.u32 %v1881, 16
      %v2216 = vrot.slane %v2214, 4
      %v2217 = vshll.u32 %v1881, 16
      %v2219 = vrot.slane %v2217, 5
      %v2220 = vor.u32 %v2216, %v2219
      %v2221 = vsel %vm594, %v2211, %v2220
      %v2223 = vshrl.u32 %v2194, 16
      %v2225 = vrot.slane %v2223, 4
      %v2226 = vshll.u32 %v2194, 16
      %v2228 = vrot.slane %v2226, 5
      %v2229 = vor.u32 %v2225, %v2228
      %v2230 = vsel %vm594, %v2220, %v2229
      %2231 = vrot.lane.b32.xlu0 %v1198, 52
      %v2232 = vpop.permute.xlu0 %2231
      %2233 = vrot.lane.b32.xlu0 %v1208, 52
      %v2234 = vpop.permute.xlu0 %2233
      %2235 = vrot.lane.b32.xlu0 %v1217, 52
      %v2236 = vpop.permute.xlu0 %2235
      %2237 = vrot.lane.b32.xlu0 %v1226, 52
      %v2238 = vpop.permute.xlu0 %2237
      %2239 = vrot.lane.b32.xlu0 %v1235, 52
      %v2240 = vpop.permute.xlu0 %2239
      %2241 = vrot.lane.b32.xlu0 %v1244, 52
      %v2242 = vpop.permute.xlu0 %2241
      %2243 = vrot.lane.b32.xlu0 %v1253, 52
      %v2244 = vpop.permute.xlu0 %2243
      %2245 = vrot.lane.b32.xlu0 %v1262, 52
      %v2246 = vpop.permute.xlu0 %2245
      %2247 = vrot.lane.b32.xlu0 %v1271, 52
      %v2248 = vpop.permute.xlu0 %2247
      %2249 = vrot.lane.b32.xlu0 %v1280, 52
      %v2250 = vpop.permute.xlu0 %2249
      %2251 = vrot.lane.b32.xlu0 %v1289, 52
      %v2252 = vpop.permute.xlu0 %2251
      %2253 = vrot.lane.b32.xlu0 %v1298, 52
      %v2254 = vpop.permute.xlu0 %2253
      %2255 = vrot.lane.b32.xlu0 %v1307, 52
      %v2256 = vpop.permute.xlu0 %2255
      %2257 = vrot.lane.b32.xlu0 %v1316, 52
      %v2258 = vpop.permute.xlu0 %2257
      %2259 = vrot.lane.b32.xlu0 %v1325, 52
      %v2260 = vpop.permute.xlu0 %2259
      %2261 = vrot.lane.b32.xlu0 %v1334, 52
      %v2262 = vpop.permute.xlu0 %2261
      %2263 = vrot.lane.b32.xlu0 %v1343, 52
      %v2264 = vpop.permute.xlu0 %2263
      %2265 = vrot.lane.b32.xlu0 %v1352, 52
      %v2266 = vpop.permute.xlu0 %2265
      %2267 = vrot.lane.b32.xlu0 %v1361, 52
      %v2268 = vpop.permute.xlu0 %2267
      %2269 = vrot.lane.b32.xlu0 %v1370, 52
      %v2270 = vpop.permute.xlu0 %2269
      %2271 = vrot.lane.b32.xlu0 %v1379, 52
      %v2272 = vpop.permute.xlu0 %2271
      %2273 = vrot.lane.b32.xlu0 %v1388, 52
      %v2274 = vpop.permute.xlu0 %2273
      %2275 = vrot.lane.b32.xlu0 %v1397, 52
      %v2276 = vpop.permute.xlu0 %2275
      %2277 = vrot.lane.b32.xlu0 %v1406, 52
      %v2278 = vpop.permute.xlu0 %2277
      %2279 = vrot.lane.b32.xlu0 %v1415, 52
      %v2280 = vpop.permute.xlu0 %2279
      %2281 = vrot.lane.b32.xlu0 %v1424, 52
      %v2282 = vpop.permute.xlu0 %2281
      %2283 = vrot.lane.b32.xlu0 %v1433, 52
      %v2284 = vpop.permute.xlu0 %2283
      %2285 = vrot.lane.b32.xlu0 %v1442, 52
      %v2286 = vpop.permute.xlu0 %2285
      %2287 = vrot.lane.b32.xlu0 %v2203, 52
      %v2288 = vpop.permute.xlu0 %2287
      %2289 = vrot.lane.b32.xlu0 %v2212, 52
      %v2290 = vpop.permute.xlu0 %2289
      %2291 = vrot.lane.b32.xlu0 %v2221, 52
      %v2292 = vpop.permute.xlu0 %2291
      %2293 = vrot.lane.b32.xlu0 %v2230, 52
      %v2294 = vpop.permute.xlu0 %2293
      %2295 = vrot.lane.b32.xlu0 %v2229, 52
      %v2296 = vpop.permute.xlu0 %2295
      %v2298 = vunpack.c.l.b16 %v381
      %v2299 = vpack.c.b16 %v2298, %v2298
      %v2300 = vrot.slane %v1879, 5
      %v2301 = vsel %vm951, %v1573, %v2300
      %v2302 = vrot.slane %v1880, 5
      %v2303 = vsel %vm951, %v2300, %v2302
      %v2304 = vrot.slane %v1881, 5
      %v2305 = vsel %vm951, %v2302, %v2304
      %v2306 = vrot.slane %v2194, 5
      %v2307 = vsel %vm951, %v2304, %v2306
      %v2308 = vrot.slane %v2299, 5
      %v2309 = vsel %vm951, %v2306, %v2308
      %2310 = vrot.lane.b32.xlu0 %v1519, 56
      %v2311 = vpop.permute.xlu0 %2310
      %2312 = vrot.lane.b32.xlu0 %v1522, 56
      %v2313 = vpop.permute.xlu0 %2312
      %2314 = vrot.lane.b32.xlu0 %v1524, 56
      %v2315 = vpop.permute.xlu0 %2314
      %2316 = vrot.lane.b32.xlu0 %v1526, 56
      %v2317 = vpop.permute.xlu0 %2316
      %2318 = vrot.lane.b32.xlu0 %v1528, 56
      %v2319 = vpop.permute.xlu0 %2318
      %2320 = vrot.lane.b32.xlu0 %v1530, 56
      %v2321 = vpop.permute.xlu0 %2320
      %2322 = vrot.lane.b32.xlu0 %v1532, 56
      %v2323 = vpop.permute.xlu0 %2322
      %2324 = vrot.lane.b32.xlu0 %v1534, 56
      %v2325 = vpop.permute.xlu0 %2324
      %2326 = vrot.lane.b32.xlu0 %v1536, 56
      %v2327 = vpop.permute.xlu0 %2326
      %2328 = vrot.lane.b32.xlu0 %v1538, 56
      %v2329 = vpop.permute.xlu0 %2328
      %2330 = vrot.lane.b32.xlu0 %v1540, 56
      %v2331 = vpop.permute.xlu0 %2330
      %2332 = vrot.lane.b32.xlu0 %v1542, 56
      %v2333 = vpop.permute.xlu0 %2332
      %2334 = vrot.lane.b32.xlu0 %v1544, 56
      %v2335 = vpop.permute.xlu0 %2334
      %2336 = vrot.lane.b32.xlu0 %v1546, 56
      %v2337 = vpop.permute.xlu0 %2336
      %2338 = vrot.lane.b32.xlu0 %v1548, 56
      %v2339 = vpop.permute.xlu0 %2338
      %2340 = vrot.lane.b32.xlu0 %v1550, 56
      %v2341 = vpop.permute.xlu0 %2340
      %2342 = vrot.lane.b32.xlu0 %v1552, 56
      %v2343 = vpop.permute.xlu0 %2342
      %2344 = vrot.lane.b32.xlu0 %v1554, 56
      %v2345 = vpop.permute.xlu0 %2344
      %2346 = vrot.lane.b32.xlu0 %v1556, 56
      %v2347 = vpop.permute.xlu0 %2346
      %2348 = vrot.lane.b32.xlu0 %v1558, 56
      %v2349 = vpop.permute.xlu0 %2348
      %2350 = vrot.lane.b32.xlu0 %v1560, 56
      %v2351 = vpop.permute.xlu0 %2350
      %2352 = vrot.lane.b32.xlu0 %v1562, 56
      %v2353 = vpop.permute.xlu0 %2352
      %2354 = vrot.lane.b32.xlu0 %v1564, 56
      %v2355 = vpop.permute.xlu0 %2354
      %2356 = vrot.lane.b32.xlu0 %v1566, 56
      %v2357 = vpop.permute.xlu0 %2356
      %2358 = vrot.lane.b32.xlu0 %v1568, 56
      %v2359 = vpop.permute.xlu0 %2358
      %2360 = vrot.lane.b32.xlu0 %v1570, 56
      %v2361 = vpop.permute.xlu0 %2360
      %2362 = vrot.lane.b32.xlu0 %v1572, 56
      %v2363 = vpop.permute.xlu0 %2362
      %2364 = vrot.lane.b32.xlu0 %v1574, 56
      %v2365 = vpop.permute.xlu0 %2364
      %2366 = vrot.lane.b32.xlu0 %v2301, 56
      %v2367 = vpop.permute.xlu0 %2366
      %2368 = vrot.lane.b32.xlu0 %v2303, 56
      %v2369 = vpop.permute.xlu0 %2368
      %2370 = vrot.lane.b32.xlu0 %v2305, 56
      %v2371 = vpop.permute.xlu0 %2370
      %2372 = vrot.lane.b32.xlu0 %v2307, 56
      %v2373 = vpop.permute.xlu0 %2372
      %2374 = vrot.lane.b32.xlu0 %v2309, 56
      %v2375 = vpop.permute.xlu0 %2374
      %v2378 = vunpack.c.l.b16 %v382
      %v2379 = vunpack.c.l.b16 %v383
      %v2380 = vpack.c.b16 %v475, %v2378
      %v2381 = vpack.c.b16 %v2379, %v2379
      %2382 = vrot.lane.b32.xlu0 %v2380, 60
      %v2383 = vpop.permute.xlu0 %2382
      %2384 = vrot.lane.b32.xlu0 %v535, 60
      %v2385 = vpop.permute.xlu0 %2384
      %2386 = vrot.lane.b32.xlu0 %v536, 60
      %v2387 = vpop.permute.xlu0 %2386
      %2388 = vrot.lane.b32.xlu0 %v537, 60
      %v2389 = vpop.permute.xlu0 %2388
      %2390 = vrot.lane.b32.xlu0 %v538, 60
      %v2391 = vpop.permute.xlu0 %2390
      %2392 = vrot.lane.b32.xlu0 %v539, 60
      %v2393 = vpop.permute.xlu0 %2392
      %2394 = vrot.lane.b32.xlu0 %v540, 60
      %v2395 = vpop.permute.xlu0 %2394
      %2396 = vrot.lane.b32.xlu0 %v541, 60
      %v2397 = vpop.permute.xlu0 %2396
      %2398 = vrot.lane.b32.xlu0 %v542, 60
      %v2399 = vpop.permute.xlu0 %2398
      %2400 = vrot.lane.b32.xlu0 %v543, 60
      %v2401 = vpop.permute.xlu0 %2400
      %2402 = vrot.lane.b32.xlu0 %v544, 60
      %v2403 = vpop.permute.xlu0 %2402
      %2404 = vrot.lane.b32.xlu0 %v545, 60
      %v2405 = vpop.permute.xlu0 %2404
      %2406 = vrot.lane.b32.xlu0 %v546, 60
      %v2407 = vpop.permute.xlu0 %2406
      %2408 = vrot.lane.b32.xlu0 %v547, 60
      %v2409 = vpop.permute.xlu0 %2408
      %2410 = vrot.lane.b32.xlu0 %v548, 60
      %v2411 = vpop.permute.xlu0 %2410
      %2412 = vrot.lane.b32.xlu0 %v549, 60
      %v2413 = vpop.permute.xlu0 %2412
      %2414 = vrot.lane.b32.xlu0 %v550, 60
      %v2415 = vpop.permute.xlu0 %2414
      %2416 = vrot.lane.b32.xlu0 %v551, 60
      %v2417 = vpop.permute.xlu0 %2416
      %2418 = vrot.lane.b32.xlu0 %v552, 60
      %v2419 = vpop.permute.xlu0 %2418
      %2420 = vrot.lane.b32.xlu0 %v553, 60
      %v2421 = vpop.permute.xlu0 %2420
      %2422 = vrot.lane.b32.xlu0 %v554, 60
      %v2423 = vpop.permute.xlu0 %2422
      %2424 = vrot.lane.b32.xlu0 %v555, 60
      %v2425 = vpop.permute.xlu0 %2424
      %2426 = vrot.lane.b32.xlu0 %v556, 60
      %v2427 = vpop.permute.xlu0 %2426
      %2428 = vrot.lane.b32.xlu0 %v557, 60
      %v2429 = vpop.permute.xlu0 %2428
      %2430 = vrot.lane.b32.xlu0 %v558, 60
      %v2431 = vpop.permute.xlu0 %2430
      %2432 = vrot.lane.b32.xlu0 %v559, 60
      %v2433 = vpop.permute.xlu0 %2432
      %2434 = vrot.lane.b32.xlu0 %v560, 60
      %v2435 = vpop.permute.xlu0 %2434
      %2436 = vrot.lane.b32.xlu0 %v1155, 60
      %v2437 = vpop.permute.xlu0 %2436
      %2438 = vrot.lane.b32.xlu0 %v1879, 60
      %v2439 = vpop.permute.xlu0 %2438
      %2440 = vrot.lane.b32.xlu0 %v1880, 60
      %v2441 = vpop.permute.xlu0 %2440
      %2442 = vrot.lane.b32.xlu0 %v1881, 60
      %v2443 = vpop.permute.xlu0 %2442
      %2444 = vrot.lane.b32.xlu0 %v2194, 60
      %v2445 = vpop.permute.xlu0 %2444
      %2446 = vrot.lane.b32.xlu0 %v2381, 60
      %v2447 = vpop.permute.xlu0 %2446
      %vm2448 = vcmask 31744
      %v2451 = vsel %vm2448, %v529, %v883
      %v2453 = vsel %vm2448, %v530, %v885
      %v2455 = vsel %vm2448, %v531, %v887
      %v2457 = vsel %vm2448, %v532, %v889
      %v2459 = vsel %vm2448, %v533, %v891
      %v2461 = vsel %vm2448, %v534, %v893
      %v2463 = vsel %vm2448, %v535, %v895
      %v2465 = vsel %vm2448, %v536, %v897
      %v2467 = vsel %vm2448, %v537, %v899
      %v2469 = vsel %vm2448, %v538, %v901
      %v2471 = vsel %vm2448, %v539, %v903
      %v2473 = vsel %vm2448, %v540, %v905
      %v2475 = vsel %vm2448, %v541, %v907
      %v2477 = vsel %vm2448, %v542, %v909
      %v2479 = vsel %vm2448, %v543, %v911
      %v2481 = vsel %vm2448, %v544, %v913
      %v2483 = vsel %vm2448, %v545, %v915
      %v2485 = vsel %vm2448, %v546, %v917
      %v2487 = vsel %vm2448, %v547, %v919
      %v2489 = vsel %vm2448, %v548, %v921
      %v2491 = vsel %vm2448, %v549, %v923
      %v2493 = vsel %vm2448, %v550, %v925
      %v2495 = vsel %vm2448, %v551, %v927
      %v2497 = vsel %vm2448, %v552, %v929
      %v2499 = vsel %vm2448, %v553, %v931
      %v2501 = vsel %vm2448, %v554, %v933
      %v2503 = vsel %vm2448, %v555, %v935
      %v2505 = vsel %vm2448, %v556, %v937
      %v2507 = vsel %vm2448, %v557, %v939
      %v2509 = vsel %vm2448, %v558, %v941
      %v2511 = vsel %vm2448, %v559, %v943
      %v2513 = vsel %vm2448, %v560, %v945
      %v2516 = vsel %vm2448, %v561, %v947
      %vm2517 = vcmask 64512
      %v2519 = vsel %vm2517, %v2451, %v1018
      %v2521 = vsel %vm2517, %v2453, %v1020
      %v2523 = vsel %vm2517, %v2455, %v1022
      %v2525 = vsel %vm2517, %v2457, %v1024
      %v2527 = vsel %vm2517, %v2459, %v1026
      %v2529 = vsel %vm2517, %v2461, %v1028
      %v2531 = vsel %vm2517, %v2463, %v1030
      %v2533 = vsel %vm2517, %v2465, %v1032
      %v2535 = vsel %vm2517, %v2467, %v1034
      %v2537 = vsel %vm2517, %v2469, %v1036
      %v2539 = vsel %vm2517, %v2471, %v1038
      %v2541 = vsel %vm2517, %v2473, %v1040
      %v2543 = vsel %vm2517, %v2475, %v1042
      %v2545 = vsel %vm2517, %v2477, %v1044
      %v2547 = vsel %vm2517, %v2479, %v1046
      %v2549 = vsel %vm2517, %v2481, %v1048
      %v2551 = vsel %vm2517, %v2483, %v1050
      %v2553 = vsel %vm2517, %v2485, %v1052
      %v2555 = vsel %vm2517, %v2487, %v1054
      %v2557 = vsel %vm2517, %v2489, %v1056
      %v2559 = vsel %vm2517, %v2491, %v1058
      %v2561 = vsel %vm2517, %v2493, %v1060
      %v2563 = vsel %vm2517, %v2495, %v1062
      %v2565 = vsel %vm2517, %v2497, %v1064
      %v2567 = vsel %vm2517, %v2499, %v1066
      %v2569 = vsel %vm2517, %v2501, %v1068
      %v2571 = vsel %vm2517, %v2503, %v1070
      %v2573 = vsel %vm2517, %v2505, %v1072
      %v2575 = vsel %vm2517, %v2507, %v1074
      %v2577 = vsel %vm2517, %v2509, %v1076
      %v2579 = vsel %vm2517, %v2511, %v1078
      %v2581 = vsel %vm2517, %v2513, %v1080
      %v2583 = vsel %vm2517, %v2516, %v1082
      %vm2584 = vcmask 97280
      %v2586 = vsel %vm2584, %v2519, %v1090
      %v2588 = vsel %vm2584, %v2521, %v1092
      %v2590 = vsel %vm2584, %v2523, %v1094
      %v2592 = vsel %vm2584, %v2525, %v1096
      %v2594 = vsel %vm2584, %v2527, %v1098
      %v2596 = vsel %vm2584, %v2529, %v1100
      %v2598 = vsel %vm2584, %v2531, %v1102
      %v2600 = vsel %vm2584, %v2533, %v1104
      %v2602 = vsel %vm2584, %v2535, %v1106
      %v2604 = vsel %vm2584, %v2537, %v1108
      %v2606 = vsel %vm2584, %v2539, %v1110
      %v2608 = vsel %vm2584, %v2541, %v1112
      %v2610 = vsel %vm2584, %v2543, %v1114
      %v2612 = vsel %vm2584, %v2545, %v1116
      %v2614 = vsel %vm2584, %v2547, %v1118
      %v2616 = vsel %vm2584, %v2549, %v1120
      %v2618 = vsel %vm2584, %v2551, %v1122
      %v2620 = vsel %vm2584, %v2553, %v1124
      %v2622 = vsel %vm2584, %v2555, %v1126
      %v2624 = vsel %vm2584, %v2557, %v1128
      %v2626 = vsel %vm2584, %v2559, %v1130
      %v2628 = vsel %vm2584, %v2561, %v1132
      %v2630 = vsel %vm2584, %v2563, %v1134
      %v2632 = vsel %vm2584, %v2565, %v1136
      %v2634 = vsel %vm2584, %v2567, %v1138
      %v2636 = vsel %vm2584, %v2569, %v1140
      %v2638 = vsel %vm2584, %v2571, %v1142
      %v2640 = vsel %vm2584, %v2573, %v1144
      %v2642 = vsel %vm2584, %v2575, %v1146
      %v2644 = vsel %vm2584, %v2577, %v1148
      %v2646 = vsel %vm2584, %v2579, %v1150
      %v2648 = vsel %vm2584, %v2581, %v1152
      %v2650 = vsel %vm2584, %v2583, %v1154
      %vm2651 = vcmask 130048
      %v2653 = vsel %vm2651, %v2586, %v1444
      %v2655 = vsel %vm2651, %v2588, %v1446
      %v2657 = vsel %vm2651, %v2590, %v1448
      %v2659 = vsel %vm2651, %v2592, %v1450
      %v2661 = vsel %vm2651, %v2594, %v1452
      %v2663 = vsel %vm2651, %v2596, %v1454
      %v2665 = vsel %vm2651, %v2598, %v1456
      %v2667 = vsel %vm2651, %v2600, %v1458
      %v2669 = vsel %vm2651, %v2602, %v1460
      %v2671 = vsel %vm2651, %v2604, %v1462
      %v2673 = vsel %vm2651, %v2606, %v1464
      %v2675 = vsel %vm2651, %v2608, %v1466
      %v2677 = vsel %vm2651, %v2610, %v1468
      %v2679 = vsel %vm2651, %v2612, %v1470
      %v2681 = vsel %vm2651, %v2614, %v1472
      %v2683 = vsel %vm2651, %v2616, %v1474
      %v2685 = vsel %vm2651, %v2618, %v1476
      %v2687 = vsel %vm2651, %v2620, %v1478
      %v2689 = vsel %vm2651, %v2622, %v1480
      %v2691 = vsel %vm2651, %v2624, %v1482
      %v2693 = vsel %vm2651, %v2626, %v1484
      %v2695 = vsel %vm2651, %v2628, %v1486
      %v2697 = vsel %vm2651, %v2630, %v1488
      %v2699 = vsel %vm2651, %v2632, %v1490
      %v2701 = vsel %vm2651, %v2634, %v1492
      %v2703 = vsel %vm2651, %v2636, %v1494
      %v2705 = vsel %vm2651, %v2638, %v1496
      %v2707 = vsel %vm2651, %v2640, %v1498
      %v2709 = vsel %vm2651, %v2642, %v1500
      %v2711 = vsel %vm2651, %v2644, %v1502
      %v2713 = vsel %vm2651, %v2646, %v1504
      %v2715 = vsel %vm2651, %v2648, %v1506
      %v2717 = vsel %vm2651, %v2650, %v1508
      %vm2718 = vcmask 162816
      %v2720 = vsel %vm2718, %v2653, %v1578
      %v2722 = vsel %vm2718, %v2655, %v1580
      %v2724 = vsel %vm2718, %v2657, %v1582
      %v2726 = vsel %vm2718, %v2659, %v1584
      %v2728 = vsel %vm2718, %v2661, %v1586
      %v2730 = vsel %vm2718, %v2663, %v1588
      %v2732 = vsel %vm2718, %v2665, %v1590
      %v2734 = vsel %vm2718, %v2667, %v1592
      %v2736 = vsel %vm2718, %v2669, %v1594
      %v2738 = vsel %vm2718, %v2671, %v1596
      %v2740 = vsel %vm2718, %v2673, %v1598
      %v2742 = vsel %vm2718, %v2675, %v1600
      %v2744 = vsel %vm2718, %v2677, %v1602
      %v2746 = vsel %vm2718, %v2679, %v1604
      %v2748 = vsel %vm2718, %v2681, %v1606
      %v2750 = vsel %vm2718, %v2683, %v1608
      %v2752 = vsel %vm2718, %v2685, %v1610
      %v2754 = vsel %vm2718, %v2687, %v1612
      %v2756 = vsel %vm2718, %v2689, %v1614
      %v2758 = vsel %vm2718, %v2691, %v1616
      %v2760 = vsel %vm2718, %v2693, %v1618
      %v2762 = vsel %vm2718, %v2695, %v1620
      %v2764 = vsel %vm2718, %v2697, %v1622
      %v2766 = vsel %vm2718, %v2699, %v1624
      %v2768 = vsel %vm2718, %v2701, %v1626
      %v2770 = vsel %vm2718, %v2703, %v1628
      %v2772 = vsel %vm2718, %v2705, %v1630
      %v2774 = vsel %vm2718, %v2707, %v1632
      %v2776 = vsel %vm2718, %v2709, %v1634
      %v2778 = vsel %vm2718, %v2711, %v1636
      %v2780 = vsel %vm2718, %v2713, %v1638
      %v2782 = vsel %vm2718, %v2715, %v1640
      %v2784 = vsel %vm2718, %v2717, %v1642
      %vm2785 = vcmask 195584
      %v2787 = vsel %vm2785, %v2720, %v1650
      %v2789 = vsel %vm2785, %v2722, %v1652
      %v2791 = vsel %vm2785, %v2724, %v1654
      %v2793 = vsel %vm2785, %v2726, %v1656
      %v2795 = vsel %vm2785, %v2728, %v1658
      %v2797 = vsel %vm2785, %v2730, %v1660
      %v2799 = vsel %vm2785, %v2732, %v1662
      %v2801 = vsel %vm2785, %v2734, %v1664
      %v2803 = vsel %vm2785, %v2736, %v1666
      %v2805 = vsel %vm2785, %v2738, %v1668
      %v2807 = vsel %vm2785, %v2740, %v1670
      %v2809 = vsel %vm2785, %v2742, %v1672
      %v2811 = vsel %vm2785, %v2744, %v1674
      %v2813 = vsel %vm2785, %v2746, %v1676
      %v2815 = vsel %vm2785, %v2748, %v1678
      %v2817 = vsel %vm2785, %v2750, %v1680
      %v2819 = vsel %vm2785, %v2752, %v1682
      %v2821 = vsel %vm2785, %v2754, %v1684
      %v2823 = vsel %vm2785, %v2756, %v1686
      %v2825 = vsel %vm2785, %v2758, %v1688
      %v2827 = vsel %vm2785, %v2760, %v1690
      %v2829 = vsel %vm2785, %v2762, %v1692
      %v2831 = vsel %vm2785, %v2764, %v1694
      %v2833 = vsel %vm2785, %v2766, %v1696
      %v2835 = vsel %vm2785, %v2768, %v1698
      %v2837 = vsel %vm2785, %v2770, %v1700
      %v2839 = vsel %vm2785, %v2772, %v1702
      %v2841 = vsel %vm2785, %v2774, %v1704
      %v2843 = vsel %vm2785, %v2776, %v1706
      %v2845 = vsel %vm2785, %v2778, %v1708
      %v2847 = vsel %vm2785, %v2780, %v1710
      %v2849 = vsel %vm2785, %v2782, %v1712
      %v2851 = vsel %vm2785, %v2784, %v1714
      %vm2852 = vcmask 228352
      %v2854 = vsel %vm2852, %v2787, %v1726
      %v2856 = vsel %vm2852, %v2789, %v1728
      %v2858 = vsel %vm2852, %v2791, %v1730
      %v2860 = vsel %vm2852, %v2793, %v1732
      %v2862 = vsel %vm2852, %v2795, %v1734
      %v2864 = vsel %vm2852, %v2797, %v1736
      %v2866 = vsel %vm2852, %v2799, %v1738
      %v2868 = vsel %vm2852, %v2801, %v1740
      %v2870 = vsel %vm2852, %v2803, %v1742
      %v2872 = vsel %vm2852, %v2805, %v1744
      %v2874 = vsel %vm2852, %v2807, %v1746
      %v2876 = vsel %vm2852, %v2809, %v1748
      %v2878 = vsel %vm2852, %v2811, %v1750
      %v2880 = vsel %vm2852, %v2813, %v1752
      %v2882 = vsel %vm2852, %v2815, %v1754
      %v2884 = vsel %vm2852, %v2817, %v1756
      %v2886 = vsel %vm2852, %v2819, %v1758
      %v2888 = vsel %vm2852, %v2821, %v1760
      %v2890 = vsel %vm2852, %v2823, %v1762
      %v2892 = vsel %vm2852, %v2825, %v1764
      %v2894 = vsel %vm2852, %v2827, %v1766
      %v2896 = vsel %vm2852, %v2829, %v1768
      %v2898 = vsel %vm2852, %v2831, %v1770
      %v2900 = vsel %vm2852, %v2833, %v1772
      %v2902 = vsel %vm2852, %v2835, %v1774
      %v2904 = vsel %vm2852, %v2837, %v1776
      %v2906 = vsel %vm2852, %v2839, %v1778
      %v2908 = vsel %vm2852, %v2841, %v1780
      %v2910 = vsel %vm2852, %v2843, %v1782
      %v2912 = vsel %vm2852, %v2845, %v1784
      %v2914 = vsel %vm2852, %v2847, %v1786
      %v2916 = vsel %vm2852, %v2849, %v1788
      %v2918 = vsel %vm2852, %v2851, %v1790
      %vm2919 = vcmask 261120
      %v2921 = vsel %vm2919, %v2854, %v1799
      %v2923 = vsel %vm2919, %v2856, %v1801
      %v2925 = vsel %vm2919, %v2858, %v1803
      %v2927 = vsel %vm2919, %v2860, %v1805
      %v2929 = vsel %vm2919, %v2862, %v1807
      %v2931 = vsel %vm2919, %v2864, %v1809
      %v2933 = vsel %vm2919, %v2866, %v1811
      %v2935 = vsel %vm2919, %v2868, %v1813
      %v2937 = vsel %vm2919, %v2870, %v1815
      %v2939 = vsel %vm2919, %v2872, %v1817
      %v2941 = vsel %vm2919, %v2874, %v1819
      %v2943 = vsel %vm2919, %v2876, %v1821
      %v2945 = vsel %vm2919, %v2878, %v1823
      %v2947 = vsel %vm2919, %v2880, %v1825
      %v2949 = vsel %vm2919, %v2882, %v1827
      %v2951 = vsel %vm2919, %v2884, %v1829
      %v2953 = vsel %vm2919, %v2886, %v1831
      %v2955 = vsel %vm2919, %v2888, %v1833
      %v2957 = vsel %vm2919, %v2890, %v1835
      %v2959 = vsel %vm2919, %v2892, %v1837
      %v2961 = vsel %vm2919, %v2894, %v1839
      %v2963 = vsel %vm2919, %v2896, %v1841
      %v2965 = vsel %vm2919, %v2898, %v1843
      %v2967 = vsel %vm2919, %v2900, %v1845
      %v2969 = vsel %vm2919, %v2902, %v1847
      %v2971 = vsel %vm2919, %v2904, %v1849
      %v2973 = vsel %vm2919, %v2906, %v1851
      %v2975 = vsel %vm2919, %v2908, %v1853
      %v2977 = vsel %vm2919, %v2910, %v1855
      %v2979 = vsel %vm2919, %v2912, %v1857
      %v2981 = vsel %vm2919, %v2914, %v1859
      %v2983 = vsel %vm2919, %v2916, %v1861
      %v2985 = vsel %vm2919, %v2918, %v1863
      %vm2986 = vcmask 293888
      %v2988 = vsel %vm2986, %v2921, %v1884
      %v2990 = vsel %vm2986, %v2923, %v1886
      %v2992 = vsel %vm2986, %v2925, %v1888
      %v2994 = vsel %vm2986, %v2927, %v1890
      %v2996 = vsel %vm2986, %v2929, %v1892
      %v2998 = vsel %vm2986, %v2931, %v1894
      %v3000 = vsel %vm2986, %v2933, %v1896
      %v3002 = vsel %vm2986, %v2935, %v1898
      %v3004 = vsel %vm2986, %v2937, %v1900
      %v3006 = vsel %vm2986, %v2939, %v1902
      %v3008 = vsel %vm2986, %v2941, %v1904
      %v3010 = vsel %vm2986, %v2943, %v1906
      %v3012 = vsel %vm2986, %v2945, %v1908
      %v3014 = vsel %vm2986, %v2947, %v1910
      %v3016 = vsel %vm2986, %v2949, %v1912
      %v3018 = vsel %vm2986, %v2951, %v1914
      %v3020 = vsel %vm2986, %v2953, %v1916
      %v3022 = vsel %vm2986, %v2955, %v1918
      %v3024 = vsel %vm2986, %v2957, %v1920
      %v3026 = vsel %vm2986, %v2959, %v1922
      %v3028 = vsel %vm2986, %v2961, %v1924
      %v3030 = vsel %vm2986, %v2963, %v1926
      %v3032 = vsel %vm2986, %v2965, %v1928
      %v3034 = vsel %vm2986, %v2967, %v1930
      %v3036 = vsel %vm2986, %v2969, %v1932
      %v3038 = vsel %vm2986, %v2971, %v1934
      %v3040 = vsel %vm2986, %v2973, %v1936
      %v3042 = vsel %vm2986, %v2975, %v1938
      %v3044 = vsel %vm2986, %v2977, %v1940
      %v3046 = vsel %vm2986, %v2979, %v1942
      %v3048 = vsel %vm2986, %v2981, %v1944
      %v3050 = vsel %vm2986, %v2983, %v1946
      %v3052 = vsel %vm2986, %v2985, %v1948
      %vm3053 = vcmask 326656
      %v3055 = vsel %vm3053, %v2988, %v1980
      %v3057 = vsel %vm3053, %v2990, %v1982
      %v3059 = vsel %vm3053, %v2992, %v1984
      %v3061 = vsel %vm3053, %v2994, %v1986
      %v3063 = vsel %vm3053, %v2996, %v1988
      %v3065 = vsel %vm3053, %v2998, %v1990
      %v3067 = vsel %vm3053, %v3000, %v1992
      %v3069 = vsel %vm3053, %v3002, %v1994
      %v3071 = vsel %vm3053, %v3004, %v1996
      %v3073 = vsel %vm3053, %v3006, %v1998
      %v3075 = vsel %vm3053, %v3008, %v2000
      %v3077 = vsel %vm3053, %v3010, %v2002
      %v3079 = vsel %vm3053, %v3012, %v2004
      %v3081 = vsel %vm3053, %v3014, %v2006
      %v3083 = vsel %vm3053, %v3016, %v2008
      %v3085 = vsel %vm3053, %v3018, %v2010
      %v3087 = vsel %vm3053, %v3020, %v2012
      %v3089 = vsel %vm3053, %v3022, %v2014
      %v3091 = vsel %vm3053, %v3024, %v2016
      %v3093 = vsel %vm3053, %v3026, %v2018
      %v3095 = vsel %vm3053, %v3028, %v2020
      %v3097 = vsel %vm3053, %v3030, %v2022
      %v3099 = vsel %vm3053, %v3032, %v2024
      %v3101 = vsel %vm3053, %v3034, %v2026
      %v3103 = vsel %vm3053, %v3036, %v2028
      %v3105 = vsel %vm3053, %v3038, %v2030
      %v3107 = vsel %vm3053, %v3040, %v2032
      %v3109 = vsel %vm3053, %v3042, %v2034
      %v3111 = vsel %vm3053, %v3044, %v2036
      %v3113 = vsel %vm3053, %v3046, %v2038
      %v3115 = vsel %vm3053, %v3048, %v2040
      %v3117 = vsel %vm3053, %v3050, %v2042
      %v3119 = vsel %vm3053, %v3052, %v2044
      %vm3120 = vcmask 359424
      %v3122 = vsel %vm3120, %v3055, %v2057
      %v3124 = vsel %vm3120, %v3057, %v2059
      %v3126 = vsel %vm3120, %v3059, %v2061
      %v3128 = vsel %vm3120, %v3061, %v2063
      %v3130 = vsel %vm3120, %v3063, %v2065
      %v3132 = vsel %vm3120, %v3065, %v2067
      %v3134 = vsel %vm3120, %v3067, %v2069
      %v3136 = vsel %vm3120, %v3069, %v2071
      %v3138 = vsel %vm3120, %v3071, %v2073
      %v3140 = vsel %vm3120, %v3073, %v2075
      %v3142 = vsel %vm3120, %v3075, %v2077
      %v3144 = vsel %vm3120, %v3077, %v2079
      %v3146 = vsel %vm3120, %v3079, %v2081
      %v3148 = vsel %vm3120, %v3081, %v2083
      %v3150 = vsel %vm3120, %v3083, %v2085
      %v3152 = vsel %vm3120, %v3085, %v2087
      %v3154 = vsel %vm3120, %v3087, %v2089
      %v3156 = vsel %vm3120, %v3089, %v2091
      %v3158 = vsel %vm3120, %v3091, %v2093
      %v3160 = vsel %vm3120, %v3093, %v2095
      %v3162 = vsel %vm3120, %v3095, %v2097
      %v3164 = vsel %vm3120, %v3097, %v2099
      %v3166 = vsel %vm3120, %v3099, %v2101
      %v3168 = vsel %vm3120, %v3101, %v2103
      %v3170 = vsel %vm3120, %v3103, %v2105
      %v3172 = vsel %vm3120, %v3105, %v2107
      %v3174 = vsel %vm3120, %v3107, %v2109
      %v3176 = vsel %vm3120, %v3109, %v2111
      %v3178 = vsel %vm3120, %v3111, %v2113
      %v3180 = vsel %vm3120, %v3113, %v2115
      %v3182 = vsel %vm3120, %v3115, %v2117
      %v3184 = vsel %vm3120, %v3117, %v2119
      %v3186 = vsel %vm3120, %v3119, %v2121
      %vm3187 = vcmask 392192
      %v3189 = vsel %vm3187, %v3122, %v2129
      %v3191 = vsel %vm3187, %v3124, %v2131
      %v3193 = vsel %vm3187, %v3126, %v2133
      %v3195 = vsel %vm3187, %v3128, %v2135
      %v3197 = vsel %vm3187, %v3130, %v2137
      %v3199 = vsel %vm3187, %v3132, %v2139
      %v3201 = vsel %vm3187, %v3134, %v2141
      %v3203 = vsel %vm3187, %v3136, %v2143
      %v3205 = vsel %vm3187, %v3138, %v2145
      %v3207 = vsel %vm3187, %v3140, %v2147
      %v3209 = vsel %vm3187, %v3142, %v2149
      %v3211 = vsel %vm3187, %v3144, %v2151
      %v3213 = vsel %vm3187, %v3146, %v2153
      %v3215 = vsel %vm3187, %v3148, %v2155
      %v3217 = vsel %vm3187, %v3150, %v2157
      %v3219 = vsel %vm3187, %v3152, %v2159
      %v3221 = vsel %vm3187, %v3154, %v2161
      %v3223 = vsel %vm3187, %v3156, %v2163
      %v3225 = vsel %vm3187, %v3158, %v2165
      %v3227 = vsel %vm3187, %v3160, %v2167
      %v3229 = vsel %vm3187, %v3162, %v2169
      %v3231 = vsel %vm3187, %v3164, %v2171
      %v3233 = vsel %vm3187, %v3166, %v2173
      %v3235 = vsel %vm3187, %v3168, %v2175
      %v3237 = vsel %vm3187, %v3170, %v2177
      %v3239 = vsel %vm3187, %v3172, %v2179
      %v3241 = vsel %vm3187, %v3174, %v2181
      %v3243 = vsel %vm3187, %v3176, %v2183
      %v3245 = vsel %vm3187, %v3178, %v2185
      %v3247 = vsel %vm3187, %v3180, %v2187
      %v3249 = vsel %vm3187, %v3182, %v2189
      %v3251 = vsel %vm3187, %v3184, %v2191
      %v3253 = vsel %vm3187, %v3186, %v2193
      %vm3254 = vcmask 424960
      %v3256 = vsel %vm3254, %v3189, %v2232
      %v3258 = vsel %vm3254, %v3191, %v2234
      %v3260 = vsel %vm3254, %v3193, %v2236
      %v3262 = vsel %vm3254, %v3195, %v2238
      %v3264 = vsel %vm3254, %v3197, %v2240
      %v3266 = vsel %vm3254, %v3199, %v2242
      %v3268 = vsel %vm3254, %v3201, %v2244
      %v3270 = vsel %vm3254, %v3203, %v2246
      %v3272 = vsel %vm3254, %v3205, %v2248
      %v3274 = vsel %vm3254, %v3207, %v2250
      %v3276 = vsel %vm3254, %v3209, %v2252
      %v3278 = vsel %vm3254, %v3211, %v2254
      %v3280 = vsel %vm3254, %v3213, %v2256
      %v3282 = vsel %vm3254, %v3215, %v2258
      %v3284 = vsel %vm3254, %v3217, %v2260
      %v3286 = vsel %vm3254, %v3219, %v2262
      %v3288 = vsel %vm3254, %v3221, %v2264
      %v3290 = vsel %vm3254, %v3223, %v2266
      %v3292 = vsel %vm3254, %v3225, %v2268
      %v3294 = vsel %vm3254, %v3227, %v2270
      %v3296 = vsel %vm3254, %v3229, %v2272
      %v3298 = vsel %vm3254, %v3231, %v2274
      %v3300 = vsel %vm3254, %v3233, %v2276
      %v3302 = vsel %vm3254, %v3235, %v2278
      %v3304 = vsel %vm3254, %v3237, %v2280
      %v3306 = vsel %vm3254, %v3239, %v2282
      %v3308 = vsel %vm3254, %v3241, %v2284
      %v3310 = vsel %vm3254, %v3243, %v2286
      %v3312 = vsel %vm3254, %v3245, %v2288
      %v3314 = vsel %vm3254, %v3247, %v2290
      %v3316 = vsel %vm3254, %v3249, %v2292
      %v3318 = vsel %vm3254, %v3251, %v2294
      %v3320 = vsel %vm3254, %v3253, %v2296
      %vm3321 = vcmask 457728
      %v3323 = vsel %vm3321, %v3256, %v2311
      %v3325 = vsel %vm3321, %v3258, %v2313
      %v3327 = vsel %vm3321, %v3260, %v2315
      %v3329 = vsel %vm3321, %v3262, %v2317
      %v3331 = vsel %vm3321, %v3264, %v2319
      %v3333 = vsel %vm3321, %v3266, %v2321
      %v3335 = vsel %vm3321, %v3268, %v2323
      %v3337 = vsel %vm3321, %v3270, %v2325
      %v3339 = vsel %vm3321, %v3272, %v2327
      %v3341 = vsel %vm3321, %v3274, %v2329
      %v3343 = vsel %vm3321, %v3276, %v2331
      %v3345 = vsel %vm3321, %v3278, %v2333
      %v3347 = vsel %vm3321, %v3280, %v2335
      %v3349 = vsel %vm3321, %v3282, %v2337
      %v3351 = vsel %vm3321, %v3284, %v2339
      %v3353 = vsel %vm3321, %v3286, %v2341
      %v3355 = vsel %vm3321, %v3288, %v2343
      %v3357 = vsel %vm3321, %v3290, %v2345
      %v3359 = vsel %vm3321, %v3292, %v2347
      %v3361 = vsel %vm3321, %v3294, %v2349
      %v3363 = vsel %vm3321, %v3296, %v2351
      %v3365 = vsel %vm3321, %v3298, %v2353
      %v3367 = vsel %vm3321, %v3300, %v2355
      %v3369 = vsel %vm3321, %v3302, %v2357
      %v3371 = vsel %vm3321, %v3304, %v2359
      %v3373 = vsel %vm3321, %v3306, %v2361
      %v3375 = vsel %vm3321, %v3308, %v2363
      %v3377 = vsel %vm3321, %v3310, %v2365
      %v3379 = vsel %vm3321, %v3312, %v2367
      %v3381 = vsel %vm3321, %v3314, %v2369
      %v3383 = vsel %vm3321, %v3316, %v2371
      %v3385 = vsel %vm3321, %v3318, %v2373
      %v3387 = vsel %vm3321, %v3320, %v2375
      %vm3388 = vcmask 490496
      %v3390 = vsel %vm3388, %v3323, %v2383
      %v3392 = vsel %vm3388, %v3325, %v2385
      %v3394 = vsel %vm3388, %v3327, %v2387
      %v3396 = vsel %vm3388, %v3329, %v2389
      %v3398 = vsel %vm3388, %v3331, %v2391
      %v3400 = vsel %vm3388, %v3333, %v2393
      %v3402 = vsel %vm3388, %v3335, %v2395
      %v3404 = vsel %vm3388, %v3337, %v2397
      %v3406 = vsel %vm3388, %v3339, %v2399
      %v3408 = vsel %vm3388, %v3341, %v2401
      %v3410 = vsel %vm3388, %v3343, %v2403
      %v3412 = vsel %vm3388, %v3345, %v2405
      %v3414 = vsel %vm3388, %v3347, %v2407
      %v3416 = vsel %vm3388, %v3349, %v2409
      %v3418 = vsel %vm3388, %v3351, %v2411
      %v3420 = vsel %vm3388, %v3353, %v2413
      %v3422 = vsel %vm3388, %v3355, %v2415
      %v3424 = vsel %vm3388, %v3357, %v2417
      %v3426 = vsel %vm3388, %v3359, %v2419
      %v3428 = vsel %vm3388, %v3361, %v2421
      %v3430 = vsel %vm3388, %v3363, %v2423
      %v3432 = vsel %vm3388, %v3365, %v2425
      %v3434 = vsel %vm3388, %v3367, %v2427
      %v3436 = vsel %vm3388, %v3369, %v2429
      %v3438 = vsel %vm3388, %v3371, %v2431
      %v3440 = vsel %vm3388, %v3373, %v2433
      %v3442 = vsel %vm3388, %v3375, %v2435
      %v3444 = vsel %vm3388, %v3377, %v2437
      %v3446 = vsel %vm3388, %v3379, %v2439
      %v3448 = vsel %vm3388, %v3381, %v2441
      %v3450 = vsel %vm3388, %v3383, %v2443
      %v3452 = vsel %vm3388, %v3385, %v2445
      %v3454 = vsel %vm3388, %v3387, %v2447
      %v3455 = vpack.c.b16 %v2379, %v2125
      %v3457 = vunpack.c.l.b16 %v384
      %v3458 = vpack.c.b16 %v3457, %v3457
      %vm3459 = vsmask.f32 7424
      %v3460 = vrot.slane %v643, 1
      %v3461 = vor.u32 %v640, %v3460
      %v3462 = vrot.slane %v652, 1
      %v3463 = vsel %vm3459, %v3461, %v3462
      %v3464 = vor.u32 %v649, %v3462
      %v3465 = vrot.slane %v661, 1
      %v3466 = vsel %vm3459, %v3464, %v3465
      %v3467 = vor.u32 %v658, %v3465
      %v3468 = vrot.slane %v670, 1
      %v3469 = vsel %vm3459, %v3467, %v3468
      %v3470 = vor.u32 %v667, %v3468
      %v3471 = vrot.slane %v679, 1
      %v3472 = vsel %vm3459, %v3470, %v3471
      %v3473 = vor.u32 %v676, %v3471
      %v3474 = vrot.slane %v688, 1
      %v3475 = vsel %vm3459, %v3473, %v3474
      %v3476 = vor.u32 %v685, %v3474
      %v3477 = vrot.slane %v697, 1
      %v3478 = vsel %vm3459, %v3476, %v3477
      %v3479 = vor.u32 %v694, %v3477
      %v3480 = vrot.slane %v706, 1
      %v3481 = vsel %vm3459, %v3479, %v3480
      %v3482 = vor.u32 %v703, %v3480
      %v3483 = vrot.slane %v715, 1
      %v3484 = vsel %vm3459, %v3482, %v3483
      %v3485 = vor.u32 %v712, %v3483
      %v3486 = vrot.slane %v724, 1
      %v3487 = vsel %vm3459, %v3485, %v3486
      %v3488 = vor.u32 %v721, %v3486
      %v3489 = vrot.slane %v733, 1
      %v3490 = vsel %vm3459, %v3488, %v3489
      %v3491 = vor.u32 %v730, %v3489
      %v3492 = vrot.slane %v742, 1
      %v3493 = vsel %vm3459, %v3491, %v3492
      %v3494 = vor.u32 %v739, %v3492
      %v3495 = vrot.slane %v751, 1
      %v3496 = vsel %vm3459, %v3494, %v3495
      %v3497 = vor.u32 %v748, %v3495
      %v3498 = vrot.slane %v760, 1
      %v3499 = vsel %vm3459, %v3497, %v3498
      %v3500 = vor.u32 %v757, %v3498
      %v3501 = vrot.slane %v769, 1
      %v3502 = vsel %vm3459, %v3500, %v3501
      %v3503 = vor.u32 %v766, %v3501
      %v3504 = vrot.slane %v778, 1
      %v3505 = vsel %vm3459, %v3503, %v3504
      %v3506 = vor.u32 %v775, %v3504
      %v3507 = vrot.slane %v787, 1
      %v3508 = vsel %vm3459, %v3506, %v3507
      %v3509 = vor.u32 %v784, %v3507
      %v3510 = vrot.slane %v796, 1
      %v3511 = vsel %vm3459, %v3509, %v3510
      %v3512 = vor.u32 %v793, %v3510
      %v3513 = vrot.slane %v805, 1
      %v3514 = vsel %vm3459, %v3512, %v3513
      %v3515 = vor.u32 %v802, %v3513
      %v3516 = vrot.slane %v814, 1
      %v3517 = vsel %vm3459, %v3515, %v3516
      %v3518 = vor.u32 %v811, %v3516
      %v3519 = vrot.slane %v823, 1
      %v3520 = vsel %vm3459, %v3518, %v3519
      %v3521 = vor.u32 %v820, %v3519
      %v3522 = vrot.slane %v832, 1
      %v3523 = vsel %vm3459, %v3521, %v3522
      %v3524 = vor.u32 %v829, %v3522
      %v3525 = vrot.slane %v841, 1
      %v3526 = vsel %vm3459, %v3524, %v3525
      %v3527 = vor.u32 %v838, %v3525
      %v3528 = vrot.slane %v850, 1
      %v3529 = vsel %vm3459, %v3527, %v3528
      %v3530 = vor.u32 %v847, %v3528
      %v3531 = vrot.slane %v859, 1
      %v3532 = vsel %vm3459, %v3530, %v3531
      %v3533 = vor.u32 %v856, %v3531
      %v3534 = vrot.slane %v868, 1
      %v3535 = vsel %vm3459, %v3533, %v3534
      %v3536 = vor.u32 %v865, %v3534
      %v3537 = vrot.slane %v877, 1
      %v3538 = vsel %vm3459, %v3536, %v3537
      %v3539 = vor.u32 %v874, %v3537
      %v3540 = vrot.slane %v1720, 1
      %v3541 = vsel %vm3459, %v3539, %v3540
      %v3542 = vor.u32 %v1717, %v3540
      %v3543 = vrot.slane %v1956, 1
      %v3544 = vsel %vm3459, %v3542, %v3543
      %v3545 = vor.u32 %v1953, %v3543
      %v3546 = vrot.slane %v1965, 1
      %v3547 = vsel %vm3459, %v3545, %v3546
      %v3548 = vor.u32 %v1962, %v3546
      %v3549 = vrot.slane %v1974, 1
      %v3550 = vsel %vm3459, %v3548, %v3549
      %v3551 = vor.u32 %v1971, %v3549
      %v3553 = vshll.u32 %v3455, 16
      %v3555 = vrot.slane %v3553, 1
      %v3556 = vsel %vm3459, %v3551, %v3555
      %v3557 = vshrl.u32 %v3455, 16
      %v3559 = vor.u32 %v3557, %v3555
      %v3561 = vshll.u32 %v3458, 16
      %v3563 = vrot.slane %v3561, 1
      %v3564 = vsel %vm3459, %v3559, %v3563
      %3565 = vrot.lane.b32.xlu0 %v3463, 4
      %v3566 = vpop.permute.xlu0 %3565
      %3567 = vrot.lane.b32.xlu0 %v3466, 4
      %v3568 = vpop.permute.xlu0 %3567
      %3569 = vrot.lane.b32.xlu0 %v3469, 4
      %v3570 = vpop.permute.xlu0 %3569
      %3571 = vrot.lane.b32.xlu0 %v3472, 4
      %v3572 = vpop.permute.xlu0 %3571
      %3573 = vrot.lane.b32.xlu0 %v3475, 4
      %v3574 = vpop.permute.xlu0 %3573
      %3575 = vrot.lane.b32.xlu0 %v3478, 4
      %v3576 = vpop.permute.xlu0 %3575
      %3577 = vrot.lane.b32.xlu0 %v3481, 4
      %v3578 = vpop.permute.xlu0 %3577
      %3579 = vrot.lane.b32.xlu0 %v3484, 4
      %v3580 = vpop.permute.xlu0 %3579
      %3581 = vrot.lane.b32.xlu0 %v3487, 4
      %v3582 = vpop.permute.xlu0 %3581
      %3583 = vrot.lane.b32.xlu0 %v3490, 4
      %v3584 = vpop.permute.xlu0 %3583
      %3585 = vrot.lane.b32.xlu0 %v3493, 4
      %v3586 = vpop.permute.xlu0 %3585
      %3587 = vrot.lane.b32.xlu0 %v3496, 4
      %v3588 = vpop.permute.xlu0 %3587
      %3589 = vrot.lane.b32.xlu0 %v3499, 4
      %v3590 = vpop.permute.xlu0 %3589
      %3591 = vrot.lane.b32.xlu0 %v3502, 4
      %v3592 = vpop.permute.xlu0 %3591
      %3593 = vrot.lane.b32.xlu0 %v3505, 4
      %v3594 = vpop.permute.xlu0 %3593
      %3595 = vrot.lane.b32.xlu0 %v3508, 4
      %v3596 = vpop.permute.xlu0 %3595
      %3597 = vrot.lane.b32.xlu0 %v3511, 4
      %v3598 = vpop.permute.xlu0 %3597
      %3599 = vrot.lane.b32.xlu0 %v3514, 4
      %v3600 = vpop.permute.xlu0 %3599
      %3601 = vrot.lane.b32.xlu0 %v3517, 4
      %v3602 = vpop.permute.xlu0 %3601
      %3603 = vrot.lane.b32.xlu0 %v3520, 4
      %v3604 = vpop.permute.xlu0 %3603
      %3605 = vrot.lane.b32.xlu0 %v3523, 4
      %v3606 = vpop.permute.xlu0 %3605
      %3607 = vrot.lane.b32.xlu0 %v3526, 4
      %v3608 = vpop.permute.xlu0 %3607
      %3609 = vrot.lane.b32.xlu0 %v3529, 4
      %v3610 = vpop.permute.xlu0 %3609
      %3611 = vrot.lane.b32.xlu0 %v3532, 4
      %v3612 = vpop.permute.xlu0 %3611
      %3613 = vrot.lane.b32.xlu0 %v3535, 4
      %v3614 = vpop.permute.xlu0 %3613
      %3615 = vrot.lane.b32.xlu0 %v3538, 4
      %v3616 = vpop.permute.xlu0 %3615
      %3617 = vrot.lane.b32.xlu0 %v3541, 4
      %v3618 = vpop.permute.xlu0 %3617
      %3619 = vrot.lane.b32.xlu0 %v3544, 4
      %v3620 = vpop.permute.xlu0 %3619
      %3621 = vrot.lane.b32.xlu0 %v3547, 4
      %v3622 = vpop.permute.xlu0 %3621
      %3623 = vrot.lane.b32.xlu0 %v3550, 4
      %v3624 = vpop.permute.xlu0 %3623
      %3625 = vrot.lane.b32.xlu0 %v3556, 4
      %v3626 = vpop.permute.xlu0 %3625
      %3627 = vrot.lane.b32.xlu0 %v3564, 4
      %v3628 = vpop.permute.xlu0 %3627
      %v3636 = vunpack.c.l.b16 %v385
      %v3637 = vunpack.c.l.b16 %v386
      %v3638 = vunpack.c.l.b16 %v387
      %v3639 = vunpack.c.l.b16 %v388
      %v3640 = vunpack.c.l.b16 %v389
      %v3641 = vunpack.c.l.b16 %v390
      %v3642 = vunpack.c.l.b16 %v391
      %v3643 = vpack.c.b16 %v481, %v3636
      %v3644 = vpack.c.b16 %v3637, %v2379
      %v3645 = vpack.c.b16 %v3639, %v3638
      %v3646 = vpack.c.b16 %v3641, %v3640
      %v3647 = vpack.c.b16 %v3642, %v3642
      %vm3648 = vsmask.f32 4352
      %v3650 = vshrl.u32 %v3643, 16
      %v3652 = vrot.slane %v3650, 3
      %v3653 = vshll.u32 %v3643, 16
      %v3655 = vrot.slane %v3653, 4
      %v3656 = vor.u32 %v3652, %v3655
      %v3657 = vrot.slane %v1228, 3
      %v3658 = vrot.slane %v1231, 4
      %v3659 = vor.u32 %v3657, %v3658
      %v3660 = vsel %vm3648, %v3656, %v3659
      %v3661 = vrot.slane %v1237, 3
      %v3662 = vrot.slane %v1240, 4
      %v3663 = vor.u32 %v3661, %v3662
      %v3664 = vsel %vm3648, %v3659, %v3663
      %v3665 = vrot.slane %v1246, 3
      %v3666 = vrot.slane %v1249, 4
      %v3667 = vor.u32 %v3665, %v3666
      %v3668 = vsel %vm3648, %v3663, %v3667
      %v3669 = vrot.slane %v1255, 3
      %v3670 = vrot.slane %v1258, 4
      %v3671 = vor.u32 %v3669, %v3670
      %v3672 = vsel %vm3648, %v3667, %v3671
      %v3673 = vrot.slane %v1264, 3
      %v3674 = vrot.slane %v1267, 4
      %v3675 = vor.u32 %v3673, %v3674
      %v3676 = vsel %vm3648, %v3671, %v3675
      %v3677 = vrot.slane %v1273, 3
      %v3678 = vrot.slane %v1276, 4
      %v3679 = vor.u32 %v3677, %v3678
      %v3680 = vsel %vm3648, %v3675, %v3679
      %v3681 = vrot.slane %v1282, 3
      %v3682 = vrot.slane %v1285, 4
      %v3683 = vor.u32 %v3681, %v3682
      %v3684 = vsel %vm3648, %v3679, %v3683
      %v3685 = vrot.slane %v1291, 3
      %v3686 = vrot.slane %v1294, 4
      %v3687 = vor.u32 %v3685, %v3686
      %v3688 = vsel %vm3648, %v3683, %v3687
      %v3689 = vrot.slane %v1300, 3
      %v3690 = vrot.slane %v1303, 4
      %v3691 = vor.u32 %v3689, %v3690
      %v3692 = vsel %vm3648, %v3687, %v3691
      %v3693 = vrot.slane %v1309, 3
      %v3694 = vrot.slane %v1312, 4
      %v3695 = vor.u32 %v3693, %v3694
      %v3696 = vsel %vm3648, %v3691, %v3695
      %v3697 = vrot.slane %v1318, 3
      %v3698 = vrot.slane %v1321, 4
      %v3699 = vor.u32 %v3697, %v3698
      %v3700 = vsel %vm3648, %v3695, %v3699
      %v3701 = vrot.slane %v1327, 3
      %v3702 = vrot.slane %v1330, 4
      %v3703 = vor.u32 %v3701, %v3702
      %v3704 = vsel %vm3648, %v3699, %v3703
      %v3705 = vrot.slane %v1336, 3
      %v3706 = vrot.slane %v1339, 4
      %v3707 = vor.u32 %v3705, %v3706
      %v3708 = vsel %vm3648, %v3703, %v3707
      %v3709 = vrot.slane %v1345, 3
      %v3710 = vrot.slane %v1348, 4
      %v3711 = vor.u32 %v3709, %v3710
      %v3712 = vsel %vm3648, %v3707, %v3711
      %v3713 = vrot.slane %v1354, 3
      %v3714 = vrot.slane %v1357, 4
      %v3715 = vor.u32 %v3713, %v3714
      %v3716 = vsel %vm3648, %v3711, %v3715
      %v3717 = vrot.slane %v1363, 3
      %v3718 = vrot.slane %v1366, 4
      %v3719 = vor.u32 %v3717, %v3718
      %v3720 = vsel %vm3648, %v3715, %v3719
      %v3721 = vrot.slane %v1372, 3
      %v3722 = vrot.slane %v1375, 4
      %v3723 = vor.u32 %v3721, %v3722
      %v3724 = vsel %vm3648, %v3719, %v3723
      %v3725 = vrot.slane %v1381, 3
      %v3726 = vrot.slane %v1384, 4
      %v3727 = vor.u32 %v3725, %v3726
      %v3728 = vsel %vm3648, %v3723, %v3727
      %v3729 = vrot.slane %v1390, 3
      %v3730 = vrot.slane %v1393, 4
      %v3731 = vor.u32 %v3729, %v3730
      %v3732 = vsel %vm3648, %v3727, %v3731
      %v3733 = vrot.slane %v1399, 3
      %v3734 = vrot.slane %v1402, 4
      %v3735 = vor.u32 %v3733, %v3734
      %v3736 = vsel %vm3648, %v3731, %v3735
      %v3737 = vrot.slane %v1408, 3
      %v3738 = vrot.slane %v1411, 4
      %v3739 = vor.u32 %v3737, %v3738
      %v3740 = vsel %vm3648, %v3735, %v3739
      %v3741 = vrot.slane %v1417, 3
      %v3742 = vrot.slane %v1420, 4
      %v3743 = vor.u32 %v3741, %v3742
      %v3744 = vsel %vm3648, %v3739, %v3743
      %v3745 = vrot.slane %v1426, 3
      %v3746 = vrot.slane %v1429, 4
      %v3747 = vor.u32 %v3745, %v3746
      %v3748 = vsel %vm3648, %v3743, %v3747
      %v3749 = vrot.slane %v1435, 3
      %v3750 = vrot.slane %v1438, 4
      %v3751 = vor.u32 %v3749, %v3750
      %v3752 = vsel %vm3648, %v3747, %v3751
      %v3753 = vrot.slane %v2196, 3
      %v3754 = vrot.slane %v2199, 4
      %v3755 = vor.u32 %v3753, %v3754
      %v3756 = vsel %vm3648, %v3751, %v3755
      %v3757 = vrot.slane %v2205, 3
      %v3758 = vrot.slane %v2208, 4
      %v3759 = vor.u32 %v3757, %v3758
      %v3760 = vsel %vm3648, %v3755, %v3759
      %v3761 = vrot.slane %v2214, 3
      %v3762 = vrot.slane %v2217, 4
      %v3763 = vor.u32 %v3761, %v3762
      %v3764 = vsel %vm3648, %v3759, %v3763
      %v3765 = vrot.slane %v2223, 3
      %v3766 = vrot.slane %v2226, 4
      %v3767 = vor.u32 %v3765, %v3766
      %v3768 = vsel %vm3648, %v3763, %v3767
      %v3770 = vshrl.u32 %v3644, 16
      %v3772 = vrot.slane %v3770, 3
      %v3773 = vshll.u32 %v3644, 16
      %v3775 = vrot.slane %v3773, 4
      %v3776 = vor.u32 %v3772, %v3775
      %v3777 = vsel %vm3648, %v3767, %v3776
      %v3779 = vshrl.u32 %v3645, 16
      %v3781 = vrot.slane %v3779, 3
      %v3782 = vshll.u32 %v3645, 16
      %v3784 = vrot.slane %v3782, 4
      %v3785 = vor.u32 %v3781, %v3784
      %v3786 = vsel %vm3648, %v3776, %v3785
      %v3788 = vshrl.u32 %v3646, 16
      %v3790 = vrot.slane %v3788, 3
      %v3791 = vshll.u32 %v3646, 16
      %v3793 = vrot.slane %v3791, 4
      %v3794 = vor.u32 %v3790, %v3793
      %v3795 = vsel %vm3648, %v3785, %v3794
      %v3797 = vshrl.u32 %v3647, 16
      %v3799 = vrot.slane %v3797, 3
      %v3800 = vshll.u32 %v3647, 16
      %v3802 = vrot.slane %v3800, 4
      %v3803 = vor.u32 %v3799, %v3802
      %v3804 = vsel %vm3648, %v3794, %v3803
      %3805 = vrot.lane.b32.xlu0 %v3660, 8
      %v3806 = vpop.permute.xlu0 %3805
      %3807 = vrot.lane.b32.xlu0 %v3664, 8
      %v3808 = vpop.permute.xlu0 %3807
      %3809 = vrot.lane.b32.xlu0 %v3668, 8
      %v3810 = vpop.permute.xlu0 %3809
      %3811 = vrot.lane.b32.xlu0 %v3672, 8
      %v3812 = vpop.permute.xlu0 %3811
      %3813 = vrot.lane.b32.xlu0 %v3676, 8
      %v3814 = vpop.permute.xlu0 %3813
      %3815 = vrot.lane.b32.xlu0 %v3680, 8
      %v3816 = vpop.permute.xlu0 %3815
      %3817 = vrot.lane.b32.xlu0 %v3684, 8
      %v3818 = vpop.permute.xlu0 %3817
      %3819 = vrot.lane.b32.xlu0 %v3688, 8
      %v3820 = vpop.permute.xlu0 %3819
      %3821 = vrot.lane.b32.xlu0 %v3692, 8
      %v3822 = vpop.permute.xlu0 %3821
      %3823 = vrot.lane.b32.xlu0 %v3696, 8
      %v3824 = vpop.permute.xlu0 %3823
      %3825 = vrot.lane.b32.xlu0 %v3700, 8
      %v3826 = vpop.permute.xlu0 %3825
      %3827 = vrot.lane.b32.xlu0 %v3704, 8
      %v3828 = vpop.permute.xlu0 %3827
      %3829 = vrot.lane.b32.xlu0 %v3708, 8
      %v3830 = vpop.permute.xlu0 %3829
      %3831 = vrot.lane.b32.xlu0 %v3712, 8
      %v3832 = vpop.permute.xlu0 %3831
      %3833 = vrot.lane.b32.xlu0 %v3716, 8
      %v3834 = vpop.permute.xlu0 %3833
      %3835 = vrot.lane.b32.xlu0 %v3720, 8
      %v3836 = vpop.permute.xlu0 %3835
      %3837 = vrot.lane.b32.xlu0 %v3724, 8
      %v3838 = vpop.permute.xlu0 %3837
      %3839 = vrot.lane.b32.xlu0 %v3728, 8
      %v3840 = vpop.permute.xlu0 %3839
      %3841 = vrot.lane.b32.xlu0 %v3732, 8
      %v3842 = vpop.permute.xlu0 %3841
      %3843 = vrot.lane.b32.xlu0 %v3736, 8
      %v3844 = vpop.permute.xlu0 %3843
      %3845 = vrot.lane.b32.xlu0 %v3740, 8
      %v3846 = vpop.permute.xlu0 %3845
      %3847 = vrot.lane.b32.xlu0 %v3744, 8
      %v3848 = vpop.permute.xlu0 %3847
      %3849 = vrot.lane.b32.xlu0 %v3748, 8
      %v3850 = vpop.permute.xlu0 %3849
      %3851 = vrot.lane.b32.xlu0 %v3752, 8
      %v3852 = vpop.permute.xlu0 %3851
      %3853 = vrot.lane.b32.xlu0 %v3756, 8
      %v3854 = vpop.permute.xlu0 %3853
      %3855 = vrot.lane.b32.xlu0 %v3760, 8
      %v3856 = vpop.permute.xlu0 %3855
      %3857 = vrot.lane.b32.xlu0 %v3764, 8
      %v3858 = vpop.permute.xlu0 %3857
      %3859 = vrot.lane.b32.xlu0 %v3768, 8
      %v3860 = vpop.permute.xlu0 %3859
      %3861 = vrot.lane.b32.xlu0 %v3777, 8
      %v3862 = vpop.permute.xlu0 %3861
      %3863 = vrot.lane.b32.xlu0 %v3786, 8
      %v3864 = vpop.permute.xlu0 %3863
      %3865 = vrot.lane.b32.xlu0 %v3795, 8
      %v3866 = vpop.permute.xlu0 %3865
      %3867 = vrot.lane.b32.xlu0 %v3804, 8
      %v3868 = vpop.permute.xlu0 %3867
      %v3869 = vpack.c.b16 %v3638, %v3637
      %v3870 = vpack.c.b16 %v3640, %v3639
      %v3871 = vpack.c.b16 %v3642, %v3641
      %3872 = vrot.lane.b32.xlu0 %v1715, 12
      %v3873 = vpop.permute.xlu0 %3872
      %3874 = vrot.lane.b32.xlu0 %v1949, 12
      %v3875 = vpop.permute.xlu0 %3874
      %3876 = vrot.lane.b32.xlu0 %v1950, 12
      %v3877 = vpop.permute.xlu0 %3876
      %3878 = vrot.lane.b32.xlu0 %v1951, 12
      %v3879 = vpop.permute.xlu0 %3878
      %3880 = vrot.lane.b32.xlu0 %v3455, 12
      %v3881 = vpop.permute.xlu0 %3880
      %3882 = vrot.lane.b32.xlu0 %v3869, 12
      %v3883 = vpop.permute.xlu0 %3882
      %3884 = vrot.lane.b32.xlu0 %v3870, 12
      %v3885 = vpop.permute.xlu0 %3884
      %3886 = vrot.lane.b32.xlu0 %v3871, 12
      %v3887 = vpop.permute.xlu0 %3886
      %v3889 = vunpack.c.l.b16 %v392
      %v3890 = vpack.c.b16 %v3889, %v3889
      %v3892 = vshll.u32 %v3869, 16
      %v3894 = vrot.slane %v3892, 1
      %v3895 = vsel %vm3459, %v3559, %v3894
      %v3896 = vshrl.u32 %v3869, 16
      %v3898 = vor.u32 %v3896, %v3894
      %v3900 = vshll.u32 %v3870, 16
      %v3902 = vrot.slane %v3900, 1
      %v3903 = vsel %vm3459, %v3898, %v3902
      %v3904 = vshrl.u32 %v3870, 16
      %v3906 = vor.u32 %v3904, %v3902
      %v3908 = vshll.u32 %v3871, 16
      %v3910 = vrot.slane %v3908, 1
      %v3911 = vsel %vm3459, %v3906, %v3910
      %v3912 = vshrl.u32 %v3871, 16
      %v3914 = vor.u32 %v3912, %v3910
      %v3916 = vshll.u32 %v3890, 16
      %v3918 = vrot.slane %v3916, 1
      %v3919 = vsel %vm3459, %v3914, %v3918
      %3920 = vrot.lane.b32.xlu0 %v3472, 16
      %v3921 = vpop.permute.xlu0 %3920
      %3922 = vrot.lane.b32.xlu0 %v3475, 16
      %v3923 = vpop.permute.xlu0 %3922
      %3924 = vrot.lane.b32.xlu0 %v3478, 16
      %v3925 = vpop.permute.xlu0 %3924
      %3926 = vrot.lane.b32.xlu0 %v3481, 16
      %v3927 = vpop.permute.xlu0 %3926
      %3928 = vrot.lane.b32.xlu0 %v3484, 16
      %v3929 = vpop.permute.xlu0 %3928
      %3930 = vrot.lane.b32.xlu0 %v3487, 16
      %v3931 = vpop.permute.xlu0 %3930
      %3932 = vrot.lane.b32.xlu0 %v3490, 16
      %v3933 = vpop.permute.xlu0 %3932
      %3934 = vrot.lane.b32.xlu0 %v3493, 16
      %v3935 = vpop.permute.xlu0 %3934
      %3936 = vrot.lane.b32.xlu0 %v3496, 16
      %v3937 = vpop.permute.xlu0 %3936
      %3938 = vrot.lane.b32.xlu0 %v3499, 16
      %v3939 = vpop.permute.xlu0 %3938
      %3940 = vrot.lane.b32.xlu0 %v3502, 16
      %v3941 = vpop.permute.xlu0 %3940
      %3942 = vrot.lane.b32.xlu0 %v3505, 16
      %v3943 = vpop.permute.xlu0 %3942
      %3944 = vrot.lane.b32.xlu0 %v3508, 16
      %v3945 = vpop.permute.xlu0 %3944
      %3946 = vrot.lane.b32.xlu0 %v3511, 16
      %v3947 = vpop.permute.xlu0 %3946
      %3948 = vrot.lane.b32.xlu0 %v3514, 16
      %v3949 = vpop.permute.xlu0 %3948
      %3950 = vrot.lane.b32.xlu0 %v3517, 16
      %v3951 = vpop.permute.xlu0 %3950
      %3952 = vrot.lane.b32.xlu0 %v3520, 16
      %v3953 = vpop.permute.xlu0 %3952
      %3954 = vrot.lane.b32.xlu0 %v3523, 16
      %v3955 = vpop.permute.xlu0 %3954
      %3956 = vrot.lane.b32.xlu0 %v3526, 16
      %v3957 = vpop.permute.xlu0 %3956
      %3958 = vrot.lane.b32.xlu0 %v3529, 16
      %v3959 = vpop.permute.xlu0 %3958
      %3960 = vrot.lane.b32.xlu0 %v3532, 16
      %v3961 = vpop.permute.xlu0 %3960
      %3962 = vrot.lane.b32.xlu0 %v3535, 16
      %v3963 = vpop.permute.xlu0 %3962
      %3964 = vrot.lane.b32.xlu0 %v3538, 16
      %v3965 = vpop.permute.xlu0 %3964
      %3966 = vrot.lane.b32.xlu0 %v3541, 16
      %v3967 = vpop.permute.xlu0 %3966
      %3968 = vrot.lane.b32.xlu0 %v3544, 16
      %v3969 = vpop.permute.xlu0 %3968
      %3970 = vrot.lane.b32.xlu0 %v3547, 16
      %v3971 = vpop.permute.xlu0 %3970
      %3972 = vrot.lane.b32.xlu0 %v3550, 16
      %v3973 = vpop.permute.xlu0 %3972
      %3974 = vrot.lane.b32.xlu0 %v3556, 16
      %v3975 = vpop.permute.xlu0 %3974
      %3976 = vrot.lane.b32.xlu0 %v3895, 16
      %v3977 = vpop.permute.xlu0 %3976
      %3978 = vrot.lane.b32.xlu0 %v3903, 16
      %v3979 = vpop.permute.xlu0 %3978
      %3980 = vrot.lane.b32.xlu0 %v3911, 16
      %v3981 = vpop.permute.xlu0 %3980
      %3982 = vrot.lane.b32.xlu0 %v3919, 16
      %v3983 = vpop.permute.xlu0 %3982
      %v3986 = vunpack.c.l.b16 %v393
      %v3987 = vunpack.c.l.b16 %v394
      %v3988 = vpack.c.b16 %v482, %v3986
      %v3989 = vpack.c.b16 %v3987, %v3987
      %v3991 = vshrl.u32 %v3988, 16
      %v3993 = vrot.slane %v3991, 3
      %v3994 = vshll.u32 %v3988, 16
      %v3996 = vrot.slane %v3994, 4
      %v3997 = vor.u32 %v3993, %v3996
      %v3998 = vrot.slane %v676, 3
      %v3999 = vrot.slane %v679, 4
      %v4000 = vor.u32 %v3998, %v3999
      %v4001 = vsel %vm3648, %v3997, %v4000
      %v4002 = vrot.slane %v685, 3
      %v4003 = vrot.slane %v688, 4
      %v4004 = vor.u32 %v4002, %v4003
      %v4005 = vsel %vm3648, %v4000, %v4004
      %v4006 = vrot.slane %v694, 3
      %v4007 = vrot.slane %v697, 4
      %v4008 = vor.u32 %v4006, %v4007
      %v4009 = vsel %vm3648, %v4004, %v4008
      %v4010 = vrot.slane %v703, 3
      %v4011 = vrot.slane %v706, 4
      %v4012 = vor.u32 %v4010, %v4011
      %v4013 = vsel %vm3648, %v4008, %v4012
      %v4014 = vrot.slane %v712, 3
      %v4015 = vrot.slane %v715, 4
      %v4016 = vor.u32 %v4014, %v4015
      %v4017 = vsel %vm3648, %v4012, %v4016
      %v4018 = vrot.slane %v721, 3
      %v4019 = vrot.slane %v724, 4
      %v4020 = vor.u32 %v4018, %v4019
      %v4021 = vsel %vm3648, %v4016, %v4020
      %v4022 = vrot.slane %v730, 3
      %v4023 = vrot.slane %v733, 4
      %v4024 = vor.u32 %v4022, %v4023
      %v4025 = vsel %vm3648, %v4020, %v4024
      %v4026 = vrot.slane %v739, 3
      %v4027 = vrot.slane %v742, 4
      %v4028 = vor.u32 %v4026, %v4027
      %v4029 = vsel %vm3648, %v4024, %v4028
      %v4030 = vrot.slane %v748, 3
      %v4031 = vrot.slane %v751, 4
      %v4032 = vor.u32 %v4030, %v4031
      %v4033 = vsel %vm3648, %v4028, %v4032
      %v4034 = vrot.slane %v757, 3
      %v4035 = vrot.slane %v760, 4
      %v4036 = vor.u32 %v4034, %v4035
      %v4037 = vsel %vm3648, %v4032, %v4036
      %v4038 = vrot.slane %v766, 3
      %v4039 = vrot.slane %v769, 4
      %v4040 = vor.u32 %v4038, %v4039
      %v4041 = vsel %vm3648, %v4036, %v4040
      %v4042 = vrot.slane %v775, 3
      %v4043 = vrot.slane %v778, 4
      %v4044 = vor.u32 %v4042, %v4043
      %v4045 = vsel %vm3648, %v4040, %v4044
      %v4046 = vrot.slane %v784, 3
      %v4047 = vrot.slane %v787, 4
      %v4048 = vor.u32 %v4046, %v4047
      %v4049 = vsel %vm3648, %v4044, %v4048
      %v4050 = vrot.slane %v793, 3
      %v4051 = vrot.slane %v796, 4
      %v4052 = vor.u32 %v4050, %v4051
      %v4053 = vsel %vm3648, %v4048, %v4052
      %v4054 = vrot.slane %v802, 3
      %v4055 = vrot.slane %v805, 4
      %v4056 = vor.u32 %v4054, %v4055
      %v4057 = vsel %vm3648, %v4052, %v4056
      %v4058 = vrot.slane %v811, 3
      %v4059 = vrot.slane %v814, 4
      %v4060 = vor.u32 %v4058, %v4059
      %v4061 = vsel %vm3648, %v4056, %v4060
      %v4062 = vrot.slane %v820, 3
      %v4063 = vrot.slane %v823, 4
      %v4064 = vor.u32 %v4062, %v4063
      %v4065 = vsel %vm3648, %v4060, %v4064
      %v4066 = vrot.slane %v829, 3
      %v4067 = vrot.slane %v832, 4
      %v4068 = vor.u32 %v4066, %v4067
      %v4069 = vsel %vm3648, %v4064, %v4068
      %v4070 = vrot.slane %v838, 3
      %v4071 = vrot.slane %v841, 4
      %v4072 = vor.u32 %v4070, %v4071
      %v4073 = vsel %vm3648, %v4068, %v4072
      %v4074 = vrot.slane %v847, 3
      %v4075 = vrot.slane %v850, 4
      %v4076 = vor.u32 %v4074, %v4075
      %v4077 = vsel %vm3648, %v4072, %v4076
      %v4078 = vrot.slane %v856, 3
      %v4079 = vrot.slane %v859, 4
      %v4080 = vor.u32 %v4078, %v4079
      %v4081 = vsel %vm3648, %v4076, %v4080
      %v4082 = vrot.slane %v865, 3
      %v4083 = vrot.slane %v868, 4
      %v4084 = vor.u32 %v4082, %v4083
      %v4085 = vsel %vm3648, %v4080, %v4084
      %v4086 = vrot.slane %v874, 3
      %v4087 = vrot.slane %v877, 4
      %v4088 = vor.u32 %v4086, %v4087
      %v4089 = vsel %vm3648, %v4084, %v4088
      %v4090 = vrot.slane %v1717, 3
      %v4091 = vrot.slane %v1720, 4
      %v4092 = vor.u32 %v4090, %v4091
      %v4093 = vsel %vm3648, %v4088, %v4092
      %v4094 = vrot.slane %v1953, 3
      %v4095 = vrot.slane %v1956, 4
      %v4096 = vor.u32 %v4094, %v4095
      %v4097 = vsel %vm3648, %v4092, %v4096
      %v4098 = vrot.slane %v1962, 3
      %v4099 = vrot.slane %v1965, 4
      %v4100 = vor.u32 %v4098, %v4099
      %v4101 = vsel %vm3648, %v4096, %v4100
      %v4102 = vrot.slane %v1971, 3
      %v4103 = vrot.slane %v1974, 4
      %v4104 = vor.u32 %v4102, %v4103
      %v4105 = vsel %vm3648, %v4100, %v4104
      %v4106 = vrot.slane %v3557, 3
      %v4107 = vrot.slane %v3553, 4
      %v4108 = vor.u32 %v4106, %v4107
      %v4109 = vsel %vm3648, %v4104, %v4108
      %v4110 = vrot.slane %v3896, 3
      %v4111 = vrot.slane %v3892, 4
      %v4112 = vor.u32 %v4110, %v4111
      %v4113 = vsel %vm3648, %v4108, %v4112
      %v4114 = vrot.slane %v3904, 3
      %v4115 = vrot.slane %v3900, 4
      %v4116 = vor.u32 %v4114, %v4115
      %v4117 = vsel %vm3648, %v4112, %v4116
      %v4118 = vrot.slane %v3912, 3
      %v4119 = vrot.slane %v3908, 4
      %v4120 = vor.u32 %v4118, %v4119
      %v4121 = vsel %vm3648, %v4116, %v4120
      %v4123 = vshrl.u32 %v3989, 16
      %v4125 = vrot.slane %v4123, 3
      %v4126 = vshll.u32 %v3989, 16
      %v4128 = vrot.slane %v4126, 4
      %v4129 = vor.u32 %v4125, %v4128
      %v4130 = vsel %vm3648, %v4120, %v4129
      %4131 = vrot.lane.b32.xlu0 %v4001, 20
      %v4132 = vpop.permute.xlu0 %4131
      %4133 = vrot.lane.b32.xlu0 %v4005, 20
      %v4134 = vpop.permute.xlu0 %4133
      %4135 = vrot.lane.b32.xlu0 %v4009, 20
      %v4136 = vpop.permute.xlu0 %4135
      %4137 = vrot.lane.b32.xlu0 %v4013, 20
      %v4138 = vpop.permute.xlu0 %4137
      %4139 = vrot.lane.b32.xlu0 %v4017, 20
      %v4140 = vpop.permute.xlu0 %4139
      %4141 = vrot.lane.b32.xlu0 %v4021, 20
      %v4142 = vpop.permute.xlu0 %4141
      %4143 = vrot.lane.b32.xlu0 %v4025, 20
      %v4144 = vpop.permute.xlu0 %4143
      %4145 = vrot.lane.b32.xlu0 %v4029, 20
      %v4146 = vpop.permute.xlu0 %4145
      %4147 = vrot.lane.b32.xlu0 %v4033, 20
      %v4148 = vpop.permute.xlu0 %4147
      %4149 = vrot.lane.b32.xlu0 %v4037, 20
      %v4150 = vpop.permute.xlu0 %4149
      %4151 = vrot.lane.b32.xlu0 %v4041, 20
      %v4152 = vpop.permute.xlu0 %4151
      %4153 = vrot.lane.b32.xlu0 %v4045, 20
      %v4154 = vpop.permute.xlu0 %4153
      %4155 = vrot.lane.b32.xlu0 %v4049, 20
      %v4156 = vpop.permute.xlu0 %4155
      %4157 = vrot.lane.b32.xlu0 %v4053, 20
      %v4158 = vpop.permute.xlu0 %4157
      %4159 = vrot.lane.b32.xlu0 %v4057, 20
      %v4160 = vpop.permute.xlu0 %4159
      %4161 = vrot.lane.b32.xlu0 %v4061, 20
      %v4162 = vpop.permute.xlu0 %4161
      %4163 = vrot.lane.b32.xlu0 %v4065, 20
      %v4164 = vpop.permute.xlu0 %4163
      %4165 = vrot.lane.b32.xlu0 %v4069, 20
      %v4166 = vpop.permute.xlu0 %4165
      %4167 = vrot.lane.b32.xlu0 %v4073, 20
      %v4168 = vpop.permute.xlu0 %4167
      %4169 = vrot.lane.b32.xlu0 %v4077, 20
      %v4170 = vpop.permute.xlu0 %4169
      %4171 = vrot.lane.b32.xlu0 %v4081, 20
      %v4172 = vpop.permute.xlu0 %4171
      %4173 = vrot.lane.b32.xlu0 %v4085, 20
      %v4174 = vpop.permute.xlu0 %4173
      %4175 = vrot.lane.b32.xlu0 %v4089, 20
      %v4176 = vpop.permute.xlu0 %4175
      %4177 = vrot.lane.b32.xlu0 %v4093, 20
      %v4178 = vpop.permute.xlu0 %4177
      %4179 = vrot.lane.b32.xlu0 %v4097, 20
      %v4180 = vpop.permute.xlu0 %4179
      %4181 = vrot.lane.b32.xlu0 %v4101, 20
      %v4182 = vpop.permute.xlu0 %4181
      %4183 = vrot.lane.b32.xlu0 %v4105, 20
      %v4184 = vpop.permute.xlu0 %4183
      %4185 = vrot.lane.b32.xlu0 %v4109, 20
      %v4186 = vpop.permute.xlu0 %4185
      %4187 = vrot.lane.b32.xlu0 %v4113, 20
      %v4188 = vpop.permute.xlu0 %4187
      %4189 = vrot.lane.b32.xlu0 %v4117, 20
      %v4190 = vpop.permute.xlu0 %4189
      %4191 = vrot.lane.b32.xlu0 %v4121, 20
      %v4192 = vpop.permute.xlu0 %4191
      %4193 = vrot.lane.b32.xlu0 %v4130, 20
      %v4194 = vpop.permute.xlu0 %4193
      %v4195 = vpack.c.b16 %v3987, %v3642
      %4196 = vrot.lane.b32.xlu0 %v1879, 24
      %v4197 = vpop.permute.xlu0 %4196
      %4198 = vrot.lane.b32.xlu0 %v1880, 24
      %v4199 = vpop.permute.xlu0 %4198
      %4200 = vrot.lane.b32.xlu0 %v1881, 24
      %v4201 = vpop.permute.xlu0 %4200
      %4202 = vrot.lane.b32.xlu0 %v2194, 24
      %v4203 = vpop.permute.xlu0 %4202
      %4204 = vrot.lane.b32.xlu0 %v3644, 24
      %v4205 = vpop.permute.xlu0 %4204
      %4206 = vrot.lane.b32.xlu0 %v3645, 24
      %v4207 = vpop.permute.xlu0 %4206
      %4208 = vrot.lane.b32.xlu0 %v3646, 24
      %v4209 = vpop.permute.xlu0 %4208
      %4210 = vrot.lane.b32.xlu0 %v4195, 24
      %v4211 = vpop.permute.xlu0 %4210
      %v4213 = vunpack.c.l.b16 %v395
      %v4214 = vpack.c.b16 %v4213, %v4213
      %v4215 = vrot.slane %v1231, 1
      %v4216 = vor.u32 %v1228, %v4215
      %v4217 = vrot.slane %v1240, 1
      %v4218 = vsel %vm3459, %v4216, %v4217
      %v4219 = vor.u32 %v1237, %v4217
      %v4220 = vrot.slane %v1249, 1
      %v4221 = vsel %vm3459, %v4219, %v4220
      %v4222 = vor.u32 %v1246, %v4220
      %v4223 = vrot.slane %v1258, 1
      %v4224 = vsel %vm3459, %v4222, %v4223
      %v4225 = vor.u32 %v1255, %v4223
      %v4226 = vrot.slane %v1267, 1
      %v4227 = vsel %vm3459, %v4225, %v4226
      %v4228 = vor.u32 %v1264, %v4226
      %v4229 = vrot.slane %v1276, 1
      %v4230 = vsel %vm3459, %v4228, %v4229
      %v4231 = vor.u32 %v1273, %v4229
      %v4232 = vrot.slane %v1285, 1
      %v4233 = vsel %vm3459, %v4231, %v4232
      %v4234 = vor.u32 %v1282, %v4232
      %v4235 = vrot.slane %v1294, 1
      %v4236 = vsel %vm3459, %v4234, %v4235
      %v4237 = vor.u32 %v1291, %v4235
      %v4238 = vrot.slane %v1303, 1
      %v4239 = vsel %vm3459, %v4237, %v4238
      %v4240 = vor.u32 %v1300, %v4238
      %v4241 = vrot.slane %v1312, 1
      %v4242 = vsel %vm3459, %v4240, %v4241
      %v4243 = vor.u32 %v1309, %v4241
      %v4244 = vrot.slane %v1321, 1
      %v4245 = vsel %vm3459, %v4243, %v4244
      %v4246 = vor.u32 %v1318, %v4244
      %v4247 = vrot.slane %v1330, 1
      %v4248 = vsel %vm3459, %v4246, %v4247
      %v4249 = vor.u32 %v1327, %v4247
      %v4250 = vrot.slane %v1339, 1
      %v4251 = vsel %vm3459, %v4249, %v4250
      %v4252 = vor.u32 %v1336, %v4250
      %v4253 = vrot.slane %v1348, 1
      %v4254 = vsel %vm3459, %v4252, %v4253
      %v4255 = vor.u32 %v1345, %v4253
      %v4256 = vrot.slane %v1357, 1
      %v4257 = vsel %vm3459, %v4255, %v4256
      %v4258 = vor.u32 %v1354, %v4256
      %v4259 = vrot.slane %v1366, 1
      %v4260 = vsel %vm3459, %v4258, %v4259
      %v4261 = vor.u32 %v1363, %v4259
      %v4262 = vrot.slane %v1375, 1
      %v4263 = vsel %vm3459, %v4261, %v4262
      %v4264 = vor.u32 %v1372, %v4262
      %v4265 = vrot.slane %v1384, 1
      %v4266 = vsel %vm3459, %v4264, %v4265
      %v4267 = vor.u32 %v1381, %v4265
      %v4268 = vrot.slane %v1393, 1
      %v4269 = vsel %vm3459, %v4267, %v4268
      %v4270 = vor.u32 %v1390, %v4268
      %v4271 = vrot.slane %v1402, 1
      %v4272 = vsel %vm3459, %v4270, %v4271
      %v4273 = vor.u32 %v1399, %v4271
      %v4274 = vrot.slane %v1411, 1
      %v4275 = vsel %vm3459, %v4273, %v4274
      %v4276 = vor.u32 %v1408, %v4274
      %v4277 = vrot.slane %v1420, 1
      %v4278 = vsel %vm3459, %v4276, %v4277
      %v4279 = vor.u32 %v1417, %v4277
      %v4280 = vrot.slane %v1429, 1
      %v4281 = vsel %vm3459, %v4279, %v4280
      %v4282 = vor.u32 %v1426, %v4280
      %v4283 = vrot.slane %v1438, 1
      %v4284 = vsel %vm3459, %v4282, %v4283
      %v4285 = vor.u32 %v1435, %v4283
      %v4286 = vrot.slane %v2199, 1
      %v4287 = vsel %vm3459, %v4285, %v4286
      %v4288 = vor.u32 %v2196, %v4286
      %v4289 = vrot.slane %v2208, 1
      %v4290 = vsel %vm3459, %v4288, %v4289
      %v4291 = vor.u32 %v2205, %v4289
      %v4292 = vrot.slane %v2217, 1
      %v4293 = vsel %vm3459, %v4291, %v4292
      %v4294 = vor.u32 %v2214, %v4292
      %v4295 = vrot.slane %v2226, 1
      %v4296 = vsel %vm3459, %v4294, %v4295
      %v4297 = vor.u32 %v2223, %v4295
      %v4298 = vrot.slane %v3773, 1
      %v4299 = vsel %vm3459, %v4297, %v4298
      %v4300 = vor.u32 %v3770, %v4298
      %v4301 = vrot.slane %v3782, 1
      %v4302 = vsel %vm3459, %v4300, %v4301
      %v4303 = vor.u32 %v3779, %v4301
      %v4304 = vrot.slane %v3791, 1
      %v4305 = vsel %vm3459, %v4303, %v4304
      %v4306 = vor.u32 %v3788, %v4304
      %v4308 = vshll.u32 %v4195, 16
      %v4310 = vrot.slane %v4308, 1
      %v4311 = vsel %vm3459, %v4306, %v4310
      %v4312 = vshrl.u32 %v4195, 16
      %v4314 = vor.u32 %v4312, %v4310
      %v4316 = vshll.u32 %v4214, 16
      %v4318 = vrot.slane %v4316, 1
      %v4319 = vsel %vm3459, %v4314, %v4318
      %4320 = vrot.lane.b32.xlu0 %v4218, 28
      %v4321 = vpop.permute.xlu0 %4320
      %4322 = vrot.lane.b32.xlu0 %v4221, 28
      %v4323 = vpop.permute.xlu0 %4322
      %4324 = vrot.lane.b32.xlu0 %v4224, 28
      %v4325 = vpop.permute.xlu0 %4324
      %4326 = vrot.lane.b32.xlu0 %v4227, 28
      %v4327 = vpop.permute.xlu0 %4326
      %4328 = vrot.lane.b32.xlu0 %v4230, 28
      %v4329 = vpop.permute.xlu0 %4328
      %4330 = vrot.lane.b32.xlu0 %v4233, 28
      %v4331 = vpop.permute.xlu0 %4330
      %4332 = vrot.lane.b32.xlu0 %v4236, 28
      %v4333 = vpop.permute.xlu0 %4332
      %4334 = vrot.lane.b32.xlu0 %v4239, 28
      %v4335 = vpop.permute.xlu0 %4334
      %4336 = vrot.lane.b32.xlu0 %v4242, 28
      %v4337 = vpop.permute.xlu0 %4336
      %4338 = vrot.lane.b32.xlu0 %v4245, 28
      %v4339 = vpop.permute.xlu0 %4338
      %4340 = vrot.lane.b32.xlu0 %v4248, 28
      %v4341 = vpop.permute.xlu0 %4340
      %4342 = vrot.lane.b32.xlu0 %v4251, 28
      %v4343 = vpop.permute.xlu0 %4342
      %4344 = vrot.lane.b32.xlu0 %v4254, 28
      %v4345 = vpop.permute.xlu0 %4344
      %4346 = vrot.lane.b32.xlu0 %v4257, 28
      %v4347 = vpop.permute.xlu0 %4346
      %4348 = vrot.lane.b32.xlu0 %v4260, 28
      %v4349 = vpop.permute.xlu0 %4348
      %4350 = vrot.lane.b32.xlu0 %v4263, 28
      %v4351 = vpop.permute.xlu0 %4350
      %4352 = vrot.lane.b32.xlu0 %v4266, 28
      %v4353 = vpop.permute.xlu0 %4352
      %4354 = vrot.lane.b32.xlu0 %v4269, 28
      %v4355 = vpop.permute.xlu0 %4354
      %4356 = vrot.lane.b32.xlu0 %v4272, 28
      %v4357 = vpop.permute.xlu0 %4356
      %4358 = vrot.lane.b32.xlu0 %v4275, 28
      %v4359 = vpop.permute.xlu0 %4358
      %4360 = vrot.lane.b32.xlu0 %v4278, 28
      %v4361 = vpop.permute.xlu0 %4360
      %4362 = vrot.lane.b32.xlu0 %v4281, 28
      %v4363 = vpop.permute.xlu0 %4362
      %4364 = vrot.lane.b32.xlu0 %v4284, 28
      %v4365 = vpop.permute.xlu0 %4364
      %4366 = vrot.lane.b32.xlu0 %v4287, 28
      %v4367 = vpop.permute.xlu0 %4366
      %4368 = vrot.lane.b32.xlu0 %v4290, 28
      %v4369 = vpop.permute.xlu0 %4368
      %4370 = vrot.lane.b32.xlu0 %v4293, 28
      %v4371 = vpop.permute.xlu0 %4370
      %4372 = vrot.lane.b32.xlu0 %v4296, 28
      %v4373 = vpop.permute.xlu0 %4372
      %4374 = vrot.lane.b32.xlu0 %v4299, 28
      %v4375 = vpop.permute.xlu0 %4374
      %4376 = vrot.lane.b32.xlu0 %v4302, 28
      %v4377 = vpop.permute.xlu0 %4376
      %4378 = vrot.lane.b32.xlu0 %v4305, 28
      %v4379 = vpop.permute.xlu0 %4378
      %4380 = vrot.lane.b32.xlu0 %v4311, 28
      %v4381 = vpop.permute.xlu0 %4380
      %4382 = vrot.lane.b32.xlu0 %v4319, 28
      %v4383 = vpop.permute.xlu0 %4382
      %v4386 = vunpack.c.l.b16 %v396
      %v4387 = vunpack.c.l.b16 %v397
      %v4388 = vpack.c.b16 %v483, %v4386
      %v4389 = vpack.c.b16 %v4387, %v4387
      %v4391 = vshrl.u32 %v4388, 16
      %v4393 = vrot.slane %v4391, 3
      %v4394 = vshll.u32 %v4388, 16
      %v4396 = vrot.slane %v4394, 4
      %v4397 = vor.u32 %v4393, %v4396
      %v4398 = vsel %vm3648, %v4397, %v3663
      %v4399 = vrot.slane %v4312, 3
      %v4400 = vrot.slane %v4308, 4
      %v4401 = vor.u32 %v4399, %v4400
      %v4402 = vsel %vm3648, %v3794, %v4401
      %v4404 = vshrl.u32 %v4389, 16
      %v4406 = vrot.slane %v4404, 3
      %v4407 = vshll.u32 %v4389, 16
      %v4409 = vrot.slane %v4407, 4
      %v4410 = vor.u32 %v4406, %v4409
      %v4411 = vsel %vm3648, %v4401, %v4410
      %4412 = vrot.lane.b32.xlu0 %v4398, 32
      %v4413 = vpop.permute.xlu0 %4412
      %4414 = vrot.lane.b32.xlu0 %v3668, 32
      %v4415 = vpop.permute.xlu0 %4414
      %4416 = vrot.lane.b32.xlu0 %v3672, 32
      %v4417 = vpop.permute.xlu0 %4416
      %4418 = vrot.lane.b32.xlu0 %v3676, 32
      %v4419 = vpop.permute.xlu0 %4418
      %4420 = vrot.lane.b32.xlu0 %v3680, 32
      %v4421 = vpop.permute.xlu0 %4420
      %4422 = vrot.lane.b32.xlu0 %v3684, 32
      %v4423 = vpop.permute.xlu0 %4422
      %4424 = vrot.lane.b32.xlu0 %v3688, 32
      %v4425 = vpop.permute.xlu0 %4424
      %4426 = vrot.lane.b32.xlu0 %v3692, 32
      %v4427 = vpop.permute.xlu0 %4426
      %4428 = vrot.lane.b32.xlu0 %v3696, 32
      %v4429 = vpop.permute.xlu0 %4428
      %4430 = vrot.lane.b32.xlu0 %v3700, 32
      %v4431 = vpop.permute.xlu0 %4430
      %4432 = vrot.lane.b32.xlu0 %v3704, 32
      %v4433 = vpop.permute.xlu0 %4432
      %4434 = vrot.lane.b32.xlu0 %v3708, 32
      %v4435 = vpop.permute.xlu0 %4434
      %4436 = vrot.lane.b32.xlu0 %v3712, 32
      %v4437 = vpop.permute.xlu0 %4436
      %4438 = vrot.lane.b32.xlu0 %v3716, 32
      %v4439 = vpop.permute.xlu0 %4438
      %4440 = vrot.lane.b32.xlu0 %v3720, 32
      %v4441 = vpop.permute.xlu0 %4440
      %4442 = vrot.lane.b32.xlu0 %v3724, 32
      %v4443 = vpop.permute.xlu0 %4442
      %4444 = vrot.lane.b32.xlu0 %v3728, 32
      %v4445 = vpop.permute.xlu0 %4444
      %4446 = vrot.lane.b32.xlu0 %v3732, 32
      %v4447 = vpop.permute.xlu0 %4446
      %4448 = vrot.lane.b32.xlu0 %v3736, 32
      %v4449 = vpop.permute.xlu0 %4448
      %4450 = vrot.lane.b32.xlu0 %v3740, 32
      %v4451 = vpop.permute.xlu0 %4450
      %4452 = vrot.lane.b32.xlu0 %v3744, 32
      %v4453 = vpop.permute.xlu0 %4452
      %4454 = vrot.lane.b32.xlu0 %v3748, 32
      %v4455 = vpop.permute.xlu0 %4454
      %4456 = vrot.lane.b32.xlu0 %v3752, 32
      %v4457 = vpop.permute.xlu0 %4456
      %4458 = vrot.lane.b32.xlu0 %v3756, 32
      %v4459 = vpop.permute.xlu0 %4458
      %4460 = vrot.lane.b32.xlu0 %v3760, 32
      %v4461 = vpop.permute.xlu0 %4460
      %4462 = vrot.lane.b32.xlu0 %v3764, 32
      %v4463 = vpop.permute.xlu0 %4462
      %4464 = vrot.lane.b32.xlu0 %v3768, 32
      %v4465 = vpop.permute.xlu0 %4464
      %4466 = vrot.lane.b32.xlu0 %v3777, 32
      %v4467 = vpop.permute.xlu0 %4466
      %4468 = vrot.lane.b32.xlu0 %v3786, 32
      %v4469 = vpop.permute.xlu0 %4468
      %4470 = vrot.lane.b32.xlu0 %v3795, 32
      %v4471 = vpop.permute.xlu0 %4470
      %4472 = vrot.lane.b32.xlu0 %v4402, 32
      %v4473 = vpop.permute.xlu0 %4472
      %4474 = vrot.lane.b32.xlu0 %v4411, 32
      %v4475 = vpop.permute.xlu0 %4474
      %v4476 = vpack.c.b16 %v4387, %v3987
      %4477 = vrot.lane.b32.xlu0 %v571, 36
      %v4478 = vpop.permute.xlu0 %4477
      %4479 = vrot.lane.b32.xlu0 %v572, 36
      %v4480 = vpop.permute.xlu0 %4479
      %4481 = vrot.lane.b32.xlu0 %v573, 36
      %v4482 = vpop.permute.xlu0 %4481
      %4483 = vrot.lane.b32.xlu0 %v574, 36
      %v4484 = vpop.permute.xlu0 %4483
      %4485 = vrot.lane.b32.xlu0 %v575, 36
      %v4486 = vpop.permute.xlu0 %4485
      %4487 = vrot.lane.b32.xlu0 %v576, 36
      %v4488 = vpop.permute.xlu0 %4487
      %4489 = vrot.lane.b32.xlu0 %v577, 36
      %v4490 = vpop.permute.xlu0 %4489
      %4491 = vrot.lane.b32.xlu0 %v578, 36
      %v4492 = vpop.permute.xlu0 %4491
      %4493 = vrot.lane.b32.xlu0 %v579, 36
      %v4494 = vpop.permute.xlu0 %4493
      %4495 = vrot.lane.b32.xlu0 %v580, 36
      %v4496 = vpop.permute.xlu0 %4495
      %4497 = vrot.lane.b32.xlu0 %v581, 36
      %v4498 = vpop.permute.xlu0 %4497
      %4499 = vrot.lane.b32.xlu0 %v582, 36
      %v4500 = vpop.permute.xlu0 %4499
      %4501 = vrot.lane.b32.xlu0 %v583, 36
      %v4502 = vpop.permute.xlu0 %4501
      %4503 = vrot.lane.b32.xlu0 %v584, 36
      %v4504 = vpop.permute.xlu0 %4503
      %4505 = vrot.lane.b32.xlu0 %v585, 36
      %v4506 = vpop.permute.xlu0 %4505
      %4507 = vrot.lane.b32.xlu0 %v586, 36
      %v4508 = vpop.permute.xlu0 %4507
      %4509 = vrot.lane.b32.xlu0 %v587, 36
      %v4510 = vpop.permute.xlu0 %4509
      %4511 = vrot.lane.b32.xlu0 %v588, 36
      %v4512 = vpop.permute.xlu0 %4511
      %4513 = vrot.lane.b32.xlu0 %v589, 36
      %v4514 = vpop.permute.xlu0 %4513
      %4515 = vrot.lane.b32.xlu0 %v590, 36
      %v4516 = vpop.permute.xlu0 %4515
      %4517 = vrot.lane.b32.xlu0 %v591, 36
      %v4518 = vpop.permute.xlu0 %4517
      %4519 = vrot.lane.b32.xlu0 %v592, 36
      %v4520 = vpop.permute.xlu0 %4519
      %4521 = vrot.lane.b32.xlu0 %v593, 36
      %v4522 = vpop.permute.xlu0 %4521
      %4523 = vrot.lane.b32.xlu0 %v1715, 36
      %v4524 = vpop.permute.xlu0 %4523
      %4525 = vrot.lane.b32.xlu0 %v1949, 36
      %v4526 = vpop.permute.xlu0 %4525
      %4527 = vrot.lane.b32.xlu0 %v1950, 36
      %v4528 = vpop.permute.xlu0 %4527
      %4529 = vrot.lane.b32.xlu0 %v1951, 36
      %v4530 = vpop.permute.xlu0 %4529
      %4531 = vrot.lane.b32.xlu0 %v3455, 36
      %v4532 = vpop.permute.xlu0 %4531
      %4533 = vrot.lane.b32.xlu0 %v3869, 36
      %v4534 = vpop.permute.xlu0 %4533
      %4535 = vrot.lane.b32.xlu0 %v3870, 36
      %v4536 = vpop.permute.xlu0 %4535
      %4537 = vrot.lane.b32.xlu0 %v3871, 36
      %v4538 = vpop.permute.xlu0 %4537
      %4539 = vrot.lane.b32.xlu0 %v4476, 36
      %v4540 = vpop.permute.xlu0 %4539
      %v4542 = vunpack.c.l.b16 %v398
      %v4543 = vpack.c.b16 %v4542, %v4542
      %v4545 = vshll.u32 %v4476, 16
      %v4547 = vrot.slane %v4545, 1
      %v4548 = vsel %vm3459, %v3914, %v4547
      %v4549 = vshrl.u32 %v4476, 16
      %v4551 = vor.u32 %v4549, %v4547
      %v4553 = vshll.u32 %v4543, 16
      %v4555 = vrot.slane %v4553, 1
      %v4556 = vsel %vm3459, %v4551, %v4555
      %4557 = vrot.lane.b32.xlu0 %v3475, 40
      %v4558 = vpop.permute.xlu0 %4557
      %4559 = vrot.lane.b32.xlu0 %v3478, 40
      %v4560 = vpop.permute.xlu0 %4559
      %4561 = vrot.lane.b32.xlu0 %v3481, 40
      %v4562 = vpop.permute.xlu0 %4561
      %4563 = vrot.lane.b32.xlu0 %v3484, 40
      %v4564 = vpop.permute.xlu0 %4563
      %4565 = vrot.lane.b32.xlu0 %v3487, 40
      %v4566 = vpop.permute.xlu0 %4565
      %4567 = vrot.lane.b32.xlu0 %v3490, 40
      %v4568 = vpop.permute.xlu0 %4567
      %4569 = vrot.lane.b32.xlu0 %v3493, 40
      %v4570 = vpop.permute.xlu0 %4569
      %4571 = vrot.lane.b32.xlu0 %v3496, 40
      %v4572 = vpop.permute.xlu0 %4571
      %4573 = vrot.lane.b32.xlu0 %v3499, 40
      %v4574 = vpop.permute.xlu0 %4573
      %4575 = vrot.lane.b32.xlu0 %v3502, 40
      %v4576 = vpop.permute.xlu0 %4575
      %4577 = vrot.lane.b32.xlu0 %v3505, 40
      %v4578 = vpop.permute.xlu0 %4577
      %4579 = vrot.lane.b32.xlu0 %v3508, 40
      %v4580 = vpop.permute.xlu0 %4579
      %4581 = vrot.lane.b32.xlu0 %v3511, 40
      %v4582 = vpop.permute.xlu0 %4581
      %4583 = vrot.lane.b32.xlu0 %v3514, 40
      %v4584 = vpop.permute.xlu0 %4583
      %4585 = vrot.lane.b32.xlu0 %v3517, 40
      %v4586 = vpop.permute.xlu0 %4585
      %4587 = vrot.lane.b32.xlu0 %v3520, 40
      %v4588 = vpop.permute.xlu0 %4587
      %4589 = vrot.lane.b32.xlu0 %v3523, 40
      %v4590 = vpop.permute.xlu0 %4589
      %4591 = vrot.lane.b32.xlu0 %v3526, 40
      %v4592 = vpop.permute.xlu0 %4591
      %4593 = vrot.lane.b32.xlu0 %v3529, 40
      %v4594 = vpop.permute.xlu0 %4593
      %4595 = vrot.lane.b32.xlu0 %v3532, 40
      %v4596 = vpop.permute.xlu0 %4595
      %4597 = vrot.lane.b32.xlu0 %v3535, 40
      %v4598 = vpop.permute.xlu0 %4597
      %4599 = vrot.lane.b32.xlu0 %v3538, 40
      %v4600 = vpop.permute.xlu0 %4599
      %4601 = vrot.lane.b32.xlu0 %v3541, 40
      %v4602 = vpop.permute.xlu0 %4601
      %4603 = vrot.lane.b32.xlu0 %v3544, 40
      %v4604 = vpop.permute.xlu0 %4603
      %4605 = vrot.lane.b32.xlu0 %v3547, 40
      %v4606 = vpop.permute.xlu0 %4605
      %4607 = vrot.lane.b32.xlu0 %v3550, 40
      %v4608 = vpop.permute.xlu0 %4607
      %4609 = vrot.lane.b32.xlu0 %v3556, 40
      %v4610 = vpop.permute.xlu0 %4609
      %4611 = vrot.lane.b32.xlu0 %v3895, 40
      %v4612 = vpop.permute.xlu0 %4611
      %4613 = vrot.lane.b32.xlu0 %v3903, 40
      %v4614 = vpop.permute.xlu0 %4613
      %4615 = vrot.lane.b32.xlu0 %v3911, 40
      %v4616 = vpop.permute.xlu0 %4615
      %4617 = vrot.lane.b32.xlu0 %v4548, 40
      %v4618 = vpop.permute.xlu0 %4617
      %4619 = vrot.lane.b32.xlu0 %v4556, 40
      %v4620 = vpop.permute.xlu0 %4619
      %v4622 = vsel %vm2448, %v567, %v3566
      %v4624 = vsel %vm2448, %v568, %v3568
      %v4626 = vsel %vm2448, %v569, %v3570
      %v4628 = vsel %vm2448, %v570, %v3572
      %v4630 = vsel %vm2448, %v571, %v3574
      %v4632 = vsel %vm2448, %v572, %v3576
      %v4634 = vsel %vm2448, %v573, %v3578
      %v4636 = vsel %vm2448, %v574, %v3580
      %v4638 = vsel %vm2448, %v575, %v3582
      %v4640 = vsel %vm2448, %v576, %v3584
      %v4642 = vsel %vm2448, %v577, %v3586
      %v4644 = vsel %vm2448, %v578, %v3588
      %v4646 = vsel %vm2448, %v579, %v3590
      %v4648 = vsel %vm2448, %v580, %v3592
      %v4650 = vsel %vm2448, %v581, %v3594
      %v4652 = vsel %vm2448, %v582, %v3596
      %v4654 = vsel %vm2448, %v583, %v3598
      %v4656 = vsel %vm2448, %v584, %v3600
      %v4658 = vsel %vm2448, %v585, %v3602
      %v4660 = vsel %vm2448, %v586, %v3604
      %v4662 = vsel %vm2448, %v587, %v3606
      %v4664 = vsel %vm2448, %v588, %v3608
      %v4666 = vsel %vm2448, %v589, %v3610
      %v4668 = vsel %vm2448, %v590, %v3612
      %v4670 = vsel %vm2448, %v591, %v3614
      %v4672 = vsel %vm2448, %v592, %v3616
      %v4674 = vsel %vm2448, %v593, %v3618
      %v4676 = vsel %vm2448, %v1715, %v3620
      %v4678 = vsel %vm2448, %v1949, %v3622
      %v4680 = vsel %vm2448, %v1950, %v3624
      %v4682 = vsel %vm2448, %v1951, %v3626
      %v4684 = vsel %vm2448, %v3455, %v3628
      %v4686 = vsel %vm2517, %v4622, %v3806
      %v4688 = vsel %vm2517, %v4624, %v3808
      %v4690 = vsel %vm2517, %v4626, %v3810
      %v4692 = vsel %vm2517, %v4628, %v3812
      %v4694 = vsel %vm2517, %v4630, %v3814
      %v4696 = vsel %vm2517, %v4632, %v3816
      %v4698 = vsel %vm2517, %v4634, %v3818
      %v4700 = vsel %vm2517, %v4636, %v3820
      %v4702 = vsel %vm2517, %v4638, %v3822
      %v4704 = vsel %vm2517, %v4640, %v3824
      %v4706 = vsel %vm2517, %v4642, %v3826
      %v4708 = vsel %vm2517, %v4644, %v3828
      %v4710 = vsel %vm2517, %v4646, %v3830
      %v4712 = vsel %vm2517, %v4648, %v3832
      %v4714 = vsel %vm2517, %v4650, %v3834
      %v4716 = vsel %vm2517, %v4652, %v3836
      %v4718 = vsel %vm2517, %v4654, %v3838
      %v4720 = vsel %vm2517, %v4656, %v3840
      %v4722 = vsel %vm2517, %v4658, %v3842
      %v4724 = vsel %vm2517, %v4660, %v3844
      %v4726 = vsel %vm2517, %v4662, %v3846
      %v4728 = vsel %vm2517, %v4664, %v3848
      %v4730 = vsel %vm2517, %v4666, %v3850
      %v4732 = vsel %vm2517, %v4668, %v3852
      %v4734 = vsel %vm2517, %v4670, %v3854
      %v4736 = vsel %vm2517, %v4672, %v3856
      %v4738 = vsel %vm2517, %v4674, %v3858
      %v4740 = vsel %vm2517, %v4676, %v3860
      %v4742 = vsel %vm2517, %v4678, %v3862
      %v4744 = vsel %vm2517, %v4680, %v3864
      %v4746 = vsel %vm2517, %v4682, %v3866
      %v4748 = vsel %vm2517, %v4684, %v3868
      %v4749 = vsel %vm2584, %v4686, %v1106
      %v4750 = vsel %vm2584, %v4688, %v1108
      %v4751 = vsel %vm2584, %v4690, %v1110
      %v4752 = vsel %vm2584, %v4692, %v1112
      %v4753 = vsel %vm2584, %v4694, %v1114
      %v4754 = vsel %vm2584, %v4696, %v1116
      %v4755 = vsel %vm2584, %v4698, %v1118
      %v4756 = vsel %vm2584, %v4700, %v1120
      %v4757 = vsel %vm2584, %v4702, %v1122
      %v4758 = vsel %vm2584, %v4704, %v1124
      %v4759 = vsel %vm2584, %v4706, %v1126
      %v4760 = vsel %vm2584, %v4708, %v1128
      %v4761 = vsel %vm2584, %v4710, %v1130
      %v4762 = vsel %vm2584, %v4712, %v1132
      %v4763 = vsel %vm2584, %v4714, %v1134
      %v4764 = vsel %vm2584, %v4716, %v1136
      %v4765 = vsel %vm2584, %v4718, %v1138
      %v4766 = vsel %vm2584, %v4720, %v1140
      %v4767 = vsel %vm2584, %v4722, %v1142
      %v4768 = vsel %vm2584, %v4724, %v1144
      %v4769 = vsel %vm2584, %v4726, %v1146
      %v4770 = vsel %vm2584, %v4728, %v1148
      %v4771 = vsel %vm2584, %v4730, %v1150
      %v4772 = vsel %vm2584, %v4732, %v1152
      %v4774 = vsel %vm2584, %v4734, %v3873
      %v4776 = vsel %vm2584, %v4736, %v3875
      %v4778 = vsel %vm2584, %v4738, %v3877
      %v4780 = vsel %vm2584, %v4740, %v3879
      %v4782 = vsel %vm2584, %v4742, %v3881
      %v4784 = vsel %vm2584, %v4744, %v3883
      %v4786 = vsel %vm2584, %v4746, %v3885
      %v4788 = vsel %vm2584, %v4748, %v3887
      %v4790 = vsel %vm2651, %v4749, %v3921
      %v4792 = vsel %vm2651, %v4750, %v3923
      %v4794 = vsel %vm2651, %v4751, %v3925
      %v4796 = vsel %vm2651, %v4752, %v3927
      %v4798 = vsel %vm2651, %v4753, %v3929
      %v4800 = vsel %vm2651, %v4754, %v3931
      %v4802 = vsel %vm2651, %v4755, %v3933
      %v4804 = vsel %vm2651, %v4756, %v3935
      %v4806 = vsel %vm2651, %v4757, %v3937
      %v4808 = vsel %vm2651, %v4758, %v3939
      %v4810 = vsel %vm2651, %v4759, %v3941
      %v4812 = vsel %vm2651, %v4760, %v3943
      %v4814 = vsel %vm2651, %v4761, %v3945
      %v4816 = vsel %vm2651, %v4762, %v3947
      %v4818 = vsel %vm2651, %v4763, %v3949
      %v4820 = vsel %vm2651, %v4764, %v3951
      %v4822 = vsel %vm2651, %v4765, %v3953
      %v4824 = vsel %vm2651, %v4766, %v3955
      %v4826 = vsel %vm2651, %v4767, %v3957
      %v4828 = vsel %vm2651, %v4768, %v3959
      %v4830 = vsel %vm2651, %v4769, %v3961
      %v4832 = vsel %vm2651, %v4770, %v3963
      %v4834 = vsel %vm2651, %v4771, %v3965
      %v4836 = vsel %vm2651, %v4772, %v3967
      %v4838 = vsel %vm2651, %v4774, %v3969
      %v4840 = vsel %vm2651, %v4776, %v3971
      %v4842 = vsel %vm2651, %v4778, %v3973
      %v4844 = vsel %vm2651, %v4780, %v3975
      %v4846 = vsel %vm2651, %v4782, %v3977
      %v4848 = vsel %vm2651, %v4784, %v3979
      %v4850 = vsel %vm2651, %v4786, %v3981
      %v4852 = vsel %vm2651, %v4788, %v3983
      %v4854 = vsel %vm2718, %v4790, %v4132
      %v4856 = vsel %vm2718, %v4792, %v4134
      %v4858 = vsel %vm2718, %v4794, %v4136
      %v4860 = vsel %vm2718, %v4796, %v4138
      %v4862 = vsel %vm2718, %v4798, %v4140
      %v4864 = vsel %vm2718, %v4800, %v4142
      %v4866 = vsel %vm2718, %v4802, %v4144
      %v4868 = vsel %vm2718, %v4804, %v4146
      %v4870 = vsel %vm2718, %v4806, %v4148
      %v4872 = vsel %vm2718, %v4808, %v4150
      %v4874 = vsel %vm2718, %v4810, %v4152
      %v4876 = vsel %vm2718, %v4812, %v4154
      %v4878 = vsel %vm2718, %v4814, %v4156
      %v4880 = vsel %vm2718, %v4816, %v4158
      %v4882 = vsel %vm2718, %v4818, %v4160
      %v4884 = vsel %vm2718, %v4820, %v4162
      %v4886 = vsel %vm2718, %v4822, %v4164
      %v4888 = vsel %vm2718, %v4824, %v4166
      %v4890 = vsel %vm2718, %v4826, %v4168
      %v4892 = vsel %vm2718, %v4828, %v4170
      %v4894 = vsel %vm2718, %v4830, %v4172
      %v4896 = vsel %vm2718, %v4832, %v4174
      %v4898 = vsel %vm2718, %v4834, %v4176
      %v4900 = vsel %vm2718, %v4836, %v4178
      %v4902 = vsel %vm2718, %v4838, %v4180
      %v4904 = vsel %vm2718, %v4840, %v4182
      %v4906 = vsel %vm2718, %v4842, %v4184
      %v4908 = vsel %vm2718, %v4844, %v4186
      %v4910 = vsel %vm2718, %v4846, %v4188
      %v4912 = vsel %vm2718, %v4848, %v4190
      %v4914 = vsel %vm2718, %v4850, %v4192
      %v4916 = vsel %vm2718, %v4852, %v4194
      %v4917 = vsel %vm2785, %v4854, %v1666
      %v4918 = vsel %vm2785, %v4856, %v1668
      %v4919 = vsel %vm2785, %v4858, %v1670
      %v4920 = vsel %vm2785, %v4860, %v1672
      %v4921 = vsel %vm2785, %v4862, %v1674
      %v4922 = vsel %vm2785, %v4864, %v1676
      %v4923 = vsel %vm2785, %v4866, %v1678
      %v4924 = vsel %vm2785, %v4868, %v1680
      %v4925 = vsel %vm2785, %v4870, %v1682
      %v4926 = vsel %vm2785, %v4872, %v1684
      %v4927 = vsel %vm2785, %v4874, %v1686
      %v4928 = vsel %vm2785, %v4876, %v1688
      %v4929 = vsel %vm2785, %v4878, %v1690
      %v4930 = vsel %vm2785, %v4880, %v1692
      %v4931 = vsel %vm2785, %v4882, %v1694
      %v4932 = vsel %vm2785, %v4884, %v1696
      %v4933 = vsel %vm2785, %v4886, %v1698
      %v4934 = vsel %vm2785, %v4888, %v1700
      %v4935 = vsel %vm2785, %v4890, %v1702
      %v4936 = vsel %vm2785, %v4892, %v1704
      %v4937 = vsel %vm2785, %v4894, %v1706
      %v4938 = vsel %vm2785, %v4896, %v1708
      %v4939 = vsel %vm2785, %v4898, %v1710
      %v4940 = vsel %vm2785, %v4900, %v1712
      %v4942 = vsel %vm2785, %v4902, %v4197
      %v4944 = vsel %vm2785, %v4904, %v4199
      %v4946 = vsel %vm2785, %v4906, %v4201
      %v4948 = vsel %vm2785, %v4908, %v4203
      %v4950 = vsel %vm2785, %v4910, %v4205
      %v4952 = vsel %vm2785, %v4912, %v4207
      %v4954 = vsel %vm2785, %v4914, %v4209
      %v4956 = vsel %vm2785, %v4916, %v4211
      %v4958 = vsel %vm2852, %v4917, %v4321
      %v4960 = vsel %vm2852, %v4918, %v4323
      %v4962 = vsel %vm2852, %v4919, %v4325
      %v4964 = vsel %vm2852, %v4920, %v4327
      %v4966 = vsel %vm2852, %v4921, %v4329
      %v4968 = vsel %vm2852, %v4922, %v4331
      %v4970 = vsel %vm2852, %v4923, %v4333
      %v4972 = vsel %vm2852, %v4924, %v4335
      %v4974 = vsel %vm2852, %v4925, %v4337
      %v4976 = vsel %vm2852, %v4926, %v4339
      %v4978 = vsel %vm2852, %v4927, %v4341
      %v4980 = vsel %vm2852, %v4928, %v4343
      %v4982 = vsel %vm2852, %v4929, %v4345
      %v4984 = vsel %vm2852, %v4930, %v4347
      %v4986 = vsel %vm2852, %v4931, %v4349
      %v4988 = vsel %vm2852, %v4932, %v4351
      %v4990 = vsel %vm2852, %v4933, %v4353
      %v4992 = vsel %vm2852, %v4934, %v4355
      %v4994 = vsel %vm2852, %v4935, %v4357
      %v4996 = vsel %vm2852, %v4936, %v4359
      %v4998 = vsel %vm2852, %v4937, %v4361
      %v5000 = vsel %vm2852, %v4938, %v4363
      %v5002 = vsel %vm2852, %v4939, %v4365
      %v5004 = vsel %vm2852, %v4940, %v4367
      %v5006 = vsel %vm2852, %v4942, %v4369
      %v5008 = vsel %vm2852, %v4944, %v4371
      %v5010 = vsel %vm2852, %v4946, %v4373
      %v5012 = vsel %vm2852, %v4948, %v4375
      %v5014 = vsel %vm2852, %v4950, %v4377
      %v5016 = vsel %vm2852, %v4952, %v4379
      %v5018 = vsel %vm2852, %v4954, %v4381
      %v5020 = vsel %vm2852, %v4956, %v4383
      %v5022 = vsel %vm2919, %v4958, %v4413
      %v5024 = vsel %vm2919, %v4960, %v4415
      %v5026 = vsel %vm2919, %v4962, %v4417
      %v5028 = vsel %vm2919, %v4964, %v4419
      %v5030 = vsel %vm2919, %v4966, %v4421
      %v5032 = vsel %vm2919, %v4968, %v4423
      %v5034 = vsel %vm2919, %v4970, %v4425
      %v5036 = vsel %vm2919, %v4972, %v4427
      %v5038 = vsel %vm2919, %v4974, %v4429
      %v5040 = vsel %vm2919, %v4976, %v4431
      %v5042 = vsel %vm2919, %v4978, %v4433
      %v5044 = vsel %vm2919, %v4980, %v4435
      %v5046 = vsel %vm2919, %v4982, %v4437
      %v5048 = vsel %vm2919, %v4984, %v4439
      %v5050 = vsel %vm2919, %v4986, %v4441
      %v5052 = vsel %vm2919, %v4988, %v4443
      %v5054 = vsel %vm2919, %v4990, %v4445
      %v5056 = vsel %vm2919, %v4992, %v4447
      %v5058 = vsel %vm2919, %v4994, %v4449
      %v5060 = vsel %vm2919, %v4996, %v4451
      %v5062 = vsel %vm2919, %v4998, %v4453
      %v5064 = vsel %vm2919, %v5000, %v4455
      %v5066 = vsel %vm2919, %v5002, %v4457
      %v5068 = vsel %vm2919, %v5004, %v4459
      %v5070 = vsel %vm2919, %v5006, %v4461
      %v5072 = vsel %vm2919, %v5008, %v4463
      %v5074 = vsel %vm2919, %v5010, %v4465
      %v5076 = vsel %vm2919, %v5012, %v4467
      %v5078 = vsel %vm2919, %v5014, %v4469
      %v5080 = vsel %vm2919, %v5016, %v4471
      %v5082 = vsel %vm2919, %v5018, %v4473
      %v5084 = vsel %vm2919, %v5020, %v4475
      %v5086 = vsel %vm2986, %v5022, %v4478
      %v5088 = vsel %vm2986, %v5024, %v4480
      %v5090 = vsel %vm2986, %v5026, %v4482
      %v5092 = vsel %vm2986, %v5028, %v4484
      %v5094 = vsel %vm2986, %v5030, %v4486
      %v5096 = vsel %vm2986, %v5032, %v4488
      %v5098 = vsel %vm2986, %v5034, %v4490
      %v5100 = vsel %vm2986, %v5036, %v4492
      %v5102 = vsel %vm2986, %v5038, %v4494
      %v5104 = vsel %vm2986, %v5040, %v4496
      %v5106 = vsel %vm2986, %v5042, %v4498
      %v5108 = vsel %vm2986, %v5044, %v4500
      %v5110 = vsel %vm2986, %v5046, %v4502
      %v5112 = vsel %vm2986, %v5048, %v4504
      %v5114 = vsel %vm2986, %v5050, %v4506
      %v5116 = vsel %vm2986, %v5052, %v4508
      %v5118 = vsel %vm2986, %v5054, %v4510
      %v5120 = vsel %vm2986, %v5056, %v4512
      %v5122 = vsel %vm2986, %v5058, %v4514
      %v5124 = vsel %vm2986, %v5060, %v4516
      %v5126 = vsel %vm2986, %v5062, %v4518
      %v5128 = vsel %vm2986, %v5064, %v4520
      %v5130 = vsel %vm2986, %v5066, %v4522
      %v5132 = vsel %vm2986, %v5068, %v4524
      %v5134 = vsel %vm2986, %v5070, %v4526
      %v5136 = vsel %vm2986, %v5072, %v4528
      %v5138 = vsel %vm2986, %v5074, %v4530
      %v5140 = vsel %vm2986, %v5076, %v4532
      %v5142 = vsel %vm2986, %v5078, %v4534
      %v5144 = vsel %vm2986, %v5080, %v4536
      %v5146 = vsel %vm2986, %v5082, %v4538
      %v5148 = vsel %vm2986, %v5084, %v4540
      %v5150 = vsel %vm3053, %v5086, %v4558
      %v5152 = vsel %vm3053, %v5088, %v4560
      %v5154 = vsel %vm3053, %v5090, %v4562
      %v5156 = vsel %vm3053, %v5092, %v4564
      %v5158 = vsel %vm3053, %v5094, %v4566
      %v5160 = vsel %vm3053, %v5096, %v4568
      %v5162 = vsel %vm3053, %v5098, %v4570
      %v5164 = vsel %vm3053, %v5100, %v4572
      %v5166 = vsel %vm3053, %v5102, %v4574
      %v5168 = vsel %vm3053, %v5104, %v4576
      %v5170 = vsel %vm3053, %v5106, %v4578
      %v5172 = vsel %vm3053, %v5108, %v4580
      %v5174 = vsel %vm3053, %v5110, %v4582
      %v5176 = vsel %vm3053, %v5112, %v4584
      %v5178 = vsel %vm3053, %v5114, %v4586
      %v5180 = vsel %vm3053, %v5116, %v4588
      %v5182 = vsel %vm3053, %v5118, %v4590
      %v5184 = vsel %vm3053, %v5120, %v4592
      %v5186 = vsel %vm3053, %v5122, %v4594
      %v5188 = vsel %vm3053, %v5124, %v4596
      %v5190 = vsel %vm3053, %v5126, %v4598
      %v5192 = vsel %vm3053, %v5128, %v4600
      %v5194 = vsel %vm3053, %v5130, %v4602
      %v5196 = vsel %vm3053, %v5132, %v4604
      %v5198 = vsel %vm3053, %v5134, %v4606
      %v5200 = vsel %vm3053, %v5136, %v4608
      %v5202 = vsel %vm3053, %v5138, %v4610
      %v5204 = vsel %vm3053, %v5140, %v4612
      %v5206 = vsel %vm3053, %v5142, %v4614
      %v5208 = vsel %vm3053, %v5144, %v4616
      %v5210 = vsel %vm3053, %v5146, %v4618
      %v5212 = vsel %vm3053, %v5148, %v4620
      %v5213 = vshrl.u32 %v5150, 16
      %v5215 = vrot.slane %v5213, 4
      %v5216 = vshll.u32 %v5150, 16
      %v5218 = vrot.slane %v5216, 5
      %v5219 = vor.u32 %v5215, %v5218
      %v5220 = vshrl.u32 %v5152, 16
      %v5222 = vrot.slane %v5220, 4
      %v5223 = vshll.u32 %v5152, 16
      %v5225 = vrot.slane %v5223, 5
      %v5226 = vor.u32 %v5222, %v5225
      %v5227 = vsel %vm594, %v5219, %v5226
      %v5228 = vshrl.u32 %v5154, 16
      %v5230 = vrot.slane %v5228, 4
      %v5231 = vshll.u32 %v5154, 16
      %v5233 = vrot.slane %v5231, 5
      %v5234 = vor.u32 %v5230, %v5233
      %v5235 = vsel %vm594, %v5226, %v5234
      %v5236 = vshrl.u32 %v5156, 16
      %v5238 = vrot.slane %v5236, 4
      %v5239 = vshll.u32 %v5156, 16
      %v5241 = vrot.slane %v5239, 5
      %v5242 = vor.u32 %v5238, %v5241
      %v5243 = vsel %vm594, %v5234, %v5242
      %v5244 = vshrl.u32 %v5158, 16
      %v5246 = vrot.slane %v5244, 4
      %v5247 = vshll.u32 %v5158, 16
      %v5249 = vrot.slane %v5247, 5
      %v5250 = vor.u32 %v5246, %v5249
      %v5251 = vsel %vm594, %v5242, %v5250
      %v5252 = vshrl.u32 %v5160, 16
      %v5254 = vrot.slane %v5252, 4
      %v5255 = vshll.u32 %v5160, 16
      %v5257 = vrot.slane %v5255, 5
      %v5258 = vor.u32 %v5254, %v5257
      %v5259 = vsel %vm594, %v5250, %v5258
      %v5260 = vshrl.u32 %v5162, 16
      %v5262 = vrot.slane %v5260, 4
      %v5263 = vshll.u32 %v5162, 16
      %v5265 = vrot.slane %v5263, 5
      %v5266 = vor.u32 %v5262, %v5265
      %v5267 = vsel %vm594, %v5258, %v5266
      %v5268 = vshrl.u32 %v5164, 16
      %v5270 = vrot.slane %v5268, 4
      %v5271 = vshll.u32 %v5164, 16
      %v5273 = vrot.slane %v5271, 5
      %v5274 = vor.u32 %v5270, %v5273
      %v5275 = vsel %vm594, %v5266, %v5274
      %v5276 = vshrl.u32 %v5166, 16
      %v5278 = vrot.slane %v5276, 4
      %v5279 = vshll.u32 %v5166, 16
      %v5281 = vrot.slane %v5279, 5
      %v5282 = vor.u32 %v5278, %v5281
      %v5283 = vsel %vm594, %v5274, %v5282
      %v5284 = vshrl.u32 %v5168, 16
      %v5286 = vrot.slane %v5284, 4
      %v5287 = vshll.u32 %v5168, 16
      %v5289 = vrot.slane %v5287, 5
      %v5290 = vor.u32 %v5286, %v5289
      %v5291 = vsel %vm594, %v5282, %v5290
      %v5292 = vshrl.u32 %v5170, 16
      %v5294 = vrot.slane %v5292, 4
      %v5295 = vshll.u32 %v5170, 16
      %v5297 = vrot.slane %v5295, 5
      %v5298 = vor.u32 %v5294, %v5297
      %v5299 = vsel %vm594, %v5290, %v5298
      %v5300 = vshrl.u32 %v5172, 16
      %v5302 = vrot.slane %v5300, 4
      %v5303 = vshll.u32 %v5172, 16
      %v5305 = vrot.slane %v5303, 5
      %v5306 = vor.u32 %v5302, %v5305
      %v5307 = vsel %vm594, %v5298, %v5306
      %v5308 = vshrl.u32 %v5174, 16
      %v5310 = vrot.slane %v5308, 4
      %v5311 = vshll.u32 %v5174, 16
      %v5313 = vrot.slane %v5311, 5
      %v5314 = vor.u32 %v5310, %v5313
      %v5315 = vsel %vm594, %v5306, %v5314
      %v5316 = vshrl.u32 %v5176, 16
      %v5318 = vrot.slane %v5316, 4
      %v5319 = vshll.u32 %v5176, 16
      %v5321 = vrot.slane %v5319, 5
      %v5322 = vor.u32 %v5318, %v5321
      %v5323 = vsel %vm594, %v5314, %v5322
      %v5324 = vshrl.u32 %v5178, 16
      %v5326 = vrot.slane %v5324, 4
      %v5327 = vshll.u32 %v5178, 16
      %v5329 = vrot.slane %v5327, 5
      %v5330 = vor.u32 %v5326, %v5329
      %v5331 = vsel %vm594, %v5322, %v5330
      %v5332 = vshrl.u32 %v5180, 16
      %v5334 = vrot.slane %v5332, 4
      %v5335 = vshll.u32 %v5180, 16
      %v5337 = vrot.slane %v5335, 5
      %v5338 = vor.u32 %v5334, %v5337
      %v5339 = vsel %vm594, %v5330, %v5338
      %v5340 = vshrl.u32 %v5182, 16
      %v5342 = vrot.slane %v5340, 4
      %v5343 = vshll.u32 %v5182, 16
      %v5345 = vrot.slane %v5343, 5
      %v5346 = vor.u32 %v5342, %v5345
      %v5347 = vsel %vm594, %v5338, %v5346
      %v5348 = vshrl.u32 %v5184, 16
      %v5350 = vrot.slane %v5348, 4
      %v5351 = vshll.u32 %v5184, 16
      %v5353 = vrot.slane %v5351, 5
      %v5354 = vor.u32 %v5350, %v5353
      %v5355 = vsel %vm594, %v5346, %v5354
      %v5356 = vshrl.u32 %v5186, 16
      %v5358 = vrot.slane %v5356, 4
      %v5359 = vshll.u32 %v5186, 16
      %v5361 = vrot.slane %v5359, 5
      %v5362 = vor.u32 %v5358, %v5361
      %v5363 = vsel %vm594, %v5354, %v5362
      %v5364 = vshrl.u32 %v5188, 16
      %v5366 = vrot.slane %v5364, 4
      %v5367 = vshll.u32 %v5188, 16
      %v5369 = vrot.slane %v5367, 5
      %v5370 = vor.u32 %v5366, %v5369
      %v5371 = vsel %vm594, %v5362, %v5370
      %v5372 = vshrl.u32 %v5190, 16
      %v5374 = vrot.slane %v5372, 4
      %v5375 = vshll.u32 %v5190, 16
      %v5377 = vrot.slane %v5375, 5
      %v5378 = vor.u32 %v5374, %v5377
      %v5379 = vsel %vm594, %v5370, %v5378
      %v5380 = vshrl.u32 %v5192, 16
      %v5382 = vrot.slane %v5380, 4
      %v5383 = vshll.u32 %v5192, 16
      %v5385 = vrot.slane %v5383, 5
      %v5386 = vor.u32 %v5382, %v5385
      %v5387 = vsel %vm594, %v5378, %v5386
      %v5388 = vshrl.u32 %v5194, 16
      %v5390 = vrot.slane %v5388, 4
      %v5391 = vshll.u32 %v5194, 16
      %v5393 = vrot.slane %v5391, 5
      %v5394 = vor.u32 %v5390, %v5393
      %v5395 = vsel %vm594, %v5386, %v5394
      %v5396 = vshrl.u32 %v5196, 16
      %v5398 = vrot.slane %v5396, 4
      %v5399 = vshll.u32 %v5196, 16
      %v5401 = vrot.slane %v5399, 5
      %v5402 = vor.u32 %v5398, %v5401
      %v5403 = vsel %vm594, %v5394, %v5402
      %v5404 = vshrl.u32 %v5198, 16
      %v5406 = vrot.slane %v5404, 4
      %v5407 = vshll.u32 %v5198, 16
      %v5409 = vrot.slane %v5407, 5
      %v5410 = vor.u32 %v5406, %v5409
      %v5411 = vsel %vm594, %v5402, %v5410
      %v5412 = vshrl.u32 %v5200, 16
      %v5414 = vrot.slane %v5412, 4
      %v5415 = vshll.u32 %v5200, 16
      %v5417 = vrot.slane %v5415, 5
      %v5418 = vor.u32 %v5414, %v5417
      %v5419 = vsel %vm594, %v5410, %v5418
      %v5420 = vshrl.u32 %v5202, 16
      %v5422 = vrot.slane %v5420, 4
      %v5423 = vshll.u32 %v5202, 16
      %v5425 = vrot.slane %v5423, 5
      %v5426 = vor.u32 %v5422, %v5425
      %v5427 = vsel %vm594, %v5418, %v5426
      %v5428 = vshrl.u32 %v5204, 16
      %v5430 = vrot.slane %v5428, 4
      %v5431 = vshll.u32 %v5204, 16
      %v5433 = vrot.slane %v5431, 5
      %v5434 = vor.u32 %v5430, %v5433
      %v5435 = vsel %vm594, %v5426, %v5434
      %v5436 = vshrl.u32 %v5206, 16
      %v5438 = vrot.slane %v5436, 4
      %v5439 = vshll.u32 %v5206, 16
      %v5441 = vrot.slane %v5439, 5
      %v5442 = vor.u32 %v5438, %v5441
      %v5443 = vsel %vm594, %v5434, %v5442
      %v5444 = vshrl.u32 %v5208, 16
      %v5446 = vrot.slane %v5444, 4
      %v5447 = vshll.u32 %v5208, 16
      %v5449 = vrot.slane %v5447, 5
      %v5450 = vor.u32 %v5446, %v5449
      %v5451 = vsel %vm594, %v5442, %v5450
      %v5452 = vshrl.u32 %v5210, 16
      %v5454 = vrot.slane %v5452, 4
      %v5455 = vshll.u32 %v5210, 16
      %v5457 = vrot.slane %v5455, 5
      %v5458 = vor.u32 %v5454, %v5457
      %v5459 = vsel %vm594, %v5450, %v5458
      %v5460 = vshrl.u32 %v5212, 16
      %v5462 = vrot.slane %v5460, 4
      %v5463 = vshll.u32 %v5212, 16
      %v5465 = vrot.slane %v5463, 5
      %v5466 = vor.u32 %v5462, %v5465
      %v5467 = vsel %vm594, %v5458, %v5466
      %5468 = vrot.lane.b32.xlu0 %v5219, 64
      %v5469 = vpop.permute.xlu0 %5468
      %5470 = vrot.lane.b32.xlu0 %v5227, 64
      %v5471 = vpop.permute.xlu0 %5470
      %5472 = vrot.lane.b32.xlu0 %v5235, 64
      %v5473 = vpop.permute.xlu0 %5472
      %5474 = vrot.lane.b32.xlu0 %v5243, 64
      %v5475 = vpop.permute.xlu0 %5474
      %5476 = vrot.lane.b32.xlu0 %v5251, 64
      %v5477 = vpop.permute.xlu0 %5476
      %5478 = vrot.lane.b32.xlu0 %v5259, 64
      %v5479 = vpop.permute.xlu0 %5478
      %5480 = vrot.lane.b32.xlu0 %v5267, 64
      %v5481 = vpop.permute.xlu0 %5480
      %5482 = vrot.lane.b32.xlu0 %v5275, 64
      %v5483 = vpop.permute.xlu0 %5482
      %5484 = vrot.lane.b32.xlu0 %v5283, 64
      %v5485 = vpop.permute.xlu0 %5484
      %5486 = vrot.lane.b32.xlu0 %v5291, 64
      %v5487 = vpop.permute.xlu0 %5486
      %5488 = vrot.lane.b32.xlu0 %v5299, 64
      %v5489 = vpop.permute.xlu0 %5488
      %5490 = vrot.lane.b32.xlu0 %v5307, 64
      %v5491 = vpop.permute.xlu0 %5490
      %5492 = vrot.lane.b32.xlu0 %v5315, 64
      %v5493 = vpop.permute.xlu0 %5492
      %5494 = vrot.lane.b32.xlu0 %v5323, 64
      %v5495 = vpop.permute.xlu0 %5494
      %5496 = vrot.lane.b32.xlu0 %v5331, 64
      %v5497 = vpop.permute.xlu0 %5496
      %5498 = vrot.lane.b32.xlu0 %v5339, 64
      %v5499 = vpop.permute.xlu0 %5498
      %5500 = vrot.lane.b32.xlu0 %v5347, 64
      %v5501 = vpop.permute.xlu0 %5500
      %5502 = vrot.lane.b32.xlu0 %v5355, 64
      %v5503 = vpop.permute.xlu0 %5502
      %5504 = vrot.lane.b32.xlu0 %v5363, 64
      %v5505 = vpop.permute.xlu0 %5504
      %5506 = vrot.lane.b32.xlu0 %v5371, 64
      %v5507 = vpop.permute.xlu0 %5506
      %5508 = vrot.lane.b32.xlu0 %v5379, 64
      %v5509 = vpop.permute.xlu0 %5508
      %5510 = vrot.lane.b32.xlu0 %v5387, 64
      %v5511 = vpop.permute.xlu0 %5510
      %5512 = vrot.lane.b32.xlu0 %v5395, 64
      %v5513 = vpop.permute.xlu0 %5512
      %5514 = vrot.lane.b32.xlu0 %v5403, 64
      %v5515 = vpop.permute.xlu0 %5514
      %5516 = vrot.lane.b32.xlu0 %v5411, 64
      %v5517 = vpop.permute.xlu0 %5516
      %5518 = vrot.lane.b32.xlu0 %v5419, 64
      %v5519 = vpop.permute.xlu0 %5518
      %5520 = vrot.lane.b32.xlu0 %v5427, 64
      %v5521 = vpop.permute.xlu0 %5520
      %5522 = vrot.lane.b32.xlu0 %v5435, 64
      %v5523 = vpop.permute.xlu0 %5522
      %5524 = vrot.lane.b32.xlu0 %v5443, 64
      %v5525 = vpop.permute.xlu0 %5524
      %5526 = vrot.lane.b32.xlu0 %v5451, 64
      %v5527 = vpop.permute.xlu0 %5526
      %5528 = vrot.lane.b32.xlu0 %v5459, 64
      %v5529 = vpop.permute.xlu0 %5528
      %5530 = vrot.lane.b32.xlu0 %v5467, 64
      %v5531 = vpop.permute.xlu0 %5530
      %5532 = vrot.lane.b32.xlu0 %v5466, 64
      %v5533 = vpop.permute.xlu0 %5532
      %vm5534 = vcmask 523264
      %v5536 = vsel %vm5534, %v3390, %v5469
      %v5538 = vsel %vm5534, %v3392, %v5471
      %v5540 = vsel %vm5534, %v3394, %v5473
      %v5542 = vsel %vm5534, %v3396, %v5475
      %v5544 = vsel %vm5534, %v3398, %v5477
      %v5546 = vsel %vm5534, %v3400, %v5479
      %v5548 = vsel %vm5534, %v3402, %v5481
      %v5550 = vsel %vm5534, %v3404, %v5483
      %v5552 = vsel %vm5534, %v3406, %v5485
      %v5554 = vsel %vm5534, %v3408, %v5487
      %v5556 = vsel %vm5534, %v3410, %v5489
      %v5558 = vsel %vm5534, %v3412, %v5491
      %v5560 = vsel %vm5534, %v3414, %v5493
      %v5562 = vsel %vm5534, %v3416, %v5495
      %v5564 = vsel %vm5534, %v3418, %v5497
      %v5566 = vsel %vm5534, %v3420, %v5499
      %v5568 = vsel %vm5534, %v3422, %v5501
      %v5570 = vsel %vm5534, %v3424, %v5503
      %v5572 = vsel %vm5534, %v3426, %v5505
      %v5574 = vsel %vm5534, %v3428, %v5507
      %v5576 = vsel %vm5534, %v3430, %v5509
      %v5578 = vsel %vm5534, %v3432, %v5511
      %v5580 = vsel %vm5534, %v3434, %v5513
      %v5582 = vsel %vm5534, %v3436, %v5515
      %v5584 = vsel %vm5534, %v3438, %v5517
      %v5586 = vsel %vm5534, %v3440, %v5519
      %v5588 = vsel %vm5534, %v3442, %v5521
      %v5590 = vsel %vm5534, %v3444, %v5523
      %v5592 = vsel %vm5534, %v3446, %v5525
      %v5594 = vsel %vm5534, %v3448, %v5527
      %v5596 = vsel %vm5534, %v3450, %v5529
      %v5598 = vsel %vm5534, %v3452, %v5531
      %v5600 = vsel %vm5534, %v3454, %v5533
      %v5601 = vld [vmem:[%s1] sm:$0xf]
      %v5602 = vld [vmem:[%s1 + $0x4] sm:$0xf]
      %v5603 = vld [vmem:[%s1 + $0x8] sm:$0xf]
      %v5604 = vld [vmem:[%s1 + $0xc] sm:$0xf]
      %v5605 = vld [vmem:[%s1 + $0x10] sm:$0xf]
      %v5606 = vld [vmem:[%s1 + $0x14] sm:$0xf]
      %v5607 = vld [vmem:[%s1 + $0x18] sm:$0xf]
      %v5608 = vld [vmem:[%s1 + $0x1c] sm:$0xf]
      %v5609 = vld [vmem:[%s1 + $0x20] sm:$0xf]
      %v5610 = vld [vmem:[%s1 + $0x24] sm:$0xf]
      %v5611 = vld [vmem:[%s1 + $0x28] sm:$0xf]
      %v5612 = vld [vmem:[%s1 + $0x2c] sm:$0xf]
      %v5613 = vld [vmem:[%s1 + $0x30] sm:$0xf]
      %v5614 = vld [vmem:[%s1 + $0x34] sm:$0x3]
      %v5615 = vld [vmem:[%s2] sm:$0x1]
      %v5617 = vlaneseq
      %v5618 = vshrl.u32 %v5617, 7
      %v5619 = vsub.s32 0, %v5618
      %v5620 = vrot.slane %v5615, %v5619
      %v5622 = vshrl.u32 %v5536, 16
      %v5624 = vrot.slane %v5622, 3
      %v5625 = vshll.u32 %v5536, 16
      %v5627 = vrot.slane %v5625, 4
      %v5628 = vor.u32 %v5624, %v5627
      %v5629 = vshrl.u32 %v5538, 16
      %v5631 = vrot.slane %v5629, 3
      %v5632 = vshll.u32 %v5538, 16
      %v5634 = vrot.slane %v5632, 4
      %v5635 = vor.u32 %v5631, %v5634
      %v5636 = vsel %vm3648, %v5628, %v5635
      %v5637 = vshrl.u32 %v5540, 16
      %v5639 = vrot.slane %v5637, 3
      %v5640 = vshll.u32 %v5540, 16
      %v5642 = vrot.slane %v5640, 4
      %v5643 = vor.u32 %v5639, %v5642
      %v5644 = vsel %vm3648, %v5635, %v5643
      %v5645 = vshrl.u32 %v5542, 16
      %v5647 = vrot.slane %v5645, 3
      %v5648 = vshll.u32 %v5542, 16
      %v5650 = vrot.slane %v5648, 4
      %v5651 = vor.u32 %v5647, %v5650
      %v5652 = vsel %vm3648, %v5643, %v5651
      %v5653 = vshrl.u32 %v5544, 16
      %v5655 = vrot.slane %v5653, 3
      %v5656 = vshll.u32 %v5544, 16
      %v5658 = vrot.slane %v5656, 4
      %v5659 = vor.u32 %v5655, %v5658
      %v5660 = vsel %vm3648, %v5651, %v5659
      %v5661 = vshrl.u32 %v5546, 16
      %v5663 = vrot.slane %v5661, 3
      %v5664 = vshll.u32 %v5546, 16
      %v5666 = vrot.slane %v5664, 4
      %v5667 = vor.u32 %v5663, %v5666
      %v5668 = vsel %vm3648, %v5659, %v5667
      %v5669 = vshrl.u32 %v5548, 16
      %v5671 = vrot.slane %v5669, 3
      %v5672 = vshll.u32 %v5548, 16
      %v5674 = vrot.slane %v5672, 4
      %v5675 = vor.u32 %v5671, %v5674
      %v5676 = vsel %vm3648, %v5667, %v5675
      %v5677 = vshrl.u32 %v5550, 16
      %v5679 = vrot.slane %v5677, 3
      %v5680 = vshll.u32 %v5550, 16
      %v5682 = vrot.slane %v5680, 4
      %v5683 = vor.u32 %v5679, %v5682
      %v5684 = vsel %vm3648, %v5675, %v5683
      %v5685 = vshrl.u32 %v5552, 16
      %v5687 = vrot.slane %v5685, 3
      %v5688 = vshll.u32 %v5552, 16
      %v5690 = vrot.slane %v5688, 4
      %v5691 = vor.u32 %v5687, %v5690
      %v5692 = vsel %vm3648, %v5683, %v5691
      %v5693 = vshrl.u32 %v5554, 16
      %v5695 = vrot.slane %v5693, 3
      %v5696 = vshll.u32 %v5554, 16
      %v5698 = vrot.slane %v5696, 4
      %v5699 = vor.u32 %v5695, %v5698
      %v5700 = vsel %vm3648, %v5691, %v5699
      %v5701 = vshrl.u32 %v5556, 16
      %v5703 = vrot.slane %v5701, 3
      %v5704 = vshll.u32 %v5556, 16
      %v5706 = vrot.slane %v5704, 4
      %v5707 = vor.u32 %v5703, %v5706
      %v5708 = vsel %vm3648, %v5699, %v5707
      %v5709 = vshrl.u32 %v5558, 16
      %v5711 = vrot.slane %v5709, 3
      %v5712 = vshll.u32 %v5558, 16
      %v5714 = vrot.slane %v5712, 4
      %v5715 = vor.u32 %v5711, %v5714
      %v5716 = vsel %vm3648, %v5707, %v5715
      %v5717 = vshrl.u32 %v5560, 16
      %v5719 = vrot.slane %v5717, 3
      %v5720 = vshll.u32 %v5560, 16
      %v5722 = vrot.slane %v5720, 4
      %v5723 = vor.u32 %v5719, %v5722
      %v5724 = vsel %vm3648, %v5715, %v5723
      %v5725 = vshrl.u32 %v5562, 16
      %v5727 = vrot.slane %v5725, 3
      %v5728 = vshll.u32 %v5562, 16
      %v5730 = vrot.slane %v5728, 4
      %v5731 = vor.u32 %v5727, %v5730
      %v5732 = vsel %vm3648, %v5723, %v5731
      %v5733 = vshrl.u32 %v5564, 16
      %v5735 = vrot.slane %v5733, 3
      %v5736 = vshll.u32 %v5564, 16
      %v5738 = vrot.slane %v5736, 4
      %v5739 = vor.u32 %v5735, %v5738
      %v5740 = vsel %vm3648, %v5731, %v5739
      %v5741 = vshrl.u32 %v5566, 16
      %v5743 = vrot.slane %v5741, 3
      %v5744 = vshll.u32 %v5566, 16
      %v5746 = vrot.slane %v5744, 4
      %v5747 = vor.u32 %v5743, %v5746
      %v5748 = vsel %vm3648, %v5739, %v5747
      %v5749 = vshrl.u32 %v5568, 16
      %v5751 = vrot.slane %v5749, 3
      %v5752 = vshll.u32 %v5568, 16
      %v5754 = vrot.slane %v5752, 4
      %v5755 = vor.u32 %v5751, %v5754
      %v5756 = vsel %vm3648, %v5747, %v5755
      %v5757 = vshrl.u32 %v5570, 16
      %v5759 = vrot.slane %v5757, 3
      %v5760 = vshll.u32 %v5570, 16
      %v5762 = vrot.slane %v5760, 4
      %v5763 = vor.u32 %v5759, %v5762
      %v5764 = vsel %vm3648, %v5755, %v5763
      %v5765 = vshrl.u32 %v5572, 16
      %v5767 = vrot.slane %v5765, 3
      %v5768 = vshll.u32 %v5572, 16
      %v5770 = vrot.slane %v5768, 4
      %v5771 = vor.u32 %v5767, %v5770
      %v5772 = vsel %vm3648, %v5763, %v5771
      %v5773 = vshrl.u32 %v5574, 16
      %v5775 = vrot.slane %v5773, 3
      %v5776 = vshll.u32 %v5574, 16
      %v5778 = vrot.slane %v5776, 4
      %v5779 = vor.u32 %v5775, %v5778
      %v5780 = vsel %vm3648, %v5771, %v5779
      %v5781 = vshrl.u32 %v5576, 16
      %v5783 = vrot.slane %v5781, 3
      %v5784 = vshll.u32 %v5576, 16
      %v5786 = vrot.slane %v5784, 4
      %v5787 = vor.u32 %v5783, %v5786
      %v5788 = vsel %vm3648, %v5779, %v5787
      %v5789 = vshrl.u32 %v5578, 16
      %v5791 = vrot.slane %v5789, 3
      %v5792 = vshll.u32 %v5578, 16
      %v5794 = vrot.slane %v5792, 4
      %v5795 = vor.u32 %v5791, %v5794
      %v5796 = vsel %vm3648, %v5787, %v5795
      %v5797 = vshrl.u32 %v5580, 16
      %v5799 = vrot.slane %v5797, 3
      %v5800 = vshll.u32 %v5580, 16
      %v5802 = vrot.slane %v5800, 4
      %v5803 = vor.u32 %v5799, %v5802
      %v5804 = vsel %vm3648, %v5795, %v5803
      %v5805 = vshrl.u32 %v5582, 16
      %v5807 = vrot.slane %v5805, 3
      %v5808 = vshll.u32 %v5582, 16
      %v5810 = vrot.slane %v5808, 4
      %v5811 = vor.u32 %v5807, %v5810
      %v5812 = vsel %vm3648, %v5803, %v5811
      %v5813 = vshrl.u32 %v5584, 16
      %v5815 = vrot.slane %v5813, 3
      %v5816 = vshll.u32 %v5584, 16
      %v5818 = vrot.slane %v5816, 4
      %v5819 = vor.u32 %v5815, %v5818
      %v5820 = vsel %vm3648, %v5811, %v5819
      %v5821 = vshrl.u32 %v5586, 16
      %v5823 = vrot.slane %v5821, 3
      %v5824 = vshll.u32 %v5586, 16
      %v5826 = vrot.slane %v5824, 4
      %v5827 = vor.u32 %v5823, %v5826
      %v5828 = vsel %vm3648, %v5819, %v5827
      %v5829 = vshrl.u32 %v5588, 16
      %v5831 = vrot.slane %v5829, 3
      %v5832 = vshll.u32 %v5588, 16
      %v5834 = vrot.slane %v5832, 4
      %v5835 = vor.u32 %v5831, %v5834
      %v5836 = vsel %vm3648, %v5827, %v5835
      %v5837 = vshrl.u32 %v5590, 16
      %v5839 = vrot.slane %v5837, 3
      %v5840 = vshll.u32 %v5590, 16
      %v5842 = vrot.slane %v5840, 4
      %v5843 = vor.u32 %v5839, %v5842
      %v5844 = vsel %vm3648, %v5835, %v5843
      %v5845 = vshrl.u32 %v5592, 16
      %v5847 = vrot.slane %v5845, 3
      %v5848 = vshll.u32 %v5592, 16
      %v5850 = vrot.slane %v5848, 4
      %v5851 = vor.u32 %v5847, %v5850
      %v5852 = vsel %vm3648, %v5843, %v5851
      %v5853 = vshrl.u32 %v5594, 16
      %v5855 = vrot.slane %v5853, 3
      %v5856 = vshll.u32 %v5594, 16
      %v5858 = vrot.slane %v5856, 4
      %v5859 = vor.u32 %v5855, %v5858
      %v5860 = vsel %vm3648, %v5851, %v5859
      %v5861 = vshrl.u32 %v5596, 16
      %v5863 = vrot.slane %v5861, 3
      %v5864 = vshll.u32 %v5596, 16
      %v5866 = vrot.slane %v5864, 4
      %v5867 = vor.u32 %v5863, %v5866
      %v5868 = vsel %vm3648, %v5859, %v5867
      %v5869 = vshrl.u32 %v5598, 16
      %v5871 = vrot.slane %v5869, 3
      %v5872 = vshll.u32 %v5598, 16
      %v5874 = vrot.slane %v5872, 4
      %v5875 = vor.u32 %v5871, %v5874
      %v5876 = vsel %vm3648, %v5867, %v5875
      %v5877 = vshrl.u32 %v5600, 16
      %v5879 = vrot.slane %v5877, 3
      %v5880 = vshll.u32 %v5600, 16
      %v5882 = vrot.slane %v5880, 4
      %v5883 = vor.u32 %v5879, %v5882
      %v5884 = vsel %vm3648, %v5875, %v5883
      %v5899 = vunpack.c.l.b16 %v5601
      %v5900 = vunpack.c.l.b16 %v5602
      %v5901 = vunpack.c.l.b16 %v5603
      %v5902 = vunpack.c.l.b16 %v5604
      %v5903 = vunpack.c.l.b16 %v5605
      %v5904 = vunpack.c.l.b16 %v5606
      %v5905 = vunpack.c.l.b16 %v5607
      %v5906 = vunpack.c.l.b16 %v5608
      %v5907 = vunpack.c.l.b16 %v5609
      %v5908 = vunpack.c.l.b16 %v5610
      %v5909 = vunpack.c.l.b16 %v5611
      %v5910 = vunpack.c.l.b16 %v5612
      %v5911 = vunpack.c.l.b16 %v5613
      %v5912 = vunpack.c.l.b16 %v5614
      %v5913 = vpack.c.b16 %v5900, %v5899
      %v5914 = vpack.c.b16 %v5902, %v5901
      %v5915 = vpack.c.b16 %v5904, %v5903
      %v5916 = vpack.c.b16 %v5906, %v5905
      %v5917 = vpack.c.b16 %v5908, %v5907
      %v5918 = vpack.c.b16 %v5910, %v5909
      %v5919 = vpack.c.b16 %v5912, %v5911
      %vm5926 = vcmask 883712
      %v5928 = vsel %vm5926, %v5636, 0
      %v5931 = vsel %vm5926, %v5644, 0
      %v5934 = vsel %vm5926, %v5652, 0
      %v5937 = vsel %vm5926, %v5660, 0
      %v5940 = vsel %vm5926, %v5668, 0
      %v5943 = vsel %vm5926, %v5676, 0
      %v5946 = vsel %vm5926, %v5684, 0
      %v5949 = vsel %vm5926, %v5692, 0
      %v5952 = vsel %vm5926, %v5700, 0
      %v5955 = vsel %vm5926, %v5708, 0
      %v5958 = vsel %vm5926, %v5716, 0
      %v5961 = vsel %vm5926, %v5724, 0
      %v5964 = vsel %vm5926, %v5732, 0
      %v5967 = vsel %vm5926, %v5740, 0
      %v5970 = vsel %vm5926, %v5748, 0
      %v5973 = vsel %vm5926, %v5756, 0
      %v5976 = vsel %vm5926, %v5764, 0
      %v5979 = vsel %vm5926, %v5772, 0
      %v5982 = vsel %vm5926, %v5780, 0
      %v5985 = vsel %vm5926, %v5788, 0
      %v5988 = vsel %vm5926, %v5796, 0
      %v5991 = vsel %vm5926, %v5804, 0
      %v5994 = vsel %vm5926, %v5812, 0
      %v5997 = vsel %vm5926, %v5820, 0
      %v6000 = vsel %vm5926, %v5828, 0
      %v6003 = vsel %vm5926, %v5836, 0
      %v6006 = vsel %vm5926, %v5844, 0
      %v6009 = vsel %vm5926, %v5852, 0
      %v6012 = vsel %vm5926, %v5860, 0
      %v6015 = vsel %vm5926, %v5868, 0
      %v6018 = vsel %vm5926, %v5876, 0
      %v6021 = vsel %vm5926, %v5884, 0
      %vm6023 = vcmask 1045504
      %v6025 = vsel %vm6023, %v5919, 0
      %6027 = vmatprep.subr.bf16.mxu0 0
      %6028 = vmatpush1.bf16.msra.mxu0 0
      %6029 = vmatprep.subr.bf16.mxu0 0
      %6030 = vmatpush1.bf16.msra.mxu0 %v6025
      %6031 = vmatprep.subr.bf16.mxu0 0
      %6032 = vmatpush1.bf16.msra.mxu0 %v5918
      %6033 = vmatprep.subr.bf16.mxu0 0
      %6034 = vmatpush1.bf16.msra.mxu0 %v5917
      %6035 = vmatprep.subr.bf16.mxu0 0
      %6036 = vmatpush1.bf16.msra.mxu0 %v5916
      %6037 = vmatprep.subr.bf16.mxu0 0
      %6038 = vmatpush1.bf16.msra.mxu0 %v5915
      %6039 = vmatprep.subr.bf16.mxu0 0
      %6040 = vmatpush1.bf16.msra.mxu0 %v5914
      %6041 = vmatprep.subr.bf16.mxu0 0
      %6042 = vmatpush1.bf16.msra.mxu0 %v5913
      %6043 = vmatprep.subr.bf16.mxu0 0
      %6044 = vmatpush2.bf16.msra.mxu0 0
      %6045 = vmatprep.subr.bf16.mxu0 0
      %6046 = vmatpush2.bf16.msra.mxu0 0
      %6047 = vmatprep.subr.bf16.mxu0 0
      %6048 = vmatpush2.bf16.msra.mxu0 0
      %6049 = vmatprep.subr.bf16.mxu0 0
      %6050 = vmatpush2.bf16.msra.mxu0 0
      %6051 = vmatprep.subr.bf16.mxu0 0
      %6052 = vmatpush2.bf16.msra.mxu0 0
      %6053 = vmatprep.subr.bf16.mxu0 0
      %6054 = vmatpush2.bf16.msra.mxu0 0
      %6055 = vmatprep.subr.bf16.mxu0 0
      %6056 = vmatpush2.bf16.msra.mxu0 0
      %6057 = vmatprep.subr.bf16.mxu0 0
      %6058 = vmatpush2.bf16.msra.mxu0 0
      %6059 = vmatprep.mubr.bf16.mxu0 0
      %6060 = vmatmul.mubr.bf16.gmra.mxu0 %v5928
      %v6061 = vpop.f32.mrf.mxu0
      %v6062 = vadd.f32 %v5620, %v6061
      %v6063 = vpop.f32.mrf.mxu0
      %v6064 = vpop.f32.mrf.mxu0
      %v6065 = vadd.f32 %v5620, %v6064
      %v6066 = vpop.f32.mrf.mxu0
      %6067 = vmatprep.mubr.bf16.mxu0 0
      %6068 = vmatmul.mubr.bf16.gmra.mxu0 %v5931
      %v6069 = vpop.f32.mrf.mxu0
      %v6070 = vadd.f32 %v5620, %v6069
      %v6071 = vpop.f32.mrf.mxu0
      %v6072 = vpop.f32.mrf.mxu0
      %v6073 = vadd.f32 %v5620, %v6072
      %v6074 = vpop.f32.mrf.mxu0
      %6075 = vmatprep.mubr.bf16.mxu0 0
      %6076 = vmatmul.mubr.bf16.gmra.mxu0 %v5934
      %v6077 = vpop.f32.mrf.mxu0
      %v6078 = vadd.f32 %v5620, %v6077
      %v6079 = vpop.f32.mrf.mxu0
      %v6080 = vpop.f32.mrf.mxu0
      %v6081 = vadd.f32 %v5620, %v6080
      %v6082 = vpop.f32.mrf.mxu0
      %6083 = vmatprep.mubr.bf16.mxu0 0
      %6084 = vmatmul.mubr.bf16.gmra.mxu0 %v5937
      %v6085 = vpop.f32.mrf.mxu0
      %v6086 = vadd.f32 %v5620, %v6085
      %v6087 = vpop.f32.mrf.mxu0
      %v6088 = vpop.f32.mrf.mxu0
      %v6089 = vadd.f32 %v5620, %v6088
      %v6090 = vpop.f32.mrf.mxu0
      %6091 = vmatprep.mubr.bf16.mxu0 0
      %6092 = vmatmul.mubr.bf16.gmra.mxu0 %v5940
      %v6093 = vpop.f32.mrf.mxu0
      %v6094 = vadd.f32 %v5620, %v6093
      %v6095 = vpop.f32.mrf.mxu0
      %v6096 = vpop.f32.mrf.mxu0
      %v6097 = vadd.f32 %v5620, %v6096
      %v6098 = vpop.f32.mrf.mxu0
      %6099 = vmatprep.mubr.bf16.mxu0 0
      %6100 = vmatmul.mubr.bf16.gmra.mxu0 %v5943
      %v6101 = vpop.f32.mrf.mxu0
      %v6102 = vadd.f32 %v5620, %v6101
      %v6103 = vpop.f32.mrf.mxu0
      %v6104 = vpop.f32.mrf.mxu0
      %v6105 = vadd.f32 %v5620, %v6104
      %v6106 = vpop.f32.mrf.mxu0
      %6107 = vmatprep.mubr.bf16.mxu0 0
      %6108 = vmatmul.mubr.bf16.gmra.mxu0 %v5946
      %v6109 = vpop.f32.mrf.mxu0
      %v6110 = vadd.f32 %v5620, %v6109
      %v6111 = vpop.f32.mrf.mxu0
      %v6112 = vpop.f32.mrf.mxu0
      %v6113 = vadd.f32 %v5620, %v6112
      %v6114 = vpop.f32.mrf.mxu0
      %6115 = vmatprep.mubr.bf16.mxu0 0
      %6116 = vmatmul.mubr.bf16.gmra.mxu0 %v5949
      %v6117 = vpop.f32.mrf.mxu0
      %v6118 = vadd.f32 %v5620, %v6117
      %v6119 = vpop.f32.mrf.mxu0
      %v6120 = vpop.f32.mrf.mxu0
      %v6121 = vadd.f32 %v5620, %v6120
      %v6122 = vpop.f32.mrf.mxu0
      %6123 = vmatprep.mubr.bf16.mxu0 0
      %6124 = vmatmul.mubr.bf16.gmra.mxu0 %v5952
      %v6125 = vpop.f32.mrf.mxu0
      %v6126 = vadd.f32 %v5620, %v6125
      %v6127 = vpop.f32.mrf.mxu0
      %v6128 = vpop.f32.mrf.mxu0
      %v6129 = vadd.f32 %v5620, %v6128
      %v6130 = vpop.f32.mrf.mxu0
      %6131 = vmatprep.mubr.bf16.mxu0 0
      %6132 = vmatmul.mubr.bf16.gmra.mxu0 %v5955
      %v6133 = vpop.f32.mrf.mxu0
      %v6134 = vadd.f32 %v5620, %v6133
      %v6135 = vpop.f32.mrf.mxu0
      %v6136 = vpop.f32.mrf.mxu0
      %v6137 = vadd.f32 %v5620, %v6136
      %v6138 = vpop.f32.mrf.mxu0
      %6139 = vmatprep.mubr.bf16.mxu0 0
      %6140 = vmatmul.mubr.bf16.gmra.mxu0 %v5958
      %v6141 = vpop.f32.mrf.mxu0
      %v6142 = vadd.f32 %v5620, %v6141
      %v6143 = vpop.f32.mrf.mxu0
      %v6144 = vpop.f32.mrf.mxu0
      %v6145 = vadd.f32 %v5620, %v6144
      %v6146 = vpop.f32.mrf.mxu0
      %6147 = vmatprep.mubr.bf16.mxu0 0
      %6148 = vmatmul.mubr.bf16.gmra.mxu0 %v5961
      %v6149 = vpop.f32.mrf.mxu0
      %v6150 = vadd.f32 %v5620, %v6149
      %v6151 = vpop.f32.mrf.mxu0
      %v6152 = vpop.f32.mrf.mxu0
      %v6153 = vadd.f32 %v5620, %v6152
      %v6154 = vpop.f32.mrf.mxu0
      %6155 = vmatprep.mubr.bf16.mxu0 0
      %6156 = vmatmul.mubr.bf16.gmra.mxu0 %v5964
      %v6157 = vpop.f32.mrf.mxu0
      %v6158 = vadd.f32 %v5620, %v6157
      %v6159 = vpop.f32.mrf.mxu0
      %v6160 = vpop.f32.mrf.mxu0
      %v6161 = vadd.f32 %v5620, %v6160
      %v6162 = vpop.f32.mrf.mxu0
      %6163 = vmatprep.mubr.bf16.mxu0 0
      %6164 = vmatmul.mubr.bf16.gmra.mxu0 %v5967
      %v6165 = vpop.f32.mrf.mxu0
      %v6166 = vadd.f32 %v5620, %v6165
      %v6167 = vpop.f32.mrf.mxu0
      %v6168 = vpop.f32.mrf.mxu0
      %v6169 = vadd.f32 %v5620, %v6168
      %v6170 = vpop.f32.mrf.mxu0
      %6171 = vmatprep.mubr.bf16.mxu0 0
      %6172 = vmatmul.mubr.bf16.gmra.mxu0 %v5970
      %v6173 = vpop.f32.mrf.mxu0
      %v6174 = vadd.f32 %v5620, %v6173
      %v6175 = vpop.f32.mrf.mxu0
      %v6176 = vpop.f32.mrf.mxu0
      %v6177 = vadd.f32 %v5620, %v6176
      %v6178 = vpop.f32.mrf.mxu0
      %6179 = vmatprep.mubr.bf16.mxu0 0
      %6180 = vmatmul.mubr.bf16.gmra.mxu0 %v5973
      %v6181 = vpop.f32.mrf.mxu0
      %v6182 = vadd.f32 %v5620, %v6181
      %v6183 = vpop.f32.mrf.mxu0
      %v6184 = vpop.f32.mrf.mxu0
      %v6185 = vadd.f32 %v5620, %v6184
      %v6186 = vpop.f32.mrf.mxu0
      %6187 = vmatprep.mubr.bf16.mxu0 0
      %6188 = vmatmul.mubr.bf16.gmra.mxu0 %v5976
      %v6189 = vpop.f32.mrf.mxu0
      %v6190 = vadd.f32 %v5620, %v6189
      %v6191 = vpop.f32.mrf.mxu0
      %v6192 = vpop.f32.mrf.mxu0
      %v6193 = vadd.f32 %v5620, %v6192
      %v6194 = vpop.f32.mrf.mxu0
      %6195 = vmatprep.mubr.bf16.mxu0 0
      %6196 = vmatmul.mubr.bf16.gmra.mxu0 %v5979
      %v6197 = vpop.f32.mrf.mxu0
      %v6198 = vadd.f32 %v5620, %v6197
      %v6199 = vpop.f32.mrf.mxu0
      %v6200 = vpop.f32.mrf.mxu0
      %v6201 = vadd.f32 %v5620, %v6200
      %v6202 = vpop.f32.mrf.mxu0
      %6203 = vmatprep.mubr.bf16.mxu0 0
      %6204 = vmatmul.mubr.bf16.gmra.mxu0 %v5982
      %v6205 = vpop.f32.mrf.mxu0
      %v6206 = vadd.f32 %v5620, %v6205
      %v6207 = vpop.f32.mrf.mxu0
      %v6208 = vpop.f32.mrf.mxu0
      %v6209 = vadd.f32 %v5620, %v6208
      %v6210 = vpop.f32.mrf.mxu0
      %6211 = vmatprep.mubr.bf16.mxu0 0
      %6212 = vmatmul.mubr.bf16.gmra.mxu0 %v5985
      %v6213 = vpop.f32.mrf.mxu0
      %v6214 = vadd.f32 %v5620, %v6213
      %v6215 = vpop.f32.mrf.mxu0
      %v6216 = vpop.f32.mrf.mxu0
      %v6217 = vadd.f32 %v5620, %v6216
      %v6218 = vpop.f32.mrf.mxu0
      %6219 = vmatprep.mubr.bf16.mxu0 0
      %6220 = vmatmul.mubr.bf16.gmra.mxu0 %v5988
      %v6221 = vpop.f32.mrf.mxu0
      %v6222 = vadd.f32 %v5620, %v6221
      %v6223 = vpop.f32.mrf.mxu0
      %v6224 = vpop.f32.mrf.mxu0
      %v6225 = vadd.f32 %v5620, %v6224
      %v6226 = vpop.f32.mrf.mxu0
      %6227 = vmatprep.mubr.bf16.mxu0 0
      %6228 = vmatmul.mubr.bf16.gmra.mxu0 %v5991
      %v6229 = vpop.f32.mrf.mxu0
      %v6230 = vadd.f32 %v5620, %v6229
      %v6231 = vpop.f32.mrf.mxu0
      %v6232 = vpop.f32.mrf.mxu0
      %v6233 = vadd.f32 %v5620, %v6232
      %v6234 = vpop.f32.mrf.mxu0
      %6235 = vmatprep.mubr.bf16.mxu0 0
      %6236 = vmatmul.mubr.bf16.gmra.mxu0 %v5994
      %v6237 = vpop.f32.mrf.mxu0
      %v6238 = vadd.f32 %v5620, %v6237
      %v6239 = vpop.f32.mrf.mxu0
      %v6240 = vpop.f32.mrf.mxu0
      %v6241 = vadd.f32 %v5620, %v6240
      %v6242 = vpop.f32.mrf.mxu0
      %6243 = vmatprep.mubr.bf16.mxu0 0
      %6244 = vmatmul.mubr.bf16.gmra.mxu0 %v5997
      %v6245 = vpop.f32.mrf.mxu0
      %v6246 = vadd.f32 %v5620, %v6245
      %v6247 = vpop.f32.mrf.mxu0
      %v6248 = vpop.f32.mrf.mxu0
      %v6249 = vadd.f32 %v5620, %v6248
      %v6250 = vpop.f32.mrf.mxu0
      %6251 = vmatprep.mubr.bf16.mxu0 0
      %6252 = vmatmul.mubr.bf16.gmra.mxu0 %v6000
      %v6253 = vpop.f32.mrf.mxu0
      %v6254 = vadd.f32 %v5620, %v6253
      %v6255 = vpop.f32.mrf.mxu0
      %v6256 = vpop.f32.mrf.mxu0
      %v6257 = vadd.f32 %v5620, %v6256
      %v6258 = vpop.f32.mrf.mxu0
      %6259 = vmatprep.mubr.bf16.mxu0 0
      %6260 = vmatmul.mubr.bf16.gmra.mxu0 %v6003
      %v6261 = vpop.f32.mrf.mxu0
      %v6262 = vadd.f32 %v5620, %v6261
      %v6263 = vpop.f32.mrf.mxu0
      %v6264 = vpop.f32.mrf.mxu0
      %v6265 = vadd.f32 %v5620, %v6264
      %v6266 = vpop.f32.mrf.mxu0
      %6267 = vmatprep.mubr.bf16.mxu0 0
      %6268 = vmatmul.mubr.bf16.gmra.mxu0 %v6006
      %v6269 = vpop.f32.mrf.mxu0
      %v6270 = vadd.f32 %v5620, %v6269
      %v6271 = vpop.f32.mrf.mxu0
      %v6272 = vpop.f32.mrf.mxu0
      %v6273 = vadd.f32 %v5620, %v6272
      %v6274 = vpop.f32.mrf.mxu0
      %6275 = vmatprep.mubr.bf16.mxu0 0
      %6276 = vmatmul.mubr.bf16.gmra.mxu0 %v6009
      %v6277 = vpop.f32.mrf.mxu0
      %v6278 = vadd.f32 %v5620, %v6277
      %v6279 = vpop.f32.mrf.mxu0
      %v6280 = vpop.f32.mrf.mxu0
      %v6281 = vadd.f32 %v5620, %v6280
      %v6282 = vpop.f32.mrf.mxu0
      %6283 = vmatprep.mubr.bf16.mxu0 0
      %6284 = vmatmul.mubr.bf16.gmra.mxu0 %v6012
      %v6285 = vpop.f32.mrf.mxu0
      %v6286 = vadd.f32 %v5620, %v6285
      %v6287 = vpop.f32.mrf.mxu0
      %v6288 = vpop.f32.mrf.mxu0
      %v6289 = vadd.f32 %v5620, %v6288
      %v6290 = vpop.f32.mrf.mxu0
      %6291 = vmatprep.mubr.bf16.mxu0 0
      %6292 = vmatmul.mubr.bf16.gmra.mxu0 %v6015
      %v6293 = vpop.f32.mrf.mxu0
      %v6294 = vadd.f32 %v5620, %v6293
      %v6295 = vpop.f32.mrf.mxu0
      %v6296 = vpop.f32.mrf.mxu0
      %v6297 = vadd.f32 %v5620, %v6296
      %v6298 = vpop.f32.mrf.mxu0
      %6299 = vmatprep.mubr.bf16.mxu0 0
      %6300 = vmatmul.mubr.bf16.gmra.mxu0 %v6018
      %v6301 = vpop.f32.mrf.mxu0
      %v6302 = vadd.f32 %v5620, %v6301
      %v6303 = vpop.f32.mrf.mxu0
      %v6304 = vpop.f32.mrf.mxu0
      %v6305 = vadd.f32 %v5620, %v6304
      %v6306 = vpop.f32.mrf.mxu0
      %6307 = vmatprep.mubr.bf16.mxu0 0
      %6308 = vmatmul.mubr.bf16.gmra.mxu0 %v6021
      %v6309 = vpop.f32.mrf.mxu0
      %v6310 = vadd.f32 %v5620, %v6309
      %v6311 = vpop.f32.mrf.mxu0
      %v6312 = vpop.f32.mrf.mxu0
      %v6313 = vadd.f32 %v5620, %v6312
      %v6314 = vpop.f32.mrf.mxu0
      %6315 = vdwg.mxu0
      %v6316 = vmul.f32 %v6062, 0.2
      %v6317 = vmul.f32 %v6065, 0.2
      %v6318 = vmul.f32 %v6070, 0.2
      %v6319 = vmul.f32 %v6073, 0.2
      %v6320 = vmul.f32 %v6078, 0.2
      %v6321 = vmul.f32 %v6081, 0.2
      %v6322 = vmul.f32 %v6086, 0.2
      %v6323 = vmul.f32 %v6089, 0.2
      %v6324 = vmul.f32 %v6094, 0.2
      %v6325 = vmul.f32 %v6097, 0.2
      %v6326 = vmul.f32 %v6102, 0.2
      %v6327 = vmul.f32 %v6105, 0.2
      %v6328 = vmul.f32 %v6110, 0.2
      %v6329 = vmul.f32 %v6113, 0.2
      %v6330 = vmul.f32 %v6118, 0.2
      %v6331 = vmul.f32 %v6121, 0.2
      %v6332 = vmul.f32 %v6126, 0.2
      %v6333 = vmul.f32 %v6129, 0.2
      %v6334 = vmul.f32 %v6134, 0.2
      %v6335 = vmul.f32 %v6137, 0.2
      %v6336 = vmul.f32 %v6142, 0.2
      %v6337 = vmul.f32 %v6145, 0.2
      %v6338 = vmul.f32 %v6150, 0.2
      %v6339 = vmul.f32 %v6153, 0.2
      %v6340 = vmul.f32 %v6158, 0.2
      %v6341 = vmul.f32 %v6161, 0.2
      %v6342 = vmul.f32 %v6166, 0.2
      %v6343 = vmul.f32 %v6169, 0.2
      %v6344 = vmul.f32 %v6174, 0.2
      %v6345 = vmul.f32 %v6177, 0.2
      %v6346 = vmul.f32 %v6182, 0.2
      %v6347 = vmul.f32 %v6185, 0.2
      %v6348 = vmul.f32 %v6190, 0.2
      %v6349 = vmul.f32 %v6193, 0.2
      %v6350 = vmul.f32 %v6198, 0.2
      %v6351 = vmul.f32 %v6201, 0.2
      %v6352 = vmul.f32 %v6206, 0.2
      %v6353 = vmul.f32 %v6209, 0.2
      %v6354 = vmul.f32 %v6214, 0.2
      %v6355 = vmul.f32 %v6217, 0.2
      %v6356 = vmul.f32 %v6222, 0.2
      %v6357 = vmul.f32 %v6225, 0.2
      %v6358 = vmul.f32 %v6230, 0.2
      %v6359 = vmul.f32 %v6233, 0.2
      %v6360 = vmul.f32 %v6238, 0.2
      %v6361 = vmul.f32 %v6241, 0.2
      %v6362 = vmul.f32 %v6246, 0.2
      %v6363 = vmul.f32 %v6249, 0.2
      %v6364 = vmul.f32 %v6254, 0.2
      %v6365 = vmul.f32 %v6257, 0.2
      %v6366 = vmul.f32 %v6262, 0.2
      %v6367 = vmul.f32 %v6265, 0.2
      %v6368 = vmul.f32 %v6270, 0.2
      %v6369 = vmul.f32 %v6273, 0.2
      %v6370 = vmul.f32 %v6278, 0.2
      %v6371 = vmul.f32 %v6281, 0.2
      %v6372 = vmul.f32 %v6286, 0.2
      %v6373 = vmul.f32 %v6289, 0.2
      %v6374 = vmul.f32 %v6294, 0.2
      %v6375 = vmul.f32 %v6297, 0.2
      %v6376 = vmul.f32 %v6302, 0.2
      %v6377 = vmul.f32 %v6305, 0.2
      %v6378 = vmul.f32 %v6310, 0.2
      %v6379 = vmul.f32 %v6313, 0.2
      %v6380 = vmax.f32 %v6316, %v6062
      %v6381 = vmax.f32 %v6317, %v6065
      %v6382 = vmax.f32 %v6318, %v6070
      %v6383 = vmax.f32 %v6319, %v6073
      %v6384 = vmax.f32 %v6320, %v6078
      %v6385 = vmax.f32 %v6321, %v6081
      %v6386 = vmax.f32 %v6322, %v6086
      %v6387 = vmax.f32 %v6323, %v6089
      %v6388 = vmax.f32 %v6324, %v6094
      %v6389 = vmax.f32 %v6325, %v6097
      %v6390 = vmax.f32 %v6326, %v6102
      %v6391 = vmax.f32 %v6327, %v6105
      %v6392 = vmax.f32 %v6328, %v6110
      %v6393 = vmax.f32 %v6329, %v6113
      %v6394 = vmax.f32 %v6330, %v6118
      %v6395 = vmax.f32 %v6331, %v6121
      %v6396 = vmax.f32 %v6332, %v6126
      %v6397 = vmax.f32 %v6333, %v6129
      %v6398 = vmax.f32 %v6334, %v6134
      %v6399 = vmax.f32 %v6335, %v6137
      %v6400 = vmax.f32 %v6336, %v6142
      %v6401 = vmax.f32 %v6337, %v6145
      %v6402 = vmax.f32 %v6338, %v6150
      %v6403 = vmax.f32 %v6339, %v6153
      %v6404 = vmax.f32 %v6340, %v6158
      %v6405 = vmax.f32 %v6341, %v6161
      %v6406 = vmax.f32 %v6342, %v6166
      %v6407 = vmax.f32 %v6343, %v6169
      %v6408 = vmax.f32 %v6344, %v6174
      %v6409 = vmax.f32 %v6345, %v6177
      %v6410 = vmax.f32 %v6346, %v6182
      %v6411 = vmax.f32 %v6347, %v6185
      %v6412 = vmax.f32 %v6348, %v6190
      %v6413 = vmax.f32 %v6349, %v6193
      %v6414 = vmax.f32 %v6350, %v6198
      %v6415 = vmax.f32 %v6351, %v6201
      %v6416 = vmax.f32 %v6352, %v6206
      %v6417 = vmax.f32 %v6353, %v6209
      %v6418 = vmax.f32 %v6354, %v6214
      %v6419 = vmax.f32 %v6355, %v6217
      %v6420 = vmax.f32 %v6356, %v6222
      %v6421 = vmax.f32 %v6357, %v6225
      %v6422 = vmax.f32 %v6358, %v6230
      %v6423 = vmax.f32 %v6359, %v6233
      %v6424 = vmax.f32 %v6360, %v6238
      %v6425 = vmax.f32 %v6361, %v6241
      %v6426 = vmax.f32 %v6362, %v6246
      %v6427 = vmax.f32 %v6363, %v6249
      %v6428 = vmax.f32 %v6364, %v6254
      %v6429 = vmax.f32 %v6365, %v6257
      %v6430 = vmax.f32 %v6366, %v6262
      %v6431 = vmax.f32 %v6367, %v6265
      %v6432 = vmax.f32 %v6368, %v6270
      %v6433 = vmax.f32 %v6369, %v6273
      %v6434 = vmax.f32 %v6370, %v6278
      %v6435 = vmax.f32 %v6371, %v6281
      %v6436 = vmax.f32 %v6372, %v6286
      %v6437 = vmax.f32 %v6373, %v6289
      %v6438 = vmax.f32 %v6374, %v6294
      %v6439 = vmax.f32 %v6375, %v6297
      %v6440 = vmax.f32 %v6376, %v6302
      %v6441 = vmax.f32 %v6377, %v6305
      %v6442 = vmax.f32 %v6378, %v6310
      %v6443 = vmax.f32 %v6379, %v6313
      %v6444 = vld [vmem:[%s5] sm:$0xff]
      %v6445 = vld [vmem:[%s5 + $0x8] sm:$0xff]
      %v6446 = vld [vmem:[%s5 + $0x10] sm:$0xff]
      %v6447 = vld [vmem:[%s5 + $0x18] sm:$0xff]
      %v6448 = vld [vmem:[%s5 + $0x20] sm:$0xff]
      %v6449 = vld [vmem:[%s5 + $0x28] sm:$0xff]
      %v6450 = vld [vmem:[%s5 + $0x30] sm:$0xff]
      %v6451 = vld [vmem:[%s5 + $0x38] sm:$0xff]
      %v6452 = vld [vmem:[%s5 + $0x40] sm:$0xff]
      %v6453 = vld [vmem:[%s5 + $0x48] sm:$0xff]
      %v6454 = vld [vmem:[%s5 + $0x50] sm:$0xff]
      %v6455 = vld [vmem:[%s5 + $0x58] sm:$0xff]
      %v6456 = vld [vmem:[%s5 + $0x60] sm:$0xff]
      %v6457 = vld [vmem:[%s5 + $0x68] sm:$0xff]
      %v6458 = vld [vmem:[%s5 + $0x70] sm:$0xff]
      %v6459 = vld [vmem:[%s5 + $0x78] sm:$0xff]
      %v6460 = vld [vmem:[%s5 + $0x80] sm:$0xff]
      %v6461 = vld [vmem:[%s5 + $0x88] sm:$0xff]
      %v6462 = vld [vmem:[%s5 + $0x90] sm:$0xff]
      %v6463 = vld [vmem:[%s5 + $0x98] sm:$0xff]
      %v6464 = vld [vmem:[%s5 + $0xa0] sm:$0xff]
      %v6465 = vld [vmem:[%s5 + $0xa8] sm:$0xff]
      %v6466 = vld [vmem:[%s5 + $0xb0] sm:$0xff]
      %v6467 = vld [vmem:[%s5 + $0xb8] sm:$0xff]
      %v6468 = vld [vmem:[%s5 + $0xc0] sm:$0xff]
      %v6469 = vld [vmem:[%s5 + $0xc8] sm:$0xff]
      %v6470 = vld [vmem:[%s5 + $0xd0] sm:$0xff]
      %v6471 = vld [vmem:[%s5 + $0xd8] sm:$0xff]
      %v6472 = vld [vmem:[%s5 + $0xe0] sm:$0xff]
      %v6473 = vld [vmem:[%s5 + $0xe8] sm:$0xff]
      %v6474 = vld [vmem:[%s5 + $0xf0] sm:$0xff]
      %v6475 = vld [vmem:[%s5 + $0xf8] sm:$0xff]
      %v6476 = vld [vmem:[%s5 + $0x100] sm:$0xff]
      %v6477 = vld [vmem:[%s5 + $0x108] sm:$0xff]
      %v6478 = vld [vmem:[%s5 + $0x110] sm:$0xff]
      %v6479 = vld [vmem:[%s5 + $0x118] sm:$0xff]
      %v6480 = vld [vmem:[%s5 + $0x120] sm:$0xff]
      %v6481 = vld [vmem:[%s5 + $0x128] sm:$0xff]
      %v6482 = vld [vmem:[%s5 + $0x130] sm:$0xff]
      %v6483 = vld [vmem:[%s5 + $0x138] sm:$0xff]
      %v6484 = vld [vmem:[%s5 + $0x140] sm:$0xff]
      %v6485 = vld [vmem:[%s5 + $0x148] sm:$0xff]
      %v6486 = vld [vmem:[%s5 + $0x150] sm:$0xff]
      %v6487 = vld [vmem:[%s5 + $0x158] sm:$0xff]
      %v6488 = vld [vmem:[%s5 + $0x160] sm:$0xff]
      %v6489 = vld [vmem:[%s5 + $0x168] sm:$0xff]
      %v6490 = vld [vmem:[%s5 + $0x170] sm:$0xff]
      %v6491 = vld [vmem:[%s5 + $0x178] sm:$0xff]
      %v6492 = vld [vmem:[%s5 + $0x180] sm:$0xff]
      %v6493 = vld [vmem:[%s5 + $0x188] sm:$0xff]
      %v6494 = vld [vmem:[%s5 + $0x190] sm:$0xff]
      %v6495 = vld [vmem:[%s5 + $0x198] sm:$0xff]
      %v6496 = vld [vmem:[%s5 + $0x1a0] sm:$0xff]
      %v6497 = vld [vmem:[%s5 + $0x1a8] sm:$0xff]
      %v6498 = vld [vmem:[%s5 + $0x1b0] sm:$0xff]
      %v6499 = vld [vmem:[%s5 + $0x1b8] sm:$0xff]
      %v6500 = vld [vmem:[%s5 + $0x1c0] sm:$0xff]
      %v6501 = vld [vmem:[%s5 + $0x1c8] sm:$0xff]
      %v6502 = vld [vmem:[%s5 + $0x1d0] sm:$0xff]
      %v6503 = vld [vmem:[%s5 + $0x1d8] sm:$0xff]
      %v6504 = vld [vmem:[%s5 + $0x1e0] sm:$0xff]
      %v6505 = vld [vmem:[%s5 + $0x1e8] sm:$0xff]
      %v6506 = vld [vmem:[%s5 + $0x1f0] sm:$0xff]
      %v6507 = vld [vmem:[%s5 + $0x1f8] sm:$0xff]
      %6509 = vset.pattern.permute.xlu0 0
      %6510 = vperm.xlu0 %6509, %v6444
      %v6511 = vpop.permute.xlu0 %6510
      %6514 = vset.pattern.permute.xlu0 0
      %6515 = vperm.xlu0 %6514, %v6445
      %v6516 = vpop.permute.xlu0 %6515
      %6519 = vset.pattern.permute.xlu0 0
      %6520 = vperm.xlu0 %6519, %v6446
      %v6521 = vpop.permute.xlu0 %6520
      %6524 = vset.pattern.permute.xlu0 0
      %6525 = vperm.xlu0 %6524, %v6447
      %v6526 = vpop.permute.xlu0 %6525
      %6529 = vset.pattern.permute.xlu0 0
      %6530 = vperm.xlu0 %6529, %v6448
      %v6531 = vpop.permute.xlu0 %6530
      %6534 = vset.pattern.permute.xlu0 0
      %6535 = vperm.xlu0 %6534, %v6449
      %v6536 = vpop.permute.xlu0 %6535
      %6539 = vset.pattern.permute.xlu0 0
      %6540 = vperm.xlu0 %6539, %v6450
      %v6541 = vpop.permute.xlu0 %6540
      %6544 = vset.pattern.permute.xlu0 0
      %6545 = vperm.xlu0 %6544, %v6451
      %v6546 = vpop.permute.xlu0 %6545
      %6549 = vset.pattern.permute.xlu0 0
      %6550 = vperm.xlu0 %6549, %v6452
      %v6551 = vpop.permute.xlu0 %6550
      %6554 = vset.pattern.permute.xlu0 0
      %6555 = vperm.xlu0 %6554, %v6453
      %v6556 = vpop.permute.xlu0 %6555
      %6559 = vset.pattern.permute.xlu0 0
      %6560 = vperm.xlu0 %6559, %v6454
      %v6561 = vpop.permute.xlu0 %6560
      %6564 = vset.pattern.permute.xlu0 0
      %6565 = vperm.xlu0 %6564, %v6455
      %v6566 = vpop.permute.xlu0 %6565
      %6569 = vset.pattern.permute.xlu0 0
      %6570 = vperm.xlu0 %6569, %v6456
      %v6571 = vpop.permute.xlu0 %6570
      %6574 = vset.pattern.permute.xlu0 0
      %6575 = vperm.xlu0 %6574, %v6457
      %v6576 = vpop.permute.xlu0 %6575
      %6579 = vset.pattern.permute.xlu0 0
      %6580 = vperm.xlu0 %6579, %v6458
      %v6581 = vpop.permute.xlu0 %6580
      %6584 = vset.pattern.permute.xlu0 0
      %6585 = vperm.xlu0 %6584, %v6459
      %v6586 = vpop.permute.xlu0 %6585
      %6589 = vset.pattern.permute.xlu0 0
      %6590 = vperm.xlu0 %6589, %v6460
      %v6591 = vpop.permute.xlu0 %6590
      %6594 = vset.pattern.permute.xlu0 0
      %6595 = vperm.xlu0 %6594, %v6461
      %v6596 = vpop.permute.xlu0 %6595
      %6599 = vset.pattern.permute.xlu0 0
      %6600 = vperm.xlu0 %6599, %v6462
      %v6601 = vpop.permute.xlu0 %6600
      %6604 = vset.pattern.permute.xlu0 0
      %6605 = vperm.xlu0 %6604, %v6463
      %v6606 = vpop.permute.xlu0 %6605
      %6609 = vset.pattern.permute.xlu0 0
      %6610 = vperm.xlu0 %6609, %v6464
      %v6611 = vpop.permute.xlu0 %6610
      %6614 = vset.pattern.permute.xlu0 0
      %6615 = vperm.xlu0 %6614, %v6465
      %v6616 = vpop.permute.xlu0 %6615
      %6619 = vset.pattern.permute.xlu0 0
      %6620 = vperm.xlu0 %6619, %v6466
      %v6621 = vpop.permute.xlu0 %6620
      %6624 = vset.pattern.permute.xlu0 0
      %6625 = vperm.xlu0 %6624, %v6467
      %v6626 = vpop.permute.xlu0 %6625
      %6629 = vset.pattern.permute.xlu0 0
      %6630 = vperm.xlu0 %6629, %v6468
      %v6631 = vpop.permute.xlu0 %6630
      %6634 = vset.pattern.permute.xlu0 0
      %6635 = vperm.xlu0 %6634, %v6469
      %v6636 = vpop.permute.xlu0 %6635
      %6639 = vset.pattern.permute.xlu0 0
      %6640 = vperm.xlu0 %6639, %v6470
      %v6641 = vpop.permute.xlu0 %6640
      %6644 = vset.pattern.permute.xlu0 0
      %6645 = vperm.xlu0 %6644, %v6471
      %v6646 = vpop.permute.xlu0 %6645
      %6649 = vset.pattern.permute.xlu0 0
      %6650 = vperm.xlu0 %6649, %v6472
      %v6651 = vpop.permute.xlu0 %6650
      %6654 = vset.pattern.permute.xlu0 0
      %6655 = vperm.xlu0 %6654, %v6473
      %v6656 = vpop.permute.xlu0 %6655
      %6659 = vset.pattern.permute.xlu0 0
      %6660 = vperm.xlu0 %6659, %v6474
      %v6661 = vpop.permute.xlu0 %6660
      %6664 = vset.pattern.permute.xlu0 0
      %6665 = vperm.xlu0 %6664, %v6475
      %v6666 = vpop.permute.xlu0 %6665
      %6669 = vset.pattern.permute.xlu0 0
      %6670 = vperm.xlu0 %6669, %v6476
      %v6671 = vpop.permute.xlu0 %6670
      %6674 = vset.pattern.permute.xlu0 0
      %6675 = vperm.xlu0 %6674, %v6477
      %v6676 = vpop.permute.xlu0 %6675
      %6679 = vset.pattern.permute.xlu0 0
      %6680 = vperm.xlu0 %6679, %v6478
      %v6681 = vpop.permute.xlu0 %6680
      %6684 = vset.pattern.permute.xlu0 0
      %6685 = vperm.xlu0 %6684, %v6479
      %v6686 = vpop.permute.xlu0 %6685
      %6689 = vset.pattern.permute.xlu0 0
      %6690 = vperm.xlu0 %6689, %v6480
      %v6691 = vpop.permute.xlu0 %6690
      %6694 = vset.pattern.permute.xlu0 0
      %6695 = vperm.xlu0 %6694, %v6481
      %v6696 = vpop.permute.xlu0 %6695
      %6699 = vset.pattern.permute.xlu0 0
      %6700 = vperm.xlu0 %6699, %v6482
      %v6701 = vpop.permute.xlu0 %6700
      %6704 = vset.pattern.permute.xlu0 0
      %6705 = vperm.xlu0 %6704, %v6483
      %v6706 = vpop.permute.xlu0 %6705
      %6709 = vset.pattern.permute.xlu0 0
      %6710 = vperm.xlu0 %6709, %v6484
      %v6711 = vpop.permute.xlu0 %6710
      %6714 = vset.pattern.permute.xlu0 0
      %6715 = vperm.xlu0 %6714, %v6485
      %v6716 = vpop.permute.xlu0 %6715
      %6719 = vset.pattern.permute.xlu0 0
      %6720 = vperm.xlu0 %6719, %v6486
      %v6721 = vpop.permute.xlu0 %6720
      %6724 = vset.pattern.permute.xlu0 0
      %6725 = vperm.xlu0 %6724, %v6487
      %v6726 = vpop.permute.xlu0 %6725
      %6729 = vset.pattern.permute.xlu0 0
      %6730 = vperm.xlu0 %6729, %v6488
      %v6731 = vpop.permute.xlu0 %6730
      %6734 = vset.pattern.permute.xlu0 0
      %6735 = vperm.xlu0 %6734, %v6489
      %v6736 = vpop.permute.xlu0 %6735
      %6739 = vset.pattern.permute.xlu0 0
      %6740 = vperm.xlu0 %6739, %v6490
      %v6741 = vpop.permute.xlu0 %6740
      %6744 = vset.pattern.permute.xlu0 0
      %6745 = vperm.xlu0 %6744, %v6491
      %v6746 = vpop.permute.xlu0 %6745
      %6749 = vset.pattern.permute.xlu0 0
      %6750 = vperm.xlu0 %6749, %v6492
      %v6751 = vpop.permute.xlu0 %6750
      %6754 = vset.pattern.permute.xlu0 0
      %6755 = vperm.xlu0 %6754, %v6493
      %v6756 = vpop.permute.xlu0 %6755
      %6759 = vset.pattern.permute.xlu0 0
      %6760 = vperm.xlu0 %6759, %v6494
      %v6761 = vpop.permute.xlu0 %6760
      %6764 = vset.pattern.permute.xlu0 0
      %6765 = vperm.xlu0 %6764, %v6495
      %v6766 = vpop.permute.xlu0 %6765
      %6769 = vset.pattern.permute.xlu0 0
      %6770 = vperm.xlu0 %6769, %v6496
      %v6771 = vpop.permute.xlu0 %6770
      %6774 = vset.pattern.permute.xlu0 0
      %6775 = vperm.xlu0 %6774, %v6497
      %v6776 = vpop.permute.xlu0 %6775
      %6779 = vset.pattern.permute.xlu0 0
      %6780 = vperm.xlu0 %6779, %v6498
      %v6781 = vpop.permute.xlu0 %6780
      %6784 = vset.pattern.permute.xlu0 0
      %6785 = vperm.xlu0 %6784, %v6499
      %v6786 = vpop.permute.xlu0 %6785
      %6789 = vset.pattern.permute.xlu0 0
      %6790 = vperm.xlu0 %6789, %v6500
      %v6791 = vpop.permute.xlu0 %6790
      %6794 = vset.pattern.permute.xlu0 0
      %6795 = vperm.xlu0 %6794, %v6501
      %v6796 = vpop.permute.xlu0 %6795
      %6799 = vset.pattern.permute.xlu0 0
      %6800 = vperm.xlu0 %6799, %v6502
      %v6801 = vpop.permute.xlu0 %6800
      %6804 = vset.pattern.permute.xlu0 0
      %6805 = vperm.xlu0 %6804, %v6503
      %v6806 = vpop.permute.xlu0 %6805
      %6809 = vset.pattern.permute.xlu0 0
      %6810 = vperm.xlu0 %6809, %v6504
      %v6811 = vpop.permute.xlu0 %6810
      %6814 = vset.pattern.permute.xlu0 0
      %6815 = vperm.xlu0 %6814, %v6505
      %v6816 = vpop.permute.xlu0 %6815
      %6819 = vset.pattern.permute.xlu0 0
      %6820 = vperm.xlu0 %6819, %v6506
      %v6821 = vpop.permute.xlu0 %6820
      %6824 = vset.pattern.permute.xlu0 0
      %6825 = vperm.xlu0 %6824, %v6507
      %v6826 = vpop.permute.xlu0 %6825
      %v6828 = vmul.f32 %v6380, %v6511
      %v6829 = vmul.f32 %v6381, %v6516
      %v6830 = vmul.f32 %v6382, %v6521
      %v6831 = vmul.f32 %v6383, %v6526
      %v6832 = vmul.f32 %v6384, %v6531
      %v6833 = vmul.f32 %v6385, %v6536
      %v6834 = vmul.f32 %v6386, %v6541
      %v6835 = vmul.f32 %v6387, %v6546
      %v6836 = vmul.f32 %v6388, %v6551
      %v6837 = vmul.f32 %v6389, %v6556
      %v6838 = vmul.f32 %v6390, %v6561
      %v6839 = vmul.f32 %v6391, %v6566
      %v6840 = vmul.f32 %v6392, %v6571
      %v6841 = vmul.f32 %v6393, %v6576
      %v6842 = vmul.f32 %v6394, %v6581
      %v6843 = vmul.f32 %v6395, %v6586
      %v6844 = vmul.f32 %v6396, %v6591
      %v6845 = vmul.f32 %v6397, %v6596
      %v6846 = vmul.f32 %v6398, %v6601
      %v6847 = vmul.f32 %v6399, %v6606
      %v6848 = vmul.f32 %v6400, %v6611
      %v6849 = vmul.f32 %v6401, %v6616
      %v6850 = vmul.f32 %v6402, %v6621
      %v6851 = vmul.f32 %v6403, %v6626
      %v6852 = vmul.f32 %v6404, %v6631
      %v6853 = vmul.f32 %v6405, %v6636
      %v6854 = vmul.f32 %v6406, %v6641
      %v6855 = vmul.f32 %v6407, %v6646
      %v6856 = vmul.f32 %v6408, %v6651
      %v6857 = vmul.f32 %v6409, %v6656
      %v6858 = vmul.f32 %v6410, %v6661
      %v6859 = vmul.f32 %v6411, %v6666
      %v6860 = vmul.f32 %v6412, %v6671
      %v6861 = vmul.f32 %v6413, %v6676
      %v6862 = vmul.f32 %v6414, %v6681
      %v6863 = vmul.f32 %v6415, %v6686
      %v6864 = vmul.f32 %v6416, %v6691
      %v6865 = vmul.f32 %v6417, %v6696
      %v6866 = vmul.f32 %v6418, %v6701
      %v6867 = vmul.f32 %v6419, %v6706
      %v6868 = vmul.f32 %v6420, %v6711
      %v6869 = vmul.f32 %v6421, %v6716
      %v6870 = vmul.f32 %v6422, %v6721
      %v6871 = vmul.f32 %v6423, %v6726
      %v6872 = vmul.f32 %v6424, %v6731
      %v6873 = vmul.f32 %v6425, %v6736
      %v6874 = vmul.f32 %v6426, %v6741
      %v6875 = vmul.f32 %v6427, %v6746
      %v6876 = vmul.f32 %v6428, %v6751
      %v6877 = vmul.f32 %v6429, %v6756
      %v6878 = vmul.f32 %v6430, %v6761
      %v6879 = vmul.f32 %v6431, %v6766
      %v6880 = vmul.f32 %v6432, %v6771
      %v6881 = vmul.f32 %v6433, %v6776
      %v6882 = vmul.f32 %v6434, %v6781
      %v6883 = vmul.f32 %v6435, %v6786
      %v6884 = vmul.f32 %v6436, %v6791
      %v6885 = vmul.f32 %v6437, %v6796
      %v6886 = vmul.f32 %v6438, %v6801
      %v6887 = vmul.f32 %v6439, %v6806
      %v6888 = vmul.f32 %v6440, %v6811
      %v6889 = vmul.f32 %v6441, %v6816
      %v6890 = vmul.f32 %v6442, %v6821
      %v6891 = vmul.f32 %v6443, %v6826
      %v6892 = vpack.c.bf16 %v6829, %v6828
      %v6893 = vpack.c.bf16 %v6831, %v6830
      %v6894 = vpack.c.bf16 %v6833, %v6832
      %v6895 = vpack.c.bf16 %v6835, %v6834
      %v6896 = vpack.c.bf16 %v6837, %v6836
      %v6897 = vpack.c.bf16 %v6839, %v6838
      %v6898 = vpack.c.bf16 %v6841, %v6840
      %v6899 = vpack.c.bf16 %v6843, %v6842
      %v6900 = vpack.c.bf16 %v6845, %v6844
      %v6901 = vpack.c.bf16 %v6847, %v6846
      %v6902 = vpack.c.bf16 %v6849, %v6848
      %v6903 = vpack.c.bf16 %v6851, %v6850
      %v6904 = vpack.c.bf16 %v6853, %v6852
      %v6905 = vpack.c.bf16 %v6855, %v6854
      %v6906 = vpack.c.bf16 %v6857, %v6856
      %v6907 = vpack.c.bf16 %v6859, %v6858
      %v6908 = vpack.c.bf16 %v6861, %v6860
      %v6909 = vpack.c.bf16 %v6863, %v6862
      %v6910 = vpack.c.bf16 %v6865, %v6864
      %v6911 = vpack.c.bf16 %v6867, %v6866
      %v6912 = vpack.c.bf16 %v6869, %v6868
      %v6913 = vpack.c.bf16 %v6871, %v6870
      %v6914 = vpack.c.bf16 %v6873, %v6872
      %v6915 = vpack.c.bf16 %v6875, %v6874
      %v6916 = vpack.c.bf16 %v6877, %v6876
      %v6917 = vpack.c.bf16 %v6879, %v6878
      %v6918 = vpack.c.bf16 %v6881, %v6880
      %v6919 = vpack.c.bf16 %v6883, %v6882
      %v6920 = vpack.c.bf16 %v6885, %v6884
      %v6921 = vpack.c.bf16 %v6887, %v6886
      %v6922 = vpack.c.bf16 %v6889, %v6888
      %v6923 = vpack.c.bf16 %v6891, %v6890
      %v6956 = vunpack.c.l.b16 %v6892
      %v6957 = vunpack.c.h.b16 %v6892
      %v6958 = vunpack.c.l.b16 %v6893
      %v6959 = vunpack.c.h.b16 %v6893
      %v6960 = vunpack.c.l.b16 %v6894
      %v6961 = vunpack.c.h.b16 %v6894
      %v6962 = vunpack.c.l.b16 %v6895
      %v6963 = vunpack.c.h.b16 %v6895
      %v6964 = vunpack.c.l.b16 %v6896
      %v6965 = vunpack.c.h.b16 %v6896
      %v6966 = vunpack.c.l.b16 %v6897
      %v6967 = vunpack.c.h.b16 %v6897
      %v6968 = vunpack.c.l.b16 %v6898
      %v6969 = vunpack.c.h.b16 %v6898
      %v6970 = vunpack.c.l.b16 %v6899
      %v6971 = vunpack.c.h.b16 %v6899
      %v6972 = vunpack.c.l.b16 %v6900
      %v6973 = vunpack.c.h.b16 %v6900
      %v6974 = vunpack.c.l.b16 %v6901
      %v6975 = vunpack.c.h.b16 %v6901
      %v6976 = vunpack.c.l.b16 %v6902
      %v6977 = vunpack.c.h.b16 %v6902
      %v6978 = vunpack.c.l.b16 %v6903
      %v6979 = vunpack.c.h.b16 %v6903
      %v6980 = vunpack.c.l.b16 %v6904
      %v6981 = vunpack.c.h.b16 %v6904
      %v6982 = vunpack.c.l.b16 %v6905
      %v6983 = vunpack.c.h.b16 %v6905
      %v6984 = vunpack.c.l.b16 %v6906
      %v6985 = vunpack.c.h.b16 %v6906
      %v6986 = vunpack.c.l.b16 %v6907
      %v6987 = vunpack.c.h.b16 %v6907
      %v6988 = vunpack.c.l.b16 %v6908
      %v6989 = vunpack.c.h.b16 %v6908
      %v6990 = vunpack.c.l.b16 %v6909
      %v6991 = vunpack.c.h.b16 %v6909
      %v6992 = vunpack.c.l.b16 %v6910
      %v6993 = vunpack.c.h.b16 %v6910
      %v6994 = vunpack.c.l.b16 %v6911
      %v6995 = vunpack.c.h.b16 %v6911
      %v6996 = vunpack.c.l.b16 %v6912
      %v6997 = vunpack.c.h.b16 %v6912
      %v6998 = vunpack.c.l.b16 %v6913
      %v6999 = vunpack.c.h.b16 %v6913
      %v7000 = vunpack.c.l.b16 %v6914
      %v7001 = vunpack.c.h.b16 %v6914
      %v7002 = vunpack.c.l.b16 %v6915
      %v7003 = vunpack.c.h.b16 %v6915
      %v7004 = vunpack.c.l.b16 %v6916
      %v7005 = vunpack.c.h.b16 %v6916
      %v7006 = vunpack.c.l.b16 %v6917
      %v7007 = vunpack.c.h.b16 %v6917
      %v7008 = vunpack.c.l.b16 %v6918
      %v7009 = vunpack.c.h.b16 %v6918
      %v7010 = vunpack.c.l.b16 %v6919
      %v7011 = vunpack.c.h.b16 %v6919
      %v7012 = vunpack.c.l.b16 %v6920
      %v7013 = vunpack.c.h.b16 %v6920
      %v7014 = vunpack.c.l.b16 %v6921
      %v7015 = vunpack.c.h.b16 %v6921
      %v7016 = vunpack.c.l.b16 %v6922
      %v7017 = vunpack.c.h.b16 %v6922
      %v7018 = vunpack.c.l.b16 %v6923
      %v7019 = vunpack.c.h.b16 %v6923
      %v7020 = vpack.c.b16 %v6956, %v6956
      %v7021 = vpack.c.b16 %v6957, %v6957
      %v7022 = vpack.c.b16 %v6958, %v6958
      %v7023 = vpack.c.b16 %v6959, %v6959
      %v7024 = vpack.c.b16 %v6960, %v6960
      %v7025 = vpack.c.b16 %v6961, %v6961
      %v7026 = vpack.c.b16 %v6962, %v6962
      %v7027 = vpack.c.b16 %v6963, %v6963
      %v7028 = vpack.c.b16 %v6964, %v6964
      %v7029 = vpack.c.b16 %v6965, %v6965
      %v7030 = vpack.c.b16 %v6966, %v6966
      %v7031 = vpack.c.b16 %v6967, %v6967
      %v7032 = vpack.c.b16 %v6968, %v6968
      %v7033 = vpack.c.b16 %v6969, %v6969
      %v7034 = vpack.c.b16 %v6970, %v6970
      %v7035 = vpack.c.b16 %v6971, %v6971
      %v7036 = vpack.c.b16 %v6972, %v6972
      %v7037 = vpack.c.b16 %v6973, %v6973
      %v7038 = vpack.c.b16 %v6974, %v6974
      %v7039 = vpack.c.b16 %v6975, %v6975
      %v7040 = vpack.c.b16 %v6976, %v6976
      %v7041 = vpack.c.b16 %v6977, %v6977
      %v7042 = vpack.c.b16 %v6978, %v6978
      %v7043 = vpack.c.b16 %v6979, %v6979
      %v7044 = vpack.c.b16 %v6980, %v6980
      %v7045 = vpack.c.b16 %v6981, %v6981
      %v7046 = vpack.c.b16 %v6982, %v6982
      %v7047 = vpack.c.b16 %v6983, %v6983
      %v7048 = vpack.c.b16 %v6984, %v6984
      %v7049 = vpack.c.b16 %v6985, %v6985
      %v7050 = vpack.c.b16 %v6986, %v6986
      %v7051 = vpack.c.b16 %v6987, %v6987
      %v7052 = vpack.c.b16 %v6988, %v6988
      %v7053 = vpack.c.b16 %v6989, %v6989
      %v7054 = vpack.c.b16 %v6990, %v6990
      %v7055 = vpack.c.b16 %v6991, %v6991
      %v7056 = vpack.c.b16 %v6992, %v6992
      %v7057 = vpack.c.b16 %v6993, %v6993
      %v7058 = vpack.c.b16 %v6994, %v6994
      %v7059 = vpack.c.b16 %v6995, %v6995
      %v7060 = vpack.c.b16 %v6996, %v6996
      %v7061 = vpack.c.b16 %v6997, %v6997
      %v7062 = vpack.c.b16 %v6998, %v6998
      %v7063 = vpack.c.b16 %v6999, %v6999
      %v7064 = vpack.c.b16 %v7000, %v7000
      %v7065 = vpack.c.b16 %v7001, %v7001
      %v7066 = vpack.c.b16 %v7002, %v7002
      %v7067 = vpack.c.b16 %v7003, %v7003
      %v7068 = vpack.c.b16 %v7004, %v7004
      %v7069 = vpack.c.b16 %v7005, %v7005
      %v7070 = vpack.c.b16 %v7006, %v7006
      %v7071 = vpack.c.b16 %v7007, %v7007
      %v7072 = vpack.c.b16 %v7008, %v7008
      %v7073 = vpack.c.b16 %v7009, %v7009
      %v7074 = vpack.c.b16 %v7010, %v7010
      %v7075 = vpack.c.b16 %v7011, %v7011
      %v7076 = vpack.c.b16 %v7012, %v7012
      %v7077 = vpack.c.b16 %v7013, %v7013
      %v7078 = vpack.c.b16 %v7014, %v7014
      %v7079 = vpack.c.b16 %v7015, %v7015
      %v7080 = vpack.c.b16 %v7016, %v7016
      %v7081 = vpack.c.b16 %v7017, %v7017
      %v7082 = vpack.c.b16 %v7018, %v7018
      %v7083 = vpack.c.b16 %v7019, %v7019
      %7148 = vst.msk [vmem:[#allocation2 + $0x28] sm:$0xf] %vm278, %v7020
      %7149 = vst.msk [vmem:[#allocation2 + $0x2c] sm:$0xf] %vm278, %v7021
      %7150 = vst.msk [vmem:[#allocation2 + $0x30] sm:$0xf] %vm278, %v7022
      %7151 = vst.msk [vmem:[#allocation2 + $0x34] sm:$0xf] %vm278, %v7023
      %7152 = vst.msk [vmem:[#allocation2 + $0x38] sm:$0xf] %vm278, %v7024
      %7153 = vst.msk [vmem:[#allocation2 + $0x3c] sm:$0xf] %vm278, %v7025
      %7154 = vst.msk [vmem:[#allocation2 + $0x40] sm:$0xf] %vm278, %v7026
      %7155 = vst.msk [vmem:[#allocation2 + $0x44] sm:$0xf] %vm278, %v7027
      %7156 = vst.msk [vmem:[#allocation2 + $0x48] sm:$0xf] %vm278, %v7028
      %7157 = vst.msk [vmem:[#allocation2 + $0x4c] sm:$0xf] %vm278, %v7029
      %7158 = vst.msk [vmem:[#allocation2 + $0x50] sm:$0xf] %vm278, %v7030
      %7159 = vst.msk [vmem:[#allocation2 + $0x54] sm:$0xf] %vm278, %v7031
      %7160 = vst.msk [vmem:[#allocation2 + $0x58] sm:$0xf] %vm278, %v7032
      %7161 = vst.msk [vmem:[#allocation2 + $0x5c] sm:$0xf] %vm278, %v7033
      %7162 = vst.msk [vmem:[#allocation2 + $0x60] sm:$0xf] %vm278, %v7034
      %7163 = vst.msk [vmem:[#allocation2 + $0x64] sm:$0xf] %vm278, %v7035
      %7164 = vst.msk [vmem:[#allocation2 + $0x68] sm:$0xf] %vm278, %v7036
      %7165 = vst.msk [vmem:[#allocation2 + $0x6c] sm:$0xf] %vm278, %v7037
      %7166 = vst.msk [vmem:[#allocation2 + $0x70] sm:$0xf] %vm278, %v7038
      %7167 = vst.msk [vmem:[#allocation2 + $0x74] sm:$0xf] %vm278, %v7039
      %7168 = vst.msk [vmem:[#allocation2 + $0x78] sm:$0xf] %vm278, %v7040
      %7169 = vst.msk [vmem:[#allocation2 + $0x7c] sm:$0xf] %vm278, %v7041
      %7170 = vst.msk [vmem:[#allocation2 + $0x80] sm:$0xf] %vm278, %v7042
      %7171 = vst.msk [vmem:[#allocation2 + $0x84] sm:$0xf] %vm278, %v7043
      %7172 = vst.msk [vmem:[#allocation2 + $0x88] sm:$0xf] %vm278, %v7044
      %7173 = vst.msk [vmem:[#allocation2 + $0x8c] sm:$0xf] %vm278, %v7045
      %7174 = vst.msk [vmem:[#allocation2 + $0x90] sm:$0xf] %vm278, %v7046
      %7175 = vst.msk [vmem:[#allocation2 + $0x94] sm:$0xf] %vm278, %v7047
      %7176 = vst.msk [vmem:[#allocation2 + $0x98] sm:$0xf] %vm278, %v7048
      %7177 = vst.msk [vmem:[#allocation2 + $0x9c] sm:$0xf] %vm278, %v7049
      %7178 = vst.msk [vmem:[#allocation2 + $0xa0] sm:$0xf] %vm278, %v7050
      %7179 = vst.msk [vmem:[#allocation2 + $0xa4] sm:$0xf] %vm278, %v7051
      %7180 = vst.msk [vmem:[#allocation2 + $0xa8] sm:$0xf] %vm278, %v7052
      %7181 = vst.msk [vmem:[#allocation2 + $0xac] sm:$0xf] %vm278, %v7053
      %7182 = vst.msk [vmem:[#allocation2 + $0xb0] sm:$0xf] %vm278, %v7054
      %7183 = vst.msk [vmem:[#allocation2 + $0xb4] sm:$0xf] %vm278, %v7055
      %7184 = vst.msk [vmem:[#allocation2 + $0xb8] sm:$0xf] %vm278, %v7056
      %7185 = vst.msk [vmem:[#allocation2 + $0xbc] sm:$0xf] %vm278, %v7057
      %7186 = vst.msk [vmem:[#allocation2 + $0xc0] sm:$0xf] %vm278, %v7058
      %7187 = vst.msk [vmem:[#allocation2 + $0xc4] sm:$0xf] %vm278, %v7059
      %7188 = vst.msk [vmem:[#allocation2 + $0xc8] sm:$0xf] %vm278, %v7060
      %7189 = vst.msk [vmem:[#allocation2 + $0xcc] sm:$0xf] %vm278, %v7061
      %7190 = vst.msk [vmem:[#allocation2 + $0xd0] sm:$0xf] %vm278, %v7062
      %7191 = vst.msk [vmem:[#allocation2 + $0xd4] sm:$0xf] %vm278, %v7063
      %7192 = vst.msk [vmem:[#allocation2 + $0xd8] sm:$0xf] %vm278, %v7064
      %7193 = vst.msk [vmem:[#allocation2 + $0xdc] sm:$0xf] %vm278, %v7065
      %7194 = vst.msk [vmem:[#allocation2 + $0xe0] sm:$0xf] %vm278, %v7066
      %7195 = vst.msk [vmem:[#allocation2 + $0xe4] sm:$0xf] %vm278, %v7067
      %7196 = vst.msk [vmem:[#allocation2 + $0xe8] sm:$0xf] %vm278, %v7068
      %7197 = vst.msk [vmem:[#allocation2 + $0xec] sm:$0xf] %vm278, %v7069
      %7198 = vst.msk [vmem:[#allocation2 + $0xf0] sm:$0xf] %vm278, %v7070
      %7199 = vst.msk [vmem:[#allocation2 + $0xf4] sm:$0xf] %vm278, %v7071
      %7200 = vst.msk [vmem:[#allocation2 + $0xf8] sm:$0xf] %vm278, %v7072
      %7201 = vst.msk [vmem:[#allocation2 + $0xfc] sm:$0xf] %vm278, %v7073
      %7202 = vst.msk [vmem:[#allocation2 + $0x100] sm:$0xf] %vm278, %v7074
      %7203 = vst.msk [vmem:[#allocation2 + $0x104] sm:$0xf] %vm278, %v7075
      %7204 = vst.msk [vmem:[#allocation2 + $0x108] sm:$0xf] %vm278, %v7076
      %7205 = vst.msk [vmem:[#allocation2 + $0x10c] sm:$0xf] %vm278, %v7077
      %7206 = vst.msk [vmem:[#allocation2 + $0x110] sm:$0xf] %vm278, %v7078
      %7207 = vst.msk [vmem:[#allocation2 + $0x114] sm:$0xf] %vm278, %v7079
      %7208 = vst.msk [vmem:[#allocation2 + $0x118] sm:$0xf] %vm278, %v7080
      %7209 = vst.msk [vmem:[#allocation2 + $0x11c] sm:$0xf] %vm278, %v7081
      %7210 = vst.msk [vmem:[#allocation2 + $0x120] sm:$0xf] %vm278, %v7082
      %7211 = vst.msk [vmem:[#allocation2 + $0x124] sm:$0xf] %vm278, %v7083
      %v7212 = vld [vmem:[#allocation2] sm:$0x8]
      %v7213 = vld [vmem:[#allocation2 + $0x4] sm:$0xf]
      %v7214 = vld [vmem:[#allocation2 + $0x8] sm:$0xf]
      %v7215 = vld [vmem:[#allocation2 + $0xc] sm:$0xf]
      %v7216 = vld [vmem:[#allocation2 + $0x10] sm:$0xf]
      %v7217 = vld [vmem:[#allocation2 + $0x14] sm:$0xf]
      %v7218 = vld [vmem:[#allocation2 + $0x18] sm:$0xf]
      %v7219 = vld [vmem:[#allocation2 + $0x1c] sm:$0xf]
      %v7220 = vld [vmem:[#allocation2 + $0x20] sm:$0xf]
      %v7221 = vld [vmem:[#allocation2 + $0x24] sm:$0xf]
      %v7222 = vld [vmem:[#allocation2 + $0x28] sm:$0xf]
      %v7223 = vld [vmem:[#allocation2 + $0x2c] sm:$0xf]
      %v7224 = vld [vmem:[#allocation2 + $0x30] sm:$0xf]
      %v7225 = vld [vmem:[#allocation2 + $0x34] sm:$0xf]
      %v7226 = vld [vmem:[#allocation2 + $0x38] sm:$0xf]
      %v7227 = vld [vmem:[#allocation2 + $0x3c] sm:$0xf]
      %v7228 = vld [vmem:[#allocation2 + $0x40] sm:$0xf]
      %v7229 = vld [vmem:[#allocation2 + $0x44] sm:$0xf]
      %v7230 = vld [vmem:[#allocation2 + $0x48] sm:$0xf]
      %v7231 = vld [vmem:[#allocation2 + $0x4c] sm:$0xf]
      %v7232 = vld [vmem:[#allocation2 + $0x50] sm:$0xf]
      %v7233 = vld [vmem:[#allocation2 + $0x54] sm:$0xf]
      %v7234 = vld [vmem:[#allocation2 + $0x58] sm:$0xf]
      %v7235 = vld [vmem:[#allocation2 + $0x5c] sm:$0xf]
      %v7236 = vld [vmem:[#allocation2 + $0x60] sm:$0xf]
      %v7237 = vld [vmem:[#allocation2 + $0x64] sm:$0xf]
      %v7238 = vld [vmem:[#allocation2 + $0x68] sm:$0xf]
      %v7239 = vld [vmem:[#allocation2 + $0x6c] sm:$0xf]
      %v7240 = vld [vmem:[#allocation2 + $0x70] sm:$0xf]
      %v7241 = vld [vmem:[#allocation2 + $0x74] sm:$0xf]
      %v7242 = vld [vmem:[#allocation2 + $0x78] sm:$0xf]
      %v7243 = vld [vmem:[#allocation2 + $0x7c] sm:$0xf]
      %v7244 = vld [vmem:[#allocation2 + $0x80] sm:$0xf]
      %v7245 = vld [vmem:[#allocation2 + $0x84] sm:$0xf]
      %v7246 = vld [vmem:[#allocation2 + $0x88] sm:$0xf]
      %v7247 = vld [vmem:[#allocation2 + $0x8c] sm:$0xf]
      %v7248 = vld [vmem:[#allocation2 + $0x90] sm:$0xf]
      %v7249 = vld [vmem:[#allocation2 + $0x94] sm:$0xf]
      %v7250 = vld [vmem:[#allocation2 + $0x98] sm:$0xf]
      %v7251 = vld [vmem:[#allocation2 + $0x9c] sm:$0xf]
      %v7252 = vld [vmem:[#allocation2 + $0xa0] sm:$0xf]
      %v7253 = vld [vmem:[#allocation2 + $0xa4] sm:$0xf]
      %v7254 = vld [vmem:[#allocation2 + $0xa8] sm:$0xf]
      %v7255 = vld [vmem:[#allocation2 + $0xac] sm:$0xf]
      %v7256 = vld [vmem:[#allocation2 + $0xb0] sm:$0xf]
      %v7257 = vld [vmem:[#allocation2 + $0xb4] sm:$0xf]
      %v7258 = vld [vmem:[#allocation2 + $0xb8] sm:$0xf]
      %v7259 = vld [vmem:[#allocation2 + $0xbc] sm:$0xf]
      %v7260 = vld [vmem:[#allocation2 + $0xc0] sm:$0xf]
      %v7261 = vld [vmem:[#allocation2 + $0xc4] sm:$0xf]
      %v7262 = vld [vmem:[#allocation2 + $0xc8] sm:$0xf]
      %v7263 = vld [vmem:[#allocation2 + $0xcc] sm:$0xf]
      %v7264 = vld [vmem:[#allocation2 + $0xd0] sm:$0xf]
      %v7265 = vld [vmem:[#allocation2 + $0xd4] sm:$0xf]
      %v7266 = vld [vmem:[#allocation2 + $0xd8] sm:$0xf]
      %v7267 = vld [vmem:[#allocation2 + $0xdc] sm:$0xf]
      %v7268 = vld [vmem:[#allocation2 + $0xe0] sm:$0xf]
      %v7269 = vld [vmem:[#allocation2 + $0xe4] sm:$0xf]
      %v7270 = vld [vmem:[#allocation2 + $0xe8] sm:$0xf]
      %v7271 = vld [vmem:[#allocation2 + $0xec] sm:$0xf]
      %v7272 = vld [vmem:[#allocation2 + $0xf0] sm:$0xf]
      %v7273 = vld [vmem:[#allocation2 + $0xf4] sm:$0xf]
      %v7274 = vld [vmem:[#allocation2 + $0xf8] sm:$0xf]
      %v7275 = vld [vmem:[#allocation2 + $0xfc] sm:$0xf]
      %v7276 = vld [vmem:[#allocation2 + $0x100] sm:$0xf]
      %v7277 = vld [vmem:[#allocation2 + $0x104] sm:$0x1]
      %v7278 = vld [vmem:[#allocation2 + $0x4] sm:$0x8]
      %v7279 = vld [vmem:[#allocation2 + $0x104] sm:$0xf]
      %v7280 = vld [vmem:[#allocation2 + $0x108] sm:$0x1]
      %v7281 = vld [vmem:[#allocation2 + $0x8] sm:$0x8]
      %v7282 = vld [vmem:[#allocation2 + $0x108] sm:$0xf]
      %v7283 = vld [vmem:[#allocation2 + $0x10c] sm:$0x1]
      %v7284 = vld [vmem:[#allocation2 + $0x20] sm:$0x8]
      %v7285 = vld [vmem:[#allocation2 + $0x10c] sm:$0xf]
      %v7286 = vld [vmem:[#allocation2 + $0x110] sm:$0xf]
      %v7287 = vld [vmem:[#allocation2 + $0x114] sm:$0xf]
      %v7288 = vld [vmem:[#allocation2 + $0x118] sm:$0xf]
      %v7289 = vld [vmem:[#allocation2 + $0x11c] sm:$0xf]
      %v7290 = vld [vmem:[#allocation2 + $0x120] sm:$0xf]
      %v7291 = vld [vmem:[#allocation2 + $0x124] sm:$0x1]
      %v7292 = vld [vmem:[#allocation2 + $0x24] sm:$0x8]
      %v7293 = vld [vmem:[#allocation2 + $0x124] sm:$0xf]
      %v7294 = vld [vmem:[#allocation2 + $0x128] sm:$0x1]
      %v7295 = vld [vmem:[#allocation2 + $0x28] sm:$0x8]
      %v7296 = vld [vmem:[#allocation2 + $0x128] sm:$0xf]
      %v7297 = vld [vmem:[#allocation2 + $0x12c] sm:$0x1]
      %v7298 = vld [vmem:[#allocation2 + $0x40] sm:$0x8]
      %v7299 = vld [vmem:[#allocation2 + $0x12c] sm:$0xf]
      %v7300 = vld [vmem:[#allocation2 + $0x130] sm:$0xf]
      %v7301 = vld [vmem:[#allocation2 + $0x134] sm:$0xf]
      %v7302 = vld [vmem:[#allocation2 + $0x138] sm:$0xf]
      %v7303 = vld [vmem:[#allocation2 + $0x13c] sm:$0xf]
      %v7304 = vld [vmem:[#allocation2 + $0x140] sm:$0xf]
      %v7305 = vld [vmem:[#allocation2 + $0x144] sm:$0x1]
      %v7306 = vld [vmem:[#allocation2 + $0x44] sm:$0x8]
      %v7307 = vld [vmem:[#allocation2 + $0x144] sm:$0xf]
      %v7308 = vld [vmem:[#allocation2 + $0x148] sm:$0x1]
      %v7309 = vld [vmem:[#allocation2 + $0x48] sm:$0x8]
      %v7310 = vld [vmem:[#allocation2 + $0x148] sm:$0xf]
      %v7311 = vld [vmem:[#allocation2 + $0x14c] sm:$0x1]
      %v7377 = vunpack.c.l.b16 %v7212
      %v7378 = vunpack.c.l.b16 %v7213
      %v7379 = vunpack.c.l.b16 %v7214
      %v7380 = vunpack.c.l.b16 %v7215
      %v7381 = vunpack.c.l.b16 %v7216
      %v7382 = vunpack.c.l.b16 %v7217
      %v7383 = vunpack.c.l.b16 %v7218
      %v7384 = vunpack.c.l.b16 %v7219
      %v7385 = vunpack.c.l.b16 %v7220
      %v7386 = vunpack.c.l.b16 %v7221
      %v7387 = vunpack.c.l.b16 %v7222
      %v7388 = vunpack.c.l.b16 %v7223
      %v7389 = vunpack.c.l.b16 %v7224
      %v7390 = vunpack.c.l.b16 %v7225
      %v7391 = vunpack.c.l.b16 %v7226
      %v7392 = vunpack.c.l.b16 %v7227
      %v7393 = vunpack.c.l.b16 %v7228
      %v7394 = vunpack.c.l.b16 %v7229
      %v7395 = vunpack.c.l.b16 %v7230
      %v7396 = vunpack.c.l.b16 %v7231
      %v7397 = vunpack.c.l.b16 %v7232
      %v7398 = vunpack.c.l.b16 %v7233
      %v7399 = vunpack.c.l.b16 %v7234
      %v7400 = vunpack.c.l.b16 %v7235
      %v7401 = vunpack.c.l.b16 %v7236
      %v7402 = vunpack.c.l.b16 %v7237
      %v7403 = vunpack.c.l.b16 %v7238
      %v7404 = vunpack.c.l.b16 %v7239
      %v7405 = vunpack.c.l.b16 %v7240
      %v7406 = vunpack.c.l.b16 %v7241
      %v7407 = vunpack.c.l.b16 %v7242
      %v7408 = vunpack.c.l.b16 %v7243
      %v7409 = vunpack.c.l.b16 %v7244
      %v7410 = vunpack.c.l.b16 %v7245
      %v7411 = vunpack.c.l.b16 %v7246
      %v7412 = vunpack.c.l.b16 %v7247
      %v7413 = vunpack.c.l.b16 %v7248
      %v7414 = vunpack.c.l.b16 %v7249
      %v7415 = vunpack.c.l.b16 %v7250
      %v7416 = vunpack.c.l.b16 %v7251
      %v7417 = vunpack.c.l.b16 %v7252
      %v7418 = vunpack.c.l.b16 %v7253
      %v7419 = vunpack.c.l.b16 %v7254
      %v7420 = vunpack.c.l.b16 %v7255
      %v7421 = vunpack.c.l.b16 %v7256
      %v7422 = vunpack.c.l.b16 %v7257
      %v7423 = vunpack.c.l.b16 %v7258
      %v7424 = vunpack.c.l.b16 %v7259
      %v7425 = vunpack.c.l.b16 %v7260
      %v7426 = vunpack.c.l.b16 %v7261
      %v7427 = vunpack.c.l.b16 %v7262
      %v7428 = vunpack.c.l.b16 %v7263
      %v7429 = vunpack.c.l.b16 %v7264
      %v7430 = vunpack.c.l.b16 %v7265
      %v7431 = vunpack.c.l.b16 %v7266
      %v7432 = vunpack.c.l.b16 %v7267
      %v7433 = vunpack.c.l.b16 %v7268
      %v7434 = vunpack.c.l.b16 %v7269
      %v7435 = vunpack.c.l.b16 %v7270
      %v7436 = vunpack.c.l.b16 %v7271
      %v7437 = vunpack.c.l.b16 %v7272
      %v7438 = vunpack.c.l.b16 %v7273
      %v7439 = vunpack.c.l.b16 %v7274
      %v7440 = vunpack.c.l.b16 %v7275
      %v7441 = vunpack.c.l.b16 %v7276
      %v7442 = vpack.c.b16 %v7378, %v7377
      %v7443 = vpack.c.b16 %v7380, %v7379
      %v7444 = vpack.c.b16 %v7382, %v7381
      %v7445 = vpack.c.b16 %v7384, %v7383
      %v7446 = vpack.c.b16 %v7386, %v7385
      %v7447 = vpack.c.b16 %v7388, %v7387
      %v7448 = vpack.c.b16 %v7390, %v7389
      %v7449 = vpack.c.b16 %v7392, %v7391
      %v7450 = vpack.c.b16 %v7394, %v7393
      %v7451 = vpack.c.b16 %v7396, %v7395
      %v7452 = vpack.c.b16 %v7398, %v7397
      %v7453 = vpack.c.b16 %v7400, %v7399
      %v7454 = vpack.c.b16 %v7402, %v7401
      %v7455 = vpack.c.b16 %v7404, %v7403
      %v7456 = vpack.c.b16 %v7406, %v7405
      %v7457 = vpack.c.b16 %v7408, %v7407
      %v7458 = vpack.c.b16 %v7410, %v7409
      %v7459 = vpack.c.b16 %v7412, %v7411
      %v7460 = vpack.c.b16 %v7414, %v7413
      %v7461 = vpack.c.b16 %v7416, %v7415
      %v7462 = vpack.c.b16 %v7418, %v7417
      %v7463 = vpack.c.b16 %v7420, %v7419
      %v7464 = vpack.c.b16 %v7422, %v7421
      %v7465 = vpack.c.b16 %v7424, %v7423
      %v7466 = vpack.c.b16 %v7426, %v7425
      %v7467 = vpack.c.b16 %v7428, %v7427
      %v7468 = vpack.c.b16 %v7430, %v7429
      %v7469 = vpack.c.b16 %v7432, %v7431
      %v7470 = vpack.c.b16 %v7434, %v7433
      %v7471 = vpack.c.b16 %v7436, %v7435
      %v7472 = vpack.c.b16 %v7438, %v7437
      %v7473 = vpack.c.b16 %v7440, %v7439
      %v7474 = vpack.c.b16 %v7441, %v7441
      %v7475 = vpack.c.b16 %v7379, %v7378
      %v7476 = vpack.c.b16 %v7381, %v7380
      %v7477 = vpack.c.b16 %v7383, %v7382
      %v7478 = vpack.c.b16 %v7385, %v7384
      %v7479 = vpack.c.b16 %v7387, %v7386
      %v7480 = vpack.c.b16 %v7389, %v7388
      %v7481 = vpack.c.b16 %v7391, %v7390
      %v7482 = vpack.c.b16 %v7393, %v7392
      %v7483 = vpack.c.b16 %v7395, %v7394
      %v7484 = vpack.c.b16 %v7397, %v7396
      %v7485 = vpack.c.b16 %v7399, %v7398
      %v7486 = vpack.c.b16 %v7401, %v7400
      %v7487 = vpack.c.b16 %v7403, %v7402
      %v7488 = vpack.c.b16 %v7405, %v7404
      %v7489 = vpack.c.b16 %v7407, %v7406
      %v7490 = vpack.c.b16 %v7409, %v7408
      %v7491 = vpack.c.b16 %v7411, %v7410
      %v7492 = vpack.c.b16 %v7413, %v7412
      %v7493 = vpack.c.b16 %v7415, %v7414
      %v7494 = vpack.c.b16 %v7417, %v7416
      %v7495 = vpack.c.b16 %v7419, %v7418
      %v7496 = vpack.c.b16 %v7421, %v7420
      %v7497 = vpack.c.b16 %v7423, %v7422
      %v7498 = vpack.c.b16 %v7425, %v7424
      %v7499 = vpack.c.b16 %v7427, %v7426
      %v7500 = vpack.c.b16 %v7429, %v7428
      %v7501 = vpack.c.b16 %v7431, %v7430
      %v7502 = vpack.c.b16 %v7433, %v7432
      %v7503 = vpack.c.b16 %v7435, %v7434
      %v7504 = vpack.c.b16 %v7437, %v7436
      %v7505 = vpack.c.b16 %v7439, %v7438
      %v7506 = vpack.c.b16 %v7441, %v7440
      %v7508 = vshrl.u32 %v7475, 16
      %v7510 = vrot.slane %v7508, 4
      %v7511 = vshll.u32 %v7475, 16
      %v7513 = vrot.slane %v7511, 5
      %v7514 = vor.u32 %v7510, %v7513
      %v7516 = vshrl.u32 %v7476, 16
      %v7518 = vrot.slane %v7516, 4
      %v7519 = vshll.u32 %v7476, 16
      %v7521 = vrot.slane %v7519, 5
      %v7522 = vor.u32 %v7518, %v7521
      %v7523 = vsel %vm594, %v7514, %v7522
      %v7525 = vshrl.u32 %v7477, 16
      %v7527 = vrot.slane %v7525, 4
      %v7528 = vshll.u32 %v7477, 16
      %v7530 = vrot.slane %v7528, 5
      %v7531 = vor.u32 %v7527, %v7530
      %v7532 = vsel %vm594, %v7522, %v7531
      %v7534 = vshrl.u32 %v7478, 16
      %v7536 = vrot.slane %v7534, 4
      %v7537 = vshll.u32 %v7478, 16
      %v7539 = vrot.slane %v7537, 5
      %v7540 = vor.u32 %v7536, %v7539
      %v7541 = vsel %vm594, %v7531, %v7540
      %v7543 = vshrl.u32 %v7479, 16
      %v7545 = vrot.slane %v7543, 4
      %v7546 = vshll.u32 %v7479, 16
      %v7548 = vrot.slane %v7546, 5
      %v7549 = vor.u32 %v7545, %v7548
      %v7550 = vsel %vm594, %v7540, %v7549
      %v7552 = vshrl.u32 %v7480, 16
      %v7554 = vrot.slane %v7552, 4
      %v7555 = vshll.u32 %v7480, 16
      %v7557 = vrot.slane %v7555, 5
      %v7558 = vor.u32 %v7554, %v7557
      %v7559 = vsel %vm594, %v7549, %v7558
      %v7561 = vshrl.u32 %v7481, 16
      %v7563 = vrot.slane %v7561, 4
      %v7564 = vshll.u32 %v7481, 16
      %v7566 = vrot.slane %v7564, 5
      %v7567 = vor.u32 %v7563, %v7566
      %v7568 = vsel %vm594, %v7558, %v7567
      %v7570 = vshrl.u32 %v7482, 16
      %v7572 = vrot.slane %v7570, 4
      %v7573 = vshll.u32 %v7482, 16
      %v7575 = vrot.slane %v7573, 5
      %v7576 = vor.u32 %v7572, %v7575
      %v7577 = vsel %vm594, %v7567, %v7576
      %v7579 = vshrl.u32 %v7483, 16
      %v7581 = vrot.slane %v7579, 4
      %v7582 = vshll.u32 %v7483, 16
      %v7584 = vrot.slane %v7582, 5
      %v7585 = vor.u32 %v7581, %v7584
      %v7586 = vsel %vm594, %v7576, %v7585
      %v7588 = vshrl.u32 %v7484, 16
      %v7590 = vrot.slane %v7588, 4
      %v7591 = vshll.u32 %v7484, 16
      %v7593 = vrot.slane %v7591, 5
      %v7594 = vor.u32 %v7590, %v7593
      %v7595 = vsel %vm594, %v7585, %v7594
      %v7597 = vshrl.u32 %v7485, 16
      %v7599 = vrot.slane %v7597, 4
      %v7600 = vshll.u32 %v7485, 16
      %v7602 = vrot.slane %v7600, 5
      %v7603 = vor.u32 %v7599, %v7602
      %v7604 = vsel %vm594, %v7594, %v7603
      %v7606 = vshrl.u32 %v7486, 16
      %v7608 = vrot.slane %v7606, 4
      %v7609 = vshll.u32 %v7486, 16
      %v7611 = vrot.slane %v7609, 5
      %v7612 = vor.u32 %v7608, %v7611
      %v7613 = vsel %vm594, %v7603, %v7612
      %v7615 = vshrl.u32 %v7487, 16
      %v7617 = vrot.slane %v7615, 4
      %v7618 = vshll.u32 %v7487, 16
      %v7620 = vrot.slane %v7618, 5
      %v7621 = vor.u32 %v7617, %v7620
      %v7622 = vsel %vm594, %v7612, %v7621
      %v7624 = vshrl.u32 %v7488, 16
      %v7626 = vrot.slane %v7624, 4
      %v7627 = vshll.u32 %v7488, 16
      %v7629 = vrot.slane %v7627, 5
      %v7630 = vor.u32 %v7626, %v7629
      %v7631 = vsel %vm594, %v7621, %v7630
      %v7633 = vshrl.u32 %v7489, 16
      %v7635 = vrot.slane %v7633, 4
      %v7636 = vshll.u32 %v7489, 16
      %v7638 = vrot.slane %v7636, 5
      %v7639 = vor.u32 %v7635, %v7638
      %v7640 = vsel %vm594, %v7630, %v7639
      %v7642 = vshrl.u32 %v7490, 16
      %v7644 = vrot.slane %v7642, 4
      %v7645 = vshll.u32 %v7490, 16
      %v7647 = vrot.slane %v7645, 5
      %v7648 = vor.u32 %v7644, %v7647
      %v7649 = vsel %vm594, %v7639, %v7648
      %v7651 = vshrl.u32 %v7491, 16
      %v7653 = vrot.slane %v7651, 4
      %v7654 = vshll.u32 %v7491, 16
      %v7656 = vrot.slane %v7654, 5
      %v7657 = vor.u32 %v7653, %v7656
      %v7658 = vsel %vm594, %v7648, %v7657
      %v7660 = vshrl.u32 %v7492, 16
      %v7662 = vrot.slane %v7660, 4
      %v7663 = vshll.u32 %v7492, 16
      %v7665 = vrot.slane %v7663, 5
      %v7666 = vor.u32 %v7662, %v7665
      %v7667 = vsel %vm594, %v7657, %v7666
      %v7669 = vshrl.u32 %v7493, 16
      %v7671 = vrot.slane %v7669, 4
      %v7672 = vshll.u32 %v7493, 16
      %v7674 = vrot.slane %v7672, 5
      %v7675 = vor.u32 %v7671, %v7674
      %v7676 = vsel %vm594, %v7666, %v7675
      %v7678 = vshrl.u32 %v7494, 16
      %v7680 = vrot.slane %v7678, 4
      %v7681 = vshll.u32 %v7494, 16
      %v7683 = vrot.slane %v7681, 5
      %v7684 = vor.u32 %v7680, %v7683
      %v7685 = vsel %vm594, %v7675, %v7684
      %v7687 = vshrl.u32 %v7495, 16
      %v7689 = vrot.slane %v7687, 4
      %v7690 = vshll.u32 %v7495, 16
      %v7692 = vrot.slane %v7690, 5
      %v7693 = vor.u32 %v7689, %v7692
      %v7694 = vsel %vm594, %v7684, %v7693
      %v7696 = vshrl.u32 %v7496, 16
      %v7698 = vrot.slane %v7696, 4
      %v7699 = vshll.u32 %v7496, 16
      %v7701 = vrot.slane %v7699, 5
      %v7702 = vor.u32 %v7698, %v7701
      %v7703 = vsel %vm594, %v7693, %v7702
      %v7705 = vshrl.u32 %v7497, 16
      %v7707 = vrot.slane %v7705, 4
      %v7708 = vshll.u32 %v7497, 16
      %v7710 = vrot.slane %v7708, 5
      %v7711 = vor.u32 %v7707, %v7710
      %v7712 = vsel %vm594, %v7702, %v7711
      %v7714 = vshrl.u32 %v7498, 16
      %v7716 = vrot.slane %v7714, 4
      %v7717 = vshll.u32 %v7498, 16
      %v7719 = vrot.slane %v7717, 5
      %v7720 = vor.u32 %v7716, %v7719
      %v7721 = vsel %vm594, %v7711, %v7720
      %v7723 = vshrl.u32 %v7499, 16
      %v7725 = vrot.slane %v7723, 4
      %v7726 = vshll.u32 %v7499, 16
      %v7728 = vrot.slane %v7726, 5
      %v7729 = vor.u32 %v7725, %v7728
      %v7730 = vsel %vm594, %v7720, %v7729
      %v7732 = vshrl.u32 %v7500, 16
      %v7734 = vrot.slane %v7732, 4
      %v7735 = vshll.u32 %v7500, 16
      %v7737 = vrot.slane %v7735, 5
      %v7738 = vor.u32 %v7734, %v7737
      %v7739 = vsel %vm594, %v7729, %v7738
      %v7741 = vshrl.u32 %v7501, 16
      %v7743 = vrot.slane %v7741, 4
      %v7744 = vshll.u32 %v7501, 16
      %v7746 = vrot.slane %v7744, 5
      %v7747 = vor.u32 %v7743, %v7746
      %v7748 = vsel %vm594, %v7738, %v7747
      %v7750 = vshrl.u32 %v7502, 16
      %v7752 = vrot.slane %v7750, 4
      %v7753 = vshll.u32 %v7502, 16
      %v7755 = vrot.slane %v7753, 5
      %v7756 = vor.u32 %v7752, %v7755
      %v7757 = vsel %vm594, %v7747, %v7756
      %v7759 = vshrl.u32 %v7503, 16
      %v7761 = vrot.slane %v7759, 4
      %v7762 = vshll.u32 %v7503, 16
      %v7764 = vrot.slane %v7762, 5
      %v7765 = vor.u32 %v7761, %v7764
      %v7766 = vsel %vm594, %v7756, %v7765
      %v7768 = vshrl.u32 %v7504, 16
      %v7770 = vrot.slane %v7768, 4
      %v7771 = vshll.u32 %v7504, 16
      %v7773 = vrot.slane %v7771, 5
      %v7774 = vor.u32 %v7770, %v7773
      %v7775 = vsel %vm594, %v7765, %v7774
      %v7777 = vshrl.u32 %v7505, 16
      %v7779 = vrot.slane %v7777, 4
      %v7780 = vshll.u32 %v7505, 16
      %v7782 = vrot.slane %v7780, 5
      %v7783 = vor.u32 %v7779, %v7782
      %v7784 = vsel %vm594, %v7774, %v7783
      %v7786 = vshrl.u32 %v7506, 16
      %v7788 = vrot.slane %v7786, 4
      %v7789 = vshll.u32 %v7506, 16
      %v7791 = vrot.slane %v7789, 5
      %v7792 = vor.u32 %v7788, %v7791
      %v7793 = vsel %vm594, %v7783, %v7792
      %7794 = vrot.lane.b32.xlu0 %v7514, 4
      %v7795 = vpop.permute.xlu0 %7794
      %7796 = vrot.lane.b32.xlu0 %v7523, 4
      %v7797 = vpop.permute.xlu0 %7796
      %7798 = vrot.lane.b32.xlu0 %v7532, 4
      %v7799 = vpop.permute.xlu0 %7798
      %7800 = vrot.lane.b32.xlu0 %v7541, 4
      %v7801 = vpop.permute.xlu0 %7800
      %7802 = vrot.lane.b32.xlu0 %v7550, 4
      %v7803 = vpop.permute.xlu0 %7802
      %7804 = vrot.lane.b32.xlu0 %v7559, 4
      %v7805 = vpop.permute.xlu0 %7804
      %7806 = vrot.lane.b32.xlu0 %v7568, 4
      %v7807 = vpop.permute.xlu0 %7806
      %7808 = vrot.lane.b32.xlu0 %v7577, 4
      %v7809 = vpop.permute.xlu0 %7808
      %7810 = vrot.lane.b32.xlu0 %v7586, 4
      %v7811 = vpop.permute.xlu0 %7810
      %7812 = vrot.lane.b32.xlu0 %v7595, 4
      %v7813 = vpop.permute.xlu0 %7812
      %7814 = vrot.lane.b32.xlu0 %v7604, 4
      %v7815 = vpop.permute.xlu0 %7814
      %7816 = vrot.lane.b32.xlu0 %v7613, 4
      %v7817 = vpop.permute.xlu0 %7816
      %7818 = vrot.lane.b32.xlu0 %v7622, 4
      %v7819 = vpop.permute.xlu0 %7818
      %7820 = vrot.lane.b32.xlu0 %v7631, 4
      %v7821 = vpop.permute.xlu0 %7820
      %7822 = vrot.lane.b32.xlu0 %v7640, 4
      %v7823 = vpop.permute.xlu0 %7822
      %7824 = vrot.lane.b32.xlu0 %v7649, 4
      %v7825 = vpop.permute.xlu0 %7824
      %7826 = vrot.lane.b32.xlu0 %v7658, 4
      %v7827 = vpop.permute.xlu0 %7826
      %7828 = vrot.lane.b32.xlu0 %v7667, 4
      %v7829 = vpop.permute.xlu0 %7828
      %7830 = vrot.lane.b32.xlu0 %v7676, 4
      %v7831 = vpop.permute.xlu0 %7830
      %7832 = vrot.lane.b32.xlu0 %v7685, 4
      %v7833 = vpop.permute.xlu0 %7832
      %7834 = vrot.lane.b32.xlu0 %v7694, 4
      %v7835 = vpop.permute.xlu0 %7834
      %7836 = vrot.lane.b32.xlu0 %v7703, 4
      %v7837 = vpop.permute.xlu0 %7836
      %7838 = vrot.lane.b32.xlu0 %v7712, 4
      %v7839 = vpop.permute.xlu0 %7838
      %7840 = vrot.lane.b32.xlu0 %v7721, 4
      %v7841 = vpop.permute.xlu0 %7840
      %7842 = vrot.lane.b32.xlu0 %v7730, 4
      %v7843 = vpop.permute.xlu0 %7842
      %7844 = vrot.lane.b32.xlu0 %v7739, 4
      %v7845 = vpop.permute.xlu0 %7844
      %7846 = vrot.lane.b32.xlu0 %v7748, 4
      %v7847 = vpop.permute.xlu0 %7846
      %7848 = vrot.lane.b32.xlu0 %v7757, 4
      %v7849 = vpop.permute.xlu0 %7848
      %7850 = vrot.lane.b32.xlu0 %v7766, 4
      %v7851 = vpop.permute.xlu0 %7850
      %7852 = vrot.lane.b32.xlu0 %v7775, 4
      %v7853 = vpop.permute.xlu0 %7852
      %7854 = vrot.lane.b32.xlu0 %v7784, 4
      %v7855 = vpop.permute.xlu0 %7854
      %7856 = vrot.lane.b32.xlu0 %v7793, 4
      %v7857 = vpop.permute.xlu0 %7856
      %7858 = vrot.lane.b32.xlu0 %v7792, 4
      %v7859 = vpop.permute.xlu0 %7858
      %v7861 = vunpack.c.l.b16 %v7277
      %v7862 = vpack.c.b16 %v7861, %v7861
      %v7863 = vrot.slane %v7475, 5
      %v7864 = vrot.slane %v7476, 5
      %v7865 = vsel %vm951, %v7863, %v7864
      %v7866 = vrot.slane %v7477, 5
      %v7867 = vsel %vm951, %v7864, %v7866
      %v7868 = vrot.slane %v7478, 5
      %v7869 = vsel %vm951, %v7866, %v7868
      %v7870 = vrot.slane %v7479, 5
      %v7871 = vsel %vm951, %v7868, %v7870
      %v7872 = vrot.slane %v7480, 5
      %v7873 = vsel %vm951, %v7870, %v7872
      %v7874 = vrot.slane %v7481, 5
      %v7875 = vsel %vm951, %v7872, %v7874
      %v7876 = vrot.slane %v7482, 5
      %v7877 = vsel %vm951, %v7874, %v7876
      %v7878 = vrot.slane %v7483, 5
      %v7879 = vsel %vm951, %v7876, %v7878
      %v7880 = vrot.slane %v7484, 5
      %v7881 = vsel %vm951, %v7878, %v7880
      %v7882 = vrot.slane %v7485, 5
      %v7883 = vsel %vm951, %v7880, %v7882
      %v7884 = vrot.slane %v7486, 5
      %v7885 = vsel %vm951, %v7882, %v7884
      %v7886 = vrot.slane %v7487, 5
      %v7887 = vsel %vm951, %v7884, %v7886
      %v7888 = vrot.slane %v7488, 5
      %v7889 = vsel %vm951, %v7886, %v7888
      %v7890 = vrot.slane %v7489, 5
      %v7891 = vsel %vm951, %v7888, %v7890
      %v7892 = vrot.slane %v7490, 5
      %v7893 = vsel %vm951, %v7890, %v7892
      %v7894 = vrot.slane %v7491, 5
      %v7895 = vsel %vm951, %v7892, %v7894
      %v7896 = vrot.slane %v7492, 5
      %v7897 = vsel %vm951, %v7894, %v7896
      %v7898 = vrot.slane %v7493, 5
      %v7899 = vsel %vm951, %v7896, %v7898
      %v7900 = vrot.slane %v7494, 5
      %v7901 = vsel %vm951, %v7898, %v7900
      %v7902 = vrot.slane %v7495, 5
      %v7903 = vsel %vm951, %v7900, %v7902
      %v7904 = vrot.slane %v7496, 5
      %v7905 = vsel %vm951, %v7902, %v7904
      %v7906 = vrot.slane %v7497, 5
      %v7907 = vsel %vm951, %v7904, %v7906
      %v7908 = vrot.slane %v7498, 5
      %v7909 = vsel %vm951, %v7906, %v7908
      %v7910 = vrot.slane %v7499, 5
      %v7911 = vsel %vm951, %v7908, %v7910
      %v7912 = vrot.slane %v7500, 5
      %v7913 = vsel %vm951, %v7910, %v7912
      %v7914 = vrot.slane %v7501, 5
      %v7915 = vsel %vm951, %v7912, %v7914
      %v7916 = vrot.slane %v7502, 5
      %v7917 = vsel %vm951, %v7914, %v7916
      %v7918 = vrot.slane %v7503, 5
      %v7919 = vsel %vm951, %v7916, %v7918
      %v7920 = vrot.slane %v7504, 5
      %v7921 = vsel %vm951, %v7918, %v7920
      %v7922 = vrot.slane %v7505, 5
      %v7923 = vsel %vm951, %v7920, %v7922
      %v7924 = vrot.slane %v7506, 5
      %v7925 = vsel %vm951, %v7922, %v7924
      %v7926 = vrot.slane %v7862, 5
      %v7927 = vsel %vm951, %v7924, %v7926
      %7928 = vrot.lane.b32.xlu0 %v7863, 8
      %v7929 = vpop.permute.xlu0 %7928
      %7930 = vrot.lane.b32.xlu0 %v7865, 8
      %v7931 = vpop.permute.xlu0 %7930
      %7932 = vrot.lane.b32.xlu0 %v7867, 8
      %v7933 = vpop.permute.xlu0 %7932
      %7934 = vrot.lane.b32.xlu0 %v7869, 8
      %v7935 = vpop.permute.xlu0 %7934
      %7936 = vrot.lane.b32.xlu0 %v7871, 8
      %v7937 = vpop.permute.xlu0 %7936
      %7938 = vrot.lane.b32.xlu0 %v7873, 8
      %v7939 = vpop.permute.xlu0 %7938
      %7940 = vrot.lane.b32.xlu0 %v7875, 8
      %v7941 = vpop.permute.xlu0 %7940
      %7942 = vrot.lane.b32.xlu0 %v7877, 8
      %v7943 = vpop.permute.xlu0 %7942
      %7944 = vrot.lane.b32.xlu0 %v7879, 8
      %v7945 = vpop.permute.xlu0 %7944
      %7946 = vrot.lane.b32.xlu0 %v7881, 8
      %v7947 = vpop.permute.xlu0 %7946
      %7948 = vrot.lane.b32.xlu0 %v7883, 8
      %v7949 = vpop.permute.xlu0 %7948
      %7950 = vrot.lane.b32.xlu0 %v7885, 8
      %v7951 = vpop.permute.xlu0 %7950
      %7952 = vrot.lane.b32.xlu0 %v7887, 8
      %v7953 = vpop.permute.xlu0 %7952
      %7954 = vrot.lane.b32.xlu0 %v7889, 8
      %v7955 = vpop.permute.xlu0 %7954
      %7956 = vrot.lane.b32.xlu0 %v7891, 8
      %v7957 = vpop.permute.xlu0 %7956
      %7958 = vrot.lane.b32.xlu0 %v7893, 8
      %v7959 = vpop.permute.xlu0 %7958
      %7960 = vrot.lane.b32.xlu0 %v7895, 8
      %v7961 = vpop.permute.xlu0 %7960
      %7962 = vrot.lane.b32.xlu0 %v7897, 8
      %v7963 = vpop.permute.xlu0 %7962
      %7964 = vrot.lane.b32.xlu0 %v7899, 8
      %v7965 = vpop.permute.xlu0 %7964
      %7966 = vrot.lane.b32.xlu0 %v7901, 8
      %v7967 = vpop.permute.xlu0 %7966
      %7968 = vrot.lane.b32.xlu0 %v7903, 8
      %v7969 = vpop.permute.xlu0 %7968
      %7970 = vrot.lane.b32.xlu0 %v7905, 8
      %v7971 = vpop.permute.xlu0 %7970
      %7972 = vrot.lane.b32.xlu0 %v7907, 8
      %v7973 = vpop.permute.xlu0 %7972
      %7974 = vrot.lane.b32.xlu0 %v7909, 8
      %v7975 = vpop.permute.xlu0 %7974
      %7976 = vrot.lane.b32.xlu0 %v7911, 8
      %v7977 = vpop.permute.xlu0 %7976
      %7978 = vrot.lane.b32.xlu0 %v7913, 8
      %v7979 = vpop.permute.xlu0 %7978
      %7980 = vrot.lane.b32.xlu0 %v7915, 8
      %v7981 = vpop.permute.xlu0 %7980
      %7982 = vrot.lane.b32.xlu0 %v7917, 8
      %v7983 = vpop.permute.xlu0 %7982
      %7984 = vrot.lane.b32.xlu0 %v7919, 8
      %v7985 = vpop.permute.xlu0 %7984
      %7986 = vrot.lane.b32.xlu0 %v7921, 8
      %v7987 = vpop.permute.xlu0 %7986
      %7988 = vrot.lane.b32.xlu0 %v7923, 8
      %v7989 = vpop.permute.xlu0 %7988
      %7990 = vrot.lane.b32.xlu0 %v7925, 8
      %v7991 = vpop.permute.xlu0 %7990
      %7992 = vrot.lane.b32.xlu0 %v7927, 8
      %v7993 = vpop.permute.xlu0 %7992
      %v7996 = vunpack.c.l.b16 %v7278
      %v7997 = vunpack.c.l.b16 %v7279
      %v7998 = vpack.c.b16 %v7379, %v7996
      %v7999 = vpack.c.b16 %v7997, %v7997
      %8000 = vrot.lane.b32.xlu0 %v7998, 12
      %v8001 = vpop.permute.xlu0 %8000
      %8002 = vrot.lane.b32.xlu0 %v7476, 12
      %v8003 = vpop.permute.xlu0 %8002
      %8004 = vrot.lane.b32.xlu0 %v7477, 12
      %v8005 = vpop.permute.xlu0 %8004
      %8006 = vrot.lane.b32.xlu0 %v7478, 12
      %v8007 = vpop.permute.xlu0 %8006
      %8008 = vrot.lane.b32.xlu0 %v7479, 12
      %v8009 = vpop.permute.xlu0 %8008
      %8010 = vrot.lane.b32.xlu0 %v7480, 12
      %v8011 = vpop.permute.xlu0 %8010
      %8012 = vrot.lane.b32.xlu0 %v7481, 12
      %v8013 = vpop.permute.xlu0 %8012
      %8014 = vrot.lane.b32.xlu0 %v7482, 12
      %v8015 = vpop.permute.xlu0 %8014
      %8016 = vrot.lane.b32.xlu0 %v7483, 12
      %v8017 = vpop.permute.xlu0 %8016
      %8018 = vrot.lane.b32.xlu0 %v7484, 12
      %v8019 = vpop.permute.xlu0 %8018
      %8020 = vrot.lane.b32.xlu0 %v7485, 12
      %v8021 = vpop.permute.xlu0 %8020
      %8022 = vrot.lane.b32.xlu0 %v7486, 12
      %v8023 = vpop.permute.xlu0 %8022
      %8024 = vrot.lane.b32.xlu0 %v7487, 12
      %v8025 = vpop.permute.xlu0 %8024
      %8026 = vrot.lane.b32.xlu0 %v7488, 12
      %v8027 = vpop.permute.xlu0 %8026
      %8028 = vrot.lane.b32.xlu0 %v7489, 12
      %v8029 = vpop.permute.xlu0 %8028
      %8030 = vrot.lane.b32.xlu0 %v7490, 12
      %v8031 = vpop.permute.xlu0 %8030
      %8032 = vrot.lane.b32.xlu0 %v7491, 12
      %v8033 = vpop.permute.xlu0 %8032
      %8034 = vrot.lane.b32.xlu0 %v7492, 12
      %v8035 = vpop.permute.xlu0 %8034
      %8036 = vrot.lane.b32.xlu0 %v7493, 12
      %v8037 = vpop.permute.xlu0 %8036
      %8038 = vrot.lane.b32.xlu0 %v7494, 12
      %v8039 = vpop.permute.xlu0 %8038
      %8040 = vrot.lane.b32.xlu0 %v7495, 12
      %v8041 = vpop.permute.xlu0 %8040
      %8042 = vrot.lane.b32.xlu0 %v7496, 12
      %v8043 = vpop.permute.xlu0 %8042
      %8044 = vrot.lane.b32.xlu0 %v7497, 12
      %v8045 = vpop.permute.xlu0 %8044
      %8046 = vrot.lane.b32.xlu0 %v7498, 12
      %v8047 = vpop.permute.xlu0 %8046
      %8048 = vrot.lane.b32.xlu0 %v7499, 12
      %v8049 = vpop.permute.xlu0 %8048
      %8050 = vrot.lane.b32.xlu0 %v7500, 12
      %v8051 = vpop.permute.xlu0 %8050
      %8052 = vrot.lane.b32.xlu0 %v7501, 12
      %v8053 = vpop.permute.xlu0 %8052
      %8054 = vrot.lane.b32.xlu0 %v7502, 12
      %v8055 = vpop.permute.xlu0 %8054
      %8056 = vrot.lane.b32.xlu0 %v7503, 12
      %v8057 = vpop.permute.xlu0 %8056
      %8058 = vrot.lane.b32.xlu0 %v7504, 12
      %v8059 = vpop.permute.xlu0 %8058
      %8060 = vrot.lane.b32.xlu0 %v7505, 12
      %v8061 = vpop.permute.xlu0 %8060
      %8062 = vrot.lane.b32.xlu0 %v7506, 12
      %v8063 = vpop.permute.xlu0 %8062
      %8064 = vrot.lane.b32.xlu0 %v7999, 12
      %v8065 = vpop.permute.xlu0 %8064
      %v8066 = vpack.c.b16 %v7997, %v7441
      %v8068 = vshrl.u32 %v7443, 16
      %v8070 = vrot.slane %v8068, 4
      %v8071 = vshll.u32 %v7443, 16
      %v8073 = vrot.slane %v8071, 5
      %v8074 = vor.u32 %v8070, %v8073
      %v8076 = vshrl.u32 %v7444, 16
      %v8078 = vrot.slane %v8076, 4
      %v8079 = vshll.u32 %v7444, 16
      %v8081 = vrot.slane %v8079, 5
      %v8082 = vor.u32 %v8078, %v8081
      %v8083 = vsel %vm594, %v8074, %v8082
      %v8085 = vshrl.u32 %v7445, 16
      %v8087 = vrot.slane %v8085, 4
      %v8088 = vshll.u32 %v7445, 16
      %v8090 = vrot.slane %v8088, 5
      %v8091 = vor.u32 %v8087, %v8090
      %v8092 = vsel %vm594, %v8082, %v8091
      %v8094 = vshrl.u32 %v7446, 16
      %v8096 = vrot.slane %v8094, 4
      %v8097 = vshll.u32 %v7446, 16
      %v8099 = vrot.slane %v8097, 5
      %v8100 = vor.u32 %v8096, %v8099
      %v8101 = vsel %vm594, %v8091, %v8100
      %v8103 = vshrl.u32 %v7447, 16
      %v8105 = vrot.slane %v8103, 4
      %v8106 = vshll.u32 %v7447, 16
      %v8108 = vrot.slane %v8106, 5
      %v8109 = vor.u32 %v8105, %v8108
      %v8110 = vsel %vm594, %v8100, %v8109
      %v8112 = vshrl.u32 %v7448, 16
      %v8114 = vrot.slane %v8112, 4
      %v8115 = vshll.u32 %v7448, 16
      %v8117 = vrot.slane %v8115, 5
      %v8118 = vor.u32 %v8114, %v8117
      %v8119 = vsel %vm594, %v8109, %v8118
      %v8121 = vshrl.u32 %v7449, 16
      %v8123 = vrot.slane %v8121, 4
      %v8124 = vshll.u32 %v7449, 16
      %v8126 = vrot.slane %v8124, 5
      %v8127 = vor.u32 %v8123, %v8126
      %v8128 = vsel %vm594, %v8118, %v8127
      %v8130 = vshrl.u32 %v7450, 16
      %v8132 = vrot.slane %v8130, 4
      %v8133 = vshll.u32 %v7450, 16
      %v8135 = vrot.slane %v8133, 5
      %v8136 = vor.u32 %v8132, %v8135
      %v8137 = vsel %vm594, %v8127, %v8136
      %v8139 = vshrl.u32 %v7451, 16
      %v8141 = vrot.slane %v8139, 4
      %v8142 = vshll.u32 %v7451, 16
      %v8144 = vrot.slane %v8142, 5
      %v8145 = vor.u32 %v8141, %v8144
      %v8146 = vsel %vm594, %v8136, %v8145
      %v8148 = vshrl.u32 %v7452, 16
      %v8150 = vrot.slane %v8148, 4
      %v8151 = vshll.u32 %v7452, 16
      %v8153 = vrot.slane %v8151, 5
      %v8154 = vor.u32 %v8150, %v8153
      %v8155 = vsel %vm594, %v8145, %v8154
      %v8157 = vshrl.u32 %v7453, 16
      %v8159 = vrot.slane %v8157, 4
      %v8160 = vshll.u32 %v7453, 16
      %v8162 = vrot.slane %v8160, 5
      %v8163 = vor.u32 %v8159, %v8162
      %v8164 = vsel %vm594, %v8154, %v8163
      %v8166 = vshrl.u32 %v7454, 16
      %v8168 = vrot.slane %v8166, 4
      %v8169 = vshll.u32 %v7454, 16
      %v8171 = vrot.slane %v8169, 5
      %v8172 = vor.u32 %v8168, %v8171
      %v8173 = vsel %vm594, %v8163, %v8172
      %v8175 = vshrl.u32 %v7455, 16
      %v8177 = vrot.slane %v8175, 4
      %v8178 = vshll.u32 %v7455, 16
      %v8180 = vrot.slane %v8178, 5
      %v8181 = vor.u32 %v8177, %v8180
      %v8182 = vsel %vm594, %v8172, %v8181
      %v8184 = vshrl.u32 %v7456, 16
      %v8186 = vrot.slane %v8184, 4
      %v8187 = vshll.u32 %v7456, 16
      %v8189 = vrot.slane %v8187, 5
      %v8190 = vor.u32 %v8186, %v8189
      %v8191 = vsel %vm594, %v8181, %v8190
      %v8193 = vshrl.u32 %v7457, 16
      %v8195 = vrot.slane %v8193, 4
      %v8196 = vshll.u32 %v7457, 16
      %v8198 = vrot.slane %v8196, 5
      %v8199 = vor.u32 %v8195, %v8198
      %v8200 = vsel %vm594, %v8190, %v8199
      %v8202 = vshrl.u32 %v7458, 16
      %v8204 = vrot.slane %v8202, 4
      %v8205 = vshll.u32 %v7458, 16
      %v8207 = vrot.slane %v8205, 5
      %v8208 = vor.u32 %v8204, %v8207
      %v8209 = vsel %vm594, %v8199, %v8208
      %v8211 = vshrl.u32 %v7459, 16
      %v8213 = vrot.slane %v8211, 4
      %v8214 = vshll.u32 %v7459, 16
      %v8216 = vrot.slane %v8214, 5
      %v8217 = vor.u32 %v8213, %v8216
      %v8218 = vsel %vm594, %v8208, %v8217
      %v8220 = vshrl.u32 %v7460, 16
      %v8222 = vrot.slane %v8220, 4
      %v8223 = vshll.u32 %v7460, 16
      %v8225 = vrot.slane %v8223, 5
      %v8226 = vor.u32 %v8222, %v8225
      %v8227 = vsel %vm594, %v8217, %v8226
      %v8229 = vshrl.u32 %v7461, 16
      %v8231 = vrot.slane %v8229, 4
      %v8232 = vshll.u32 %v7461, 16
      %v8234 = vrot.slane %v8232, 5
      %v8235 = vor.u32 %v8231, %v8234
      %v8236 = vsel %vm594, %v8226, %v8235
      %v8238 = vshrl.u32 %v7462, 16
      %v8240 = vrot.slane %v8238, 4
      %v8241 = vshll.u32 %v7462, 16
      %v8243 = vrot.slane %v8241, 5
      %v8244 = vor.u32 %v8240, %v8243
      %v8245 = vsel %vm594, %v8235, %v8244
      %v8247 = vshrl.u32 %v7463, 16
      %v8249 = vrot.slane %v8247, 4
      %v8250 = vshll.u32 %v7463, 16
      %v8252 = vrot.slane %v8250, 5
      %v8253 = vor.u32 %v8249, %v8252
      %v8254 = vsel %vm594, %v8244, %v8253
      %v8256 = vshrl.u32 %v7464, 16
      %v8258 = vrot.slane %v8256, 4
      %v8259 = vshll.u32 %v7464, 16
      %v8261 = vrot.slane %v8259, 5
      %v8262 = vor.u32 %v8258, %v8261
      %v8263 = vsel %vm594, %v8253, %v8262
      %v8265 = vshrl.u32 %v7465, 16
      %v8267 = vrot.slane %v8265, 4
      %v8268 = vshll.u32 %v7465, 16
      %v8270 = vrot.slane %v8268, 5
      %v8271 = vor.u32 %v8267, %v8270
      %v8272 = vsel %vm594, %v8262, %v8271
      %v8274 = vshrl.u32 %v7466, 16
      %v8276 = vrot.slane %v8274, 4
      %v8277 = vshll.u32 %v7466, 16
      %v8279 = vrot.slane %v8277, 5
      %v8280 = vor.u32 %v8276, %v8279
      %v8281 = vsel %vm594, %v8271, %v8280
      %v8283 = vshrl.u32 %v7467, 16
      %v8285 = vrot.slane %v8283, 4
      %v8286 = vshll.u32 %v7467, 16
      %v8288 = vrot.slane %v8286, 5
      %v8289 = vor.u32 %v8285, %v8288
      %v8290 = vsel %vm594, %v8280, %v8289
      %v8292 = vshrl.u32 %v7468, 16
      %v8294 = vrot.slane %v8292, 4
      %v8295 = vshll.u32 %v7468, 16
      %v8297 = vrot.slane %v8295, 5
      %v8298 = vor.u32 %v8294, %v8297
      %v8299 = vsel %vm594, %v8289, %v8298
      %v8301 = vshrl.u32 %v7469, 16
      %v8303 = vrot.slane %v8301, 4
      %v8304 = vshll.u32 %v7469, 16
      %v8306 = vrot.slane %v8304, 5
      %v8307 = vor.u32 %v8303, %v8306
      %v8308 = vsel %vm594, %v8298, %v8307
      %v8310 = vshrl.u32 %v7470, 16
      %v8312 = vrot.slane %v8310, 4
      %v8313 = vshll.u32 %v7470, 16
      %v8315 = vrot.slane %v8313, 5
      %v8316 = vor.u32 %v8312, %v8315
      %v8317 = vsel %vm594, %v8307, %v8316
      %v8319 = vshrl.u32 %v7471, 16
      %v8321 = vrot.slane %v8319, 4
      %v8322 = vshll.u32 %v7471, 16
      %v8324 = vrot.slane %v8322, 5
      %v8325 = vor.u32 %v8321, %v8324
      %v8326 = vsel %vm594, %v8316, %v8325
      %v8328 = vshrl.u32 %v7472, 16
      %v8330 = vrot.slane %v8328, 4
      %v8331 = vshll.u32 %v7472, 16
      %v8333 = vrot.slane %v8331, 5
      %v8334 = vor.u32 %v8330, %v8333
      %v8335 = vsel %vm594, %v8325, %v8334
      %v8337 = vshrl.u32 %v7473, 16
      %v8339 = vrot.slane %v8337, 4
      %v8340 = vshll.u32 %v7473, 16
      %v8342 = vrot.slane %v8340, 5
      %v8343 = vor.u32 %v8339, %v8342
      %v8344 = vsel %vm594, %v8334, %v8343
      %v8346 = vshrl.u32 %v8066, 16
      %v8348 = vrot.slane %v8346, 4
      %v8349 = vshll.u32 %v8066, 16
      %v8351 = vrot.slane %v8349, 5
      %v8352 = vor.u32 %v8348, %v8351
      %v8353 = vsel %vm594, %v8343, %v8352
      %8354 = vrot.lane.b32.xlu0 %v8074, 16
      %v8355 = vpop.permute.xlu0 %8354
      %8356 = vrot.lane.b32.xlu0 %v8083, 16
      %v8357 = vpop.permute.xlu0 %8356
      %8358 = vrot.lane.b32.xlu0 %v8092, 16
      %v8359 = vpop.permute.xlu0 %8358
      %8360 = vrot.lane.b32.xlu0 %v8101, 16
      %v8361 = vpop.permute.xlu0 %8360
      %8362 = vrot.lane.b32.xlu0 %v8110, 16
      %v8363 = vpop.permute.xlu0 %8362
      %8364 = vrot.lane.b32.xlu0 %v8119, 16
      %v8365 = vpop.permute.xlu0 %8364
      %8366 = vrot.lane.b32.xlu0 %v8128, 16
      %v8367 = vpop.permute.xlu0 %8366
      %8368 = vrot.lane.b32.xlu0 %v8137, 16
      %v8369 = vpop.permute.xlu0 %8368
      %8370 = vrot.lane.b32.xlu0 %v8146, 16
      %v8371 = vpop.permute.xlu0 %8370
      %8372 = vrot.lane.b32.xlu0 %v8155, 16
      %v8373 = vpop.permute.xlu0 %8372
      %8374 = vrot.lane.b32.xlu0 %v8164, 16
      %v8375 = vpop.permute.xlu0 %8374
      %8376 = vrot.lane.b32.xlu0 %v8173, 16
      %v8377 = vpop.permute.xlu0 %8376
      %8378 = vrot.lane.b32.xlu0 %v8182, 16
      %v8379 = vpop.permute.xlu0 %8378
      %8380 = vrot.lane.b32.xlu0 %v8191, 16
      %v8381 = vpop.permute.xlu0 %8380
      %8382 = vrot.lane.b32.xlu0 %v8200, 16
      %v8383 = vpop.permute.xlu0 %8382
      %8384 = vrot.lane.b32.xlu0 %v8209, 16
      %v8385 = vpop.permute.xlu0 %8384
      %8386 = vrot.lane.b32.xlu0 %v8218, 16
      %v8387 = vpop.permute.xlu0 %8386
      %8388 = vrot.lane.b32.xlu0 %v8227, 16
      %v8389 = vpop.permute.xlu0 %8388
      %8390 = vrot.lane.b32.xlu0 %v8236, 16
      %v8391 = vpop.permute.xlu0 %8390
      %8392 = vrot.lane.b32.xlu0 %v8245, 16
      %v8393 = vpop.permute.xlu0 %8392
      %8394 = vrot.lane.b32.xlu0 %v8254, 16
      %v8395 = vpop.permute.xlu0 %8394
      %8396 = vrot.lane.b32.xlu0 %v8263, 16
      %v8397 = vpop.permute.xlu0 %8396
      %8398 = vrot.lane.b32.xlu0 %v8272, 16
      %v8399 = vpop.permute.xlu0 %8398
      %8400 = vrot.lane.b32.xlu0 %v8281, 16
      %v8401 = vpop.permute.xlu0 %8400
      %8402 = vrot.lane.b32.xlu0 %v8290, 16
      %v8403 = vpop.permute.xlu0 %8402
      %8404 = vrot.lane.b32.xlu0 %v8299, 16
      %v8405 = vpop.permute.xlu0 %8404
      %8406 = vrot.lane.b32.xlu0 %v8308, 16
      %v8407 = vpop.permute.xlu0 %8406
      %8408 = vrot.lane.b32.xlu0 %v8317, 16
      %v8409 = vpop.permute.xlu0 %8408
      %8410 = vrot.lane.b32.xlu0 %v8326, 16
      %v8411 = vpop.permute.xlu0 %8410
      %8412 = vrot.lane.b32.xlu0 %v8335, 16
      %v8413 = vpop.permute.xlu0 %8412
      %8414 = vrot.lane.b32.xlu0 %v8344, 16
      %v8415 = vpop.permute.xlu0 %8414
      %8416 = vrot.lane.b32.xlu0 %v8353, 16
      %v8417 = vpop.permute.xlu0 %8416
      %8418 = vrot.lane.b32.xlu0 %v8352, 16
      %v8419 = vpop.permute.xlu0 %8418
      %v8421 = vunpack.c.l.b16 %v7280
      %v8422 = vpack.c.b16 %v8421, %v8421
      %v8423 = vrot.slane %v7443, 5
      %v8424 = vrot.slane %v7444, 5
      %v8425 = vsel %vm951, %v8423, %v8424
      %v8426 = vrot.slane %v7445, 5
      %v8427 = vsel %vm951, %v8424, %v8426
      %v8428 = vrot.slane %v7446, 5
      %v8429 = vsel %vm951, %v8426, %v8428
      %v8430 = vrot.slane %v7447, 5
      %v8431 = vsel %vm951, %v8428, %v8430
      %v8432 = vrot.slane %v7448, 5
      %v8433 = vsel %vm951, %v8430, %v8432
      %v8434 = vrot.slane %v7449, 5
      %v8435 = vsel %vm951, %v8432, %v8434
      %v8436 = vrot.slane %v7450, 5
      %v8437 = vsel %vm951, %v8434, %v8436
      %v8438 = vrot.slane %v7451, 5
      %v8439 = vsel %vm951, %v8436, %v8438
      %v8440 = vrot.slane %v7452, 5
      %v8441 = vsel %vm951, %v8438, %v8440
      %v8442 = vrot.slane %v7453, 5
      %v8443 = vsel %vm951, %v8440, %v8442
      %v8444 = vrot.slane %v7454, 5
      %v8445 = vsel %vm951, %v8442, %v8444
      %v8446 = vrot.slane %v7455, 5
      %v8447 = vsel %vm951, %v8444, %v8446
      %v8448 = vrot.slane %v7456, 5
      %v8449 = vsel %vm951, %v8446, %v8448
      %v8450 = vrot.slane %v7457, 5
      %v8451 = vsel %vm951, %v8448, %v8450
      %v8452 = vrot.slane %v7458, 5
      %v8453 = vsel %vm951, %v8450, %v8452
      %v8454 = vrot.slane %v7459, 5
      %v8455 = vsel %vm951, %v8452, %v8454
      %v8456 = vrot.slane %v7460, 5
      %v8457 = vsel %vm951, %v8454, %v8456
      %v8458 = vrot.slane %v7461, 5
      %v8459 = vsel %vm951, %v8456, %v8458
      %v8460 = vrot.slane %v7462, 5
      %v8461 = vsel %vm951, %v8458, %v8460
      %v8462 = vrot.slane %v7463, 5
      %v8463 = vsel %vm951, %v8460, %v8462
      %v8464 = vrot.slane %v7464, 5
      %v8465 = vsel %vm951, %v8462, %v8464
      %v8466 = vrot.slane %v7465, 5
      %v8467 = vsel %vm951, %v8464, %v8466
      %v8468 = vrot.slane %v7466, 5
      %v8469 = vsel %vm951, %v8466, %v8468
      %v8470 = vrot.slane %v7467, 5
      %v8471 = vsel %vm951, %v8468, %v8470
      %v8472 = vrot.slane %v7468, 5
      %v8473 = vsel %vm951, %v8470, %v8472
      %v8474 = vrot.slane %v7469, 5
      %v8475 = vsel %vm951, %v8472, %v8474
      %v8476 = vrot.slane %v7470, 5
      %v8477 = vsel %vm951, %v8474, %v8476
      %v8478 = vrot.slane %v7471, 5
      %v8479 = vsel %vm951, %v8476, %v8478
      %v8480 = vrot.slane %v7472, 5
      %v8481 = vsel %vm951, %v8478, %v8480
      %v8482 = vrot.slane %v7473, 5
      %v8483 = vsel %vm951, %v8480, %v8482
      %v8484 = vrot.slane %v8066, 5
      %v8485 = vsel %vm951, %v8482, %v8484
      %v8486 = vrot.slane %v8422, 5
      %v8487 = vsel %vm951, %v8484, %v8486
      %8488 = vrot.lane.b32.xlu0 %v8423, 20
      %v8489 = vpop.permute.xlu0 %8488
      %8490 = vrot.lane.b32.xlu0 %v8425, 20
      %v8491 = vpop.permute.xlu0 %8490
      %8492 = vrot.lane.b32.xlu0 %v8427, 20
      %v8493 = vpop.permute.xlu0 %8492
      %8494 = vrot.lane.b32.xlu0 %v8429, 20
      %v8495 = vpop.permute.xlu0 %8494
      %8496 = vrot.lane.b32.xlu0 %v8431, 20
      %v8497 = vpop.permute.xlu0 %8496
      %8498 = vrot.lane.b32.xlu0 %v8433, 20
      %v8499 = vpop.permute.xlu0 %8498
      %8500 = vrot.lane.b32.xlu0 %v8435, 20
      %v8501 = vpop.permute.xlu0 %8500
      %8502 = vrot.lane.b32.xlu0 %v8437, 20
      %v8503 = vpop.permute.xlu0 %8502
      %8504 = vrot.lane.b32.xlu0 %v8439, 20
      %v8505 = vpop.permute.xlu0 %8504
      %8506 = vrot.lane.b32.xlu0 %v8441, 20
      %v8507 = vpop.permute.xlu0 %8506
      %8508 = vrot.lane.b32.xlu0 %v8443, 20
      %v8509 = vpop.permute.xlu0 %8508
      %8510 = vrot.lane.b32.xlu0 %v8445, 20
      %v8511 = vpop.permute.xlu0 %8510
      %8512 = vrot.lane.b32.xlu0 %v8447, 20
      %v8513 = vpop.permute.xlu0 %8512
      %8514 = vrot.lane.b32.xlu0 %v8449, 20
      %v8515 = vpop.permute.xlu0 %8514
      %8516 = vrot.lane.b32.xlu0 %v8451, 20
      %v8517 = vpop.permute.xlu0 %8516
      %8518 = vrot.lane.b32.xlu0 %v8453, 20
      %v8519 = vpop.permute.xlu0 %8518
      %8520 = vrot.lane.b32.xlu0 %v8455, 20
      %v8521 = vpop.permute.xlu0 %8520
      %8522 = vrot.lane.b32.xlu0 %v8457, 20
      %v8523 = vpop.permute.xlu0 %8522
      %8524 = vrot.lane.b32.xlu0 %v8459, 20
      %v8525 = vpop.permute.xlu0 %8524
      %8526 = vrot.lane.b32.xlu0 %v8461, 20
      %v8527 = vpop.permute.xlu0 %8526
      %8528 = vrot.lane.b32.xlu0 %v8463, 20
      %v8529 = vpop.permute.xlu0 %8528
      %8530 = vrot.lane.b32.xlu0 %v8465, 20
      %v8531 = vpop.permute.xlu0 %8530
      %8532 = vrot.lane.b32.xlu0 %v8467, 20
      %v8533 = vpop.permute.xlu0 %8532
      %8534 = vrot.lane.b32.xlu0 %v8469, 20
      %v8535 = vpop.permute.xlu0 %8534
      %8536 = vrot.lane.b32.xlu0 %v8471, 20
      %v8537 = vpop.permute.xlu0 %8536
      %8538 = vrot.lane.b32.xlu0 %v8473, 20
      %v8539 = vpop.permute.xlu0 %8538
      %8540 = vrot.lane.b32.xlu0 %v8475, 20
      %v8541 = vpop.permute.xlu0 %8540
      %8542 = vrot.lane.b32.xlu0 %v8477, 20
      %v8543 = vpop.permute.xlu0 %8542
      %8544 = vrot.lane.b32.xlu0 %v8479, 20
      %v8545 = vpop.permute.xlu0 %8544
      %8546 = vrot.lane.b32.xlu0 %v8481, 20
      %v8547 = vpop.permute.xlu0 %8546
      %8548 = vrot.lane.b32.xlu0 %v8483, 20
      %v8549 = vpop.permute.xlu0 %8548
      %8550 = vrot.lane.b32.xlu0 %v8485, 20
      %v8551 = vpop.permute.xlu0 %8550
      %8552 = vrot.lane.b32.xlu0 %v8487, 20
      %v8553 = vpop.permute.xlu0 %8552
      %v8556 = vunpack.c.l.b16 %v7281
      %v8557 = vunpack.c.l.b16 %v7282
      %v8558 = vpack.c.b16 %v7380, %v8556
      %v8559 = vpack.c.b16 %v8557, %v8557
      %8560 = vrot.lane.b32.xlu0 %v8558, 24
      %v8561 = vpop.permute.xlu0 %8560
      %8562 = vrot.lane.b32.xlu0 %v7444, 24
      %v8563 = vpop.permute.xlu0 %8562
      %8564 = vrot.lane.b32.xlu0 %v7445, 24
      %v8565 = vpop.permute.xlu0 %8564
      %8566 = vrot.lane.b32.xlu0 %v7446, 24
      %v8567 = vpop.permute.xlu0 %8566
      %8568 = vrot.lane.b32.xlu0 %v7447, 24
      %v8569 = vpop.permute.xlu0 %8568
      %8570 = vrot.lane.b32.xlu0 %v7448, 24
      %v8571 = vpop.permute.xlu0 %8570
      %8572 = vrot.lane.b32.xlu0 %v7449, 24
      %v8573 = vpop.permute.xlu0 %8572
      %8574 = vrot.lane.b32.xlu0 %v7450, 24
      %v8575 = vpop.permute.xlu0 %8574
      %8576 = vrot.lane.b32.xlu0 %v7451, 24
      %v8577 = vpop.permute.xlu0 %8576
      %8578 = vrot.lane.b32.xlu0 %v7452, 24
      %v8579 = vpop.permute.xlu0 %8578
      %8580 = vrot.lane.b32.xlu0 %v7453, 24
      %v8581 = vpop.permute.xlu0 %8580
      %8582 = vrot.lane.b32.xlu0 %v7454, 24
      %v8583 = vpop.permute.xlu0 %8582
      %8584 = vrot.lane.b32.xlu0 %v7455, 24
      %v8585 = vpop.permute.xlu0 %8584
      %8586 = vrot.lane.b32.xlu0 %v7456, 24
      %v8587 = vpop.permute.xlu0 %8586
      %8588 = vrot.lane.b32.xlu0 %v7457, 24
      %v8589 = vpop.permute.xlu0 %8588
      %8590 = vrot.lane.b32.xlu0 %v7458, 24
      %v8591 = vpop.permute.xlu0 %8590
      %8592 = vrot.lane.b32.xlu0 %v7459, 24
      %v8593 = vpop.permute.xlu0 %8592
      %8594 = vrot.lane.b32.xlu0 %v7460, 24
      %v8595 = vpop.permute.xlu0 %8594
      %8596 = vrot.lane.b32.xlu0 %v7461, 24
      %v8597 = vpop.permute.xlu0 %8596
      %8598 = vrot.lane.b32.xlu0 %v7462, 24
      %v8599 = vpop.permute.xlu0 %8598
      %8600 = vrot.lane.b32.xlu0 %v7463, 24
      %v8601 = vpop.permute.xlu0 %8600
      %8602 = vrot.lane.b32.xlu0 %v7464, 24
      %v8603 = vpop.permute.xlu0 %8602
      %8604 = vrot.lane.b32.xlu0 %v7465, 24
      %v8605 = vpop.permute.xlu0 %8604
      %8606 = vrot.lane.b32.xlu0 %v7466, 24
      %v8607 = vpop.permute.xlu0 %8606
      %8608 = vrot.lane.b32.xlu0 %v7467, 24
      %v8609 = vpop.permute.xlu0 %8608
      %8610 = vrot.lane.b32.xlu0 %v7468, 24
      %v8611 = vpop.permute.xlu0 %8610
      %8612 = vrot.lane.b32.xlu0 %v7469, 24
      %v8613 = vpop.permute.xlu0 %8612
      %8614 = vrot.lane.b32.xlu0 %v7470, 24
      %v8615 = vpop.permute.xlu0 %8614
      %8616 = vrot.lane.b32.xlu0 %v7471, 24
      %v8617 = vpop.permute.xlu0 %8616
      %8618 = vrot.lane.b32.xlu0 %v7472, 24
      %v8619 = vpop.permute.xlu0 %8618
      %8620 = vrot.lane.b32.xlu0 %v7473, 24
      %v8621 = vpop.permute.xlu0 %8620
      %8622 = vrot.lane.b32.xlu0 %v8066, 24
      %v8623 = vpop.permute.xlu0 %8622
      %8624 = vrot.lane.b32.xlu0 %v8559, 24
      %v8625 = vpop.permute.xlu0 %8624
      %v8626 = vpack.c.b16 %v8557, %v7997
      %v8628 = vshrl.u32 %v8626, 16
      %v8630 = vrot.slane %v8628, 4
      %v8631 = vshll.u32 %v8626, 16
      %v8633 = vrot.slane %v8631, 5
      %v8634 = vor.u32 %v8630, %v8633
      %v8635 = vsel %vm594, %v7792, %v8634
      %8636 = vrot.lane.b32.xlu0 %v7522, 28
      %v8637 = vpop.permute.xlu0 %8636
      %8638 = vrot.lane.b32.xlu0 %v7532, 28
      %v8639 = vpop.permute.xlu0 %8638
      %8640 = vrot.lane.b32.xlu0 %v7541, 28
      %v8641 = vpop.permute.xlu0 %8640
      %8642 = vrot.lane.b32.xlu0 %v7550, 28
      %v8643 = vpop.permute.xlu0 %8642
      %8644 = vrot.lane.b32.xlu0 %v7559, 28
      %v8645 = vpop.permute.xlu0 %8644
      %8646 = vrot.lane.b32.xlu0 %v7568, 28
      %v8647 = vpop.permute.xlu0 %8646
      %8648 = vrot.lane.b32.xlu0 %v7577, 28
      %v8649 = vpop.permute.xlu0 %8648
      %8650 = vrot.lane.b32.xlu0 %v7586, 28
      %v8651 = vpop.permute.xlu0 %8650
      %8652 = vrot.lane.b32.xlu0 %v7595, 28
      %v8653 = vpop.permute.xlu0 %8652
      %8654 = vrot.lane.b32.xlu0 %v7604, 28
      %v8655 = vpop.permute.xlu0 %8654
      %8656 = vrot.lane.b32.xlu0 %v7613, 28
      %v8657 = vpop.permute.xlu0 %8656
      %8658 = vrot.lane.b32.xlu0 %v7622, 28
      %v8659 = vpop.permute.xlu0 %8658
      %8660 = vrot.lane.b32.xlu0 %v7631, 28
      %v8661 = vpop.permute.xlu0 %8660
      %8662 = vrot.lane.b32.xlu0 %v7640, 28
      %v8663 = vpop.permute.xlu0 %8662
      %8664 = vrot.lane.b32.xlu0 %v7649, 28
      %v8665 = vpop.permute.xlu0 %8664
      %8666 = vrot.lane.b32.xlu0 %v7658, 28
      %v8667 = vpop.permute.xlu0 %8666
      %8668 = vrot.lane.b32.xlu0 %v7667, 28
      %v8669 = vpop.permute.xlu0 %8668
      %8670 = vrot.lane.b32.xlu0 %v7676, 28
      %v8671 = vpop.permute.xlu0 %8670
      %8672 = vrot.lane.b32.xlu0 %v7685, 28
      %v8673 = vpop.permute.xlu0 %8672
      %8674 = vrot.lane.b32.xlu0 %v7694, 28
      %v8675 = vpop.permute.xlu0 %8674
      %8676 = vrot.lane.b32.xlu0 %v7703, 28
      %v8677 = vpop.permute.xlu0 %8676
      %8678 = vrot.lane.b32.xlu0 %v7712, 28
      %v8679 = vpop.permute.xlu0 %8678
      %8680 = vrot.lane.b32.xlu0 %v7721, 28
      %v8681 = vpop.permute.xlu0 %8680
      %8682 = vrot.lane.b32.xlu0 %v7730, 28
      %v8683 = vpop.permute.xlu0 %8682
      %8684 = vrot.lane.b32.xlu0 %v7739, 28
      %v8685 = vpop.permute.xlu0 %8684
      %8686 = vrot.lane.b32.xlu0 %v7748, 28
      %v8687 = vpop.permute.xlu0 %8686
      %8688 = vrot.lane.b32.xlu0 %v7757, 28
      %v8689 = vpop.permute.xlu0 %8688
      %8690 = vrot.lane.b32.xlu0 %v7766, 28
      %v8691 = vpop.permute.xlu0 %8690
      %8692 = vrot.lane.b32.xlu0 %v7775, 28
      %v8693 = vpop.permute.xlu0 %8692
      %8694 = vrot.lane.b32.xlu0 %v7784, 28
      %v8695 = vpop.permute.xlu0 %8694
      %8696 = vrot.lane.b32.xlu0 %v7793, 28
      %v8697 = vpop.permute.xlu0 %8696
      %8698 = vrot.lane.b32.xlu0 %v8635, 28
      %v8699 = vpop.permute.xlu0 %8698
      %8700 = vrot.lane.b32.xlu0 %v8634, 28
      %v8701 = vpop.permute.xlu0 %8700
      %v8703 = vunpack.c.l.b16 %v7283
      %v8704 = vpack.c.b16 %v8703, %v8703
      %v8705 = vrot.slane %v8626, 5
      %v8706 = vsel %vm951, %v7924, %v8705
      %v8707 = vrot.slane %v8704, 5
      %v8708 = vsel %vm951, %v8705, %v8707
      %8709 = vrot.lane.b32.xlu0 %v7864, 32
      %v8710 = vpop.permute.xlu0 %8709
      %8711 = vrot.lane.b32.xlu0 %v7867, 32
      %v8712 = vpop.permute.xlu0 %8711
      %8713 = vrot.lane.b32.xlu0 %v7869, 32
      %v8714 = vpop.permute.xlu0 %8713
      %8715 = vrot.lane.b32.xlu0 %v7871, 32
      %v8716 = vpop.permute.xlu0 %8715
      %8717 = vrot.lane.b32.xlu0 %v7873, 32
      %v8718 = vpop.permute.xlu0 %8717
      %8719 = vrot.lane.b32.xlu0 %v7875, 32
      %v8720 = vpop.permute.xlu0 %8719
      %8721 = vrot.lane.b32.xlu0 %v7877, 32
      %v8722 = vpop.permute.xlu0 %8721
      %8723 = vrot.lane.b32.xlu0 %v7879, 32
      %v8724 = vpop.permute.xlu0 %8723
      %8725 = vrot.lane.b32.xlu0 %v7881, 32
      %v8726 = vpop.permute.xlu0 %8725
      %8727 = vrot.lane.b32.xlu0 %v7883, 32
      %v8728 = vpop.permute.xlu0 %8727
      %8729 = vrot.lane.b32.xlu0 %v7885, 32
      %v8730 = vpop.permute.xlu0 %8729
      %8731 = vrot.lane.b32.xlu0 %v7887, 32
      %v8732 = vpop.permute.xlu0 %8731
      %8733 = vrot.lane.b32.xlu0 %v7889, 32
      %v8734 = vpop.permute.xlu0 %8733
      %8735 = vrot.lane.b32.xlu0 %v7891, 32
      %v8736 = vpop.permute.xlu0 %8735
      %8737 = vrot.lane.b32.xlu0 %v7893, 32
      %v8738 = vpop.permute.xlu0 %8737
      %8739 = vrot.lane.b32.xlu0 %v7895, 32
      %v8740 = vpop.permute.xlu0 %8739
      %8741 = vrot.lane.b32.xlu0 %v7897, 32
      %v8742 = vpop.permute.xlu0 %8741
      %8743 = vrot.lane.b32.xlu0 %v7899, 32
      %v8744 = vpop.permute.xlu0 %8743
      %8745 = vrot.lane.b32.xlu0 %v7901, 32
      %v8746 = vpop.permute.xlu0 %8745
      %8747 = vrot.lane.b32.xlu0 %v7903, 32
      %v8748 = vpop.permute.xlu0 %8747
      %8749 = vrot.lane.b32.xlu0 %v7905, 32
      %v8750 = vpop.permute.xlu0 %8749
      %8751 = vrot.lane.b32.xlu0 %v7907, 32
      %v8752 = vpop.permute.xlu0 %8751
      %8753 = vrot.lane.b32.xlu0 %v7909, 32
      %v8754 = vpop.permute.xlu0 %8753
      %8755 = vrot.lane.b32.xlu0 %v7911, 32
      %v8756 = vpop.permute.xlu0 %8755
      %8757 = vrot.lane.b32.xlu0 %v7913, 32
      %v8758 = vpop.permute.xlu0 %8757
      %8759 = vrot.lane.b32.xlu0 %v7915, 32
      %v8760 = vpop.permute.xlu0 %8759
      %8761 = vrot.lane.b32.xlu0 %v7917, 32
      %v8762 = vpop.permute.xlu0 %8761
      %8763 = vrot.lane.b32.xlu0 %v7919, 32
      %v8764 = vpop.permute.xlu0 %8763
      %8765 = vrot.lane.b32.xlu0 %v7921, 32
      %v8766 = vpop.permute.xlu0 %8765
      %8767 = vrot.lane.b32.xlu0 %v7923, 32
      %v8768 = vpop.permute.xlu0 %8767
      %8769 = vrot.lane.b32.xlu0 %v7925, 32
      %v8770 = vpop.permute.xlu0 %8769
      %8771 = vrot.lane.b32.xlu0 %v8706, 32
      %v8772 = vpop.permute.xlu0 %8771
      %8773 = vrot.lane.b32.xlu0 %v8708, 32
      %v8774 = vpop.permute.xlu0 %8773
      %v8782 = vunpack.c.l.b16 %v7284
      %v8783 = vunpack.c.l.b16 %v7285
      %v8784 = vunpack.c.l.b16 %v7286
      %v8785 = vunpack.c.l.b16 %v7287
      %v8786 = vunpack.c.l.b16 %v7288
      %v8787 = vunpack.c.l.b16 %v7289
      %v8788 = vunpack.c.l.b16 %v7290
      %v8789 = vpack.c.b16 %v7386, %v8782
      %v8790 = vpack.c.b16 %v8783, %v8557
      %v8791 = vpack.c.b16 %v8785, %v8784
      %v8792 = vpack.c.b16 %v8787, %v8786
      %v8793 = vpack.c.b16 %v8788, %v8788
      %8794 = vrot.lane.b32.xlu0 %v8789, 36
      %v8795 = vpop.permute.xlu0 %8794
      %8796 = vrot.lane.b32.xlu0 %v7447, 36
      %v8797 = vpop.permute.xlu0 %8796
      %8798 = vrot.lane.b32.xlu0 %v7448, 36
      %v8799 = vpop.permute.xlu0 %8798
      %8800 = vrot.lane.b32.xlu0 %v7449, 36
      %v8801 = vpop.permute.xlu0 %8800
      %8802 = vrot.lane.b32.xlu0 %v7450, 36
      %v8803 = vpop.permute.xlu0 %8802
      %8804 = vrot.lane.b32.xlu0 %v7451, 36
      %v8805 = vpop.permute.xlu0 %8804
      %8806 = vrot.lane.b32.xlu0 %v7452, 36
      %v8807 = vpop.permute.xlu0 %8806
      %8808 = vrot.lane.b32.xlu0 %v7453, 36
      %v8809 = vpop.permute.xlu0 %8808
      %8810 = vrot.lane.b32.xlu0 %v7454, 36
      %v8811 = vpop.permute.xlu0 %8810
      %8812 = vrot.lane.b32.xlu0 %v7455, 36
      %v8813 = vpop.permute.xlu0 %8812
      %8814 = vrot.lane.b32.xlu0 %v7456, 36
      %v8815 = vpop.permute.xlu0 %8814
      %8816 = vrot.lane.b32.xlu0 %v7457, 36
      %v8817 = vpop.permute.xlu0 %8816
      %8818 = vrot.lane.b32.xlu0 %v7458, 36
      %v8819 = vpop.permute.xlu0 %8818
      %8820 = vrot.lane.b32.xlu0 %v7459, 36
      %v8821 = vpop.permute.xlu0 %8820
      %8822 = vrot.lane.b32.xlu0 %v7460, 36
      %v8823 = vpop.permute.xlu0 %8822
      %8824 = vrot.lane.b32.xlu0 %v7461, 36
      %v8825 = vpop.permute.xlu0 %8824
      %8826 = vrot.lane.b32.xlu0 %v7462, 36
      %v8827 = vpop.permute.xlu0 %8826
      %8828 = vrot.lane.b32.xlu0 %v7463, 36
      %v8829 = vpop.permute.xlu0 %8828
      %8830 = vrot.lane.b32.xlu0 %v7464, 36
      %v8831 = vpop.permute.xlu0 %8830
      %8832 = vrot.lane.b32.xlu0 %v7465, 36
      %v8833 = vpop.permute.xlu0 %8832
      %8834 = vrot.lane.b32.xlu0 %v7466, 36
      %v8835 = vpop.permute.xlu0 %8834
      %8836 = vrot.lane.b32.xlu0 %v7467, 36
      %v8837 = vpop.permute.xlu0 %8836
      %8838 = vrot.lane.b32.xlu0 %v7468, 36
      %v8839 = vpop.permute.xlu0 %8838
      %8840 = vrot.lane.b32.xlu0 %v7469, 36
      %v8841 = vpop.permute.xlu0 %8840
      %8842 = vrot.lane.b32.xlu0 %v7470, 36
      %v8843 = vpop.permute.xlu0 %8842
      %8844 = vrot.lane.b32.xlu0 %v7471, 36
      %v8845 = vpop.permute.xlu0 %8844
      %8846 = vrot.lane.b32.xlu0 %v7472, 36
      %v8847 = vpop.permute.xlu0 %8846
      %8848 = vrot.lane.b32.xlu0 %v7473, 36
      %v8849 = vpop.permute.xlu0 %8848
      %8850 = vrot.lane.b32.xlu0 %v8066, 36
      %v8851 = vpop.permute.xlu0 %8850
      %8852 = vrot.lane.b32.xlu0 %v8790, 36
      %v8853 = vpop.permute.xlu0 %8852
      %8854 = vrot.lane.b32.xlu0 %v8791, 36
      %v8855 = vpop.permute.xlu0 %8854
      %8856 = vrot.lane.b32.xlu0 %v8792, 36
      %v8857 = vpop.permute.xlu0 %8856
      %8858 = vrot.lane.b32.xlu0 %v8793, 36
      %v8859 = vpop.permute.xlu0 %8858
      %v8860 = vpack.c.b16 %v8784, %v8783
      %v8861 = vpack.c.b16 %v8786, %v8785
      %v8862 = vpack.c.b16 %v8788, %v8787
      %v8864 = vshrl.u32 %v8860, 16
      %v8866 = vrot.slane %v8864, 4
      %v8867 = vshll.u32 %v8860, 16
      %v8869 = vrot.slane %v8867, 5
      %v8870 = vor.u32 %v8866, %v8869
      %v8871 = vsel %vm594, %v8634, %v8870
      %v8873 = vshrl.u32 %v8861, 16
      %v8875 = vrot.slane %v8873, 4
      %v8876 = vshll.u32 %v8861, 16
      %v8878 = vrot.slane %v8876, 5
      %v8879 = vor.u32 %v8875, %v8878
      %v8880 = vsel %vm594, %v8870, %v8879
      %v8882 = vshrl.u32 %v8862, 16
      %v8884 = vrot.slane %v8882, 4
      %v8885 = vshll.u32 %v8862, 16
      %v8887 = vrot.slane %v8885, 5
      %v8888 = vor.u32 %v8884, %v8887
      %v8889 = vsel %vm594, %v8879, %v8888
      %8890 = vrot.lane.b32.xlu0 %v7549, 40
      %v8891 = vpop.permute.xlu0 %8890
      %8892 = vrot.lane.b32.xlu0 %v7559, 40
      %v8893 = vpop.permute.xlu0 %8892
      %8894 = vrot.lane.b32.xlu0 %v7568, 40
      %v8895 = vpop.permute.xlu0 %8894
      %8896 = vrot.lane.b32.xlu0 %v7577, 40
      %v8897 = vpop.permute.xlu0 %8896
      %8898 = vrot.lane.b32.xlu0 %v7586, 40
      %v8899 = vpop.permute.xlu0 %8898
      %8900 = vrot.lane.b32.xlu0 %v7595, 40
      %v8901 = vpop.permute.xlu0 %8900
      %8902 = vrot.lane.b32.xlu0 %v7604, 40
      %v8903 = vpop.permute.xlu0 %8902
      %8904 = vrot.lane.b32.xlu0 %v7613, 40
      %v8905 = vpop.permute.xlu0 %8904
      %8906 = vrot.lane.b32.xlu0 %v7622, 40
      %v8907 = vpop.permute.xlu0 %8906
      %8908 = vrot.lane.b32.xlu0 %v7631, 40
      %v8909 = vpop.permute.xlu0 %8908
      %8910 = vrot.lane.b32.xlu0 %v7640, 40
      %v8911 = vpop.permute.xlu0 %8910
      %8912 = vrot.lane.b32.xlu0 %v7649, 40
      %v8913 = vpop.permute.xlu0 %8912
      %8914 = vrot.lane.b32.xlu0 %v7658, 40
      %v8915 = vpop.permute.xlu0 %8914
      %8916 = vrot.lane.b32.xlu0 %v7667, 40
      %v8917 = vpop.permute.xlu0 %8916
      %8918 = vrot.lane.b32.xlu0 %v7676, 40
      %v8919 = vpop.permute.xlu0 %8918
      %8920 = vrot.lane.b32.xlu0 %v7685, 40
      %v8921 = vpop.permute.xlu0 %8920
      %8922 = vrot.lane.b32.xlu0 %v7694, 40
      %v8923 = vpop.permute.xlu0 %8922
      %8924 = vrot.lane.b32.xlu0 %v7703, 40
      %v8925 = vpop.permute.xlu0 %8924
      %8926 = vrot.lane.b32.xlu0 %v7712, 40
      %v8927 = vpop.permute.xlu0 %8926
      %8928 = vrot.lane.b32.xlu0 %v7721, 40
      %v8929 = vpop.permute.xlu0 %8928
      %8930 = vrot.lane.b32.xlu0 %v7730, 40
      %v8931 = vpop.permute.xlu0 %8930
      %8932 = vrot.lane.b32.xlu0 %v7739, 40
      %v8933 = vpop.permute.xlu0 %8932
      %8934 = vrot.lane.b32.xlu0 %v7748, 40
      %v8935 = vpop.permute.xlu0 %8934
      %8936 = vrot.lane.b32.xlu0 %v7757, 40
      %v8937 = vpop.permute.xlu0 %8936
      %8938 = vrot.lane.b32.xlu0 %v7766, 40
      %v8939 = vpop.permute.xlu0 %8938
      %8940 = vrot.lane.b32.xlu0 %v7775, 40
      %v8941 = vpop.permute.xlu0 %8940
      %8942 = vrot.lane.b32.xlu0 %v7784, 40
      %v8943 = vpop.permute.xlu0 %8942
      %8944 = vrot.lane.b32.xlu0 %v7793, 40
      %v8945 = vpop.permute.xlu0 %8944
      %8946 = vrot.lane.b32.xlu0 %v8635, 40
      %v8947 = vpop.permute.xlu0 %8946
      %8948 = vrot.lane.b32.xlu0 %v8871, 40
      %v8949 = vpop.permute.xlu0 %8948
      %8950 = vrot.lane.b32.xlu0 %v8880, 40
      %v8951 = vpop.permute.xlu0 %8950
      %8952 = vrot.lane.b32.xlu0 %v8889, 40
      %v8953 = vpop.permute.xlu0 %8952
      %8954 = vrot.lane.b32.xlu0 %v8888, 40
      %v8955 = vpop.permute.xlu0 %8954
      %v8957 = vunpack.c.l.b16 %v7291
      %v8958 = vpack.c.b16 %v8957, %v8957
      %v8959 = vrot.slane %v8860, 5
      %v8960 = vsel %vm951, %v8705, %v8959
      %v8961 = vrot.slane %v8861, 5
      %v8962 = vsel %vm951, %v8959, %v8961
      %v8963 = vrot.slane %v8862, 5
      %v8964 = vsel %vm951, %v8961, %v8963
      %v8965 = vrot.slane %v8958, 5
      %v8966 = vsel %vm951, %v8963, %v8965
      %8967 = vrot.lane.b32.xlu0 %v7870, 44
      %v8968 = vpop.permute.xlu0 %8967
      %8969 = vrot.lane.b32.xlu0 %v7873, 44
      %v8970 = vpop.permute.xlu0 %8969
      %8971 = vrot.lane.b32.xlu0 %v7875, 44
      %v8972 = vpop.permute.xlu0 %8971
      %8973 = vrot.lane.b32.xlu0 %v7877, 44
      %v8974 = vpop.permute.xlu0 %8973
      %8975 = vrot.lane.b32.xlu0 %v7879, 44
      %v8976 = vpop.permute.xlu0 %8975
      %8977 = vrot.lane.b32.xlu0 %v7881, 44
      %v8978 = vpop.permute.xlu0 %8977
      %8979 = vrot.lane.b32.xlu0 %v7883, 44
      %v8980 = vpop.permute.xlu0 %8979
      %8981 = vrot.lane.b32.xlu0 %v7885, 44
      %v8982 = vpop.permute.xlu0 %8981
      %8983 = vrot.lane.b32.xlu0 %v7887, 44
      %v8984 = vpop.permute.xlu0 %8983
      %8985 = vrot.lane.b32.xlu0 %v7889, 44
      %v8986 = vpop.permute.xlu0 %8985
      %8987 = vrot.lane.b32.xlu0 %v7891, 44
      %v8988 = vpop.permute.xlu0 %8987
      %8989 = vrot.lane.b32.xlu0 %v7893, 44
      %v8990 = vpop.permute.xlu0 %8989
      %8991 = vrot.lane.b32.xlu0 %v7895, 44
      %v8992 = vpop.permute.xlu0 %8991
      %8993 = vrot.lane.b32.xlu0 %v7897, 44
      %v8994 = vpop.permute.xlu0 %8993
      %8995 = vrot.lane.b32.xlu0 %v7899, 44
      %v8996 = vpop.permute.xlu0 %8995
      %8997 = vrot.lane.b32.xlu0 %v7901, 44
      %v8998 = vpop.permute.xlu0 %8997
      %8999 = vrot.lane.b32.xlu0 %v7903, 44
      %v9000 = vpop.permute.xlu0 %8999
      %9001 = vrot.lane.b32.xlu0 %v7905, 44
      %v9002 = vpop.permute.xlu0 %9001
      %9003 = vrot.lane.b32.xlu0 %v7907, 44
      %v9004 = vpop.permute.xlu0 %9003
      %9005 = vrot.lane.b32.xlu0 %v7909, 44
      %v9006 = vpop.permute.xlu0 %9005
      %9007 = vrot.lane.b32.xlu0 %v7911, 44
      %v9008 = vpop.permute.xlu0 %9007
      %9009 = vrot.lane.b32.xlu0 %v7913, 44
      %v9010 = vpop.permute.xlu0 %9009
      %9011 = vrot.lane.b32.xlu0 %v7915, 44
      %v9012 = vpop.permute.xlu0 %9011
      %9013 = vrot.lane.b32.xlu0 %v7917, 44
      %v9014 = vpop.permute.xlu0 %9013
      %9015 = vrot.lane.b32.xlu0 %v7919, 44
      %v9016 = vpop.permute.xlu0 %9015
      %9017 = vrot.lane.b32.xlu0 %v7921, 44
      %v9018 = vpop.permute.xlu0 %9017
      %9019 = vrot.lane.b32.xlu0 %v7923, 44
      %v9020 = vpop.permute.xlu0 %9019
      %9021 = vrot.lane.b32.xlu0 %v7925, 44
      %v9022 = vpop.permute.xlu0 %9021
      %9023 = vrot.lane.b32.xlu0 %v8706, 44
      %v9024 = vpop.permute.xlu0 %9023
      %9025 = vrot.lane.b32.xlu0 %v8960, 44
      %v9026 = vpop.permute.xlu0 %9025
      %9027 = vrot.lane.b32.xlu0 %v8962, 44
      %v9028 = vpop.permute.xlu0 %9027
      %9029 = vrot.lane.b32.xlu0 %v8964, 44
      %v9030 = vpop.permute.xlu0 %9029
      %9031 = vrot.lane.b32.xlu0 %v8966, 44
      %v9032 = vpop.permute.xlu0 %9031
      %v9035 = vunpack.c.l.b16 %v7292
      %v9036 = vunpack.c.l.b16 %v7293
      %v9037 = vpack.c.b16 %v7387, %v9035
      %v9038 = vpack.c.b16 %v9036, %v9036
      %9039 = vrot.lane.b32.xlu0 %v9037, 48
      %v9040 = vpop.permute.xlu0 %9039
      %9041 = vrot.lane.b32.xlu0 %v7480, 48
      %v9042 = vpop.permute.xlu0 %9041
      %9043 = vrot.lane.b32.xlu0 %v7481, 48
      %v9044 = vpop.permute.xlu0 %9043
      %9045 = vrot.lane.b32.xlu0 %v7482, 48
      %v9046 = vpop.permute.xlu0 %9045
      %9047 = vrot.lane.b32.xlu0 %v7483, 48
      %v9048 = vpop.permute.xlu0 %9047
      %9049 = vrot.lane.b32.xlu0 %v7484, 48
      %v9050 = vpop.permute.xlu0 %9049
      %9051 = vrot.lane.b32.xlu0 %v7485, 48
      %v9052 = vpop.permute.xlu0 %9051
      %9053 = vrot.lane.b32.xlu0 %v7486, 48
      %v9054 = vpop.permute.xlu0 %9053
      %9055 = vrot.lane.b32.xlu0 %v7487, 48
      %v9056 = vpop.permute.xlu0 %9055
      %9057 = vrot.lane.b32.xlu0 %v7488, 48
      %v9058 = vpop.permute.xlu0 %9057
      %9059 = vrot.lane.b32.xlu0 %v7489, 48
      %v9060 = vpop.permute.xlu0 %9059
      %9061 = vrot.lane.b32.xlu0 %v7490, 48
      %v9062 = vpop.permute.xlu0 %9061
      %9063 = vrot.lane.b32.xlu0 %v7491, 48
      %v9064 = vpop.permute.xlu0 %9063
      %9065 = vrot.lane.b32.xlu0 %v7492, 48
      %v9066 = vpop.permute.xlu0 %9065
      %9067 = vrot.lane.b32.xlu0 %v7493, 48
      %v9068 = vpop.permute.xlu0 %9067
      %9069 = vrot.lane.b32.xlu0 %v7494, 48
      %v9070 = vpop.permute.xlu0 %9069
      %9071 = vrot.lane.b32.xlu0 %v7495, 48
      %v9072 = vpop.permute.xlu0 %9071
      %9073 = vrot.lane.b32.xlu0 %v7496, 48
      %v9074 = vpop.permute.xlu0 %9073
      %9075 = vrot.lane.b32.xlu0 %v7497, 48
      %v9076 = vpop.permute.xlu0 %9075
      %9077 = vrot.lane.b32.xlu0 %v7498, 48
      %v9078 = vpop.permute.xlu0 %9077
      %9079 = vrot.lane.b32.xlu0 %v7499, 48
      %v9080 = vpop.permute.xlu0 %9079
      %9081 = vrot.lane.b32.xlu0 %v7500, 48
      %v9082 = vpop.permute.xlu0 %9081
      %9083 = vrot.lane.b32.xlu0 %v7501, 48
      %v9084 = vpop.permute.xlu0 %9083
      %9085 = vrot.lane.b32.xlu0 %v7502, 48
      %v9086 = vpop.permute.xlu0 %9085
      %9087 = vrot.lane.b32.xlu0 %v7503, 48
      %v9088 = vpop.permute.xlu0 %9087
      %9089 = vrot.lane.b32.xlu0 %v7504, 48
      %v9090 = vpop.permute.xlu0 %9089
      %9091 = vrot.lane.b32.xlu0 %v7505, 48
      %v9092 = vpop.permute.xlu0 %9091
      %9093 = vrot.lane.b32.xlu0 %v7506, 48
      %v9094 = vpop.permute.xlu0 %9093
      %9095 = vrot.lane.b32.xlu0 %v8626, 48
      %v9096 = vpop.permute.xlu0 %9095
      %9097 = vrot.lane.b32.xlu0 %v8860, 48
      %v9098 = vpop.permute.xlu0 %9097
      %9099 = vrot.lane.b32.xlu0 %v8861, 48
      %v9100 = vpop.permute.xlu0 %9099
      %9101 = vrot.lane.b32.xlu0 %v8862, 48
      %v9102 = vpop.permute.xlu0 %9101
      %9103 = vrot.lane.b32.xlu0 %v9038, 48
      %v9104 = vpop.permute.xlu0 %9103
      %v9105 = vpack.c.b16 %v9036, %v8788
      %v9107 = vshrl.u32 %v8790, 16
      %v9109 = vrot.slane %v9107, 4
      %v9110 = vshll.u32 %v8790, 16
      %v9112 = vrot.slane %v9110, 5
      %v9113 = vor.u32 %v9109, %v9112
      %v9114 = vsel %vm594, %v8352, %v9113
      %v9116 = vshrl.u32 %v8791, 16
      %v9118 = vrot.slane %v9116, 4
      %v9119 = vshll.u32 %v8791, 16
      %v9121 = vrot.slane %v9119, 5
      %v9122 = vor.u32 %v9118, %v9121
      %v9123 = vsel %vm594, %v9113, %v9122
      %v9125 = vshrl.u32 %v8792, 16
      %v9127 = vrot.slane %v9125, 4
      %v9128 = vshll.u32 %v8792, 16
      %v9130 = vrot.slane %v9128, 5
      %v9131 = vor.u32 %v9127, %v9130
      %v9132 = vsel %vm594, %v9122, %v9131
      %v9134 = vshrl.u32 %v9105, 16
      %v9136 = vrot.slane %v9134, 4
      %v9137 = vshll.u32 %v9105, 16
      %v9139 = vrot.slane %v9137, 5
      %v9140 = vor.u32 %v9136, %v9139
      %v9141 = vsel %vm594, %v9131, %v9140
      %9142 = vrot.lane.b32.xlu0 %v8109, 52
      %v9143 = vpop.permute.xlu0 %9142
      %9144 = vrot.lane.b32.xlu0 %v8119, 52
      %v9145 = vpop.permute.xlu0 %9144
      %9146 = vrot.lane.b32.xlu0 %v8128, 52
      %v9147 = vpop.permute.xlu0 %9146
      %9148 = vrot.lane.b32.xlu0 %v8137, 52
      %v9149 = vpop.permute.xlu0 %9148
      %9150 = vrot.lane.b32.xlu0 %v8146, 52
      %v9151 = vpop.permute.xlu0 %9150
      %9152 = vrot.lane.b32.xlu0 %v8155, 52
      %v9153 = vpop.permute.xlu0 %9152
      %9154 = vrot.lane.b32.xlu0 %v8164, 52
      %v9155 = vpop.permute.xlu0 %9154
      %9156 = vrot.lane.b32.xlu0 %v8173, 52
      %v9157 = vpop.permute.xlu0 %9156
      %9158 = vrot.lane.b32.xlu0 %v8182, 52
      %v9159 = vpop.permute.xlu0 %9158
      %9160 = vrot.lane.b32.xlu0 %v8191, 52
      %v9161 = vpop.permute.xlu0 %9160
      %9162 = vrot.lane.b32.xlu0 %v8200, 52
      %v9163 = vpop.permute.xlu0 %9162
      %9164 = vrot.lane.b32.xlu0 %v8209, 52
      %v9165 = vpop.permute.xlu0 %9164
      %9166 = vrot.lane.b32.xlu0 %v8218, 52
      %v9167 = vpop.permute.xlu0 %9166
      %9168 = vrot.lane.b32.xlu0 %v8227, 52
      %v9169 = vpop.permute.xlu0 %9168
      %9170 = vrot.lane.b32.xlu0 %v8236, 52
      %v9171 = vpop.permute.xlu0 %9170
      %9172 = vrot.lane.b32.xlu0 %v8245, 52
      %v9173 = vpop.permute.xlu0 %9172
      %9174 = vrot.lane.b32.xlu0 %v8254, 52
      %v9175 = vpop.permute.xlu0 %9174
      %9176 = vrot.lane.b32.xlu0 %v8263, 52
      %v9177 = vpop.permute.xlu0 %9176
      %9178 = vrot.lane.b32.xlu0 %v8272, 52
      %v9179 = vpop.permute.xlu0 %9178
      %9180 = vrot.lane.b32.xlu0 %v8281, 52
      %v9181 = vpop.permute.xlu0 %9180
      %9182 = vrot.lane.b32.xlu0 %v8290, 52
      %v9183 = vpop.permute.xlu0 %9182
      %9184 = vrot.lane.b32.xlu0 %v8299, 52
      %v9185 = vpop.permute.xlu0 %9184
      %9186 = vrot.lane.b32.xlu0 %v8308, 52
      %v9187 = vpop.permute.xlu0 %9186
      %9188 = vrot.lane.b32.xlu0 %v8317, 52
      %v9189 = vpop.permute.xlu0 %9188
      %9190 = vrot.lane.b32.xlu0 %v8326, 52
      %v9191 = vpop.permute.xlu0 %9190
      %9192 = vrot.lane.b32.xlu0 %v8335, 52
      %v9193 = vpop.permute.xlu0 %9192
      %9194 = vrot.lane.b32.xlu0 %v8344, 52
      %v9195 = vpop.permute.xlu0 %9194
      %9196 = vrot.lane.b32.xlu0 %v8353, 52
      %v9197 = vpop.permute.xlu0 %9196
      %9198 = vrot.lane.b32.xlu0 %v9114, 52
      %v9199 = vpop.permute.xlu0 %9198
      %9200 = vrot.lane.b32.xlu0 %v9123, 52
      %v9201 = vpop.permute.xlu0 %9200
      %9202 = vrot.lane.b32.xlu0 %v9132, 52
      %v9203 = vpop.permute.xlu0 %9202
      %9204 = vrot.lane.b32.xlu0 %v9141, 52
      %v9205 = vpop.permute.xlu0 %9204
      %9206 = vrot.lane.b32.xlu0 %v9140, 52
      %v9207 = vpop.permute.xlu0 %9206
      %v9209 = vunpack.c.l.b16 %v7294
      %v9210 = vpack.c.b16 %v9209, %v9209
      %v9211 = vrot.slane %v8790, 5
      %v9212 = vsel %vm951, %v8484, %v9211
      %v9213 = vrot.slane %v8791, 5
      %v9214 = vsel %vm951, %v9211, %v9213
      %v9215 = vrot.slane %v8792, 5
      %v9216 = vsel %vm951, %v9213, %v9215
      %v9217 = vrot.slane %v9105, 5
      %v9218 = vsel %vm951, %v9215, %v9217
      %v9219 = vrot.slane %v9210, 5
      %v9220 = vsel %vm951, %v9217, %v9219
      %9221 = vrot.lane.b32.xlu0 %v8430, 56
      %v9222 = vpop.permute.xlu0 %9221
      %9223 = vrot.lane.b32.xlu0 %v8433, 56
      %v9224 = vpop.permute.xlu0 %9223
      %9225 = vrot.lane.b32.xlu0 %v8435, 56
      %v9226 = vpop.permute.xlu0 %9225
      %9227 = vrot.lane.b32.xlu0 %v8437, 56
      %v9228 = vpop.permute.xlu0 %9227
      %9229 = vrot.lane.b32.xlu0 %v8439, 56
      %v9230 = vpop.permute.xlu0 %9229
      %9231 = vrot.lane.b32.xlu0 %v8441, 56
      %v9232 = vpop.permute.xlu0 %9231
      %9233 = vrot.lane.b32.xlu0 %v8443, 56
      %v9234 = vpop.permute.xlu0 %9233
      %9235 = vrot.lane.b32.xlu0 %v8445, 56
      %v9236 = vpop.permute.xlu0 %9235
      %9237 = vrot.lane.b32.xlu0 %v8447, 56
      %v9238 = vpop.permute.xlu0 %9237
      %9239 = vrot.lane.b32.xlu0 %v8449, 56
      %v9240 = vpop.permute.xlu0 %9239
      %9241 = vrot.lane.b32.xlu0 %v8451, 56
      %v9242 = vpop.permute.xlu0 %9241
      %9243 = vrot.lane.b32.xlu0 %v8453, 56
      %v9244 = vpop.permute.xlu0 %9243
      %9245 = vrot.lane.b32.xlu0 %v8455, 56
      %v9246 = vpop.permute.xlu0 %9245
      %9247 = vrot.lane.b32.xlu0 %v8457, 56
      %v9248 = vpop.permute.xlu0 %9247
      %9249 = vrot.lane.b32.xlu0 %v8459, 56
      %v9250 = vpop.permute.xlu0 %9249
      %9251 = vrot.lane.b32.xlu0 %v8461, 56
      %v9252 = vpop.permute.xlu0 %9251
      %9253 = vrot.lane.b32.xlu0 %v8463, 56
      %v9254 = vpop.permute.xlu0 %9253
      %9255 = vrot.lane.b32.xlu0 %v8465, 56
      %v9256 = vpop.permute.xlu0 %9255
      %9257 = vrot.lane.b32.xlu0 %v8467, 56
      %v9258 = vpop.permute.xlu0 %9257
      %9259 = vrot.lane.b32.xlu0 %v8469, 56
      %v9260 = vpop.permute.xlu0 %9259
      %9261 = vrot.lane.b32.xlu0 %v8471, 56
      %v9262 = vpop.permute.xlu0 %9261
      %9263 = vrot.lane.b32.xlu0 %v8473, 56
      %v9264 = vpop.permute.xlu0 %9263
      %9265 = vrot.lane.b32.xlu0 %v8475, 56
      %v9266 = vpop.permute.xlu0 %9265
      %9267 = vrot.lane.b32.xlu0 %v8477, 56
      %v9268 = vpop.permute.xlu0 %9267
      %9269 = vrot.lane.b32.xlu0 %v8479, 56
      %v9270 = vpop.permute.xlu0 %9269
      %9271 = vrot.lane.b32.xlu0 %v8481, 56
      %v9272 = vpop.permute.xlu0 %9271
      %9273 = vrot.lane.b32.xlu0 %v8483, 56
      %v9274 = vpop.permute.xlu0 %9273
      %9275 = vrot.lane.b32.xlu0 %v8485, 56
      %v9276 = vpop.permute.xlu0 %9275
      %9277 = vrot.lane.b32.xlu0 %v9212, 56
      %v9278 = vpop.permute.xlu0 %9277
      %9279 = vrot.lane.b32.xlu0 %v9214, 56
      %v9280 = vpop.permute.xlu0 %9279
      %9281 = vrot.lane.b32.xlu0 %v9216, 56
      %v9282 = vpop.permute.xlu0 %9281
      %9283 = vrot.lane.b32.xlu0 %v9218, 56
      %v9284 = vpop.permute.xlu0 %9283
      %9285 = vrot.lane.b32.xlu0 %v9220, 56
      %v9286 = vpop.permute.xlu0 %9285
      %v9289 = vunpack.c.l.b16 %v7295
      %v9290 = vunpack.c.l.b16 %v7296
      %v9291 = vpack.c.b16 %v7388, %v9289
      %v9292 = vpack.c.b16 %v9290, %v9290
      %9293 = vrot.lane.b32.xlu0 %v9291, 60
      %v9294 = vpop.permute.xlu0 %9293
      %9295 = vrot.lane.b32.xlu0 %v7448, 60
      %v9296 = vpop.permute.xlu0 %9295
      %9297 = vrot.lane.b32.xlu0 %v7449, 60
      %v9298 = vpop.permute.xlu0 %9297
      %9299 = vrot.lane.b32.xlu0 %v7450, 60
      %v9300 = vpop.permute.xlu0 %9299
      %9301 = vrot.lane.b32.xlu0 %v7451, 60
      %v9302 = vpop.permute.xlu0 %9301
      %9303 = vrot.lane.b32.xlu0 %v7452, 60
      %v9304 = vpop.permute.xlu0 %9303
      %9305 = vrot.lane.b32.xlu0 %v7453, 60
      %v9306 = vpop.permute.xlu0 %9305
      %9307 = vrot.lane.b32.xlu0 %v7454, 60
      %v9308 = vpop.permute.xlu0 %9307
      %9309 = vrot.lane.b32.xlu0 %v7455, 60
      %v9310 = vpop.permute.xlu0 %9309
      %9311 = vrot.lane.b32.xlu0 %v7456, 60
      %v9312 = vpop.permute.xlu0 %9311
      %9313 = vrot.lane.b32.xlu0 %v7457, 60
      %v9314 = vpop.permute.xlu0 %9313
      %9315 = vrot.lane.b32.xlu0 %v7458, 60
      %v9316 = vpop.permute.xlu0 %9315
      %9317 = vrot.lane.b32.xlu0 %v7459, 60
      %v9318 = vpop.permute.xlu0 %9317
      %9319 = vrot.lane.b32.xlu0 %v7460, 60
      %v9320 = vpop.permute.xlu0 %9319
      %9321 = vrot.lane.b32.xlu0 %v7461, 60
      %v9322 = vpop.permute.xlu0 %9321
      %9323 = vrot.lane.b32.xlu0 %v7462, 60
      %v9324 = vpop.permute.xlu0 %9323
      %9325 = vrot.lane.b32.xlu0 %v7463, 60
      %v9326 = vpop.permute.xlu0 %9325
      %9327 = vrot.lane.b32.xlu0 %v7464, 60
      %v9328 = vpop.permute.xlu0 %9327
      %9329 = vrot.lane.b32.xlu0 %v7465, 60
      %v9330 = vpop.permute.xlu0 %9329
      %9331 = vrot.lane.b32.xlu0 %v7466, 60
      %v9332 = vpop.permute.xlu0 %9331
      %9333 = vrot.lane.b32.xlu0 %v7467, 60
      %v9334 = vpop.permute.xlu0 %9333
      %9335 = vrot.lane.b32.xlu0 %v7468, 60
      %v9336 = vpop.permute.xlu0 %9335
      %9337 = vrot.lane.b32.xlu0 %v7469, 60
      %v9338 = vpop.permute.xlu0 %9337
      %9339 = vrot.lane.b32.xlu0 %v7470, 60
      %v9340 = vpop.permute.xlu0 %9339
      %9341 = vrot.lane.b32.xlu0 %v7471, 60
      %v9342 = vpop.permute.xlu0 %9341
      %9343 = vrot.lane.b32.xlu0 %v7472, 60
      %v9344 = vpop.permute.xlu0 %9343
      %9345 = vrot.lane.b32.xlu0 %v7473, 60
      %v9346 = vpop.permute.xlu0 %9345
      %9347 = vrot.lane.b32.xlu0 %v8066, 60
      %v9348 = vpop.permute.xlu0 %9347
      %9349 = vrot.lane.b32.xlu0 %v8790, 60
      %v9350 = vpop.permute.xlu0 %9349
      %9351 = vrot.lane.b32.xlu0 %v8791, 60
      %v9352 = vpop.permute.xlu0 %9351
      %9353 = vrot.lane.b32.xlu0 %v8792, 60
      %v9354 = vpop.permute.xlu0 %9353
      %9355 = vrot.lane.b32.xlu0 %v9105, 60
      %v9356 = vpop.permute.xlu0 %9355
      %9357 = vrot.lane.b32.xlu0 %v9292, 60
      %v9358 = vpop.permute.xlu0 %9357
      %v9361 = vsel %vm2448, %v7442, %v7795
      %v9363 = vsel %vm2448, %v7443, %v7797
      %v9365 = vsel %vm2448, %v7444, %v7799
      %v9367 = vsel %vm2448, %v7445, %v7801
      %v9369 = vsel %vm2448, %v7446, %v7803
      %v9371 = vsel %vm2448, %v7447, %v7805
      %v9373 = vsel %vm2448, %v7448, %v7807
      %v9375 = vsel %vm2448, %v7449, %v7809
      %v9377 = vsel %vm2448, %v7450, %v7811
      %v9379 = vsel %vm2448, %v7451, %v7813
      %v9381 = vsel %vm2448, %v7452, %v7815
      %v9383 = vsel %vm2448, %v7453, %v7817
      %v9385 = vsel %vm2448, %v7454, %v7819
      %v9387 = vsel %vm2448, %v7455, %v7821
      %v9389 = vsel %vm2448, %v7456, %v7823
      %v9391 = vsel %vm2448, %v7457, %v7825
      %v9393 = vsel %vm2448, %v7458, %v7827
      %v9395 = vsel %vm2448, %v7459, %v7829
      %v9397 = vsel %vm2448, %v7460, %v7831
      %v9399 = vsel %vm2448, %v7461, %v7833
      %v9401 = vsel %vm2448, %v7462, %v7835
      %v9403 = vsel %vm2448, %v7463, %v7837
      %v9405 = vsel %vm2448, %v7464, %v7839
      %v9407 = vsel %vm2448, %v7465, %v7841
      %v9409 = vsel %vm2448, %v7466, %v7843
      %v9411 = vsel %vm2448, %v7467, %v7845
      %v9413 = vsel %vm2448, %v7468, %v7847
      %v9415 = vsel %vm2448, %v7469, %v7849
      %v9417 = vsel %vm2448, %v7470, %v7851
      %v9419 = vsel %vm2448, %v7471, %v7853
      %v9421 = vsel %vm2448, %v7472, %v7855
      %v9423 = vsel %vm2448, %v7473, %v7857
      %v9426 = vsel %vm2448, %v7474, %v7859
      %v9428 = vsel %vm2517, %v9361, %v7929
      %v9430 = vsel %vm2517, %v9363, %v7931
      %v9432 = vsel %vm2517, %v9365, %v7933
      %v9434 = vsel %vm2517, %v9367, %v7935
      %v9436 = vsel %vm2517, %v9369, %v7937
      %v9438 = vsel %vm2517, %v9371, %v7939
      %v9440 = vsel %vm2517, %v9373, %v7941
      %v9442 = vsel %vm2517, %v9375, %v7943
      %v9444 = vsel %vm2517, %v9377, %v7945
      %v9446 = vsel %vm2517, %v9379, %v7947
      %v9448 = vsel %vm2517, %v9381, %v7949
      %v9450 = vsel %vm2517, %v9383, %v7951
      %v9452 = vsel %vm2517, %v9385, %v7953
      %v9454 = vsel %vm2517, %v9387, %v7955
      %v9456 = vsel %vm2517, %v9389, %v7957
      %v9458 = vsel %vm2517, %v9391, %v7959
      %v9460 = vsel %vm2517, %v9393, %v7961
      %v9462 = vsel %vm2517, %v9395, %v7963
      %v9464 = vsel %vm2517, %v9397, %v7965
      %v9466 = vsel %vm2517, %v9399, %v7967
      %v9468 = vsel %vm2517, %v9401, %v7969
      %v9470 = vsel %vm2517, %v9403, %v7971
      %v9472 = vsel %vm2517, %v9405, %v7973
      %v9474 = vsel %vm2517, %v9407, %v7975
      %v9476 = vsel %vm2517, %v9409, %v7977
      %v9478 = vsel %vm2517, %v9411, %v7979
      %v9480 = vsel %vm2517, %v9413, %v7981
      %v9482 = vsel %vm2517, %v9415, %v7983
      %v9484 = vsel %vm2517, %v9417, %v7985
      %v9486 = vsel %vm2517, %v9419, %v7987
      %v9488 = vsel %vm2517, %v9421, %v7989
      %v9490 = vsel %vm2517, %v9423, %v7991
      %v9492 = vsel %vm2517, %v9426, %v7993
      %v9494 = vsel %vm2584, %v9428, %v8001
      %v9496 = vsel %vm2584, %v9430, %v8003
      %v9498 = vsel %vm2584, %v9432, %v8005
      %v9500 = vsel %vm2584, %v9434, %v8007
      %v9502 = vsel %vm2584, %v9436, %v8009
      %v9504 = vsel %vm2584, %v9438, %v8011
      %v9506 = vsel %vm2584, %v9440, %v8013
      %v9508 = vsel %vm2584, %v9442, %v8015
      %v9510 = vsel %vm2584, %v9444, %v8017
      %v9512 = vsel %vm2584, %v9446, %v8019
      %v9514 = vsel %vm2584, %v9448, %v8021
      %v9516 = vsel %vm2584, %v9450, %v8023
      %v9518 = vsel %vm2584, %v9452, %v8025
      %v9520 = vsel %vm2584, %v9454, %v8027
      %v9522 = vsel %vm2584, %v9456, %v8029
      %v9524 = vsel %vm2584, %v9458, %v8031
      %v9526 = vsel %vm2584, %v9460, %v8033
      %v9528 = vsel %vm2584, %v9462, %v8035
      %v9530 = vsel %vm2584, %v9464, %v8037
      %v9532 = vsel %vm2584, %v9466, %v8039
      %v9534 = vsel %vm2584, %v9468, %v8041
      %v9536 = vsel %vm2584, %v9470, %v8043
      %v9538 = vsel %vm2584, %v9472, %v8045
      %v9540 = vsel %vm2584, %v9474, %v8047
      %v9542 = vsel %vm2584, %v9476, %v8049
      %v9544 = vsel %vm2584, %v9478, %v8051
      %v9546 = vsel %vm2584, %v9480, %v8053
      %v9548 = vsel %vm2584, %v9482, %v8055
      %v9550 = vsel %vm2584, %v9484, %v8057
      %v9552 = vsel %vm2584, %v9486, %v8059
      %v9554 = vsel %vm2584, %v9488, %v8061
      %v9556 = vsel %vm2584, %v9490, %v8063
      %v9558 = vsel %vm2584, %v9492, %v8065
      %v9560 = vsel %vm2651, %v9494, %v8355
      %v9562 = vsel %vm2651, %v9496, %v8357
      %v9564 = vsel %vm2651, %v9498, %v8359
      %v9566 = vsel %vm2651, %v9500, %v8361
      %v9568 = vsel %vm2651, %v9502, %v8363
      %v9570 = vsel %vm2651, %v9504, %v8365
      %v9572 = vsel %vm2651, %v9506, %v8367
      %v9574 = vsel %vm2651, %v9508, %v8369
      %v9576 = vsel %vm2651, %v9510, %v8371
      %v9578 = vsel %vm2651, %v9512, %v8373
      %v9580 = vsel %vm2651, %v9514, %v8375
      %v9582 = vsel %vm2651, %v9516, %v8377
      %v9584 = vsel %vm2651, %v9518, %v8379
      %v9586 = vsel %vm2651, %v9520, %v8381
      %v9588 = vsel %vm2651, %v9522, %v8383
      %v9590 = vsel %vm2651, %v9524, %v8385
      %v9592 = vsel %vm2651, %v9526, %v8387
      %v9594 = vsel %vm2651, %v9528, %v8389
      %v9596 = vsel %vm2651, %v9530, %v8391
      %v9598 = vsel %vm2651, %v9532, %v8393
      %v9600 = vsel %vm2651, %v9534, %v8395
      %v9602 = vsel %vm2651, %v9536, %v8397
      %v9604 = vsel %vm2651, %v9538, %v8399
      %v9606 = vsel %vm2651, %v9540, %v8401
      %v9608 = vsel %vm2651, %v9542, %v8403
      %v9610 = vsel %vm2651, %v9544, %v8405
      %v9612 = vsel %vm2651, %v9546, %v8407
      %v9614 = vsel %vm2651, %v9548, %v8409
      %v9616 = vsel %vm2651, %v9550, %v8411
      %v9618 = vsel %vm2651, %v9552, %v8413
      %v9620 = vsel %vm2651, %v9554, %v8415
      %v9622 = vsel %vm2651, %v9556, %v8417
      %v9624 = vsel %vm2651, %v9558, %v8419
      %v9626 = vsel %vm2718, %v9560, %v8489
      %v9628 = vsel %vm2718, %v9562, %v8491
      %v9630 = vsel %vm2718, %v9564, %v8493
      %v9632 = vsel %vm2718, %v9566, %v8495
      %v9634 = vsel %vm2718, %v9568, %v8497
      %v9636 = vsel %vm2718, %v9570, %v8499
      %v9638 = vsel %vm2718, %v9572, %v8501
      %v9640 = vsel %vm2718, %v9574, %v8503
      %v9642 = vsel %vm2718, %v9576, %v8505
      %v9644 = vsel %vm2718, %v9578, %v8507
      %v9646 = vsel %vm2718, %v9580, %v8509
      %v9648 = vsel %vm2718, %v9582, %v8511
      %v9650 = vsel %vm2718, %v9584, %v8513
      %v9652 = vsel %vm2718, %v9586, %v8515
      %v9654 = vsel %vm2718, %v9588, %v8517
      %v9656 = vsel %vm2718, %v9590, %v8519
      %v9658 = vsel %vm2718, %v9592, %v8521
      %v9660 = vsel %vm2718, %v9594, %v8523
      %v9662 = vsel %vm2718, %v9596, %v8525
      %v9664 = vsel %vm2718, %v9598, %v8527
      %v9666 = vsel %vm2718, %v9600, %v8529
      %v9668 = vsel %vm2718, %v9602, %v8531
      %v9670 = vsel %vm2718, %v9604, %v8533
      %v9672 = vsel %vm2718, %v9606, %v8535
      %v9674 = vsel %vm2718, %v9608, %v8537
      %v9676 = vsel %vm2718, %v9610, %v8539
      %v9678 = vsel %vm2718, %v9612, %v8541
      %v9680 = vsel %vm2718, %v9614, %v8543
      %v9682 = vsel %vm2718, %v9616, %v8545
      %v9684 = vsel %vm2718, %v9618, %v8547
      %v9686 = vsel %vm2718, %v9620, %v8549
      %v9688 = vsel %vm2718, %v9622, %v8551
      %v9690 = vsel %vm2718, %v9624, %v8553
      %v9692 = vsel %vm2785, %v9626, %v8561
      %v9694 = vsel %vm2785, %v9628, %v8563
      %v9696 = vsel %vm2785, %v9630, %v8565
      %v9698 = vsel %vm2785, %v9632, %v8567
      %v9700 = vsel %vm2785, %v9634, %v8569
      %v9702 = vsel %vm2785, %v9636, %v8571
      %v9704 = vsel %vm2785, %v9638, %v8573
      %v9706 = vsel %vm2785, %v9640, %v8575
      %v9708 = vsel %vm2785, %v9642, %v8577
      %v9710 = vsel %vm2785, %v9644, %v8579
      %v9712 = vsel %vm2785, %v9646, %v8581
      %v9714 = vsel %vm2785, %v9648, %v8583
      %v9716 = vsel %vm2785, %v9650, %v8585
      %v9718 = vsel %vm2785, %v9652, %v8587
      %v9720 = vsel %vm2785, %v9654, %v8589
      %v9722 = vsel %vm2785, %v9656, %v8591
      %v9724 = vsel %vm2785, %v9658, %v8593
      %v9726 = vsel %vm2785, %v9660, %v8595
      %v9728 = vsel %vm2785, %v9662, %v8597
      %v9730 = vsel %vm2785, %v9664, %v8599
      %v9732 = vsel %vm2785, %v9666, %v8601
      %v9734 = vsel %vm2785, %v9668, %v8603
      %v9736 = vsel %vm2785, %v9670, %v8605
      %v9738 = vsel %vm2785, %v9672, %v8607
      %v9740 = vsel %vm2785, %v9674, %v8609
      %v9742 = vsel %vm2785, %v9676, %v8611
      %v9744 = vsel %vm2785, %v9678, %v8613
      %v9746 = vsel %vm2785, %v9680, %v8615
      %v9748 = vsel %vm2785, %v9682, %v8617
      %v9750 = vsel %vm2785, %v9684, %v8619
      %v9752 = vsel %vm2785, %v9686, %v8621
      %v9754 = vsel %vm2785, %v9688, %v8623
      %v9756 = vsel %vm2785, %v9690, %v8625
      %v9758 = vsel %vm2852, %v9692, %v8637
      %v9760 = vsel %vm2852, %v9694, %v8639
      %v9762 = vsel %vm2852, %v9696, %v8641
      %v9764 = vsel %vm2852, %v9698, %v8643
      %v9766 = vsel %vm2852, %v9700, %v8645
      %v9768 = vsel %vm2852, %v9702, %v8647
      %v9770 = vsel %vm2852, %v9704, %v8649
      %v9772 = vsel %vm2852, %v9706, %v8651
      %v9774 = vsel %vm2852, %v9708, %v8653
      %v9776 = vsel %vm2852, %v9710, %v8655
      %v9778 = vsel %vm2852, %v9712, %v8657
      %v9780 = vsel %vm2852, %v9714, %v8659
      %v9782 = vsel %vm2852, %v9716, %v8661
      %v9784 = vsel %vm2852, %v9718, %v8663
      %v9786 = vsel %vm2852, %v9720, %v8665
      %v9788 = vsel %vm2852, %v9722, %v8667
      %v9790 = vsel %vm2852, %v9724, %v8669
      %v9792 = vsel %vm2852, %v9726, %v8671
      %v9794 = vsel %vm2852, %v9728, %v8673
      %v9796 = vsel %vm2852, %v9730, %v8675
      %v9798 = vsel %vm2852, %v9732, %v8677
      %v9800 = vsel %vm2852, %v9734, %v8679
      %v9802 = vsel %vm2852, %v9736, %v8681
      %v9804 = vsel %vm2852, %v9738, %v8683
      %v9806 = vsel %vm2852, %v9740, %v8685
      %v9808 = vsel %vm2852, %v9742, %v8687
      %v9810 = vsel %vm2852, %v9744, %v8689
      %v9812 = vsel %vm2852, %v9746, %v8691
      %v9814 = vsel %vm2852, %v9748, %v8693
      %v9816 = vsel %vm2852, %v9750, %v8695
      %v9818 = vsel %vm2852, %v9752, %v8697
      %v9820 = vsel %vm2852, %v9754, %v8699
      %v9822 = vsel %vm2852, %v9756, %v8701
      %v9824 = vsel %vm2919, %v9758, %v8710
      %v9826 = vsel %vm2919, %v9760, %v8712
      %v9828 = vsel %vm2919, %v9762, %v8714
      %v9830 = vsel %vm2919, %v9764, %v8716
      %v9832 = vsel %vm2919, %v9766, %v8718
      %v9834 = vsel %vm2919, %v9768, %v8720
      %v9836 = vsel %vm2919, %v9770, %v8722
      %v9838 = vsel %vm2919, %v9772, %v8724
      %v9840 = vsel %vm2919, %v9774, %v8726
      %v9842 = vsel %vm2919, %v9776, %v8728
      %v9844 = vsel %vm2919, %v9778, %v8730
      %v9846 = vsel %vm2919, %v9780, %v8732
      %v9848 = vsel %vm2919, %v9782, %v8734
      %v9850 = vsel %vm2919, %v9784, %v8736
      %v9852 = vsel %vm2919, %v9786, %v8738
      %v9854 = vsel %vm2919, %v9788, %v8740
      %v9856 = vsel %vm2919, %v9790, %v8742
      %v9858 = vsel %vm2919, %v9792, %v8744
      %v9860 = vsel %vm2919, %v9794, %v8746
      %v9862 = vsel %vm2919, %v9796, %v8748
      %v9864 = vsel %vm2919, %v9798, %v8750
      %v9866 = vsel %vm2919, %v9800, %v8752
      %v9868 = vsel %vm2919, %v9802, %v8754
      %v9870 = vsel %vm2919, %v9804, %v8756
      %v9872 = vsel %vm2919, %v9806, %v8758
      %v9874 = vsel %vm2919, %v9808, %v8760
      %v9876 = vsel %vm2919, %v9810, %v8762
      %v9878 = vsel %vm2919, %v9812, %v8764
      %v9880 = vsel %vm2919, %v9814, %v8766
      %v9882 = vsel %vm2919, %v9816, %v8768
      %v9884 = vsel %vm2919, %v9818, %v8770
      %v9886 = vsel %vm2919, %v9820, %v8772
      %v9888 = vsel %vm2919, %v9822, %v8774
      %v9890 = vsel %vm2986, %v9824, %v8795
      %v9892 = vsel %vm2986, %v9826, %v8797
      %v9894 = vsel %vm2986, %v9828, %v8799
      %v9896 = vsel %vm2986, %v9830, %v8801
      %v9898 = vsel %vm2986, %v9832, %v8803
      %v9900 = vsel %vm2986, %v9834, %v8805
      %v9902 = vsel %vm2986, %v9836, %v8807
      %v9904 = vsel %vm2986, %v9838, %v8809
      %v9906 = vsel %vm2986, %v9840, %v8811
      %v9908 = vsel %vm2986, %v9842, %v8813
      %v9910 = vsel %vm2986, %v9844, %v8815
      %v9912 = vsel %vm2986, %v9846, %v8817
      %v9914 = vsel %vm2986, %v9848, %v8819
      %v9916 = vsel %vm2986, %v9850, %v8821
      %v9918 = vsel %vm2986, %v9852, %v8823
      %v9920 = vsel %vm2986, %v9854, %v8825
      %v9922 = vsel %vm2986, %v9856, %v8827
      %v9924 = vsel %vm2986, %v9858, %v8829
      %v9926 = vsel %vm2986, %v9860, %v8831
      %v9928 = vsel %vm2986, %v9862, %v8833
      %v9930 = vsel %vm2986, %v9864, %v8835
      %v9932 = vsel %vm2986, %v9866, %v8837
      %v9934 = vsel %vm2986, %v9868, %v8839
      %v9936 = vsel %vm2986, %v9870, %v8841
      %v9938 = vsel %vm2986, %v9872, %v8843
      %v9940 = vsel %vm2986, %v9874, %v8845
      %v9942 = vsel %vm2986, %v9876, %v8847
      %v9944 = vsel %vm2986, %v9878, %v8849
      %v9946 = vsel %vm2986, %v9880, %v8851
      %v9948 = vsel %vm2986, %v9882, %v8853
      %v9950 = vsel %vm2986, %v9884, %v8855
      %v9952 = vsel %vm2986, %v9886, %v8857
      %v9954 = vsel %vm2986, %v9888, %v8859
      %v9956 = vsel %vm3053, %v9890, %v8891
      %v9958 = vsel %vm3053, %v9892, %v8893
      %v9960 = vsel %vm3053, %v9894, %v8895
      %v9962 = vsel %vm3053, %v9896, %v8897
      %v9964 = vsel %vm3053, %v9898, %v8899
      %v9966 = vsel %vm3053, %v9900, %v8901
      %v9968 = vsel %vm3053, %v9902, %v8903
      %v9970 = vsel %vm3053, %v9904, %v8905
      %v9972 = vsel %vm3053, %v9906, %v8907
      %v9974 = vsel %vm3053, %v9908, %v8909
      %v9976 = vsel %vm3053, %v9910, %v8911
      %v9978 = vsel %vm3053, %v9912, %v8913
      %v9980 = vsel %vm3053, %v9914, %v8915
      %v9982 = vsel %vm3053, %v9916, %v8917
      %v9984 = vsel %vm3053, %v9918, %v8919
      %v9986 = vsel %vm3053, %v9920, %v8921
      %v9988 = vsel %vm3053, %v9922, %v8923
      %v9990 = vsel %vm3053, %v9924, %v8925
      %v9992 = vsel %vm3053, %v9926, %v8927
      %v9994 = vsel %vm3053, %v9928, %v8929
      %v9996 = vsel %vm3053, %v9930, %v8931
      %v9998 = vsel %vm3053, %v9932, %v8933
      %v10000 = vsel %vm3053, %v9934, %v8935
      %v10002 = vsel %vm3053, %v9936, %v8937
      %v10004 = vsel %vm3053, %v9938, %v8939
      %v10006 = vsel %vm3053, %v9940, %v8941
      %v10008 = vsel %vm3053, %v9942, %v8943
      %v10010 = vsel %vm3053, %v9944, %v8945
      %v10012 = vsel %vm3053, %v9946, %v8947
      %v10014 = vsel %vm3053, %v9948, %v8949
      %v10016 = vsel %vm3053, %v9950, %v8951
      %v10018 = vsel %vm3053, %v9952, %v8953
      %v10020 = vsel %vm3053, %v9954, %v8955
      %v10022 = vsel %vm3120, %v9956, %v8968
      %v10024 = vsel %vm3120, %v9958, %v8970
      %v10026 = vsel %vm3120, %v9960, %v8972
      %v10028 = vsel %vm3120, %v9962, %v8974
      %v10030 = vsel %vm3120, %v9964, %v8976
      %v10032 = vsel %vm3120, %v9966, %v8978
      %v10034 = vsel %vm3120, %v9968, %v8980
      %v10036 = vsel %vm3120, %v9970, %v8982
      %v10038 = vsel %vm3120, %v9972, %v8984
      %v10040 = vsel %vm3120, %v9974, %v8986
      %v10042 = vsel %vm3120, %v9976, %v8988
      %v10044 = vsel %vm3120, %v9978, %v8990
      %v10046 = vsel %vm3120, %v9980, %v8992
      %v10048 = vsel %vm3120, %v9982, %v8994
      %v10050 = vsel %vm3120, %v9984, %v8996
      %v10052 = vsel %vm3120, %v9986, %v8998
      %v10054 = vsel %vm3120, %v9988, %v9000
      %v10056 = vsel %vm3120, %v9990, %v9002
      %v10058 = vsel %vm3120, %v9992, %v9004
      %v10060 = vsel %vm3120, %v9994, %v9006
      %v10062 = vsel %vm3120, %v9996, %v9008
      %v10064 = vsel %vm3120, %v9998, %v9010
      %v10066 = vsel %vm3120, %v10000, %v9012
      %v10068 = vsel %vm3120, %v10002, %v9014
      %v10070 = vsel %vm3120, %v10004, %v9016
      %v10072 = vsel %vm3120, %v10006, %v9018
      %v10074 = vsel %vm3120, %v10008, %v9020
      %v10076 = vsel %vm3120, %v10010, %v9022
      %v10078 = vsel %vm3120, %v10012, %v9024
      %v10080 = vsel %vm3120, %v10014, %v9026
      %v10082 = vsel %vm3120, %v10016, %v9028
      %v10084 = vsel %vm3120, %v10018, %v9030
      %v10086 = vsel %vm3120, %v10020, %v9032
      %v10088 = vsel %vm3187, %v10022, %v9040
      %v10090 = vsel %vm3187, %v10024, %v9042
      %v10092 = vsel %vm3187, %v10026, %v9044
      %v10094 = vsel %vm3187, %v10028, %v9046
      %v10096 = vsel %vm3187, %v10030, %v9048
      %v10098 = vsel %vm3187, %v10032, %v9050
      %v10100 = vsel %vm3187, %v10034, %v9052
      %v10102 = vsel %vm3187, %v10036, %v9054
      %v10104 = vsel %vm3187, %v10038, %v9056
      %v10106 = vsel %vm3187, %v10040, %v9058
      %v10108 = vsel %vm3187, %v10042, %v9060
      %v10110 = vsel %vm3187, %v10044, %v9062
      %v10112 = vsel %vm3187, %v10046, %v9064
      %v10114 = vsel %vm3187, %v10048, %v9066
      %v10116 = vsel %vm3187, %v10050, %v9068
      %v10118 = vsel %vm3187, %v10052, %v9070
      %v10120 = vsel %vm3187, %v10054, %v9072
      %v10122 = vsel %vm3187, %v10056, %v9074
      %v10124 = vsel %vm3187, %v10058, %v9076
      %v10126 = vsel %vm3187, %v10060, %v9078
      %v10128 = vsel %vm3187, %v10062, %v9080
      %v10130 = vsel %vm3187, %v10064, %v9082
      %v10132 = vsel %vm3187, %v10066, %v9084
      %v10134 = vsel %vm3187, %v10068, %v9086
      %v10136 = vsel %vm3187, %v10070, %v9088
      %v10138 = vsel %vm3187, %v10072, %v9090
      %v10140 = vsel %vm3187, %v10074, %v9092
      %v10142 = vsel %vm3187, %v10076, %v9094
      %v10144 = vsel %vm3187, %v10078, %v9096
      %v10146 = vsel %vm3187, %v10080, %v9098
      %v10148 = vsel %vm3187, %v10082, %v9100
      %v10150 = vsel %vm3187, %v10084, %v9102
      %v10152 = vsel %vm3187, %v10086, %v9104
      %v10154 = vsel %vm3254, %v10088, %v9143
      %v10156 = vsel %vm3254, %v10090, %v9145
      %v10158 = vsel %vm3254, %v10092, %v9147
      %v10160 = vsel %vm3254, %v10094, %v9149
      %v10162 = vsel %vm3254, %v10096, %v9151
      %v10164 = vsel %vm3254, %v10098, %v9153
      %v10166 = vsel %vm3254, %v10100, %v9155
      %v10168 = vsel %vm3254, %v10102, %v9157
      %v10170 = vsel %vm3254, %v10104, %v9159
      %v10172 = vsel %vm3254, %v10106, %v9161
      %v10174 = vsel %vm3254, %v10108, %v9163
      %v10176 = vsel %vm3254, %v10110, %v9165
      %v10178 = vsel %vm3254, %v10112, %v9167
      %v10180 = vsel %vm3254, %v10114, %v9169
      %v10182 = vsel %vm3254, %v10116, %v9171
      %v10184 = vsel %vm3254, %v10118, %v9173
      %v10186 = vsel %vm3254, %v10120, %v9175
      %v10188 = vsel %vm3254, %v10122, %v9177
      %v10190 = vsel %vm3254, %v10124, %v9179
      %v10192 = vsel %vm3254, %v10126, %v9181
      %v10194 = vsel %vm3254, %v10128, %v9183
      %v10196 = vsel %vm3254, %v10130, %v9185
      %v10198 = vsel %vm3254, %v10132, %v9187
      %v10200 = vsel %vm3254, %v10134, %v9189
      %v10202 = vsel %vm3254, %v10136, %v9191
      %v10204 = vsel %vm3254, %v10138, %v9193
      %v10206 = vsel %vm3254, %v10140, %v9195
      %v10208 = vsel %vm3254, %v10142, %v9197
      %v10210 = vsel %vm3254, %v10144, %v9199
      %v10212 = vsel %vm3254, %v10146, %v9201
      %v10214 = vsel %vm3254, %v10148, %v9203
      %v10216 = vsel %vm3254, %v10150, %v9205
      %v10218 = vsel %vm3254, %v10152, %v9207
      %v10220 = vsel %vm3321, %v10154, %v9222
      %v10222 = vsel %vm3321, %v10156, %v9224
      %v10224 = vsel %vm3321, %v10158, %v9226
      %v10226 = vsel %vm3321, %v10160, %v9228
      %v10228 = vsel %vm3321, %v10162, %v9230
      %v10230 = vsel %vm3321, %v10164, %v9232
      %v10232 = vsel %vm3321, %v10166, %v9234
      %v10234 = vsel %vm3321, %v10168, %v9236
      %v10236 = vsel %vm3321, %v10170, %v9238
      %v10238 = vsel %vm3321, %v10172, %v9240
      %v10240 = vsel %vm3321, %v10174, %v9242
      %v10242 = vsel %vm3321, %v10176, %v9244
      %v10244 = vsel %vm3321, %v10178, %v9246
      %v10246 = vsel %vm3321, %v10180, %v9248
      %v10248 = vsel %vm3321, %v10182, %v9250
      %v10250 = vsel %vm3321, %v10184, %v9252
      %v10252 = vsel %vm3321, %v10186, %v9254
      %v10254 = vsel %vm3321, %v10188, %v9256
      %v10256 = vsel %vm3321, %v10190, %v9258
      %v10258 = vsel %vm3321, %v10192, %v9260
      %v10260 = vsel %vm3321, %v10194, %v9262
      %v10262 = vsel %vm3321, %v10196, %v9264
      %v10264 = vsel %vm3321, %v10198, %v9266
      %v10266 = vsel %vm3321, %v10200, %v9268
      %v10268 = vsel %vm3321, %v10202, %v9270
      %v10270 = vsel %vm3321, %v10204, %v9272
      %v10272 = vsel %vm3321, %v10206, %v9274
      %v10274 = vsel %vm3321, %v10208, %v9276
      %v10276 = vsel %vm3321, %v10210, %v9278
      %v10278 = vsel %vm3321, %v10212, %v9280
      %v10280 = vsel %vm3321, %v10214, %v9282
      %v10282 = vsel %vm3321, %v10216, %v9284
      %v10284 = vsel %vm3321, %v10218, %v9286
      %v10286 = vsel %vm3388, %v10220, %v9294
      %v10288 = vsel %vm3388, %v10222, %v9296
      %v10290 = vsel %vm3388, %v10224, %v9298
      %v10292 = vsel %vm3388, %v10226, %v9300
      %v10294 = vsel %vm3388, %v10228, %v9302
      %v10296 = vsel %vm3388, %v10230, %v9304
      %v10298 = vsel %vm3388, %v10232, %v9306
      %v10300 = vsel %vm3388, %v10234, %v9308
      %v10302 = vsel %vm3388, %v10236, %v9310
      %v10304 = vsel %vm3388, %v10238, %v9312
      %v10306 = vsel %vm3388, %v10240, %v9314
      %v10308 = vsel %vm3388, %v10242, %v9316
      %v10310 = vsel %vm3388, %v10244, %v9318
      %v10312 = vsel %vm3388, %v10246, %v9320
      %v10314 = vsel %vm3388, %v10248, %v9322
      %v10316 = vsel %vm3388, %v10250, %v9324
      %v10318 = vsel %vm3388, %v10252, %v9326
      %v10320 = vsel %vm3388, %v10254, %v9328
      %v10322 = vsel %vm3388, %v10256, %v9330
      %v10324 = vsel %vm3388, %v10258, %v9332
      %v10326 = vsel %vm3388, %v10260, %v9334
      %v10328 = vsel %vm3388, %v10262, %v9336
      %v10330 = vsel %vm3388, %v10264, %v9338
      %v10332 = vsel %vm3388, %v10266, %v9340
      %v10334 = vsel %vm3388, %v10268, %v9342
      %v10336 = vsel %vm3388, %v10270, %v9344
      %v10338 = vsel %vm3388, %v10272, %v9346
      %v10340 = vsel %vm3388, %v10274, %v9348
      %v10342 = vsel %vm3388, %v10276, %v9350
      %v10344 = vsel %vm3388, %v10278, %v9352
      %v10346 = vsel %vm3388, %v10280, %v9354
      %v10348 = vsel %vm3388, %v10282, %v9356
      %v10350 = vsel %vm3388, %v10284, %v9358
      %v10351 = vpack.c.b16 %v9290, %v9036
      %v10353 = vunpack.c.l.b16 %v7297
      %v10354 = vpack.c.b16 %v10353, %v10353
      %v10355 = vrot.slane %v7555, 1
      %v10356 = vor.u32 %v7552, %v10355
      %v10357 = vrot.slane %v7564, 1
      %v10358 = vsel %vm3459, %v10356, %v10357
      %v10359 = vor.u32 %v7561, %v10357
      %v10360 = vrot.slane %v7573, 1
      %v10361 = vsel %vm3459, %v10359, %v10360
      %v10362 = vor.u32 %v7570, %v10360
      %v10363 = vrot.slane %v7582, 1
      %v10364 = vsel %vm3459, %v10362, %v10363
      %v10365 = vor.u32 %v7579, %v10363
      %v10366 = vrot.slane %v7591, 1
      %v10367 = vsel %vm3459, %v10365, %v10366
      %v10368 = vor.u32 %v7588, %v10366
      %v10369 = vrot.slane %v7600, 1
      %v10370 = vsel %vm3459, %v10368, %v10369
      %v10371 = vor.u32 %v7597, %v10369
      %v10372 = vrot.slane %v7609, 1
      %v10373 = vsel %vm3459, %v10371, %v10372
      %v10374 = vor.u32 %v7606, %v10372
      %v10375 = vrot.slane %v7618, 1
      %v10376 = vsel %vm3459, %v10374, %v10375
      %v10377 = vor.u32 %v7615, %v10375
      %v10378 = vrot.slane %v7627, 1
      %v10379 = vsel %vm3459, %v10377, %v10378
      %v10380 = vor.u32 %v7624, %v10378
      %v10381 = vrot.slane %v7636, 1
      %v10382 = vsel %vm3459, %v10380, %v10381
      %v10383 = vor.u32 %v7633, %v10381
      %v10384 = vrot.slane %v7645, 1
      %v10385 = vsel %vm3459, %v10383, %v10384
      %v10386 = vor.u32 %v7642, %v10384
      %v10387 = vrot.slane %v7654, 1
      %v10388 = vsel %vm3459, %v10386, %v10387
      %v10389 = vor.u32 %v7651, %v10387
      %v10390 = vrot.slane %v7663, 1
      %v10391 = vsel %vm3459, %v10389, %v10390
      %v10392 = vor.u32 %v7660, %v10390
      %v10393 = vrot.slane %v7672, 1
      %v10394 = vsel %vm3459, %v10392, %v10393
      %v10395 = vor.u32 %v7669, %v10393
      %v10396 = vrot.slane %v7681, 1
      %v10397 = vsel %vm3459, %v10395, %v10396
      %v10398 = vor.u32 %v7678, %v10396
      %v10399 = vrot.slane %v7690, 1
      %v10400 = vsel %vm3459, %v10398, %v10399
      %v10401 = vor.u32 %v7687, %v10399
      %v10402 = vrot.slane %v7699, 1
      %v10403 = vsel %vm3459, %v10401, %v10402
      %v10404 = vor.u32 %v7696, %v10402
      %v10405 = vrot.slane %v7708, 1
      %v10406 = vsel %vm3459, %v10404, %v10405
      %v10407 = vor.u32 %v7705, %v10405
      %v10408 = vrot.slane %v7717, 1
      %v10409 = vsel %vm3459, %v10407, %v10408
      %v10410 = vor.u32 %v7714, %v10408
      %v10411 = vrot.slane %v7726, 1
      %v10412 = vsel %vm3459, %v10410, %v10411
      %v10413 = vor.u32 %v7723, %v10411
      %v10414 = vrot.slane %v7735, 1
      %v10415 = vsel %vm3459, %v10413, %v10414
      %v10416 = vor.u32 %v7732, %v10414
      %v10417 = vrot.slane %v7744, 1
      %v10418 = vsel %vm3459, %v10416, %v10417
      %v10419 = vor.u32 %v7741, %v10417
      %v10420 = vrot.slane %v7753, 1
      %v10421 = vsel %vm3459, %v10419, %v10420
      %v10422 = vor.u32 %v7750, %v10420
      %v10423 = vrot.slane %v7762, 1
      %v10424 = vsel %vm3459, %v10422, %v10423
      %v10425 = vor.u32 %v7759, %v10423
      %v10426 = vrot.slane %v7771, 1
      %v10427 = vsel %vm3459, %v10425, %v10426
      %v10428 = vor.u32 %v7768, %v10426
      %v10429 = vrot.slane %v7780, 1
      %v10430 = vsel %vm3459, %v10428, %v10429
      %v10431 = vor.u32 %v7777, %v10429
      %v10432 = vrot.slane %v7789, 1
      %v10433 = vsel %vm3459, %v10431, %v10432
      %v10434 = vor.u32 %v7786, %v10432
      %v10435 = vrot.slane %v8631, 1
      %v10436 = vsel %vm3459, %v10434, %v10435
      %v10437 = vor.u32 %v8628, %v10435
      %v10438 = vrot.slane %v8867, 1
      %v10439 = vsel %vm3459, %v10437, %v10438
      %v10440 = vor.u32 %v8864, %v10438
      %v10441 = vrot.slane %v8876, 1
      %v10442 = vsel %vm3459, %v10440, %v10441
      %v10443 = vor.u32 %v8873, %v10441
      %v10444 = vrot.slane %v8885, 1
      %v10445 = vsel %vm3459, %v10443, %v10444
      %v10446 = vor.u32 %v8882, %v10444
      %v10448 = vshll.u32 %v10351, 16
      %v10450 = vrot.slane %v10448, 1
      %v10451 = vsel %vm3459, %v10446, %v10450
      %v10452 = vshrl.u32 %v10351, 16
      %v10454 = vor.u32 %v10452, %v10450
      %v10456 = vshll.u32 %v10354, 16
      %v10458 = vrot.slane %v10456, 1
      %v10459 = vsel %vm3459, %v10454, %v10458
      %10460 = vrot.lane.b32.xlu0 %v10358, 4
      %v10461 = vpop.permute.xlu0 %10460
      %10462 = vrot.lane.b32.xlu0 %v10361, 4
      %v10463 = vpop.permute.xlu0 %10462
      %10464 = vrot.lane.b32.xlu0 %v10364, 4
      %v10465 = vpop.permute.xlu0 %10464
      %10466 = vrot.lane.b32.xlu0 %v10367, 4
      %v10467 = vpop.permute.xlu0 %10466
      %10468 = vrot.lane.b32.xlu0 %v10370, 4
      %v10469 = vpop.permute.xlu0 %10468
      %10470 = vrot.lane.b32.xlu0 %v10373, 4
      %v10471 = vpop.permute.xlu0 %10470
      %10472 = vrot.lane.b32.xlu0 %v10376, 4
      %v10473 = vpop.permute.xlu0 %10472
      %10474 = vrot.lane.b32.xlu0 %v10379, 4
      %v10475 = vpop.permute.xlu0 %10474
      %10476 = vrot.lane.b32.xlu0 %v10382, 4
      %v10477 = vpop.permute.xlu0 %10476
      %10478 = vrot.lane.b32.xlu0 %v10385, 4
      %v10479 = vpop.permute.xlu0 %10478
      %10480 = vrot.lane.b32.xlu0 %v10388, 4
      %v10481 = vpop.permute.xlu0 %10480
      %10482 = vrot.lane.b32.xlu0 %v10391, 4
      %v10483 = vpop.permute.xlu0 %10482
      %10484 = vrot.lane.b32.xlu0 %v10394, 4
      %v10485 = vpop.permute.xlu0 %10484
      %10486 = vrot.lane.b32.xlu0 %v10397, 4
      %v10487 = vpop.permute.xlu0 %10486
      %10488 = vrot.lane.b32.xlu0 %v10400, 4
      %v10489 = vpop.permute.xlu0 %10488
      %10490 = vrot.lane.b32.xlu0 %v10403, 4
      %v10491 = vpop.permute.xlu0 %10490
      %10492 = vrot.lane.b32.xlu0 %v10406, 4
      %v10493 = vpop.permute.xlu0 %10492
      %10494 = vrot.lane.b32.xlu0 %v10409, 4
      %v10495 = vpop.permute.xlu0 %10494
      %10496 = vrot.lane.b32.xlu0 %v10412, 4
      %v10497 = vpop.permute.xlu0 %10496
      %10498 = vrot.lane.b32.xlu0 %v10415, 4
      %v10499 = vpop.permute.xlu0 %10498
      %10500 = vrot.lane.b32.xlu0 %v10418, 4
      %v10501 = vpop.permute.xlu0 %10500
      %10502 = vrot.lane.b32.xlu0 %v10421, 4
      %v10503 = vpop.permute.xlu0 %10502
      %10504 = vrot.lane.b32.xlu0 %v10424, 4
      %v10505 = vpop.permute.xlu0 %10504
      %10506 = vrot.lane.b32.xlu0 %v10427, 4
      %v10507 = vpop.permute.xlu0 %10506
      %10508 = vrot.lane.b32.xlu0 %v10430, 4
      %v10509 = vpop.permute.xlu0 %10508
      %10510 = vrot.lane.b32.xlu0 %v10433, 4
      %v10511 = vpop.permute.xlu0 %10510
      %10512 = vrot.lane.b32.xlu0 %v10436, 4
      %v10513 = vpop.permute.xlu0 %10512
      %10514 = vrot.lane.b32.xlu0 %v10439, 4
      %v10515 = vpop.permute.xlu0 %10514
      %10516 = vrot.lane.b32.xlu0 %v10442, 4
      %v10517 = vpop.permute.xlu0 %10516
      %10518 = vrot.lane.b32.xlu0 %v10445, 4
      %v10519 = vpop.permute.xlu0 %10518
      %10520 = vrot.lane.b32.xlu0 %v10451, 4
      %v10521 = vpop.permute.xlu0 %10520
      %10522 = vrot.lane.b32.xlu0 %v10459, 4
      %v10523 = vpop.permute.xlu0 %10522
      %v10531 = vunpack.c.l.b16 %v7298
      %v10532 = vunpack.c.l.b16 %v7299
      %v10533 = vunpack.c.l.b16 %v7300
      %v10534 = vunpack.c.l.b16 %v7301
      %v10535 = vunpack.c.l.b16 %v7302
      %v10536 = vunpack.c.l.b16 %v7303
      %v10537 = vunpack.c.l.b16 %v7304
      %v10538 = vpack.c.b16 %v7394, %v10531
      %v10539 = vpack.c.b16 %v10532, %v9290
      %v10540 = vpack.c.b16 %v10534, %v10533
      %v10541 = vpack.c.b16 %v10536, %v10535
      %v10542 = vpack.c.b16 %v10537, %v10537
      %v10544 = vshrl.u32 %v10538, 16
      %v10546 = vrot.slane %v10544, 3
      %v10547 = vshll.u32 %v10538, 16
      %v10549 = vrot.slane %v10547, 4
      %v10550 = vor.u32 %v10546, %v10549
      %v10551 = vrot.slane %v8139, 3
      %v10552 = vrot.slane %v8142, 4
      %v10553 = vor.u32 %v10551, %v10552
      %v10554 = vsel %vm3648, %v10550, %v10553
      %v10555 = vrot.slane %v8148, 3
      %v10556 = vrot.slane %v8151, 4
      %v10557 = vor.u32 %v10555, %v10556
      %v10558 = vsel %vm3648, %v10553, %v10557
      %v10559 = vrot.slane %v8157, 3
      %v10560 = vrot.slane %v8160, 4
      %v10561 = vor.u32 %v10559, %v10560
      %v10562 = vsel %vm3648, %v10557, %v10561
      %v10563 = vrot.slane %v8166, 3
      %v10564 = vrot.slane %v8169, 4
      %v10565 = vor.u32 %v10563, %v10564
      %v10566 = vsel %vm3648, %v10561, %v10565
      %v10567 = vrot.slane %v8175, 3
      %v10568 = vrot.slane %v8178, 4
      %v10569 = vor.u32 %v10567, %v10568
      %v10570 = vsel %vm3648, %v10565, %v10569
      %v10571 = vrot.slane %v8184, 3
      %v10572 = vrot.slane %v8187, 4
      %v10573 = vor.u32 %v10571, %v10572
      %v10574 = vsel %vm3648, %v10569, %v10573
      %v10575 = vrot.slane %v8193, 3
      %v10576 = vrot.slane %v8196, 4
      %v10577 = vor.u32 %v10575, %v10576
      %v10578 = vsel %vm3648, %v10573, %v10577
      %v10579 = vrot.slane %v8202, 3
      %v10580 = vrot.slane %v8205, 4
      %v10581 = vor.u32 %v10579, %v10580
      %v10582 = vsel %vm3648, %v10577, %v10581
      %v10583 = vrot.slane %v8211, 3
      %v10584 = vrot.slane %v8214, 4
      %v10585 = vor.u32 %v10583, %v10584
      %v10586 = vsel %vm3648, %v10581, %v10585
      %v10587 = vrot.slane %v8220, 3
      %v10588 = vrot.slane %v8223, 4
      %v10589 = vor.u32 %v10587, %v10588
      %v10590 = vsel %vm3648, %v10585, %v10589
      %v10591 = vrot.slane %v8229, 3
      %v10592 = vrot.slane %v8232, 4
      %v10593 = vor.u32 %v10591, %v10592
      %v10594 = vsel %vm3648, %v10589, %v10593
      %v10595 = vrot.slane %v8238, 3
      %v10596 = vrot.slane %v8241, 4
      %v10597 = vor.u32 %v10595, %v10596
      %v10598 = vsel %vm3648, %v10593, %v10597
      %v10599 = vrot.slane %v8247, 3
      %v10600 = vrot.slane %v8250, 4
      %v10601 = vor.u32 %v10599, %v10600
      %v10602 = vsel %vm3648, %v10597, %v10601
      %v10603 = vrot.slane %v8256, 3
      %v10604 = vrot.slane %v8259, 4
      %v10605 = vor.u32 %v10603, %v10604
      %v10606 = vsel %vm3648, %v10601, %v10605
      %v10607 = vrot.slane %v8265, 3
      %v10608 = vrot.slane %v8268, 4
      %v10609 = vor.u32 %v10607, %v10608
      %v10610 = vsel %vm3648, %v10605, %v10609
      %v10611 = vrot.slane %v8274, 3
      %v10612 = vrot.slane %v8277, 4
      %v10613 = vor.u32 %v10611, %v10612
      %v10614 = vsel %vm3648, %v10609, %v10613
      %v10615 = vrot.slane %v8283, 3
      %v10616 = vrot.slane %v8286, 4
      %v10617 = vor.u32 %v10615, %v10616
      %v10618 = vsel %vm3648, %v10613, %v10617
      %v10619 = vrot.slane %v8292, 3
      %v10620 = vrot.slane %v8295, 4
      %v10621 = vor.u32 %v10619, %v10620
      %v10622 = vsel %vm3648, %v10617, %v10621
      %v10623 = vrot.slane %v8301, 3
      %v10624 = vrot.slane %v8304, 4
      %v10625 = vor.u32 %v10623, %v10624
      %v10626 = vsel %vm3648, %v10621, %v10625
      %v10627 = vrot.slane %v8310, 3
      %v10628 = vrot.slane %v8313, 4
      %v10629 = vor.u32 %v10627, %v10628
      %v10630 = vsel %vm3648, %v10625, %v10629
      %v10631 = vrot.slane %v8319, 3
      %v10632 = vrot.slane %v8322, 4
      %v10633 = vor.u32 %v10631, %v10632
      %v10634 = vsel %vm3648, %v10629, %v10633
      %v10635 = vrot.slane %v8328, 3
      %v10636 = vrot.slane %v8331, 4
      %v10637 = vor.u32 %v10635, %v10636
      %v10638 = vsel %vm3648, %v10633, %v10637
      %v10639 = vrot.slane %v8337, 3
      %v10640 = vrot.slane %v8340, 4
      %v10641 = vor.u32 %v10639, %v10640
      %v10642 = vsel %vm3648, %v10637, %v10641
      %v10643 = vrot.slane %v8346, 3
      %v10644 = vrot.slane %v8349, 4
      %v10645 = vor.u32 %v10643, %v10644
      %v10646 = vsel %vm3648, %v10641, %v10645
      %v10647 = vrot.slane %v9107, 3
      %v10648 = vrot.slane %v9110, 4
      %v10649 = vor.u32 %v10647, %v10648
      %v10650 = vsel %vm3648, %v10645, %v10649
      %v10651 = vrot.slane %v9116, 3
      %v10652 = vrot.slane %v9119, 4
      %v10653 = vor.u32 %v10651, %v10652
      %v10654 = vsel %vm3648, %v10649, %v10653
      %v10655 = vrot.slane %v9125, 3
      %v10656 = vrot.slane %v9128, 4
      %v10657 = vor.u32 %v10655, %v10656
      %v10658 = vsel %vm3648, %v10653, %v10657
      %v10659 = vrot.slane %v9134, 3
      %v10660 = vrot.slane %v9137, 4
      %v10661 = vor.u32 %v10659, %v10660
      %v10662 = vsel %vm3648, %v10657, %v10661
      %v10664 = vshrl.u32 %v10539, 16
      %v10666 = vrot.slane %v10664, 3
      %v10667 = vshll.u32 %v10539, 16
      %v10669 = vrot.slane %v10667, 4
      %v10670 = vor.u32 %v10666, %v10669
      %v10671 = vsel %vm3648, %v10661, %v10670
      %v10673 = vshrl.u32 %v10540, 16
      %v10675 = vrot.slane %v10673, 3
      %v10676 = vshll.u32 %v10540, 16
      %v10678 = vrot.slane %v10676, 4
      %v10679 = vor.u32 %v10675, %v10678
      %v10680 = vsel %vm3648, %v10670, %v10679
      %v10682 = vshrl.u32 %v10541, 16
      %v10684 = vrot.slane %v10682, 3
      %v10685 = vshll.u32 %v10541, 16
      %v10687 = vrot.slane %v10685, 4
      %v10688 = vor.u32 %v10684, %v10687
      %v10689 = vsel %vm3648, %v10679, %v10688
      %v10691 = vshrl.u32 %v10542, 16
      %v10693 = vrot.slane %v10691, 3
      %v10694 = vshll.u32 %v10542, 16
      %v10696 = vrot.slane %v10694, 4
      %v10697 = vor.u32 %v10693, %v10696
      %v10698 = vsel %vm3648, %v10688, %v10697
      %10699 = vrot.lane.b32.xlu0 %v10554, 8
      %v10700 = vpop.permute.xlu0 %10699
      %10701 = vrot.lane.b32.xlu0 %v10558, 8
      %v10702 = vpop.permute.xlu0 %10701
      %10703 = vrot.lane.b32.xlu0 %v10562, 8
      %v10704 = vpop.permute.xlu0 %10703
      %10705 = vrot.lane.b32.xlu0 %v10566, 8
      %v10706 = vpop.permute.xlu0 %10705
      %10707 = vrot.lane.b32.xlu0 %v10570, 8
      %v10708 = vpop.permute.xlu0 %10707
      %10709 = vrot.lane.b32.xlu0 %v10574, 8
      %v10710 = vpop.permute.xlu0 %10709
      %10711 = vrot.lane.b32.xlu0 %v10578, 8
      %v10712 = vpop.permute.xlu0 %10711
      %10713 = vrot.lane.b32.xlu0 %v10582, 8
      %v10714 = vpop.permute.xlu0 %10713
      %10715 = vrot.lane.b32.xlu0 %v10586, 8
      %v10716 = vpop.permute.xlu0 %10715
      %10717 = vrot.lane.b32.xlu0 %v10590, 8
      %v10718 = vpop.permute.xlu0 %10717
      %10719 = vrot.lane.b32.xlu0 %v10594, 8
      %v10720 = vpop.permute.xlu0 %10719
      %10721 = vrot.lane.b32.xlu0 %v10598, 8
      %v10722 = vpop.permute.xlu0 %10721
      %10723 = vrot.lane.b32.xlu0 %v10602, 8
      %v10724 = vpop.permute.xlu0 %10723
      %10725 = vrot.lane.b32.xlu0 %v10606, 8
      %v10726 = vpop.permute.xlu0 %10725
      %10727 = vrot.lane.b32.xlu0 %v10610, 8
      %v10728 = vpop.permute.xlu0 %10727
      %10729 = vrot.lane.b32.xlu0 %v10614, 8
      %v10730 = vpop.permute.xlu0 %10729
      %10731 = vrot.lane.b32.xlu0 %v10618, 8
      %v10732 = vpop.permute.xlu0 %10731
      %10733 = vrot.lane.b32.xlu0 %v10622, 8
      %v10734 = vpop.permute.xlu0 %10733
      %10735 = vrot.lane.b32.xlu0 %v10626, 8
      %v10736 = vpop.permute.xlu0 %10735
      %10737 = vrot.lane.b32.xlu0 %v10630, 8
      %v10738 = vpop.permute.xlu0 %10737
      %10739 = vrot.lane.b32.xlu0 %v10634, 8
      %v10740 = vpop.permute.xlu0 %10739
      %10741 = vrot.lane.b32.xlu0 %v10638, 8
      %v10742 = vpop.permute.xlu0 %10741
      %10743 = vrot.lane.b32.xlu0 %v10642, 8
      %v10744 = vpop.permute.xlu0 %10743
      %10745 = vrot.lane.b32.xlu0 %v10646, 8
      %v10746 = vpop.permute.xlu0 %10745
      %10747 = vrot.lane.b32.xlu0 %v10650, 8
      %v10748 = vpop.permute.xlu0 %10747
      %10749 = vrot.lane.b32.xlu0 %v10654, 8
      %v10750 = vpop.permute.xlu0 %10749
      %10751 = vrot.lane.b32.xlu0 %v10658, 8
      %v10752 = vpop.permute.xlu0 %10751
      %10753 = vrot.lane.b32.xlu0 %v10662, 8
      %v10754 = vpop.permute.xlu0 %10753
      %10755 = vrot.lane.b32.xlu0 %v10671, 8
      %v10756 = vpop.permute.xlu0 %10755
      %10757 = vrot.lane.b32.xlu0 %v10680, 8
      %v10758 = vpop.permute.xlu0 %10757
      %10759 = vrot.lane.b32.xlu0 %v10689, 8
      %v10760 = vpop.permute.xlu0 %10759
      %10761 = vrot.lane.b32.xlu0 %v10698, 8
      %v10762 = vpop.permute.xlu0 %10761
      %v10763 = vpack.c.b16 %v10533, %v10532
      %v10764 = vpack.c.b16 %v10535, %v10534
      %v10765 = vpack.c.b16 %v10537, %v10536
      %10766 = vrot.lane.b32.xlu0 %v8626, 12
      %v10767 = vpop.permute.xlu0 %10766
      %10768 = vrot.lane.b32.xlu0 %v8860, 12
      %v10769 = vpop.permute.xlu0 %10768
      %10770 = vrot.lane.b32.xlu0 %v8861, 12
      %v10771 = vpop.permute.xlu0 %10770
      %10772 = vrot.lane.b32.xlu0 %v8862, 12
      %v10773 = vpop.permute.xlu0 %10772
      %10774 = vrot.lane.b32.xlu0 %v10351, 12
      %v10775 = vpop.permute.xlu0 %10774
      %10776 = vrot.lane.b32.xlu0 %v10763, 12
      %v10777 = vpop.permute.xlu0 %10776
      %10778 = vrot.lane.b32.xlu0 %v10764, 12
      %v10779 = vpop.permute.xlu0 %10778
      %10780 = vrot.lane.b32.xlu0 %v10765, 12
      %v10781 = vpop.permute.xlu0 %10780
      %v10783 = vunpack.c.l.b16 %v7305
      %v10784 = vpack.c.b16 %v10783, %v10783
      %v10786 = vshll.u32 %v10763, 16
      %v10788 = vrot.slane %v10786, 1
      %v10789 = vsel %vm3459, %v10454, %v10788
      %v10790 = vshrl.u32 %v10763, 16
      %v10792 = vor.u32 %v10790, %v10788
      %v10794 = vshll.u32 %v10764, 16
      %v10796 = vrot.slane %v10794, 1
      %v10797 = vsel %vm3459, %v10792, %v10796
      %v10798 = vshrl.u32 %v10764, 16
      %v10800 = vor.u32 %v10798, %v10796
      %v10802 = vshll.u32 %v10765, 16
      %v10804 = vrot.slane %v10802, 1
      %v10805 = vsel %vm3459, %v10800, %v10804
      %v10806 = vshrl.u32 %v10765, 16
      %v10808 = vor.u32 %v10806, %v10804
      %v10810 = vshll.u32 %v10784, 16
      %v10812 = vrot.slane %v10810, 1
      %v10813 = vsel %vm3459, %v10808, %v10812
      %10814 = vrot.lane.b32.xlu0 %v10367, 16
      %v10815 = vpop.permute.xlu0 %10814
      %10816 = vrot.lane.b32.xlu0 %v10370, 16
      %v10817 = vpop.permute.xlu0 %10816
      %10818 = vrot.lane.b32.xlu0 %v10373, 16
      %v10819 = vpop.permute.xlu0 %10818
      %10820 = vrot.lane.b32.xlu0 %v10376, 16
      %v10821 = vpop.permute.xlu0 %10820
      %10822 = vrot.lane.b32.xlu0 %v10379, 16
      %v10823 = vpop.permute.xlu0 %10822
      %10824 = vrot.lane.b32.xlu0 %v10382, 16
      %v10825 = vpop.permute.xlu0 %10824
      %10826 = vrot.lane.b32.xlu0 %v10385, 16
      %v10827 = vpop.permute.xlu0 %10826
      %10828 = vrot.lane.b32.xlu0 %v10388, 16
      %v10829 = vpop.permute.xlu0 %10828
      %10830 = vrot.lane.b32.xlu0 %v10391, 16
      %v10831 = vpop.permute.xlu0 %10830
      %10832 = vrot.lane.b32.xlu0 %v10394, 16
      %v10833 = vpop.permute.xlu0 %10832
      %10834 = vrot.lane.b32.xlu0 %v10397, 16
      %v10835 = vpop.permute.xlu0 %10834
      %10836 = vrot.lane.b32.xlu0 %v10400, 16
      %v10837 = vpop.permute.xlu0 %10836
      %10838 = vrot.lane.b32.xlu0 %v10403, 16
      %v10839 = vpop.permute.xlu0 %10838
      %10840 = vrot.lane.b32.xlu0 %v10406, 16
      %v10841 = vpop.permute.xlu0 %10840
      %10842 = vrot.lane.b32.xlu0 %v10409, 16
      %v10843 = vpop.permute.xlu0 %10842
      %10844 = vrot.lane.b32.xlu0 %v10412, 16
      %v10845 = vpop.permute.xlu0 %10844
      %10846 = vrot.lane.b32.xlu0 %v10415, 16
      %v10847 = vpop.permute.xlu0 %10846
      %10848 = vrot.lane.b32.xlu0 %v10418, 16
      %v10849 = vpop.permute.xlu0 %10848
      %10850 = vrot.lane.b32.xlu0 %v10421, 16
      %v10851 = vpop.permute.xlu0 %10850
      %10852 = vrot.lane.b32.xlu0 %v10424, 16
      %v10853 = vpop.permute.xlu0 %10852
      %10854 = vrot.lane.b32.xlu0 %v10427, 16
      %v10855 = vpop.permute.xlu0 %10854
      %10856 = vrot.lane.b32.xlu0 %v10430, 16
      %v10857 = vpop.permute.xlu0 %10856
      %10858 = vrot.lane.b32.xlu0 %v10433, 16
      %v10859 = vpop.permute.xlu0 %10858
      %10860 = vrot.lane.b32.xlu0 %v10436, 16
      %v10861 = vpop.permute.xlu0 %10860
      %10862 = vrot.lane.b32.xlu0 %v10439, 16
      %v10863 = vpop.permute.xlu0 %10862
      %10864 = vrot.lane.b32.xlu0 %v10442, 16
      %v10865 = vpop.permute.xlu0 %10864
      %10866 = vrot.lane.b32.xlu0 %v10445, 16
      %v10867 = vpop.permute.xlu0 %10866
      %10868 = vrot.lane.b32.xlu0 %v10451, 16
      %v10869 = vpop.permute.xlu0 %10868
      %10870 = vrot.lane.b32.xlu0 %v10789, 16
      %v10871 = vpop.permute.xlu0 %10870
      %10872 = vrot.lane.b32.xlu0 %v10797, 16
      %v10873 = vpop.permute.xlu0 %10872
      %10874 = vrot.lane.b32.xlu0 %v10805, 16
      %v10875 = vpop.permute.xlu0 %10874
      %10876 = vrot.lane.b32.xlu0 %v10813, 16
      %v10877 = vpop.permute.xlu0 %10876
      %v10880 = vunpack.c.l.b16 %v7306
      %v10881 = vunpack.c.l.b16 %v7307
      %v10882 = vpack.c.b16 %v7395, %v10880
      %v10883 = vpack.c.b16 %v10881, %v10881
      %v10885 = vshrl.u32 %v10882, 16
      %v10887 = vrot.slane %v10885, 3
      %v10888 = vshll.u32 %v10882, 16
      %v10890 = vrot.slane %v10888, 4
      %v10891 = vor.u32 %v10887, %v10890
      %v10892 = vrot.slane %v7588, 3
      %v10893 = vrot.slane %v7591, 4
      %v10894 = vor.u32 %v10892, %v10893
      %v10895 = vsel %vm3648, %v10891, %v10894
      %v10896 = vrot.slane %v7597, 3
      %v10897 = vrot.slane %v7600, 4
      %v10898 = vor.u32 %v10896, %v10897
      %v10899 = vsel %vm3648, %v10894, %v10898
      %v10900 = vrot.slane %v7606, 3
      %v10901 = vrot.slane %v7609, 4
      %v10902 = vor.u32 %v10900, %v10901
      %v10903 = vsel %vm3648, %v10898, %v10902
      %v10904 = vrot.slane %v7615, 3
      %v10905 = vrot.slane %v7618, 4
      %v10906 = vor.u32 %v10904, %v10905
      %v10907 = vsel %vm3648, %v10902, %v10906
      %v10908 = vrot.slane %v7624, 3
      %v10909 = vrot.slane %v7627, 4
      %v10910 = vor.u32 %v10908, %v10909
      %v10911 = vsel %vm3648, %v10906, %v10910
      %v10912 = vrot.slane %v7633, 3
      %v10913 = vrot.slane %v7636, 4
      %v10914 = vor.u32 %v10912, %v10913
      %v10915 = vsel %vm3648, %v10910, %v10914
      %v10916 = vrot.slane %v7642, 3
      %v10917 = vrot.slane %v7645, 4
      %v10918 = vor.u32 %v10916, %v10917
      %v10919 = vsel %vm3648, %v10914, %v10918
      %v10920 = vrot.slane %v7651, 3
      %v10921 = vrot.slane %v7654, 4
      %v10922 = vor.u32 %v10920, %v10921
      %v10923 = vsel %vm3648, %v10918, %v10922
      %v10924 = vrot.slane %v7660, 3
      %v10925 = vrot.slane %v7663, 4
      %v10926 = vor.u32 %v10924, %v10925
      %v10927 = vsel %vm3648, %v10922, %v10926
      %v10928 = vrot.slane %v7669, 3
      %v10929 = vrot.slane %v7672, 4
      %v10930 = vor.u32 %v10928, %v10929
      %v10931 = vsel %vm3648, %v10926, %v10930
      %v10932 = vrot.slane %v7678, 3
      %v10933 = vrot.slane %v7681, 4
      %v10934 = vor.u32 %v10932, %v10933
      %v10935 = vsel %vm3648, %v10930, %v10934
      %v10936 = vrot.slane %v7687, 3
      %v10937 = vrot.slane %v7690, 4
      %v10938 = vor.u32 %v10936, %v10937
      %v10939 = vsel %vm3648, %v10934, %v10938
      %v10940 = vrot.slane %v7696, 3
      %v10941 = vrot.slane %v7699, 4
      %v10942 = vor.u32 %v10940, %v10941
      %v10943 = vsel %vm3648, %v10938, %v10942
      %v10944 = vrot.slane %v7705, 3
      %v10945 = vrot.slane %v7708, 4
      %v10946 = vor.u32 %v10944, %v10945
      %v10947 = vsel %vm3648, %v10942, %v10946
      %v10948 = vrot.slane %v7714, 3
      %v10949 = vrot.slane %v7717, 4
      %v10950 = vor.u32 %v10948, %v10949
      %v10951 = vsel %vm3648, %v10946, %v10950
      %v10952 = vrot.slane %v7723, 3
      %v10953 = vrot.slane %v7726, 4
      %v10954 = vor.u32 %v10952, %v10953
      %v10955 = vsel %vm3648, %v10950, %v10954
      %v10956 = vrot.slane %v7732, 3
      %v10957 = vrot.slane %v7735, 4
      %v10958 = vor.u32 %v10956, %v10957
      %v10959 = vsel %vm3648, %v10954, %v10958
      %v10960 = vrot.slane %v7741, 3
      %v10961 = vrot.slane %v7744, 4
      %v10962 = vor.u32 %v10960, %v10961
      %v10963 = vsel %vm3648, %v10958, %v10962
      %v10964 = vrot.slane %v7750, 3
      %v10965 = vrot.slane %v7753, 4
      %v10966 = vor.u32 %v10964, %v10965
      %v10967 = vsel %vm3648, %v10962, %v10966
      %v10968 = vrot.slane %v7759, 3
      %v10969 = vrot.slane %v7762, 4
      %v10970 = vor.u32 %v10968, %v10969
      %v10971 = vsel %vm3648, %v10966, %v10970
      %v10972 = vrot.slane %v7768, 3
      %v10973 = vrot.slane %v7771, 4
      %v10974 = vor.u32 %v10972, %v10973
      %v10975 = vsel %vm3648, %v10970, %v10974
      %v10976 = vrot.slane %v7777, 3
      %v10977 = vrot.slane %v7780, 4
      %v10978 = vor.u32 %v10976, %v10977
      %v10979 = vsel %vm3648, %v10974, %v10978
      %v10980 = vrot.slane %v7786, 3
      %v10981 = vrot.slane %v7789, 4
      %v10982 = vor.u32 %v10980, %v10981
      %v10983 = vsel %vm3648, %v10978, %v10982
      %v10984 = vrot.slane %v8628, 3
      %v10985 = vrot.slane %v8631, 4
      %v10986 = vor.u32 %v10984, %v10985
      %v10987 = vsel %vm3648, %v10982, %v10986
      %v10988 = vrot.slane %v8864, 3
      %v10989 = vrot.slane %v8867, 4
      %v10990 = vor.u32 %v10988, %v10989
      %v10991 = vsel %vm3648, %v10986, %v10990
      %v10992 = vrot.slane %v8873, 3
      %v10993 = vrot.slane %v8876, 4
      %v10994 = vor.u32 %v10992, %v10993
      %v10995 = vsel %vm3648, %v10990, %v10994
      %v10996 = vrot.slane %v8882, 3
      %v10997 = vrot.slane %v8885, 4
      %v10998 = vor.u32 %v10996, %v10997
      %v10999 = vsel %vm3648, %v10994, %v10998
      %v11000 = vrot.slane %v10452, 3
      %v11001 = vrot.slane %v10448, 4
      %v11002 = vor.u32 %v11000, %v11001
      %v11003 = vsel %vm3648, %v10998, %v11002
      %v11004 = vrot.slane %v10790, 3
      %v11005 = vrot.slane %v10786, 4
      %v11006 = vor.u32 %v11004, %v11005
      %v11007 = vsel %vm3648, %v11002, %v11006
      %v11008 = vrot.slane %v10798, 3
      %v11009 = vrot.slane %v10794, 4
      %v11010 = vor.u32 %v11008, %v11009
      %v11011 = vsel %vm3648, %v11006, %v11010
      %v11012 = vrot.slane %v10806, 3
      %v11013 = vrot.slane %v10802, 4
      %v11014 = vor.u32 %v11012, %v11013
      %v11015 = vsel %vm3648, %v11010, %v11014
      %v11017 = vshrl.u32 %v10883, 16
      %v11019 = vrot.slane %v11017, 3
      %v11020 = vshll.u32 %v10883, 16
      %v11022 = vrot.slane %v11020, 4
      %v11023 = vor.u32 %v11019, %v11022
      %v11024 = vsel %vm3648, %v11014, %v11023
      %11025 = vrot.lane.b32.xlu0 %v10895, 20
      %v11026 = vpop.permute.xlu0 %11025
      %11027 = vrot.lane.b32.xlu0 %v10899, 20
      %v11028 = vpop.permute.xlu0 %11027
      %11029 = vrot.lane.b32.xlu0 %v10903, 20
      %v11030 = vpop.permute.xlu0 %11029
      %11031 = vrot.lane.b32.xlu0 %v10907, 20
      %v11032 = vpop.permute.xlu0 %11031
      %11033 = vrot.lane.b32.xlu0 %v10911, 20
      %v11034 = vpop.permute.xlu0 %11033
      %11035 = vrot.lane.b32.xlu0 %v10915, 20
      %v11036 = vpop.permute.xlu0 %11035
      %11037 = vrot.lane.b32.xlu0 %v10919, 20
      %v11038 = vpop.permute.xlu0 %11037
      %11039 = vrot.lane.b32.xlu0 %v10923, 20
      %v11040 = vpop.permute.xlu0 %11039
      %11041 = vrot.lane.b32.xlu0 %v10927, 20
      %v11042 = vpop.permute.xlu0 %11041
      %11043 = vrot.lane.b32.xlu0 %v10931, 20
      %v11044 = vpop.permute.xlu0 %11043
      %11045 = vrot.lane.b32.xlu0 %v10935, 20
      %v11046 = vpop.permute.xlu0 %11045
      %11047 = vrot.lane.b32.xlu0 %v10939, 20
      %v11048 = vpop.permute.xlu0 %11047
      %11049 = vrot.lane.b32.xlu0 %v10943, 20
      %v11050 = vpop.permute.xlu0 %11049
      %11051 = vrot.lane.b32.xlu0 %v10947, 20
      %v11052 = vpop.permute.xlu0 %11051
      %11053 = vrot.lane.b32.xlu0 %v10951, 20
      %v11054 = vpop.permute.xlu0 %11053
      %11055 = vrot.lane.b32.xlu0 %v10955, 20
      %v11056 = vpop.permute.xlu0 %11055
      %11057 = vrot.lane.b32.xlu0 %v10959, 20
      %v11058 = vpop.permute.xlu0 %11057
      %11059 = vrot.lane.b32.xlu0 %v10963, 20
      %v11060 = vpop.permute.xlu0 %11059
      %11061 = vrot.lane.b32.xlu0 %v10967, 20
      %v11062 = vpop.permute.xlu0 %11061
      %11063 = vrot.lane.b32.xlu0 %v10971, 20
      %v11064 = vpop.permute.xlu0 %11063
      %11065 = vrot.lane.b32.xlu0 %v10975, 20
      %v11066 = vpop.permute.xlu0 %11065
      %11067 = vrot.lane.b32.xlu0 %v10979, 20
      %v11068 = vpop.permute.xlu0 %11067
      %11069 = vrot.lane.b32.xlu0 %v10983, 20
      %v11070 = vpop.permute.xlu0 %11069
      %11071 = vrot.lane.b32.xlu0 %v10987, 20
      %v11072 = vpop.permute.xlu0 %11071
      %11073 = vrot.lane.b32.xlu0 %v10991, 20
      %v11074 = vpop.permute.xlu0 %11073
      %11075 = vrot.lane.b32.xlu0 %v10995, 20
      %v11076 = vpop.permute.xlu0 %11075
      %11077 = vrot.lane.b32.xlu0 %v10999, 20
      %v11078 = vpop.permute.xlu0 %11077
      %11079 = vrot.lane.b32.xlu0 %v11003, 20
      %v11080 = vpop.permute.xlu0 %11079
      %11081 = vrot.lane.b32.xlu0 %v11007, 20
      %v11082 = vpop.permute.xlu0 %11081
      %11083 = vrot.lane.b32.xlu0 %v11011, 20
      %v11084 = vpop.permute.xlu0 %11083
      %11085 = vrot.lane.b32.xlu0 %v11015, 20
      %v11086 = vpop.permute.xlu0 %11085
      %11087 = vrot.lane.b32.xlu0 %v11024, 20
      %v11088 = vpop.permute.xlu0 %11087
      %v11089 = vpack.c.b16 %v10881, %v10537
      %11090 = vrot.lane.b32.xlu0 %v8790, 24
      %v11091 = vpop.permute.xlu0 %11090
      %11092 = vrot.lane.b32.xlu0 %v8791, 24
      %v11093 = vpop.permute.xlu0 %11092
      %11094 = vrot.lane.b32.xlu0 %v8792, 24
      %v11095 = vpop.permute.xlu0 %11094
      %11096 = vrot.lane.b32.xlu0 %v9105, 24
      %v11097 = vpop.permute.xlu0 %11096
      %11098 = vrot.lane.b32.xlu0 %v10539, 24
      %v11099 = vpop.permute.xlu0 %11098
      %11100 = vrot.lane.b32.xlu0 %v10540, 24
      %v11101 = vpop.permute.xlu0 %11100
      %11102 = vrot.lane.b32.xlu0 %v10541, 24
      %v11103 = vpop.permute.xlu0 %11102
      %11104 = vrot.lane.b32.xlu0 %v11089, 24
      %v11105 = vpop.permute.xlu0 %11104
      %v11107 = vunpack.c.l.b16 %v7308
      %v11108 = vpack.c.b16 %v11107, %v11107
      %v11109 = vrot.slane %v8142, 1
      %v11110 = vor.u32 %v8139, %v11109
      %v11111 = vrot.slane %v8151, 1
      %v11112 = vsel %vm3459, %v11110, %v11111
      %v11113 = vor.u32 %v8148, %v11111
      %v11114 = vrot.slane %v8160, 1
      %v11115 = vsel %vm3459, %v11113, %v11114
      %v11116 = vor.u32 %v8157, %v11114
      %v11117 = vrot.slane %v8169, 1
      %v11118 = vsel %vm3459, %v11116, %v11117
      %v11119 = vor.u32 %v8166, %v11117
      %v11120 = vrot.slane %v8178, 1
      %v11121 = vsel %vm3459, %v11119, %v11120
      %v11122 = vor.u32 %v8175, %v11120
      %v11123 = vrot.slane %v8187, 1
      %v11124 = vsel %vm3459, %v11122, %v11123
      %v11125 = vor.u32 %v8184, %v11123
      %v11126 = vrot.slane %v8196, 1
      %v11127 = vsel %vm3459, %v11125, %v11126
      %v11128 = vor.u32 %v8193, %v11126
      %v11129 = vrot.slane %v8205, 1
      %v11130 = vsel %vm3459, %v11128, %v11129
      %v11131 = vor.u32 %v8202, %v11129
      %v11132 = vrot.slane %v8214, 1
      %v11133 = vsel %vm3459, %v11131, %v11132
      %v11134 = vor.u32 %v8211, %v11132
      %v11135 = vrot.slane %v8223, 1
      %v11136 = vsel %vm3459, %v11134, %v11135
      %v11137 = vor.u32 %v8220, %v11135
      %v11138 = vrot.slane %v8232, 1
      %v11139 = vsel %vm3459, %v11137, %v11138
      %v11140 = vor.u32 %v8229, %v11138
      %v11141 = vrot.slane %v8241, 1
      %v11142 = vsel %vm3459, %v11140, %v11141
      %v11143 = vor.u32 %v8238, %v11141
      %v11144 = vrot.slane %v8250, 1
      %v11145 = vsel %vm3459, %v11143, %v11144
      %v11146 = vor.u32 %v8247, %v11144
      %v11147 = vrot.slane %v8259, 1
      %v11148 = vsel %vm3459, %v11146, %v11147
      %v11149 = vor.u32 %v8256, %v11147
      %v11150 = vrot.slane %v8268, 1
      %v11151 = vsel %vm3459, %v11149, %v11150
      %v11152 = vor.u32 %v8265, %v11150
      %v11153 = vrot.slane %v8277, 1
      %v11154 = vsel %vm3459, %v11152, %v11153
      %v11155 = vor.u32 %v8274, %v11153
      %v11156 = vrot.slane %v8286, 1
      %v11157 = vsel %vm3459, %v11155, %v11156
      %v11158 = vor.u32 %v8283, %v11156
      %v11159 = vrot.slane %v8295, 1
      %v11160 = vsel %vm3459, %v11158, %v11159
      %v11161 = vor.u32 %v8292, %v11159
      %v11162 = vrot.slane %v8304, 1
      %v11163 = vsel %vm3459, %v11161, %v11162
      %v11164 = vor.u32 %v8301, %v11162
      %v11165 = vrot.slane %v8313, 1
      %v11166 = vsel %vm3459, %v11164, %v11165
      %v11167 = vor.u32 %v8310, %v11165
      %v11168 = vrot.slane %v8322, 1
      %v11169 = vsel %vm3459, %v11167, %v11168
      %v11170 = vor.u32 %v8319, %v11168
      %v11171 = vrot.slane %v8331, 1
      %v11172 = vsel %vm3459, %v11170, %v11171
      %v11173 = vor.u32 %v8328, %v11171
      %v11174 = vrot.slane %v8340, 1
      %v11175 = vsel %vm3459, %v11173, %v11174
      %v11176 = vor.u32 %v8337, %v11174
      %v11177 = vrot.slane %v8349, 1
      %v11178 = vsel %vm3459, %v11176, %v11177
      %v11179 = vor.u32 %v8346, %v11177
      %v11180 = vrot.slane %v9110, 1
      %v11181 = vsel %vm3459, %v11179, %v11180
      %v11182 = vor.u32 %v9107, %v11180
      %v11183 = vrot.slane %v9119, 1
      %v11184 = vsel %vm3459, %v11182, %v11183
      %v11185 = vor.u32 %v9116, %v11183
      %v11186 = vrot.slane %v9128, 1
      %v11187 = vsel %vm3459, %v11185, %v11186
      %v11188 = vor.u32 %v9125, %v11186
      %v11189 = vrot.slane %v9137, 1
      %v11190 = vsel %vm3459, %v11188, %v11189
      %v11191 = vor.u32 %v9134, %v11189
      %v11192 = vrot.slane %v10667, 1
      %v11193 = vsel %vm3459, %v11191, %v11192
      %v11194 = vor.u32 %v10664, %v11192
      %v11195 = vrot.slane %v10676, 1
      %v11196 = vsel %vm3459, %v11194, %v11195
      %v11197 = vor.u32 %v10673, %v11195
      %v11198 = vrot.slane %v10685, 1
      %v11199 = vsel %vm3459, %v11197, %v11198
      %v11200 = vor.u32 %v10682, %v11198
      %v11202 = vshll.u32 %v11089, 16
      %v11204 = vrot.slane %v11202, 1
      %v11205 = vsel %vm3459, %v11200, %v11204
      %v11206 = vshrl.u32 %v11089, 16
      %v11208 = vor.u32 %v11206, %v11204
      %v11210 = vshll.u32 %v11108, 16
      %v11212 = vrot.slane %v11210, 1
      %v11213 = vsel %vm3459, %v11208, %v11212
      %11214 = vrot.lane.b32.xlu0 %v11112, 28
      %v11215 = vpop.permute.xlu0 %11214
      %11216 = vrot.lane.b32.xlu0 %v11115, 28
      %v11217 = vpop.permute.xlu0 %11216
      %11218 = vrot.lane.b32.xlu0 %v11118, 28
      %v11219 = vpop.permute.xlu0 %11218
      %11220 = vrot.lane.b32.xlu0 %v11121, 28
      %v11221 = vpop.permute.xlu0 %11220
      %11222 = vrot.lane.b32.xlu0 %v11124, 28
      %v11223 = vpop.permute.xlu0 %11222
      %11224 = vrot.lane.b32.xlu0 %v11127, 28
      %v11225 = vpop.permute.xlu0 %11224
      %11226 = vrot.lane.b32.xlu0 %v11130, 28
      %v11227 = vpop.permute.xlu0 %11226
      %11228 = vrot.lane.b32.xlu0 %v11133, 28
      %v11229 = vpop.permute.xlu0 %11228
      %11230 = vrot.lane.b32.xlu0 %v11136, 28
      %v11231 = vpop.permute.xlu0 %11230
      %11232 = vrot.lane.b32.xlu0 %v11139, 28
      %v11233 = vpop.permute.xlu0 %11232
      %11234 = vrot.lane.b32.xlu0 %v11142, 28
      %v11235 = vpop.permute.xlu0 %11234
      %11236 = vrot.lane.b32.xlu0 %v11145, 28
      %v11237 = vpop.permute.xlu0 %11236
      %11238 = vrot.lane.b32.xlu0 %v11148, 28
      %v11239 = vpop.permute.xlu0 %11238
      %11240 = vrot.lane.b32.xlu0 %v11151, 28
      %v11241 = vpop.permute.xlu0 %11240
      %11242 = vrot.lane.b32.xlu0 %v11154, 28
      %v11243 = vpop.permute.xlu0 %11242
      %11244 = vrot.lane.b32.xlu0 %v11157, 28
      %v11245 = vpop.permute.xlu0 %11244
      %11246 = vrot.lane.b32.xlu0 %v11160, 28
      %v11247 = vpop.permute.xlu0 %11246
      %11248 = vrot.lane.b32.xlu0 %v11163, 28
      %v11249 = vpop.permute.xlu0 %11248
      %11250 = vrot.lane.b32.xlu0 %v11166, 28
      %v11251 = vpop.permute.xlu0 %11250
      %11252 = vrot.lane.b32.xlu0 %v11169, 28
      %v11253 = vpop.permute.xlu0 %11252
      %11254 = vrot.lane.b32.xlu0 %v11172, 28
      %v11255 = vpop.permute.xlu0 %11254
      %11256 = vrot.lane.b32.xlu0 %v11175, 28
      %v11257 = vpop.permute.xlu0 %11256
      %11258 = vrot.lane.b32.xlu0 %v11178, 28
      %v11259 = vpop.permute.xlu0 %11258
      %11260 = vrot.lane.b32.xlu0 %v11181, 28
      %v11261 = vpop.permute.xlu0 %11260
      %11262 = vrot.lane.b32.xlu0 %v11184, 28
      %v11263 = vpop.permute.xlu0 %11262
      %11264 = vrot.lane.b32.xlu0 %v11187, 28
      %v11265 = vpop.permute.xlu0 %11264
      %11266 = vrot.lane.b32.xlu0 %v11190, 28
      %v11267 = vpop.permute.xlu0 %11266
      %11268 = vrot.lane.b32.xlu0 %v11193, 28
      %v11269 = vpop.permute.xlu0 %11268
      %11270 = vrot.lane.b32.xlu0 %v11196, 28
      %v11271 = vpop.permute.xlu0 %11270
      %11272 = vrot.lane.b32.xlu0 %v11199, 28
      %v11273 = vpop.permute.xlu0 %11272
      %11274 = vrot.lane.b32.xlu0 %v11205, 28
      %v11275 = vpop.permute.xlu0 %11274
      %11276 = vrot.lane.b32.xlu0 %v11213, 28
      %v11277 = vpop.permute.xlu0 %11276
      %v11280 = vunpack.c.l.b16 %v7309
      %v11281 = vunpack.c.l.b16 %v7310
      %v11282 = vpack.c.b16 %v7396, %v11280
      %v11283 = vpack.c.b16 %v11281, %v11281
      %v11285 = vshrl.u32 %v11282, 16
      %v11287 = vrot.slane %v11285, 3
      %v11288 = vshll.u32 %v11282, 16
      %v11290 = vrot.slane %v11288, 4
      %v11291 = vor.u32 %v11287, %v11290
      %v11292 = vsel %vm3648, %v11291, %v10557
      %v11293 = vrot.slane %v11206, 3
      %v11294 = vrot.slane %v11202, 4
      %v11295 = vor.u32 %v11293, %v11294
      %v11296 = vsel %vm3648, %v10688, %v11295
      %v11298 = vshrl.u32 %v11283, 16
      %v11300 = vrot.slane %v11298, 3
      %v11301 = vshll.u32 %v11283, 16
      %v11303 = vrot.slane %v11301, 4
      %v11304 = vor.u32 %v11300, %v11303
      %v11305 = vsel %vm3648, %v11295, %v11304
      %11306 = vrot.lane.b32.xlu0 %v11292, 32
      %v11307 = vpop.permute.xlu0 %11306
      %11308 = vrot.lane.b32.xlu0 %v10562, 32
      %v11309 = vpop.permute.xlu0 %11308
      %11310 = vrot.lane.b32.xlu0 %v10566, 32
      %v11311 = vpop.permute.xlu0 %11310
      %11312 = vrot.lane.b32.xlu0 %v10570, 32
      %v11313 = vpop.permute.xlu0 %11312
      %11314 = vrot.lane.b32.xlu0 %v10574, 32
      %v11315 = vpop.permute.xlu0 %11314
      %11316 = vrot.lane.b32.xlu0 %v10578, 32
      %v11317 = vpop.permute.xlu0 %11316
      %11318 = vrot.lane.b32.xlu0 %v10582, 32
      %v11319 = vpop.permute.xlu0 %11318
      %11320 = vrot.lane.b32.xlu0 %v10586, 32
      %v11321 = vpop.permute.xlu0 %11320
      %11322 = vrot.lane.b32.xlu0 %v10590, 32
      %v11323 = vpop.permute.xlu0 %11322
      %11324 = vrot.lane.b32.xlu0 %v10594, 32
      %v11325 = vpop.permute.xlu0 %11324
      %11326 = vrot.lane.b32.xlu0 %v10598, 32
      %v11327 = vpop.permute.xlu0 %11326
      %11328 = vrot.lane.b32.xlu0 %v10602, 32
      %v11329 = vpop.permute.xlu0 %11328
      %11330 = vrot.lane.b32.xlu0 %v10606, 32
      %v11331 = vpop.permute.xlu0 %11330
      %11332 = vrot.lane.b32.xlu0 %v10610, 32
      %v11333 = vpop.permute.xlu0 %11332
      %11334 = vrot.lane.b32.xlu0 %v10614, 32
      %v11335 = vpop.permute.xlu0 %11334
      %11336 = vrot.lane.b32.xlu0 %v10618, 32
      %v11337 = vpop.permute.xlu0 %11336
      %11338 = vrot.lane.b32.xlu0 %v10622, 32
      %v11339 = vpop.permute.xlu0 %11338
      %11340 = vrot.lane.b32.xlu0 %v10626, 32
      %v11341 = vpop.permute.xlu0 %11340
      %11342 = vrot.lane.b32.xlu0 %v10630, 32
      %v11343 = vpop.permute.xlu0 %11342
      %11344 = vrot.lane.b32.xlu0 %v10634, 32
      %v11345 = vpop.permute.xlu0 %11344
      %11346 = vrot.lane.b32.xlu0 %v10638, 32
      %v11347 = vpop.permute.xlu0 %11346
      %11348 = vrot.lane.b32.xlu0 %v10642, 32
      %v11349 = vpop.permute.xlu0 %11348
      %11350 = vrot.lane.b32.xlu0 %v10646, 32
      %v11351 = vpop.permute.xlu0 %11350
      %11352 = vrot.lane.b32.xlu0 %v10650, 32
      %v11353 = vpop.permute.xlu0 %11352
      %11354 = vrot.lane.b32.xlu0 %v10654, 32
      %v11355 = vpop.permute.xlu0 %11354
      %11356 = vrot.lane.b32.xlu0 %v10658, 32
      %v11357 = vpop.permute.xlu0 %11356
      %11358 = vrot.lane.b32.xlu0 %v10662, 32
      %v11359 = vpop.permute.xlu0 %11358
      %11360 = vrot.lane.b32.xlu0 %v10671, 32
      %v11361 = vpop.permute.xlu0 %11360
      %11362 = vrot.lane.b32.xlu0 %v10680, 32
      %v11363 = vpop.permute.xlu0 %11362
      %11364 = vrot.lane.b32.xlu0 %v10689, 32
      %v11365 = vpop.permute.xlu0 %11364
      %11366 = vrot.lane.b32.xlu0 %v11296, 32
      %v11367 = vpop.permute.xlu0 %11366
      %11368 = vrot.lane.b32.xlu0 %v11305, 32
      %v11369 = vpop.permute.xlu0 %11368
      %v11370 = vpack.c.b16 %v11281, %v10881
      %11371 = vrot.lane.b32.xlu0 %v7484, 36
      %v11372 = vpop.permute.xlu0 %11371
      %11373 = vrot.lane.b32.xlu0 %v7485, 36
      %v11374 = vpop.permute.xlu0 %11373
      %11375 = vrot.lane.b32.xlu0 %v7486, 36
      %v11376 = vpop.permute.xlu0 %11375
      %11377 = vrot.lane.b32.xlu0 %v7487, 36
      %v11378 = vpop.permute.xlu0 %11377
      %11379 = vrot.lane.b32.xlu0 %v7488, 36
      %v11380 = vpop.permute.xlu0 %11379
      %11381 = vrot.lane.b32.xlu0 %v7489, 36
      %v11382 = vpop.permute.xlu0 %11381
      %11383 = vrot.lane.b32.xlu0 %v7490, 36
      %v11384 = vpop.permute.xlu0 %11383
      %11385 = vrot.lane.b32.xlu0 %v7491, 36
      %v11386 = vpop.permute.xlu0 %11385
      %11387 = vrot.lane.b32.xlu0 %v7492, 36
      %v11388 = vpop.permute.xlu0 %11387
      %11389 = vrot.lane.b32.xlu0 %v7493, 36
      %v11390 = vpop.permute.xlu0 %11389
      %11391 = vrot.lane.b32.xlu0 %v7494, 36
      %v11392 = vpop.permute.xlu0 %11391
      %11393 = vrot.lane.b32.xlu0 %v7495, 36
      %v11394 = vpop.permute.xlu0 %11393
      %11395 = vrot.lane.b32.xlu0 %v7496, 36
      %v11396 = vpop.permute.xlu0 %11395
      %11397 = vrot.lane.b32.xlu0 %v7497, 36
      %v11398 = vpop.permute.xlu0 %11397
      %11399 = vrot.lane.b32.xlu0 %v7498, 36
      %v11400 = vpop.permute.xlu0 %11399
      %11401 = vrot.lane.b32.xlu0 %v7499, 36
      %v11402 = vpop.permute.xlu0 %11401
      %11403 = vrot.lane.b32.xlu0 %v7500, 36
      %v11404 = vpop.permute.xlu0 %11403
      %11405 = vrot.lane.b32.xlu0 %v7501, 36
      %v11406 = vpop.permute.xlu0 %11405
      %11407 = vrot.lane.b32.xlu0 %v7502, 36
      %v11408 = vpop.permute.xlu0 %11407
      %11409 = vrot.lane.b32.xlu0 %v7503, 36
      %v11410 = vpop.permute.xlu0 %11409
      %11411 = vrot.lane.b32.xlu0 %v7504, 36
      %v11412 = vpop.permute.xlu0 %11411
      %11413 = vrot.lane.b32.xlu0 %v7505, 36
      %v11414 = vpop.permute.xlu0 %11413
      %11415 = vrot.lane.b32.xlu0 %v7506, 36
      %v11416 = vpop.permute.xlu0 %11415
      %11417 = vrot.lane.b32.xlu0 %v8626, 36
      %v11418 = vpop.permute.xlu0 %11417
      %11419 = vrot.lane.b32.xlu0 %v8860, 36
      %v11420 = vpop.permute.xlu0 %11419
      %11421 = vrot.lane.b32.xlu0 %v8861, 36
      %v11422 = vpop.permute.xlu0 %11421
      %11423 = vrot.lane.b32.xlu0 %v8862, 36
      %v11424 = vpop.permute.xlu0 %11423
      %11425 = vrot.lane.b32.xlu0 %v10351, 36
      %v11426 = vpop.permute.xlu0 %11425
      %11427 = vrot.lane.b32.xlu0 %v10763, 36
      %v11428 = vpop.permute.xlu0 %11427
      %11429 = vrot.lane.b32.xlu0 %v10764, 36
      %v11430 = vpop.permute.xlu0 %11429
      %11431 = vrot.lane.b32.xlu0 %v10765, 36
      %v11432 = vpop.permute.xlu0 %11431
      %11433 = vrot.lane.b32.xlu0 %v11370, 36
      %v11434 = vpop.permute.xlu0 %11433
      %v11436 = vunpack.c.l.b16 %v7311
      %v11437 = vpack.c.b16 %v11436, %v11436
      %v11439 = vshll.u32 %v11370, 16
      %v11441 = vrot.slane %v11439, 1
      %v11442 = vsel %vm3459, %v10808, %v11441
      %v11443 = vshrl.u32 %v11370, 16
      %v11445 = vor.u32 %v11443, %v11441
      %v11447 = vshll.u32 %v11437, 16
      %v11449 = vrot.slane %v11447, 1
      %v11450 = vsel %vm3459, %v11445, %v11449
      %11451 = vrot.lane.b32.xlu0 %v10370, 40
      %v11452 = vpop.permute.xlu0 %11451
      %11453 = vrot.lane.b32.xlu0 %v10373, 40
      %v11454 = vpop.permute.xlu0 %11453
      %11455 = vrot.lane.b32.xlu0 %v10376, 40
      %v11456 = vpop.permute.xlu0 %11455
      %11457 = vrot.lane.b32.xlu0 %v10379, 40
      %v11458 = vpop.permute.xlu0 %11457
      %11459 = vrot.lane.b32.xlu0 %v10382, 40
      %v11460 = vpop.permute.xlu0 %11459
      %11461 = vrot.lane.b32.xlu0 %v10385, 40
      %v11462 = vpop.permute.xlu0 %11461
      %11463 = vrot.lane.b32.xlu0 %v10388, 40
      %v11464 = vpop.permute.xlu0 %11463
      %11465 = vrot.lane.b32.xlu0 %v10391, 40
      %v11466 = vpop.permute.xlu0 %11465
      %11467 = vrot.lane.b32.xlu0 %v10394, 40
      %v11468 = vpop.permute.xlu0 %11467
      %11469 = vrot.lane.b32.xlu0 %v10397, 40
      %v11470 = vpop.permute.xlu0 %11469
      %11471 = vrot.lane.b32.xlu0 %v10400, 40
      %v11472 = vpop.permute.xlu0 %11471
      %11473 = vrot.lane.b32.xlu0 %v10403, 40
      %v11474 = vpop.permute.xlu0 %11473
      %11475 = vrot.lane.b32.xlu0 %v10406, 40
      %v11476 = vpop.permute.xlu0 %11475
      %11477 = vrot.lane.b32.xlu0 %v10409, 40
      %v11478 = vpop.permute.xlu0 %11477
      %11479 = vrot.lane.b32.xlu0 %v10412, 40
      %v11480 = vpop.permute.xlu0 %11479
      %11481 = vrot.lane.b32.xlu0 %v10415, 40
      %v11482 = vpop.permute.xlu0 %11481
      %11483 = vrot.lane.b32.xlu0 %v10418, 40
      %v11484 = vpop.permute.xlu0 %11483
      %11485 = vrot.lane.b32.xlu0 %v10421, 40
      %v11486 = vpop.permute.xlu0 %11485
      %11487 = vrot.lane.b32.xlu0 %v10424, 40
      %v11488 = vpop.permute.xlu0 %11487
      %11489 = vrot.lane.b32.xlu0 %v10427, 40
      %v11490 = vpop.permute.xlu0 %11489
      %11491 = vrot.lane.b32.xlu0 %v10430, 40
      %v11492 = vpop.permute.xlu0 %11491
      %11493 = vrot.lane.b32.xlu0 %v10433, 40
      %v11494 = vpop.permute.xlu0 %11493
      %11495 = vrot.lane.b32.xlu0 %v10436, 40
      %v11496 = vpop.permute.xlu0 %11495
      %11497 = vrot.lane.b32.xlu0 %v10439, 40
      %v11498 = vpop.permute.xlu0 %11497
      %11499 = vrot.lane.b32.xlu0 %v10442, 40
      %v11500 = vpop.permute.xlu0 %11499
      %11501 = vrot.lane.b32.xlu0 %v10445, 40
      %v11502 = vpop.permute.xlu0 %11501
      %11503 = vrot.lane.b32.xlu0 %v10451, 40
      %v11504 = vpop.permute.xlu0 %11503
      %11505 = vrot.lane.b32.xlu0 %v10789, 40
      %v11506 = vpop.permute.xlu0 %11505
      %11507 = vrot.lane.b32.xlu0 %v10797, 40
      %v11508 = vpop.permute.xlu0 %11507
      %11509 = vrot.lane.b32.xlu0 %v10805, 40
      %v11510 = vpop.permute.xlu0 %11509
      %11511 = vrot.lane.b32.xlu0 %v11442, 40
      %v11512 = vpop.permute.xlu0 %11511
      %11513 = vrot.lane.b32.xlu0 %v11450, 40
      %v11514 = vpop.permute.xlu0 %11513
      %v11516 = vsel %vm2448, %v7480, %v10461
      %v11518 = vsel %vm2448, %v7481, %v10463
      %v11520 = vsel %vm2448, %v7482, %v10465
      %v11522 = vsel %vm2448, %v7483, %v10467
      %v11524 = vsel %vm2448, %v7484, %v10469
      %v11526 = vsel %vm2448, %v7485, %v10471
      %v11528 = vsel %vm2448, %v7486, %v10473
      %v11530 = vsel %vm2448, %v7487, %v10475
      %v11532 = vsel %vm2448, %v7488, %v10477
      %v11534 = vsel %vm2448, %v7489, %v10479
      %v11536 = vsel %vm2448, %v7490, %v10481
      %v11538 = vsel %vm2448, %v7491, %v10483
      %v11540 = vsel %vm2448, %v7492, %v10485
      %v11542 = vsel %vm2448, %v7493, %v10487
      %v11544 = vsel %vm2448, %v7494, %v10489
      %v11546 = vsel %vm2448, %v7495, %v10491
      %v11548 = vsel %vm2448, %v7496, %v10493
      %v11550 = vsel %vm2448, %v7497, %v10495
      %v11552 = vsel %vm2448, %v7498, %v10497
      %v11554 = vsel %vm2448, %v7499, %v10499
      %v11556 = vsel %vm2448, %v7500, %v10501
      %v11558 = vsel %vm2448, %v7501, %v10503
      %v11560 = vsel %vm2448, %v7502, %v10505
      %v11562 = vsel %vm2448, %v7503, %v10507
      %v11564 = vsel %vm2448, %v7504, %v10509
      %v11566 = vsel %vm2448, %v7505, %v10511
      %v11568 = vsel %vm2448, %v7506, %v10513
      %v11570 = vsel %vm2448, %v8626, %v10515
      %v11572 = vsel %vm2448, %v8860, %v10517
      %v11574 = vsel %vm2448, %v8861, %v10519
      %v11576 = vsel %vm2448, %v8862, %v10521
      %v11578 = vsel %vm2448, %v10351, %v10523
      %v11580 = vsel %vm2517, %v11516, %v10700
      %v11582 = vsel %vm2517, %v11518, %v10702
      %v11584 = vsel %vm2517, %v11520, %v10704
      %v11586 = vsel %vm2517, %v11522, %v10706
      %v11588 = vsel %vm2517, %v11524, %v10708
      %v11590 = vsel %vm2517, %v11526, %v10710
      %v11592 = vsel %vm2517, %v11528, %v10712
      %v11594 = vsel %vm2517, %v11530, %v10714
      %v11596 = vsel %vm2517, %v11532, %v10716
      %v11598 = vsel %vm2517, %v11534, %v10718
      %v11600 = vsel %vm2517, %v11536, %v10720
      %v11602 = vsel %vm2517, %v11538, %v10722
      %v11604 = vsel %vm2517, %v11540, %v10724
      %v11606 = vsel %vm2517, %v11542, %v10726
      %v11608 = vsel %vm2517, %v11544, %v10728
      %v11610 = vsel %vm2517, %v11546, %v10730
      %v11612 = vsel %vm2517, %v11548, %v10732
      %v11614 = vsel %vm2517, %v11550, %v10734
      %v11616 = vsel %vm2517, %v11552, %v10736
      %v11618 = vsel %vm2517, %v11554, %v10738
      %v11620 = vsel %vm2517, %v11556, %v10740
      %v11622 = vsel %vm2517, %v11558, %v10742
      %v11624 = vsel %vm2517, %v11560, %v10744
      %v11626 = vsel %vm2517, %v11562, %v10746
      %v11628 = vsel %vm2517, %v11564, %v10748
      %v11630 = vsel %vm2517, %v11566, %v10750
      %v11632 = vsel %vm2517, %v11568, %v10752
      %v11634 = vsel %vm2517, %v11570, %v10754
      %v11636 = vsel %vm2517, %v11572, %v10756
      %v11638 = vsel %vm2517, %v11574, %v10758
      %v11640 = vsel %vm2517, %v11576, %v10760
      %v11642 = vsel %vm2517, %v11578, %v10762
      %v11643 = vsel %vm2584, %v11580, %v8017
      %v11644 = vsel %vm2584, %v11582, %v8019
      %v11645 = vsel %vm2584, %v11584, %v8021
      %v11646 = vsel %vm2584, %v11586, %v8023
      %v11647 = vsel %vm2584, %v11588, %v8025
      %v11648 = vsel %vm2584, %v11590, %v8027
      %v11649 = vsel %vm2584, %v11592, %v8029
      %v11650 = vsel %vm2584, %v11594, %v8031
      %v11651 = vsel %vm2584, %v11596, %v8033
      %v11652 = vsel %vm2584, %v11598, %v8035
      %v11653 = vsel %vm2584, %v11600, %v8037
      %v11654 = vsel %vm2584, %v11602, %v8039
      %v11655 = vsel %vm2584, %v11604, %v8041
      %v11656 = vsel %vm2584, %v11606, %v8043
      %v11657 = vsel %vm2584, %v11608, %v8045
      %v11658 = vsel %vm2584, %v11610, %v8047
      %v11659 = vsel %vm2584, %v11612, %v8049
      %v11660 = vsel %vm2584, %v11614, %v8051
      %v11661 = vsel %vm2584, %v11616, %v8053
      %v11662 = vsel %vm2584, %v11618, %v8055
      %v11663 = vsel %vm2584, %v11620, %v8057
      %v11664 = vsel %vm2584, %v11622, %v8059
      %v11665 = vsel %vm2584, %v11624, %v8061
      %v11666 = vsel %vm2584, %v11626, %v8063
      %v11668 = vsel %vm2584, %v11628, %v10767
      %v11670 = vsel %vm2584, %v11630, %v10769
      %v11672 = vsel %vm2584, %v11632, %v10771
      %v11674 = vsel %vm2584, %v11634, %v10773
      %v11676 = vsel %vm2584, %v11636, %v10775
      %v11678 = vsel %vm2584, %v11638, %v10777
      %v11680 = vsel %vm2584, %v11640, %v10779
      %v11682 = vsel %vm2584, %v11642, %v10781
      %v11684 = vsel %vm2651, %v11643, %v10815
      %v11686 = vsel %vm2651, %v11644, %v10817
      %v11688 = vsel %vm2651, %v11645, %v10819
      %v11690 = vsel %vm2651, %v11646, %v10821
      %v11692 = vsel %vm2651, %v11647, %v10823
      %v11694 = vsel %vm2651, %v11648, %v10825
      %v11696 = vsel %vm2651, %v11649, %v10827
      %v11698 = vsel %vm2651, %v11650, %v10829
      %v11700 = vsel %vm2651, %v11651, %v10831
      %v11702 = vsel %vm2651, %v11652, %v10833
      %v11704 = vsel %vm2651, %v11653, %v10835
      %v11706 = vsel %vm2651, %v11654, %v10837
      %v11708 = vsel %vm2651, %v11655, %v10839
      %v11710 = vsel %vm2651, %v11656, %v10841
      %v11712 = vsel %vm2651, %v11657, %v10843
      %v11714 = vsel %vm2651, %v11658, %v10845
      %v11716 = vsel %vm2651, %v11659, %v10847
      %v11718 = vsel %vm2651, %v11660, %v10849
      %v11720 = vsel %vm2651, %v11661, %v10851
      %v11722 = vsel %vm2651, %v11662, %v10853
      %v11724 = vsel %vm2651, %v11663, %v10855
      %v11726 = vsel %vm2651, %v11664, %v10857
      %v11728 = vsel %vm2651, %v11665, %v10859
      %v11730 = vsel %vm2651, %v11666, %v10861
      %v11732 = vsel %vm2651, %v11668, %v10863
      %v11734 = vsel %vm2651, %v11670, %v10865
      %v11736 = vsel %vm2651, %v11672, %v10867
      %v11738 = vsel %vm2651, %v11674, %v10869
      %v11740 = vsel %vm2651, %v11676, %v10871
      %v11742 = vsel %vm2651, %v11678, %v10873
      %v11744 = vsel %vm2651, %v11680, %v10875
      %v11746 = vsel %vm2651, %v11682, %v10877
      %v11748 = vsel %vm2718, %v11684, %v11026
      %v11750 = vsel %vm2718, %v11686, %v11028
      %v11752 = vsel %vm2718, %v11688, %v11030
      %v11754 = vsel %vm2718, %v11690, %v11032
      %v11756 = vsel %vm2718, %v11692, %v11034
      %v11758 = vsel %vm2718, %v11694, %v11036
      %v11760 = vsel %vm2718, %v11696, %v11038
      %v11762 = vsel %vm2718, %v11698, %v11040
      %v11764 = vsel %vm2718, %v11700, %v11042
      %v11766 = vsel %vm2718, %v11702, %v11044
      %v11768 = vsel %vm2718, %v11704, %v11046
      %v11770 = vsel %vm2718, %v11706, %v11048
      %v11772 = vsel %vm2718, %v11708, %v11050
      %v11774 = vsel %vm2718, %v11710, %v11052
      %v11776 = vsel %vm2718, %v11712, %v11054
      %v11778 = vsel %vm2718, %v11714, %v11056
      %v11780 = vsel %vm2718, %v11716, %v11058
      %v11782 = vsel %vm2718, %v11718, %v11060
      %v11784 = vsel %vm2718, %v11720, %v11062
      %v11786 = vsel %vm2718, %v11722, %v11064
      %v11788 = vsel %vm2718, %v11724, %v11066
      %v11790 = vsel %vm2718, %v11726, %v11068
      %v11792 = vsel %vm2718, %v11728, %v11070
      %v11794 = vsel %vm2718, %v11730, %v11072
      %v11796 = vsel %vm2718, %v11732, %v11074
      %v11798 = vsel %vm2718, %v11734, %v11076
      %v11800 = vsel %vm2718, %v11736, %v11078
      %v11802 = vsel %vm2718, %v11738, %v11080
      %v11804 = vsel %vm2718, %v11740, %v11082
      %v11806 = vsel %vm2718, %v11742, %v11084
      %v11808 = vsel %vm2718, %v11744, %v11086
      %v11810 = vsel %vm2718, %v11746, %v11088
      %v11811 = vsel %vm2785, %v11748, %v8577
      %v11812 = vsel %vm2785, %v11750, %v8579
      %v11813 = vsel %vm2785, %v11752, %v8581
      %v11814 = vsel %vm2785, %v11754, %v8583
      %v11815 = vsel %vm2785, %v11756, %v8585
      %v11816 = vsel %vm2785, %v11758, %v8587
      %v11817 = vsel %vm2785, %v11760, %v8589
      %v11818 = vsel %vm2785, %v11762, %v8591
      %v11819 = vsel %vm2785, %v11764, %v8593
      %v11820 = vsel %vm2785, %v11766, %v8595
      %v11821 = vsel %vm2785, %v11768, %v8597
      %v11822 = vsel %vm2785, %v11770, %v8599
      %v11823 = vsel %vm2785, %v11772, %v8601
      %v11824 = vsel %vm2785, %v11774, %v8603
      %v11825 = vsel %vm2785, %v11776, %v8605
      %v11826 = vsel %vm2785, %v11778, %v8607
      %v11827 = vsel %vm2785, %v11780, %v8609
      %v11828 = vsel %vm2785, %v11782, %v8611
      %v11829 = vsel %vm2785, %v11784, %v8613
      %v11830 = vsel %vm2785, %v11786, %v8615
      %v11831 = vsel %vm2785, %v11788, %v8617
      %v11832 = vsel %vm2785, %v11790, %v8619
      %v11833 = vsel %vm2785, %v11792, %v8621
      %v11834 = vsel %vm2785, %v11794, %v8623
      %v11836 = vsel %vm2785, %v11796, %v11091
      %v11838 = vsel %vm2785, %v11798, %v11093
      %v11840 = vsel %vm2785, %v11800, %v11095
      %v11842 = vsel %vm2785, %v11802, %v11097
      %v11844 = vsel %vm2785, %v11804, %v11099
      %v11846 = vsel %vm2785, %v11806, %v11101
      %v11848 = vsel %vm2785, %v11808, %v11103
      %v11850 = vsel %vm2785, %v11810, %v11105
      %v11852 = vsel %vm2852, %v11811, %v11215
      %v11854 = vsel %vm2852, %v11812, %v11217
      %v11856 = vsel %vm2852, %v11813, %v11219
      %v11858 = vsel %vm2852, %v11814, %v11221
      %v11860 = vsel %vm2852, %v11815, %v11223
      %v11862 = vsel %vm2852, %v11816, %v11225
      %v11864 = vsel %vm2852, %v11817, %v11227
      %v11866 = vsel %vm2852, %v11818, %v11229
      %v11868 = vsel %vm2852, %v11819, %v11231
      %v11870 = vsel %vm2852, %v11820, %v11233
      %v11872 = vsel %vm2852, %v11821, %v11235
      %v11874 = vsel %vm2852, %v11822, %v11237
      %v11876 = vsel %vm2852, %v11823, %v11239
      %v11878 = vsel %vm2852, %v11824, %v11241
      %v11880 = vsel %vm2852, %v11825, %v11243
      %v11882 = vsel %vm2852, %v11826, %v11245
      %v11884 = vsel %vm2852, %v11827, %v11247
      %v11886 = vsel %vm2852, %v11828, %v11249
      %v11888 = vsel %vm2852, %v11829, %v11251
      %v11890 = vsel %vm2852, %v11830, %v11253
      %v11892 = vsel %vm2852, %v11831, %v11255
      %v11894 = vsel %vm2852, %v11832, %v11257
      %v11896 = vsel %vm2852, %v11833, %v11259
      %v11898 = vsel %vm2852, %v11834, %v11261
      %v11900 = vsel %vm2852, %v11836, %v11263
      %v11902 = vsel %vm2852, %v11838, %v11265
      %v11904 = vsel %vm2852, %v11840, %v11267
      %v11906 = vsel %vm2852, %v11842, %v11269
      %v11908 = vsel %vm2852, %v11844, %v11271
      %v11910 = vsel %vm2852, %v11846, %v11273
      %v11912 = vsel %vm2852, %v11848, %v11275
      %v11914 = vsel %vm2852, %v11850, %v11277
      %v11916 = vsel %vm2919, %v11852, %v11307
      %v11918 = vsel %vm2919, %v11854, %v11309
      %v11920 = vsel %vm2919, %v11856, %v11311
      %v11922 = vsel %vm2919, %v11858, %v11313
      %v11924 = vsel %vm2919, %v11860, %v11315
      %v11926 = vsel %vm2919, %v11862, %v11317
      %v11928 = vsel %vm2919, %v11864, %v11319
      %v11930 = vsel %vm2919, %v11866, %v11321
      %v11932 = vsel %vm2919, %v11868, %v11323
      %v11934 = vsel %vm2919, %v11870, %v11325
      %v11936 = vsel %vm2919, %v11872, %v11327
      %v11938 = vsel %vm2919, %v11874, %v11329
      %v11940 = vsel %vm2919, %v11876, %v11331
      %v11942 = vsel %vm2919, %v11878, %v11333
      %v11944 = vsel %vm2919, %v11880, %v11335
      %v11946 = vsel %vm2919, %v11882, %v11337
      %v11948 = vsel %vm2919, %v11884, %v11339
      %v11950 = vsel %vm2919, %v11886, %v11341
      %v11952 = vsel %vm2919, %v11888, %v11343
      %v11954 = vsel %vm2919, %v11890, %v11345
      %v11956 = vsel %vm2919, %v11892, %v11347
      %v11958 = vsel %vm2919, %v11894, %v11349
      %v11960 = vsel %vm2919, %v11896, %v11351
      %v11962 = vsel %vm2919, %v11898, %v11353
      %v11964 = vsel %vm2919, %v11900, %v11355
      %v11966 = vsel %vm2919, %v11902, %v11357
      %v11968 = vsel %vm2919, %v11904, %v11359
      %v11970 = vsel %vm2919, %v11906, %v11361
      %v11972 = vsel %vm2919, %v11908, %v11363
      %v11974 = vsel %vm2919, %v11910, %v11365
      %v11976 = vsel %vm2919, %v11912, %v11367
      %v11978 = vsel %vm2919, %v11914, %v11369
      %v11980 = vsel %vm2986, %v11916, %v11372
      %v11982 = vsel %vm2986, %v11918, %v11374
      %v11984 = vsel %vm2986, %v11920, %v11376
      %v11986 = vsel %vm2986, %v11922, %v11378
      %v11988 = vsel %vm2986, %v11924, %v11380
      %v11990 = vsel %vm2986, %v11926, %v11382
      %v11992 = vsel %vm2986, %v11928, %v11384
      %v11994 = vsel %vm2986, %v11930, %v11386
      %v11996 = vsel %vm2986, %v11932, %v11388
      %v11998 = vsel %vm2986, %v11934, %v11390
      %v12000 = vsel %vm2986, %v11936, %v11392
      %v12002 = vsel %vm2986, %v11938, %v11394
      %v12004 = vsel %vm2986, %v11940, %v11396
      %v12006 = vsel %vm2986, %v11942, %v11398
      %v12008 = vsel %vm2986, %v11944, %v11400
      %v12010 = vsel %vm2986, %v11946, %v11402
      %v12012 = vsel %vm2986, %v11948, %v11404
      %v12014 = vsel %vm2986, %v11950, %v11406
      %v12016 = vsel %vm2986, %v11952, %v11408
      %v12018 = vsel %vm2986, %v11954, %v11410
      %v12020 = vsel %vm2986, %v11956, %v11412
      %v12022 = vsel %vm2986, %v11958, %v11414
      %v12024 = vsel %vm2986, %v11960, %v11416
      %v12026 = vsel %vm2986, %v11962, %v11418
      %v12028 = vsel %vm2986, %v11964, %v11420
      %v12030 = vsel %vm2986, %v11966, %v11422
      %v12032 = vsel %vm2986, %v11968, %v11424
      %v12034 = vsel %vm2986, %v11970, %v11426
      %v12036 = vsel %vm2986, %v11972, %v11428
      %v12038 = vsel %vm2986, %v11974, %v11430
      %v12040 = vsel %vm2986, %v11976, %v11432
      %v12042 = vsel %vm2986, %v11978, %v11434
      %v12044 = vsel %vm3053, %v11980, %v11452
      %v12046 = vsel %vm3053, %v11982, %v11454
      %v12048 = vsel %vm3053, %v11984, %v11456
      %v12050 = vsel %vm3053, %v11986, %v11458
      %v12052 = vsel %vm3053, %v11988, %v11460
      %v12054 = vsel %vm3053, %v11990, %v11462
      %v12056 = vsel %vm3053, %v11992, %v11464
      %v12058 = vsel %vm3053, %v11994, %v11466
      %v12060 = vsel %vm3053, %v11996, %v11468
      %v12062 = vsel %vm3053, %v11998, %v11470
      %v12064 = vsel %vm3053, %v12000, %v11472
      %v12066 = vsel %vm3053, %v12002, %v11474
      %v12068 = vsel %vm3053, %v12004, %v11476
      %v12070 = vsel %vm3053, %v12006, %v11478
      %v12072 = vsel %vm3053, %v12008, %v11480
      %v12074 = vsel %vm3053, %v12010, %v11482
      %v12076 = vsel %vm3053, %v12012, %v11484
      %v12078 = vsel %vm3053, %v12014, %v11486
      %v12080 = vsel %vm3053, %v12016, %v11488
      %v12082 = vsel %vm3053, %v12018, %v11490
      %v12084 = vsel %vm3053, %v12020, %v11492
      %v12086 = vsel %vm3053, %v12022, %v11494
      %v12088 = vsel %vm3053, %v12024, %v11496
      %v12090 = vsel %vm3053, %v12026, %v11498
      %v12092 = vsel %vm3053, %v12028, %v11500
      %v12094 = vsel %vm3053, %v12030, %v11502
      %v12096 = vsel %vm3053, %v12032, %v11504
      %v12098 = vsel %vm3053, %v12034, %v11506
      %v12100 = vsel %vm3053, %v12036, %v11508
      %v12102 = vsel %vm3053, %v12038, %v11510
      %v12104 = vsel %vm3053, %v12040, %v11512
      %v12106 = vsel %vm3053, %v12042, %v11514
      %v12107 = vshrl.u32 %v12044, 16
      %v12109 = vrot.slane %v12107, 4
      %v12110 = vshll.u32 %v12044, 16
      %v12112 = vrot.slane %v12110, 5
      %v12113 = vor.u32 %v12109, %v12112
      %v12114 = vshrl.u32 %v12046, 16
      %v12116 = vrot.slane %v12114, 4
      %v12117 = vshll.u32 %v12046, 16
      %v12119 = vrot.slane %v12117, 5
      %v12120 = vor.u32 %v12116, %v12119
      %v12121 = vsel %vm594, %v12113, %v12120
      %v12122 = vshrl.u32 %v12048, 16
      %v12124 = vrot.slane %v12122, 4
      %v12125 = vshll.u32 %v12048, 16
      %v12127 = vrot.slane %v12125, 5
      %v12128 = vor.u32 %v12124, %v12127
      %v12129 = vsel %vm594, %v12120, %v12128
      %v12130 = vshrl.u32 %v12050, 16
      %v12132 = vrot.slane %v12130, 4
      %v12133 = vshll.u32 %v12050, 16
      %v12135 = vrot.slane %v12133, 5
      %v12136 = vor.u32 %v12132, %v12135
      %v12137 = vsel %vm594, %v12128, %v12136
      %v12138 = vshrl.u32 %v12052, 16
      %v12140 = vrot.slane %v12138, 4
      %v12141 = vshll.u32 %v12052, 16
      %v12143 = vrot.slane %v12141, 5
      %v12144 = vor.u32 %v12140, %v12143
      %v12145 = vsel %vm594, %v12136, %v12144
      %v12146 = vshrl.u32 %v12054, 16
      %v12148 = vrot.slane %v12146, 4
      %v12149 = vshll.u32 %v12054, 16
      %v12151 = vrot.slane %v12149, 5
      %v12152 = vor.u32 %v12148, %v12151
      %v12153 = vsel %vm594, %v12144, %v12152
      %v12154 = vshrl.u32 %v12056, 16
      %v12156 = vrot.slane %v12154, 4
      %v12157 = vshll.u32 %v12056, 16
      %v12159 = vrot.slane %v12157, 5
      %v12160 = vor.u32 %v12156, %v12159
      %v12161 = vsel %vm594, %v12152, %v12160
      %v12162 = vshrl.u32 %v12058, 16
      %v12164 = vrot.slane %v12162, 4
      %v12165 = vshll.u32 %v12058, 16
      %v12167 = vrot.slane %v12165, 5
      %v12168 = vor.u32 %v12164, %v12167
      %v12169 = vsel %vm594, %v12160, %v12168
      %v12170 = vshrl.u32 %v12060, 16
      %v12172 = vrot.slane %v12170, 4
      %v12173 = vshll.u32 %v12060, 16
      %v12175 = vrot.slane %v12173, 5
      %v12176 = vor.u32 %v12172, %v12175
      %v12177 = vsel %vm594, %v12168, %v12176
      %v12178 = vshrl.u32 %v12062, 16
      %v12180 = vrot.slane %v12178, 4
      %v12181 = vshll.u32 %v12062, 16
      %v12183 = vrot.slane %v12181, 5
      %v12184 = vor.u32 %v12180, %v12183
      %v12185 = vsel %vm594, %v12176, %v12184
      %v12186 = vshrl.u32 %v12064, 16
      %v12188 = vrot.slane %v12186, 4
      %v12189 = vshll.u32 %v12064, 16
      %v12191 = vrot.slane %v12189, 5
      %v12192 = vor.u32 %v12188, %v12191
      %v12193 = vsel %vm594, %v12184, %v12192
      %v12194 = vshrl.u32 %v12066, 16
      %v12196 = vrot.slane %v12194, 4
      %v12197 = vshll.u32 %v12066, 16
      %v12199 = vrot.slane %v12197, 5
      %v12200 = vor.u32 %v12196, %v12199
      %v12201 = vsel %vm594, %v12192, %v12200
      %v12202 = vshrl.u32 %v12068, 16
      %v12204 = vrot.slane %v12202, 4
      %v12205 = vshll.u32 %v12068, 16
      %v12207 = vrot.slane %v12205, 5
      %v12208 = vor.u32 %v12204, %v12207
      %v12209 = vsel %vm594, %v12200, %v12208
      %v12210 = vshrl.u32 %v12070, 16
      %v12212 = vrot.slane %v12210, 4
      %v12213 = vshll.u32 %v12070, 16
      %v12215 = vrot.slane %v12213, 5
      %v12216 = vor.u32 %v12212, %v12215
      %v12217 = vsel %vm594, %v12208, %v12216
      %v12218 = vshrl.u32 %v12072, 16
      %v12220 = vrot.slane %v12218, 4
      %v12221 = vshll.u32 %v12072, 16
      %v12223 = vrot.slane %v12221, 5
      %v12224 = vor.u32 %v12220, %v12223
      %v12225 = vsel %vm594, %v12216, %v12224
      %v12226 = vshrl.u32 %v12074, 16
      %v12228 = vrot.slane %v12226, 4
      %v12229 = vshll.u32 %v12074, 16
      %v12231 = vrot.slane %v12229, 5
      %v12232 = vor.u32 %v12228, %v12231
      %v12233 = vsel %vm594, %v12224, %v12232
      %v12234 = vshrl.u32 %v12076, 16
      %v12236 = vrot.slane %v12234, 4
      %v12237 = vshll.u32 %v12076, 16
      %v12239 = vrot.slane %v12237, 5
      %v12240 = vor.u32 %v12236, %v12239
      %v12241 = vsel %vm594, %v12232, %v12240
      %v12242 = vshrl.u32 %v12078, 16
      %v12244 = vrot.slane %v12242, 4
      %v12245 = vshll.u32 %v12078, 16
      %v12247 = vrot.slane %v12245, 5
      %v12248 = vor.u32 %v12244, %v12247
      %v12249 = vsel %vm594, %v12240, %v12248
      %v12250 = vshrl.u32 %v12080, 16
      %v12252 = vrot.slane %v12250, 4
      %v12253 = vshll.u32 %v12080, 16
      %v12255 = vrot.slane %v12253, 5
      %v12256 = vor.u32 %v12252, %v12255
      %v12257 = vsel %vm594, %v12248, %v12256
      %v12258 = vshrl.u32 %v12082, 16
      %v12260 = vrot.slane %v12258, 4
      %v12261 = vshll.u32 %v12082, 16
      %v12263 = vrot.slane %v12261, 5
      %v12264 = vor.u32 %v12260, %v12263
      %v12265 = vsel %vm594, %v12256, %v12264
      %v12266 = vshrl.u32 %v12084, 16
      %v12268 = vrot.slane %v12266, 4
      %v12269 = vshll.u32 %v12084, 16
      %v12271 = vrot.slane %v12269, 5
      %v12272 = vor.u32 %v12268, %v12271
      %v12273 = vsel %vm594, %v12264, %v12272
      %v12274 = vshrl.u32 %v12086, 16
      %v12276 = vrot.slane %v12274, 4
      %v12277 = vshll.u32 %v12086, 16
      %v12279 = vrot.slane %v12277, 5
      %v12280 = vor.u32 %v12276, %v12279
      %v12281 = vsel %vm594, %v12272, %v12280
      %v12282 = vshrl.u32 %v12088, 16
      %v12284 = vrot.slane %v12282, 4
      %v12285 = vshll.u32 %v12088, 16
      %v12287 = vrot.slane %v12285, 5
      %v12288 = vor.u32 %v12284, %v12287
      %v12289 = vsel %vm594, %v12280, %v12288
      %v12290 = vshrl.u32 %v12090, 16
      %v12292 = vrot.slane %v12290, 4
      %v12293 = vshll.u32 %v12090, 16
      %v12295 = vrot.slane %v12293, 5
      %v12296 = vor.u32 %v12292, %v12295
      %v12297 = vsel %vm594, %v12288, %v12296
      %v12298 = vshrl.u32 %v12092, 16
      %v12300 = vrot.slane %v12298, 4
      %v12301 = vshll.u32 %v12092, 16
      %v12303 = vrot.slane %v12301, 5
      %v12304 = vor.u32 %v12300, %v12303
      %v12305 = vsel %vm594, %v12296, %v12304
      %v12306 = vshrl.u32 %v12094, 16
      %v12308 = vrot.slane %v12306, 4
      %v12309 = vshll.u32 %v12094, 16
      %v12311 = vrot.slane %v12309, 5
      %v12312 = vor.u32 %v12308, %v12311
      %v12313 = vsel %vm594, %v12304, %v12312
      %v12314 = vshrl.u32 %v12096, 16
      %v12316 = vrot.slane %v12314, 4
      %v12317 = vshll.u32 %v12096, 16
      %v12319 = vrot.slane %v12317, 5
      %v12320 = vor.u32 %v12316, %v12319
      %v12321 = vsel %vm594, %v12312, %v12320
      %v12322 = vshrl.u32 %v12098, 16
      %v12324 = vrot.slane %v12322, 4
      %v12325 = vshll.u32 %v12098, 16
      %v12327 = vrot.slane %v12325, 5
      %v12328 = vor.u32 %v12324, %v12327
      %v12329 = vsel %vm594, %v12320, %v12328
      %v12330 = vshrl.u32 %v12100, 16
      %v12332 = vrot.slane %v12330, 4
      %v12333 = vshll.u32 %v12100, 16
      %v12335 = vrot.slane %v12333, 5
      %v12336 = vor.u32 %v12332, %v12335
      %v12337 = vsel %vm594, %v12328, %v12336
      %v12338 = vshrl.u32 %v12102, 16
      %v12340 = vrot.slane %v12338, 4
      %v12341 = vshll.u32 %v12102, 16
      %v12343 = vrot.slane %v12341, 5
      %v12344 = vor.u32 %v12340, %v12343
      %v12345 = vsel %vm594, %v12336, %v12344
      %v12346 = vshrl.u32 %v12104, 16
      %v12348 = vrot.slane %v12346, 4
      %v12349 = vshll.u32 %v12104, 16
      %v12351 = vrot.slane %v12349, 5
      %v12352 = vor.u32 %v12348, %v12351
      %v12353 = vsel %vm594, %v12344, %v12352
      %v12354 = vshrl.u32 %v12106, 16
      %v12356 = vrot.slane %v12354, 4
      %v12357 = vshll.u32 %v12106, 16
      %v12359 = vrot.slane %v12357, 5
      %v12360 = vor.u32 %v12356, %v12359
      %v12361 = vsel %vm594, %v12352, %v12360
      %12362 = vrot.lane.b32.xlu0 %v12113, 64
      %v12363 = vpop.permute.xlu0 %12362
      %12364 = vrot.lane.b32.xlu0 %v12121, 64
      %v12365 = vpop.permute.xlu0 %12364
      %12366 = vrot.lane.b32.xlu0 %v12129, 64
      %v12367 = vpop.permute.xlu0 %12366
      %12368 = vrot.lane.b32.xlu0 %v12137, 64
      %v12369 = vpop.permute.xlu0 %12368
      %12370 = vrot.lane.b32.xlu0 %v12145, 64
      %v12371 = vpop.permute.xlu0 %12370
      %12372 = vrot.lane.b32.xlu0 %v12153, 64
      %v12373 = vpop.permute.xlu0 %12372
      %12374 = vrot.lane.b32.xlu0 %v12161, 64
      %v12375 = vpop.permute.xlu0 %12374
      %12376 = vrot.lane.b32.xlu0 %v12169, 64
      %v12377 = vpop.permute.xlu0 %12376
      %12378 = vrot.lane.b32.xlu0 %v12177, 64
      %v12379 = vpop.permute.xlu0 %12378
      %12380 = vrot.lane.b32.xlu0 %v12185, 64
      %v12381 = vpop.permute.xlu0 %12380
      %12382 = vrot.lane.b32.xlu0 %v12193, 64
      %v12383 = vpop.permute.xlu0 %12382
      %12384 = vrot.lane.b32.xlu0 %v12201, 64
      %v12385 = vpop.permute.xlu0 %12384
      %12386 = vrot.lane.b32.xlu0 %v12209, 64
      %v12387 = vpop.permute.xlu0 %12386
      %12388 = vrot.lane.b32.xlu0 %v12217, 64
      %v12389 = vpop.permute.xlu0 %12388
      %12390 = vrot.lane.b32.xlu0 %v12225, 64
      %v12391 = vpop.permute.xlu0 %12390
      %12392 = vrot.lane.b32.xlu0 %v12233, 64
      %v12393 = vpop.permute.xlu0 %12392
      %12394 = vrot.lane.b32.xlu0 %v12241, 64
      %v12395 = vpop.permute.xlu0 %12394
      %12396 = vrot.lane.b32.xlu0 %v12249, 64
      %v12397 = vpop.permute.xlu0 %12396
      %12398 = vrot.lane.b32.xlu0 %v12257, 64
      %v12399 = vpop.permute.xlu0 %12398
      %12400 = vrot.lane.b32.xlu0 %v12265, 64
      %v12401 = vpop.permute.xlu0 %12400
      %12402 = vrot.lane.b32.xlu0 %v12273, 64
      %v12403 = vpop.permute.xlu0 %12402
      %12404 = vrot.lane.b32.xlu0 %v12281, 64
      %v12405 = vpop.permute.xlu0 %12404
      %12406 = vrot.lane.b32.xlu0 %v12289, 64
      %v12407 = vpop.permute.xlu0 %12406
      %12408 = vrot.lane.b32.xlu0 %v12297, 64
      %v12409 = vpop.permute.xlu0 %12408
      %12410 = vrot.lane.b32.xlu0 %v12305, 64
      %v12411 = vpop.permute.xlu0 %12410
      %12412 = vrot.lane.b32.xlu0 %v12313, 64
      %v12413 = vpop.permute.xlu0 %12412
      %12414 = vrot.lane.b32.xlu0 %v12321, 64
      %v12415 = vpop.permute.xlu0 %12414
      %12416 = vrot.lane.b32.xlu0 %v12329, 64
      %v12417 = vpop.permute.xlu0 %12416
      %12418 = vrot.lane.b32.xlu0 %v12337, 64
      %v12419 = vpop.permute.xlu0 %12418
      %12420 = vrot.lane.b32.xlu0 %v12345, 64
      %v12421 = vpop.permute.xlu0 %12420
      %12422 = vrot.lane.b32.xlu0 %v12353, 64
      %v12423 = vpop.permute.xlu0 %12422
      %12424 = vrot.lane.b32.xlu0 %v12361, 64
      %v12425 = vpop.permute.xlu0 %12424
      %12426 = vrot.lane.b32.xlu0 %v12360, 64
      %v12427 = vpop.permute.xlu0 %12426
      %v12429 = vsel %vm5534, %v10286, %v12363
      %v12431 = vsel %vm5534, %v10288, %v12365
      %v12433 = vsel %vm5534, %v10290, %v12367
      %v12435 = vsel %vm5534, %v10292, %v12369
      %v12437 = vsel %vm5534, %v10294, %v12371
      %v12439 = vsel %vm5534, %v10296, %v12373
      %v12441 = vsel %vm5534, %v10298, %v12375
      %v12443 = vsel %vm5534, %v10300, %v12377
      %v12445 = vsel %vm5534, %v10302, %v12379
      %v12447 = vsel %vm5534, %v10304, %v12381
      %v12449 = vsel %vm5534, %v10306, %v12383
      %v12451 = vsel %vm5534, %v10308, %v12385
      %v12453 = vsel %vm5534, %v10310, %v12387
      %v12455 = vsel %vm5534, %v10312, %v12389
      %v12457 = vsel %vm5534, %v10314, %v12391
      %v12459 = vsel %vm5534, %v10316, %v12393
      %v12461 = vsel %vm5534, %v10318, %v12395
      %v12463 = vsel %vm5534, %v10320, %v12397
      %v12465 = vsel %vm5534, %v10322, %v12399
      %v12467 = vsel %vm5534, %v10324, %v12401
      %v12469 = vsel %vm5534, %v10326, %v12403
      %v12471 = vsel %vm5534, %v10328, %v12405
      %v12473 = vsel %vm5534, %v10330, %v12407
      %v12475 = vsel %vm5534, %v10332, %v12409
      %v12477 = vsel %vm5534, %v10334, %v12411
      %v12479 = vsel %vm5534, %v10336, %v12413
      %v12481 = vsel %vm5534, %v10338, %v12415
      %v12483 = vsel %vm5534, %v10340, %v12417
      %v12485 = vsel %vm5534, %v10342, %v12419
      %v12487 = vsel %vm5534, %v10344, %v12421
      %v12489 = vsel %vm5534, %v10346, %v12423
      %v12491 = vsel %vm5534, %v10348, %v12425
      %v12493 = vsel %vm5534, %v10350, %v12427
      %v12494 = vld [vmem:[%s3] sm:$0xf]
      %v12495 = vld [vmem:[%s3 + $0x4] sm:$0xf]
      %v12496 = vld [vmem:[%s3 + $0x8] sm:$0xf]
      %v12497 = vld [vmem:[%s3 + $0xc] sm:$0xf]
      %v12498 = vld [vmem:[%s3 + $0x10] sm:$0xf]
      %v12499 = vld [vmem:[%s3 + $0x14] sm:$0xf]
      %v12500 = vld [vmem:[%s3 + $0x18] sm:$0xf]
      %v12501 = vld [vmem:[%s3 + $0x1c] sm:$0xf]
      %v12502 = vld [vmem:[%s3 + $0x20] sm:$0xf]
      %v12503 = vld [vmem:[%s3 + $0x24] sm:$0xf]
      %v12504 = vld [vmem:[%s3 + $0x28] sm:$0xf]
      %v12505 = vld [vmem:[%s3 + $0x2c] sm:$0xf]
      %v12506 = vld [vmem:[%s3 + $0x30] sm:$0xf]
      %v12507 = vld [vmem:[%s3 + $0x34] sm:$0x3]
      %v12508 = vld [vmem:[%s4] sm:$0x1]
      %v12510 = vlaneseq
      %v12511 = vshrl.u32 %v12510, 7
      %v12512 = vsub.s32 0, %v12511
      %v12513 = vrot.slane %v12508, %v12512
      %v12515 = vshrl.u32 %v12429, 16
      %v12517 = vrot.slane %v12515, 3
      %v12518 = vshll.u32 %v12429, 16
      %v12520 = vrot.slane %v12518, 4
      %v12521 = vor.u32 %v12517, %v12520
      %v12522 = vshrl.u32 %v12431, 16
      %v12524 = vrot.slane %v12522, 3
      %v12525 = vshll.u32 %v12431, 16
      %v12527 = vrot.slane %v12525, 4
      %v12528 = vor.u32 %v12524, %v12527
      %v12529 = vsel %vm3648, %v12521, %v12528
      %v12530 = vshrl.u32 %v12433, 16
      %v12532 = vrot.slane %v12530, 3
      %v12533 = vshll.u32 %v12433, 16
      %v12535 = vrot.slane %v12533, 4
      %v12536 = vor.u32 %v12532, %v12535
      %v12537 = vsel %vm3648, %v12528, %v12536
      %v12538 = vshrl.u32 %v12435, 16
      %v12540 = vrot.slane %v12538, 3
      %v12541 = vshll.u32 %v12435, 16
      %v12543 = vrot.slane %v12541, 4
      %v12544 = vor.u32 %v12540, %v12543
      %v12545 = vsel %vm3648, %v12536, %v12544
      %v12546 = vshrl.u32 %v12437, 16
      %v12548 = vrot.slane %v12546, 3
      %v12549 = vshll.u32 %v12437, 16
      %v12551 = vrot.slane %v12549, 4
      %v12552 = vor.u32 %v12548, %v12551
      %v12553 = vsel %vm3648, %v12544, %v12552
      %v12554 = vshrl.u32 %v12439, 16
      %v12556 = vrot.slane %v12554, 3
      %v12557 = vshll.u32 %v12439, 16
      %v12559 = vrot.slane %v12557, 4
      %v12560 = vor.u32 %v12556, %v12559
      %v12561 = vsel %vm3648, %v12552, %v12560
      %v12562 = vshrl.u32 %v12441, 16
      %v12564 = vrot.slane %v12562, 3
      %v12565 = vshll.u32 %v12441, 16
      %v12567 = vrot.slane %v12565, 4
      %v12568 = vor.u32 %v12564, %v12567
      %v12569 = vsel %vm3648, %v12560, %v12568
      %v12570 = vshrl.u32 %v12443, 16
      %v12572 = vrot.slane %v12570, 3
      %v12573 = vshll.u32 %v12443, 16
      %v12575 = vrot.slane %v12573, 4
      %v12576 = vor.u32 %v12572, %v12575
      %v12577 = vsel %vm3648, %v12568, %v12576
      %v12578 = vshrl.u32 %v12445, 16
      %v12580 = vrot.slane %v12578, 3
      %v12581 = vshll.u32 %v12445, 16
      %v12583 = vrot.slane %v12581, 4
      %v12584 = vor.u32 %v12580, %v12583
      %v12585 = vsel %vm3648, %v12576, %v12584
      %v12586 = vshrl.u32 %v12447, 16
      %v12588 = vrot.slane %v12586, 3
      %v12589 = vshll.u32 %v12447, 16
      %v12591 = vrot.slane %v12589, 4
      %v12592 = vor.u32 %v12588, %v12591
      %v12593 = vsel %vm3648, %v12584, %v12592
      %v12594 = vshrl.u32 %v12449, 16
      %v12596 = vrot.slane %v12594, 3
      %v12597 = vshll.u32 %v12449, 16
      %v12599 = vrot.slane %v12597, 4
      %v12600 = vor.u32 %v12596, %v12599
      %v12601 = vsel %vm3648, %v12592, %v12600
      %v12602 = vshrl.u32 %v12451, 16
      %v12604 = vrot.slane %v12602, 3
      %v12605 = vshll.u32 %v12451, 16
      %v12607 = vrot.slane %v12605, 4
      %v12608 = vor.u32 %v12604, %v12607
      %v12609 = vsel %vm3648, %v12600, %v12608
      %v12610 = vshrl.u32 %v12453, 16
      %v12612 = vrot.slane %v12610, 3
      %v12613 = vshll.u32 %v12453, 16
      %v12615 = vrot.slane %v12613, 4
      %v12616 = vor.u32 %v12612, %v12615
      %v12617 = vsel %vm3648, %v12608, %v12616
      %v12618 = vshrl.u32 %v12455, 16
      %v12620 = vrot.slane %v12618, 3
      %v12621 = vshll.u32 %v12455, 16
      %v12623 = vrot.slane %v12621, 4
      %v12624 = vor.u32 %v12620, %v12623
      %v12625 = vsel %vm3648, %v12616, %v12624
      %v12626 = vshrl.u32 %v12457, 16
      %v12628 = vrot.slane %v12626, 3
      %v12629 = vshll.u32 %v12457, 16
      %v12631 = vrot.slane %v12629, 4
      %v12632 = vor.u32 %v12628, %v12631
      %v12633 = vsel %vm3648, %v12624, %v12632
      %v12634 = vshrl.u32 %v12459, 16
      %v12636 = vrot.slane %v12634, 3
      %v12637 = vshll.u32 %v12459, 16
      %v12639 = vrot.slane %v12637, 4
      %v12640 = vor.u32 %v12636, %v12639
      %v12641 = vsel %vm3648, %v12632, %v12640
      %v12642 = vshrl.u32 %v12461, 16
      %v12644 = vrot.slane %v12642, 3
      %v12645 = vshll.u32 %v12461, 16
      %v12647 = vrot.slane %v12645, 4
      %v12648 = vor.u32 %v12644, %v12647
      %v12649 = vsel %vm3648, %v12640, %v12648
      %v12650 = vshrl.u32 %v12463, 16
      %v12652 = vrot.slane %v12650, 3
      %v12653 = vshll.u32 %v12463, 16
      %v12655 = vrot.slane %v12653, 4
      %v12656 = vor.u32 %v12652, %v12655
      %v12657 = vsel %vm3648, %v12648, %v12656
      %v12658 = vshrl.u32 %v12465, 16
      %v12660 = vrot.slane %v12658, 3
      %v12661 = vshll.u32 %v12465, 16
      %v12663 = vrot.slane %v12661, 4
      %v12664 = vor.u32 %v12660, %v12663
      %v12665 = vsel %vm3648, %v12656, %v12664
      %v12666 = vshrl.u32 %v12467, 16
      %v12668 = vrot.slane %v12666, 3
      %v12669 = vshll.u32 %v12467, 16
      %v12671 = vrot.slane %v12669, 4
      %v12672 = vor.u32 %v12668, %v12671
      %v12673 = vsel %vm3648, %v12664, %v12672
      %v12674 = vshrl.u32 %v12469, 16
      %v12676 = vrot.slane %v12674, 3
      %v12677 = vshll.u32 %v12469, 16
      %v12679 = vrot.slane %v12677, 4
      %v12680 = vor.u32 %v12676, %v12679
      %v12681 = vsel %vm3648, %v12672, %v12680
      %v12682 = vshrl.u32 %v12471, 16
      %v12684 = vrot.slane %v12682, 3
      %v12685 = vshll.u32 %v12471, 16
      %v12687 = vrot.slane %v12685, 4
      %v12688 = vor.u32 %v12684, %v12687
      %v12689 = vsel %vm3648, %v12680, %v12688
      %v12690 = vshrl.u32 %v12473, 16
      %v12692 = vrot.slane %v12690, 3
      %v12693 = vshll.u32 %v12473, 16
      %v12695 = vrot.slane %v12693, 4
      %v12696 = vor.u32 %v12692, %v12695
      %v12697 = vsel %vm3648, %v12688, %v12696
      %v12698 = vshrl.u32 %v12475, 16
      %v12700 = vrot.slane %v12698, 3
      %v12701 = vshll.u32 %v12475, 16
      %v12703 = vrot.slane %v12701, 4
      %v12704 = vor.u32 %v12700, %v12703
      %v12705 = vsel %vm3648, %v12696, %v12704
      %v12706 = vshrl.u32 %v12477, 16
      %v12708 = vrot.slane %v12706, 3
      %v12709 = vshll.u32 %v12477, 16
      %v12711 = vrot.slane %v12709, 4
      %v12712 = vor.u32 %v12708, %v12711
      %v12713 = vsel %vm3648, %v12704, %v12712
      %v12714 = vshrl.u32 %v12479, 16
      %v12716 = vrot.slane %v12714, 3
      %v12717 = vshll.u32 %v12479, 16
      %v12719 = vrot.slane %v12717, 4
      %v12720 = vor.u32 %v12716, %v12719
      %v12721 = vsel %vm3648, %v12712, %v12720
      %v12722 = vshrl.u32 %v12481, 16
      %v12724 = vrot.slane %v12722, 3
      %v12725 = vshll.u32 %v12481, 16
      %v12727 = vrot.slane %v12725, 4
      %v12728 = vor.u32 %v12724, %v12727
      %v12729 = vsel %vm3648, %v12720, %v12728
      %v12730 = vshrl.u32 %v12483, 16
      %v12732 = vrot.slane %v12730, 3
      %v12733 = vshll.u32 %v12483, 16
      %v12735 = vrot.slane %v12733, 4
      %v12736 = vor.u32 %v12732, %v12735
      %v12737 = vsel %vm3648, %v12728, %v12736
      %v12738 = vshrl.u32 %v12485, 16
      %v12740 = vrot.slane %v12738, 3
      %v12741 = vshll.u32 %v12485, 16
      %v12743 = vrot.slane %v12741, 4
      %v12744 = vor.u32 %v12740, %v12743
      %v12745 = vsel %vm3648, %v12736, %v12744
      %v12746 = vshrl.u32 %v12487, 16
      %v12748 = vrot.slane %v12746, 3
      %v12749 = vshll.u32 %v12487, 16
      %v12751 = vrot.slane %v12749, 4
      %v12752 = vor.u32 %v12748, %v12751
      %v12753 = vsel %vm3648, %v12744, %v12752
      %v12754 = vshrl.u32 %v12489, 16
      %v12756 = vrot.slane %v12754, 3
      %v12757 = vshll.u32 %v12489, 16
      %v12759 = vrot.slane %v12757, 4
      %v12760 = vor.u32 %v12756, %v12759
      %v12761 = vsel %vm3648, %v12752, %v12760
      %v12762 = vshrl.u32 %v12491, 16
      %v12764 = vrot.slane %v12762, 3
      %v12765 = vshll.u32 %v12491, 16
      %v12767 = vrot.slane %v12765, 4
      %v12768 = vor.u32 %v12764, %v12767
      %v12769 = vsel %vm3648, %v12760, %v12768
      %v12770 = vshrl.u32 %v12493, 16
      %v12772 = vrot.slane %v12770, 3
      %v12773 = vshll.u32 %v12493, 16
      %v12775 = vrot.slane %v12773, 4
      %v12776 = vor.u32 %v12772, %v12775
      %v12777 = vsel %vm3648, %v12768, %v12776
      %v12792 = vunpack.c.l.b16 %v12494
      %v12793 = vunpack.c.l.b16 %v12495
      %v12794 = vunpack.c.l.b16 %v12496
      %v12795 = vunpack.c.l.b16 %v12497
      %v12796 = vunpack.c.l.b16 %v12498
      %v12797 = vunpack.c.l.b16 %v12499
      %v12798 = vunpack.c.l.b16 %v12500
      %v12799 = vunpack.c.l.b16 %v12501
      %v12800 = vunpack.c.l.b16 %v12502
      %v12801 = vunpack.c.l.b16 %v12503
      %v12802 = vunpack.c.l.b16 %v12504
      %v12803 = vunpack.c.l.b16 %v12505
      %v12804 = vunpack.c.l.b16 %v12506
      %v12805 = vunpack.c.l.b16 %v12507
      %v12806 = vpack.c.b16 %v12793, %v12792
      %v12807 = vpack.c.b16 %v12795, %v12794
      %v12808 = vpack.c.b16 %v12797, %v12796
      %v12809 = vpack.c.b16 %v12799, %v12798
      %v12810 = vpack.c.b16 %v12801, %v12800
      %v12811 = vpack.c.b16 %v12803, %v12802
      %v12812 = vpack.c.b16 %v12805, %v12804
      %v12820 = vsel %vm5926, %v12529, 0
      %v12823 = vsel %vm5926, %v12537, 0
      %v12826 = vsel %vm5926, %v12545, 0
      %v12829 = vsel %vm5926, %v12553, 0
      %v12832 = vsel %vm5926, %v12561, 0
      %v12835 = vsel %vm5926, %v12569, 0
      %v12838 = vsel %vm5926, %v12577, 0
      %v12841 = vsel %vm5926, %v12585, 0
      %v12844 = vsel %vm5926, %v12593, 0
      %v12847 = vsel %vm5926, %v12601, 0
      %v12850 = vsel %vm5926, %v12609, 0
      %v12853 = vsel %vm5926, %v12617, 0
      %v12856 = vsel %vm5926, %v12625, 0
      %v12859 = vsel %vm5926, %v12633, 0
      %v12862 = vsel %vm5926, %v12641, 0
      %v12865 = vsel %vm5926, %v12649, 0
      %v12868 = vsel %vm5926, %v12657, 0
      %v12871 = vsel %vm5926, %v12665, 0
      %v12874 = vsel %vm5926, %v12673, 0
      %v12877 = vsel %vm5926, %v12681, 0
      %v12880 = vsel %vm5926, %v12689, 0
      %v12883 = vsel %vm5926, %v12697, 0
      %v12886 = vsel %vm5926, %v12705, 0
      %v12889 = vsel %vm5926, %v12713, 0
      %v12892 = vsel %vm5926, %v12721, 0
      %v12895 = vsel %vm5926, %v12729, 0
      %v12898 = vsel %vm5926, %v12737, 0
      %v12901 = vsel %vm5926, %v12745, 0
      %v12904 = vsel %vm5926, %v12753, 0
      %v12907 = vsel %vm5926, %v12761, 0
      %v12910 = vsel %vm5926, %v12769, 0
      %v12913 = vsel %vm5926, %v12777, 0
      %v12916 = vsel %vm6023, %v12812, 0
      %12918 = vmatprep.subr.bf16.mxu0 0
      %12919 = vmatpush1.bf16.msra.mxu0 0
      %12920 = vmatprep.subr.bf16.mxu0 0
      %12921 = vmatpush1.bf16.msra.mxu0 %v12916
      %12922 = vmatprep.subr.bf16.mxu0 0
      %12923 = vmatpush1.bf16.msra.mxu0 %v12811
      %12924 = vmatprep.subr.bf16.mxu0 0
      %12925 = vmatpush1.bf16.msra.mxu0 %v12810
      %12926 = vmatprep.subr.bf16.mxu0 0
      %12927 = vmatpush1.bf16.msra.mxu0 %v12809
      %12928 = vmatprep.subr.bf16.mxu0 0
      %12929 = vmatpush1.bf16.msra.mxu0 %v12808
      %12930 = vmatprep.subr.bf16.mxu0 0
      %12931 = vmatpush1.bf16.msra.mxu0 %v12807
      %12932 = vmatprep.subr.bf16.mxu0 0
      %12933 = vmatpush1.bf16.msra.mxu0 %v12806
      %12934 = vmatprep.subr.bf16.mxu0 0
      %12935 = vmatpush2.bf16.msra.mxu0 0
      %12936 = vmatprep.subr.bf16.mxu0 0
      %12937 = vmatpush2.bf16.msra.mxu0 0
      %12938 = vmatprep.subr.bf16.mxu0 0
      %12939 = vmatpush2.bf16.msra.mxu0 0
      %12940 = vmatprep.subr.bf16.mxu0 0
      %12941 = vmatpush2.bf16.msra.mxu0 0
      %12942 = vmatprep.subr.bf16.mxu0 0
      %12943 = vmatpush2.bf16.msra.mxu0 0
      %12944 = vmatprep.subr.bf16.mxu0 0
      %12945 = vmatpush2.bf16.msra.mxu0 0
      %12946 = vmatprep.subr.bf16.mxu0 0
      %12947 = vmatpush2.bf16.msra.mxu0 0
      %12948 = vmatprep.subr.bf16.mxu0 0
      %12949 = vmatpush2.bf16.msra.mxu0 0
      %12950 = vmatprep.mubr.bf16.mxu0 0
      %12951 = vmatmul.mubr.bf16.gmra.mxu0 %v12820
      %v12952 = vpop.f32.mrf.mxu0
      %v12953 = vadd.f32 %v12513, %v12952
      %v12954 = vpop.f32.mrf.mxu0
      %v12955 = vpop.f32.mrf.mxu0
      %v12956 = vadd.f32 %v12513, %v12955
      %v12957 = vpop.f32.mrf.mxu0
      %12958 = vmatprep.mubr.bf16.mxu0 0
      %12959 = vmatmul.mubr.bf16.gmra.mxu0 %v12823
      %v12960 = vpop.f32.mrf.mxu0
      %v12961 = vadd.f32 %v12513, %v12960
      %v12962 = vpop.f32.mrf.mxu0
      %v12963 = vpop.f32.mrf.mxu0
      %v12964 = vadd.f32 %v12513, %v12963
      %v12965 = vpop.f32.mrf.mxu0
      %12966 = vmatprep.mubr.bf16.mxu0 0
      %12967 = vmatmul.mubr.bf16.gmra.mxu0 %v12826
      %v12968 = vpop.f32.mrf.mxu0
      %v12969 = vadd.f32 %v12513, %v12968
      %v12970 = vpop.f32.mrf.mxu0
      %v12971 = vpop.f32.mrf.mxu0
      %v12972 = vadd.f32 %v12513, %v12971
      %v12973 = vpop.f32.mrf.mxu0
      %12974 = vmatprep.mubr.bf16.mxu0 0
      %12975 = vmatmul.mubr.bf16.gmra.mxu0 %v12829
      %v12976 = vpop.f32.mrf.mxu0
      %v12977 = vadd.f32 %v12513, %v12976
      %v12978 = vpop.f32.mrf.mxu0
      %v12979 = vpop.f32.mrf.mxu0
      %v12980 = vadd.f32 %v12513, %v12979
      %v12981 = vpop.f32.mrf.mxu0
      %12982 = vmatprep.mubr.bf16.mxu0 0
      %12983 = vmatmul.mubr.bf16.gmra.mxu0 %v12832
      %v12984 = vpop.f32.mrf.mxu0
      %v12985 = vadd.f32 %v12513, %v12984
      %v12986 = vpop.f32.mrf.mxu0
      %v12987 = vpop.f32.mrf.mxu0
      %v12988 = vadd.f32 %v12513, %v12987
      %v12989 = vpop.f32.mrf.mxu0
      %12990 = vmatprep.mubr.bf16.mxu0 0
      %12991 = vmatmul.mubr.bf16.gmra.mxu0 %v12835
      %v12992 = vpop.f32.mrf.mxu0
      %v12993 = vadd.f32 %v12513, %v12992
      %v12994 = vpop.f32.mrf.mxu0
      %v12995 = vpop.f32.mrf.mxu0
      %v12996 = vadd.f32 %v12513, %v12995
      %v12997 = vpop.f32.mrf.mxu0
      %12998 = vmatprep.mubr.bf16.mxu0 0
      %12999 = vmatmul.mubr.bf16.gmra.mxu0 %v12838
      %v13000 = vpop.f32.mrf.mxu0
      %v13001 = vadd.f32 %v12513, %v13000
      %v13002 = vpop.f32.mrf.mxu0
      %v13003 = vpop.f32.mrf.mxu0
      %v13004 = vadd.f32 %v12513, %v13003
      %v13005 = vpop.f32.mrf.mxu0
      %13006 = vmatprep.mubr.bf16.mxu0 0
      %13007 = vmatmul.mubr.bf16.gmra.mxu0 %v12841
      %v13008 = vpop.f32.mrf.mxu0
      %v13009 = vadd.f32 %v12513, %v13008
      %v13010 = vpop.f32.mrf.mxu0
      %v13011 = vpop.f32.mrf.mxu0
      %v13012 = vadd.f32 %v12513, %v13011
      %v13013 = vpop.f32.mrf.mxu0
      %13014 = vmatprep.mubr.bf16.mxu0 0
      %13015 = vmatmul.mubr.bf16.gmra.mxu0 %v12844
      %v13016 = vpop.f32.mrf.mxu0
      %v13017 = vadd.f32 %v12513, %v13016
      %v13018 = vpop.f32.mrf.mxu0
      %v13019 = vpop.f32.mrf.mxu0
      %v13020 = vadd.f32 %v12513, %v13019
      %v13021 = vpop.f32.mrf.mxu0
      %13022 = vmatprep.mubr.bf16.mxu0 0
      %13023 = vmatmul.mubr.bf16.gmra.mxu0 %v12847
      %v13024 = vpop.f32.mrf.mxu0
      %v13025 = vadd.f32 %v12513, %v13024
      %v13026 = vpop.f32.mrf.mxu0
      %v13027 = vpop.f32.mrf.mxu0
      %v13028 = vadd.f32 %v12513, %v13027
      %v13029 = vpop.f32.mrf.mxu0
      %13030 = vmatprep.mubr.bf16.mxu0 0
      %13031 = vmatmul.mubr.bf16.gmra.mxu0 %v12850
      %v13032 = vpop.f32.mrf.mxu0
      %v13033 = vadd.f32 %v12513, %v13032
      %v13034 = vpop.f32.mrf.mxu0
      %v13035 = vpop.f32.mrf.mxu0
      %v13036 = vadd.f32 %v12513, %v13035
      %v13037 = vpop.f32.mrf.mxu0
      %13038 = vmatprep.mubr.bf16.mxu0 0
      %13039 = vmatmul.mubr.bf16.gmra.mxu0 %v12853
      %v13040 = vpop.f32.mrf.mxu0
      %v13041 = vadd.f32 %v12513, %v13040
      %v13042 = vpop.f32.mrf.mxu0
      %v13043 = vpop.f32.mrf.mxu0
      %v13044 = vadd.f32 %v12513, %v13043
      %v13045 = vpop.f32.mrf.mxu0
      %13046 = vmatprep.mubr.bf16.mxu0 0
      %13047 = vmatmul.mubr.bf16.gmra.mxu0 %v12856
      %v13048 = vpop.f32.mrf.mxu0
      %v13049 = vadd.f32 %v12513, %v13048
      %v13050 = vpop.f32.mrf.mxu0
      %v13051 = vpop.f32.mrf.mxu0
      %v13052 = vadd.f32 %v12513, %v13051
      %v13053 = vpop.f32.mrf.mxu0
      %13054 = vmatprep.mubr.bf16.mxu0 0
      %13055 = vmatmul.mubr.bf16.gmra.mxu0 %v12859
      %v13056 = vpop.f32.mrf.mxu0
      %v13057 = vadd.f32 %v12513, %v13056
      %v13058 = vpop.f32.mrf.mxu0
      %v13059 = vpop.f32.mrf.mxu0
      %v13060 = vadd.f32 %v12513, %v13059
      %v13061 = vpop.f32.mrf.mxu0
      %13062 = vmatprep.mubr.bf16.mxu0 0
      %13063 = vmatmul.mubr.bf16.gmra.mxu0 %v12862
      %v13064 = vpop.f32.mrf.mxu0
      %v13065 = vadd.f32 %v12513, %v13064
      %v13066 = vpop.f32.mrf.mxu0
      %v13067 = vpop.f32.mrf.mxu0
      %v13068 = vadd.f32 %v12513, %v13067
      %v13069 = vpop.f32.mrf.mxu0
      %13070 = vmatprep.mubr.bf16.mxu0 0
      %13071 = vmatmul.mubr.bf16.gmra.mxu0 %v12865
      %v13072 = vpop.f32.mrf.mxu0
      %v13073 = vadd.f32 %v12513, %v13072
      %v13074 = vpop.f32.mrf.mxu0
      %v13075 = vpop.f32.mrf.mxu0
      %v13076 = vadd.f32 %v12513, %v13075
      %v13077 = vpop.f32.mrf.mxu0
      %13078 = vmatprep.mubr.bf16.mxu0 0
      %13079 = vmatmul.mubr.bf16.gmra.mxu0 %v12868
      %v13080 = vpop.f32.mrf.mxu0
      %v13081 = vadd.f32 %v12513, %v13080
      %v13082 = vpop.f32.mrf.mxu0
      %v13083 = vpop.f32.mrf.mxu0
      %v13084 = vadd.f32 %v12513, %v13083
      %v13085 = vpop.f32.mrf.mxu0
      %13086 = vmatprep.mubr.bf16.mxu0 0
      %13087 = vmatmul.mubr.bf16.gmra.mxu0 %v12871
      %v13088 = vpop.f32.mrf.mxu0
      %v13089 = vadd.f32 %v12513, %v13088
      %v13090 = vpop.f32.mrf.mxu0
      %v13091 = vpop.f32.mrf.mxu0
      %v13092 = vadd.f32 %v12513, %v13091
      %v13093 = vpop.f32.mrf.mxu0
      %13094 = vmatprep.mubr.bf16.mxu0 0
      %13095 = vmatmul.mubr.bf16.gmra.mxu0 %v12874
      %v13096 = vpop.f32.mrf.mxu0
      %v13097 = vadd.f32 %v12513, %v13096
      %v13098 = vpop.f32.mrf.mxu0
      %v13099 = vpop.f32.mrf.mxu0
      %v13100 = vadd.f32 %v12513, %v13099
      %v13101 = vpop.f32.mrf.mxu0
      %13102 = vmatprep.mubr.bf16.mxu0 0
      %13103 = vmatmul.mubr.bf16.gmra.mxu0 %v12877
      %v13104 = vpop.f32.mrf.mxu0
      %v13105 = vadd.f32 %v12513, %v13104
      %v13106 = vpop.f32.mrf.mxu0
      %v13107 = vpop.f32.mrf.mxu0
      %v13108 = vadd.f32 %v12513, %v13107
      %v13109 = vpop.f32.mrf.mxu0
      %13110 = vmatprep.mubr.bf16.mxu0 0
      %13111 = vmatmul.mubr.bf16.gmra.mxu0 %v12880
      %v13112 = vpop.f32.mrf.mxu0
      %v13113 = vadd.f32 %v12513, %v13112
      %v13114 = vpop.f32.mrf.mxu0
      %v13115 = vpop.f32.mrf.mxu0
      %v13116 = vadd.f32 %v12513, %v13115
      %v13117 = vpop.f32.mrf.mxu0
      %13118 = vmatprep.mubr.bf16.mxu0 0
      %13119 = vmatmul.mubr.bf16.gmra.mxu0 %v12883
      %v13120 = vpop.f32.mrf.mxu0
      %v13121 = vadd.f32 %v12513, %v13120
      %v13122 = vpop.f32.mrf.mxu0
      %v13123 = vpop.f32.mrf.mxu0
      %v13124 = vadd.f32 %v12513, %v13123
      %v13125 = vpop.f32.mrf.mxu0
      %13126 = vmatprep.mubr.bf16.mxu0 0
      %13127 = vmatmul.mubr.bf16.gmra.mxu0 %v12886
      %v13128 = vpop.f32.mrf.mxu0
      %v13129 = vadd.f32 %v12513, %v13128
      %v13130 = vpop.f32.mrf.mxu0
      %v13131 = vpop.f32.mrf.mxu0
      %v13132 = vadd.f32 %v12513, %v13131
      %v13133 = vpop.f32.mrf.mxu0
      %13134 = vmatprep.mubr.bf16.mxu0 0
      %13135 = vmatmul.mubr.bf16.gmra.mxu0 %v12889
      %v13136 = vpop.f32.mrf.mxu0
      %v13137 = vadd.f32 %v12513, %v13136
      %v13138 = vpop.f32.mrf.mxu0
      %v13139 = vpop.f32.mrf.mxu0
      %v13140 = vadd.f32 %v12513, %v13139
      %v13141 = vpop.f32.mrf.mxu0
      %13142 = vmatprep.mubr.bf16.mxu0 0
      %13143 = vmatmul.mubr.bf16.gmra.mxu0 %v12892
      %v13144 = vpop.f32.mrf.mxu0
      %v13145 = vadd.f32 %v12513, %v13144
      %v13146 = vpop.f32.mrf.mxu0
      %v13147 = vpop.f32.mrf.mxu0
      %v13148 = vadd.f32 %v12513, %v13147
      %v13149 = vpop.f32.mrf.mxu0
      %13150 = vmatprep.mubr.bf16.mxu0 0
      %13151 = vmatmul.mubr.bf16.gmra.mxu0 %v12895
      %v13152 = vpop.f32.mrf.mxu0
      %v13153 = vadd.f32 %v12513, %v13152
      %v13154 = vpop.f32.mrf.mxu0
      %v13155 = vpop.f32.mrf.mxu0
      %v13156 = vadd.f32 %v12513, %v13155
      %v13157 = vpop.f32.mrf.mxu0
      %13158 = vmatprep.mubr.bf16.mxu0 0
      %13159 = vmatmul.mubr.bf16.gmra.mxu0 %v12898
      %v13160 = vpop.f32.mrf.mxu0
      %v13161 = vadd.f32 %v12513, %v13160
      %v13162 = vpop.f32.mrf.mxu0
      %v13163 = vpop.f32.mrf.mxu0
      %v13164 = vadd.f32 %v12513, %v13163
      %v13165 = vpop.f32.mrf.mxu0
      %13166 = vmatprep.mubr.bf16.mxu0 0
      %13167 = vmatmul.mubr.bf16.gmra.mxu0 %v12901
      %v13168 = vpop.f32.mrf.mxu0
      %v13169 = vadd.f32 %v12513, %v13168
      %v13170 = vpop.f32.mrf.mxu0
      %v13171 = vpop.f32.mrf.mxu0
      %v13172 = vadd.f32 %v12513, %v13171
      %v13173 = vpop.f32.mrf.mxu0
      %13174 = vmatprep.mubr.bf16.mxu0 0
      %13175 = vmatmul.mubr.bf16.gmra.mxu0 %v12904
      %v13176 = vpop.f32.mrf.mxu0
      %v13177 = vadd.f32 %v12513, %v13176
      %v13178 = vpop.f32.mrf.mxu0
      %v13179 = vpop.f32.mrf.mxu0
      %v13180 = vadd.f32 %v12513, %v13179
      %v13181 = vpop.f32.mrf.mxu0
      %13182 = vmatprep.mubr.bf16.mxu0 0
      %13183 = vmatmul.mubr.bf16.gmra.mxu0 %v12907
      %v13184 = vpop.f32.mrf.mxu0
      %v13185 = vadd.f32 %v12513, %v13184
      %v13186 = vpop.f32.mrf.mxu0
      %v13187 = vpop.f32.mrf.mxu0
      %v13188 = vadd.f32 %v12513, %v13187
      %v13189 = vpop.f32.mrf.mxu0
      %13190 = vmatprep.mubr.bf16.mxu0 0
      %13191 = vmatmul.mubr.bf16.gmra.mxu0 %v12910
      %v13192 = vpop.f32.mrf.mxu0
      %v13193 = vadd.f32 %v12513, %v13192
      %v13194 = vpop.f32.mrf.mxu0
      %v13195 = vpop.f32.mrf.mxu0
      %v13196 = vadd.f32 %v12513, %v13195
      %v13197 = vpop.f32.mrf.mxu0
      %13198 = vmatprep.mubr.bf16.mxu0 0
      %13199 = vmatmul.mubr.bf16.gmra.mxu0 %v12913
      %v13200 = vpop.f32.mrf.mxu0
      %v13201 = vadd.f32 %v12513, %v13200
      %v13202 = vpop.f32.mrf.mxu0
      %v13203 = vpop.f32.mrf.mxu0
      %v13204 = vadd.f32 %v12513, %v13203
      %v13205 = vpop.f32.mrf.mxu0
      %13206 = vdwg.mxu0
      %v13207 = vmul.f32 %v12953, 0.2
      %v13208 = vmul.f32 %v12956, 0.2
      %v13209 = vmul.f32 %v12961, 0.2
      %v13210 = vmul.f32 %v12964, 0.2
      %v13211 = vmul.f32 %v12969, 0.2
      %v13212 = vmul.f32 %v12972, 0.2
      %v13213 = vmul.f32 %v12977, 0.2
      %v13214 = vmul.f32 %v12980, 0.2
      %v13215 = vmul.f32 %v12985, 0.2
      %v13216 = vmul.f32 %v12988, 0.2
      %v13217 = vmul.f32 %v12993, 0.2
      %v13218 = vmul.f32 %v12996, 0.2
      %v13219 = vmul.f32 %v13001, 0.2
      %v13220 = vmul.f32 %v13004, 0.2
      %v13221 = vmul.f32 %v13009, 0.2
      %v13222 = vmul.f32 %v13012, 0.2
      %v13223 = vmul.f32 %v13017, 0.2
      %v13224 = vmul.f32 %v13020, 0.2
      %v13225 = vmul.f32 %v13025, 0.2
      %v13226 = vmul.f32 %v13028, 0.2
      %v13227 = vmul.f32 %v13033, 0.2
      %v13228 = vmul.f32 %v13036, 0.2
      %v13229 = vmul.f32 %v13041, 0.2
      %v13230 = vmul.f32 %v13044, 0.2
      %v13231 = vmul.f32 %v13049, 0.2
      %v13232 = vmul.f32 %v13052, 0.2
      %v13233 = vmul.f32 %v13057, 0.2
      %v13234 = vmul.f32 %v13060, 0.2
      %v13235 = vmul.f32 %v13065, 0.2
      %v13236 = vmul.f32 %v13068, 0.2
      %v13237 = vmul.f32 %v13073, 0.2
      %v13238 = vmul.f32 %v13076, 0.2
      %v13239 = vmul.f32 %v13081, 0.2
      %v13240 = vmul.f32 %v13084, 0.2
      %v13241 = vmul.f32 %v13089, 0.2
      %v13242 = vmul.f32 %v13092, 0.2
      %v13243 = vmul.f32 %v13097, 0.2
      %v13244 = vmul.f32 %v13100, 0.2
      %v13245 = vmul.f32 %v13105, 0.2
      %v13246 = vmul.f32 %v13108, 0.2
      %v13247 = vmul.f32 %v13113, 0.2
      %v13248 = vmul.f32 %v13116, 0.2
      %v13249 = vmul.f32 %v13121, 0.2
      %v13250 = vmul.f32 %v13124, 0.2
      %v13251 = vmul.f32 %v13129, 0.2
      %v13252 = vmul.f32 %v13132, 0.2
      %v13253 = vmul.f32 %v13137, 0.2
      %v13254 = vmul.f32 %v13140, 0.2
      %v13255 = vmul.f32 %v13145, 0.2
      %v13256 = vmul.f32 %v13148, 0.2
      %v13257 = vmul.f32 %v13153, 0.2
      %v13258 = vmul.f32 %v13156, 0.2
      %v13259 = vmul.f32 %v13161, 0.2
      %v13260 = vmul.f32 %v13164, 0.2
      %v13261 = vmul.f32 %v13169, 0.2
      %v13262 = vmul.f32 %v13172, 0.2
      %v13263 = vmul.f32 %v13177, 0.2
      %v13264 = vmul.f32 %v13180, 0.2
      %v13265 = vmul.f32 %v13185, 0.2
      %v13266 = vmul.f32 %v13188, 0.2
      %v13267 = vmul.f32 %v13193, 0.2
      %v13268 = vmul.f32 %v13196, 0.2
      %v13269 = vmul.f32 %v13201, 0.2
      %v13270 = vmul.f32 %v13204, 0.2
      %v13271 = vmax.f32 %v13207, %v12953
      %v13272 = vmax.f32 %v13208, %v12956
      %v13273 = vmax.f32 %v13209, %v12961
      %v13274 = vmax.f32 %v13210, %v12964
      %v13275 = vmax.f32 %v13211, %v12969
      %v13276 = vmax.f32 %v13212, %v12972
      %v13277 = vmax.f32 %v13213, %v12977
      %v13278 = vmax.f32 %v13214, %v12980
      %v13279 = vmax.f32 %v13215, %v12985
      %v13280 = vmax.f32 %v13216, %v12988
      %v13281 = vmax.f32 %v13217, %v12993
      %v13282 = vmax.f32 %v13218, %v12996
      %v13283 = vmax.f32 %v13219, %v13001
      %v13284 = vmax.f32 %v13220, %v13004
      %v13285 = vmax.f32 %v13221, %v13009
      %v13286 = vmax.f32 %v13222, %v13012
      %v13287 = vmax.f32 %v13223, %v13017
      %v13288 = vmax.f32 %v13224, %v13020
      %v13289 = vmax.f32 %v13225, %v13025
      %v13290 = vmax.f32 %v13226, %v13028
      %v13291 = vmax.f32 %v13227, %v13033
      %v13292 = vmax.f32 %v13228, %v13036
      %v13293 = vmax.f32 %v13229, %v13041
      %v13294 = vmax.f32 %v13230, %v13044
      %v13295 = vmax.f32 %v13231, %v13049
      %v13296 = vmax.f32 %v13232, %v13052
      %v13297 = vmax.f32 %v13233, %v13057
      %v13298 = vmax.f32 %v13234, %v13060
      %v13299 = vmax.f32 %v13235, %v13065
      %v13300 = vmax.f32 %v13236, %v13068
      %v13301 = vmax.f32 %v13237, %v13073
      %v13302 = vmax.f32 %v13238, %v13076
      %v13303 = vmax.f32 %v13239, %v13081
      %v13304 = vmax.f32 %v13240, %v13084
      %v13305 = vmax.f32 %v13241, %v13089
      %v13306 = vmax.f32 %v13242, %v13092
      %v13307 = vmax.f32 %v13243, %v13097
      %v13308 = vmax.f32 %v13244, %v13100
      %v13309 = vmax.f32 %v13245, %v13105
      %v13310 = vmax.f32 %v13246, %v13108
      %v13311 = vmax.f32 %v13247, %v13113
      %v13312 = vmax.f32 %v13248, %v13116
      %v13313 = vmax.f32 %v13249, %v13121
      %v13314 = vmax.f32 %v13250, %v13124
      %v13315 = vmax.f32 %v13251, %v13129
      %v13316 = vmax.f32 %v13252, %v13132
      %v13317 = vmax.f32 %v13253, %v13137
      %v13318 = vmax.f32 %v13254, %v13140
      %v13319 = vmax.f32 %v13255, %v13145
      %v13320 = vmax.f32 %v13256, %v13148
      %v13321 = vmax.f32 %v13257, %v13153
      %v13322 = vmax.f32 %v13258, %v13156
      %v13323 = vmax.f32 %v13259, %v13161
      %v13324 = vmax.f32 %v13260, %v13164
      %v13325 = vmax.f32 %v13261, %v13169
      %v13326 = vmax.f32 %v13262, %v13172
      %v13327 = vmax.f32 %v13263, %v13177
      %v13328 = vmax.f32 %v13264, %v13180
      %v13329 = vmax.f32 %v13265, %v13185
      %v13330 = vmax.f32 %v13266, %v13188
      %v13331 = vmax.f32 %v13267, %v13193
      %v13332 = vmax.f32 %v13268, %v13196
      %v13333 = vmax.f32 %v13269, %v13201
      %v13334 = vmax.f32 %v13270, %v13204
      %v13335 = vld [vmem:[%s6] sm:$0xff]
      %v13336 = vld [vmem:[%s6 + $0x8] sm:$0xff]
      %v13337 = vpack.c.bf16 %v13272, %v13271
      %v13338 = vpack.c.bf16 %v13274, %v13273
      %v13339 = vpack.c.bf16 %v13276, %v13275
      %v13340 = vpack.c.bf16 %v13278, %v13277
      %v13341 = vpack.c.bf16 %v13280, %v13279
      %v13342 = vpack.c.bf16 %v13282, %v13281
      %v13343 = vpack.c.bf16 %v13284, %v13283
      %v13344 = vpack.c.bf16 %v13286, %v13285
      %v13345 = vpack.c.bf16 %v13288, %v13287
      %v13346 = vpack.c.bf16 %v13290, %v13289
      %v13347 = vpack.c.bf16 %v13292, %v13291
      %v13348 = vpack.c.bf16 %v13294, %v13293
      %v13349 = vpack.c.bf16 %v13296, %v13295
      %v13350 = vpack.c.bf16 %v13298, %v13297
      %v13351 = vpack.c.bf16 %v13300, %v13299
      %v13352 = vpack.c.bf16 %v13302, %v13301
      %v13353 = vpack.c.bf16 %v13304, %v13303
      %v13354 = vpack.c.bf16 %v13306, %v13305
      %v13355 = vpack.c.bf16 %v13308, %v13307
      %v13356 = vpack.c.bf16 %v13310, %v13309
      %v13357 = vpack.c.bf16 %v13312, %v13311
      %v13358 = vpack.c.bf16 %v13314, %v13313
      %v13359 = vpack.c.bf16 %v13316, %v13315
      %v13360 = vpack.c.bf16 %v13318, %v13317
      %v13361 = vpack.c.bf16 %v13320, %v13319
      %v13362 = vpack.c.bf16 %v13322, %v13321
      %v13363 = vpack.c.bf16 %v13324, %v13323
      %v13364 = vpack.c.bf16 %v13326, %v13325
      %v13365 = vpack.c.bf16 %v13328, %v13327
      %v13366 = vpack.c.bf16 %v13330, %v13329
      %v13367 = vpack.c.bf16 %v13332, %v13331
      %v13368 = vpack.c.bf16 %v13334, %v13333
      %v13371 = vunpack.c.l.b16 %v13335
      %v13372 = vunpack.c.h.b16 %v13335
      %v13373 = vunpack.c.l.b16 %v13336
      %v13374 = vunpack.c.h.b16 %v13336
      %v13375 = vpack.c.b16 %v13371, %v13371
      %v13376 = vpack.c.b16 %v13372, %v13372
      %v13377 = vpack.c.b16 %v13373, %v13373
      %v13378 = vpack.c.b16 %v13374, %v13374
      %13383 = vmatprep.subr.bf16.mxu0 0
      %13384 = vmatpush1.bf16.msra.mxu0 %v13344
      %13385 = vmatprep.subr.bf16.mxu0 0
      %13386 = vmatpush1.bf16.msra.mxu0 %v13343
      %13387 = vmatprep.subr.bf16.mxu0 0
      %13388 = vmatpush1.bf16.msra.mxu0 %v13342
      %13389 = vmatprep.subr.bf16.mxu0 0
      %13390 = vmatpush1.bf16.msra.mxu0 %v13341
      %13391 = vmatprep.subr.bf16.mxu0 0
      %13392 = vmatpush1.bf16.msra.mxu0 %v13340
      %13393 = vmatprep.subr.bf16.mxu0 0
      %13394 = vmatpush1.bf16.msra.mxu0 %v13339
      %13395 = vmatprep.subr.bf16.mxu0 0
      %13396 = vmatpush1.bf16.msra.mxu0 %v13338
      %13397 = vmatprep.subr.bf16.mxu0 0
      %13398 = vmatpush1.bf16.msra.mxu0 %v13337
      %13399 = vmatprep.subr.bf16.mxu0 0
      %13400 = vmatpush2.bf16.msra.mxu0 %v13352
      %13401 = vmatprep.subr.bf16.mxu0 0
      %13402 = vmatpush2.bf16.msra.mxu0 %v13351
      %13403 = vmatprep.subr.bf16.mxu0 0
      %13404 = vmatpush2.bf16.msra.mxu0 %v13350
      %13405 = vmatprep.subr.bf16.mxu0 0
      %13406 = vmatpush2.bf16.msra.mxu0 %v13349
      %13407 = vmatprep.subr.bf16.mxu0 0
      %13408 = vmatpush2.bf16.msra.mxu0 %v13348
      %13409 = vmatprep.subr.bf16.mxu0 0
      %13410 = vmatpush2.bf16.msra.mxu0 %v13347
      %13411 = vmatprep.subr.bf16.mxu0 0
      %13412 = vmatpush2.bf16.msra.mxu0 %v13346
      %13413 = vmatprep.subr.bf16.mxu0 0
      %13414 = vmatpush2.bf16.msra.mxu0 %v13345
      %13415 = vmatprep.mubr.bf16.mxu0 %v13376
      %13416 = vmatmul.mubr.bf16.gmra.mxu0 %v13375
      %v13417 = vpop.f32.mrf.mxu0
      %v13418 = vadd.f32 0.0, %v13417
      %v13419 = vpop.f32.mrf.mxu0
      %v13420 = vpop.f32.mrf.mxu0
      %v13421 = vpop.f32.mrf.mxu0
      %13422 = vdwg.mxu0
      %13423 = vmatprep.subr.bf16.mxu0 0
      %13424 = vmatpush1.bf16.msra.mxu0 %v13360
      %13425 = vmatprep.subr.bf16.mxu0 0
      %13426 = vmatpush1.bf16.msra.mxu0 %v13359
      %13427 = vmatprep.subr.bf16.mxu0 0
      %13428 = vmatpush1.bf16.msra.mxu0 %v13358
      %13429 = vmatprep.subr.bf16.mxu0 0
      %13430 = vmatpush1.bf16.msra.mxu0 %v13357
      %13431 = vmatprep.subr.bf16.mxu0 0
      %13432 = vmatpush1.bf16.msra.mxu0 %v13356
      %13433 = vmatprep.subr.bf16.mxu0 0
      %13434 = vmatpush1.bf16.msra.mxu0 %v13355
      %13435 = vmatprep.subr.bf16.mxu0 0
      %13436 = vmatpush1.bf16.msra.mxu0 %v13354
      %13437 = vmatprep.subr.bf16.mxu0 0
      %13438 = vmatpush1.bf16.msra.mxu0 %v13353
      %13439 = vmatprep.subr.bf16.mxu0 0
      %13440 = vmatpush2.bf16.msra.mxu0 %v13368
      %13441 = vmatprep.subr.bf16.mxu0 0
      %13442 = vmatpush2.bf16.msra.mxu0 %v13367
      %13443 = vmatprep.subr.bf16.mxu0 0
      %13444 = vmatpush2.bf16.msra.mxu0 %v13366
      %13445 = vmatprep.subr.bf16.mxu0 0
      %13446 = vmatpush2.bf16.msra.mxu0 %v13365
      %13447 = vmatprep.subr.bf16.mxu0 0
      %13448 = vmatpush2.bf16.msra.mxu0 %v13364
      %13449 = vmatprep.subr.bf16.mxu0 0
      %13450 = vmatpush2.bf16.msra.mxu0 %v13363
      %13451 = vmatprep.subr.bf16.mxu0 0
      %13452 = vmatpush2.bf16.msra.mxu0 %v13362
      %13453 = vmatprep.subr.bf16.mxu0 0
      %13454 = vmatpush2.bf16.msra.mxu0 %v13361
      %13455 = vmatprep.mubr.bf16.mxu0 %v13378
      %13456 = vmatmul.mubr.bf16.gmra.mxu0 %v13377
      %v13457 = vpop.f32.mrf.mxu0
      %v13458 = vadd.f32 %v13418, %v13457
      %v13459 = vpop.f32.mrf.mxu0
      %v13460 = vpop.f32.mrf.mxu0
      %v13461 = vpop.f32.mrf.mxu0
      %13462 = vdwg.mxu0
      %v13463 = vmul.f32 %v13458, 0.037037037
      %13464 = vst.msk [vmem:[%s276] sm:$0xff] %vm2448, %v13463
      %p13465 = scmp.lt.s32.totalorder %s18, 1
      %s13466 = scalar_select %p13465, %s18, 1
      %s13467 = smul.addr %s13466, 8
      %s13468 = scalar_lea.vmem %s7, %s13467
      // Predicated region
      $region49: #{tpu_custom_call.1} parent=47 // pred_check
        %p13469 = pneg %p188
      $region50: #{tpu_custom_call.1} parent=47 // pred_check_branch
        %13471 = sbr.rel (%p13469) target = $region52
      $region51: #{tpu_custom_call.1} parent=47 // pred_region
        _
      $region52: #{tpu_custom_call.1} parent=47 // pred_fallthru
        _
    $region48: #{tpu_custom_call.1} parent=5 // pred_fallthru
      _
    %p13472 = scmp.le.s32.totalorder 2, %s13
    // Predicated region
    $region53: #{tpu_custom_call.1} parent=5 // pred_check
      %p13473 = pneg %p13472
    $region54: #{tpu_custom_call.1} parent=5 // pred_check_branch
      %13475 = sbr.rel (%p13473) target = $region56
    $region55: #{tpu_custom_call.1} parent=5 // pred_region
      %s13476 = ssub.s32 %s13, 2
      // Predicated region
      $region57: #{tpu_custom_call.1} parent=55 // pred_check
        %p13477 = pneg %p194
      $region58: #{tpu_custom_call.1} parent=55 // pred_check_branch
        %13479 = sbr.rel (%p13477) target = $region60
      $region59: #{tpu_custom_call.1} parent=55 // pred_region
        %p13480 = scmp.lt.s32.totalorder %s19, 1
        %s13481 = scalar_select %p13480, %s19, 1
        %s13482 = smul.addr %s13481, 8
        %s13483 = scalar_lea.vmem %s7, %s13482
      $region60: #{tpu_custom_call.1} parent=55 // pred_fallthru
        _
    $region56: #{tpu_custom_call.1} parent=5 // pred_fallthru
      _
  $region6: #{tpu_custom_call.1} parent=0 // loop_footer
    %s17 = sadd.s32 1, %s13
  $region7: #{tpu_custom_call.1} parent=0 // loop_footer_branch
    %12 = sbr.rel target = $region3
  $region8: #{tpu_custom_call.1} parent=0 // loop_exit
    _

</llo_original>
